<compile_context>
chip_gen: v7x
topology: tpu7x:2x2x1
jax: 0.10.0
libtpu: 0.0.40
codegen_flags: <defaults>
</compile_context>

<pallas_src>
import functools
import math

import jax
import jax.numpy as jnp
from jax import lax
from jax.experimental import pallas as pl
from jax.experimental.pallas import tpu as pltpu


def _round_up(x, m):
    return ((x + m - 1) // m) * m


def _pick_tile(n, candidates):
    for c in candidates:
        if n % c == 0:
            return c
    return n


def _vmem_capacity_bytes():
    try:
        return int(pltpu.get_tpu_info().vmem_capacity_bytes)
    except Exception:
        return 64 * 1024 * 1024          # conservative (v7x-sized) fallback


# ----------------------------------------------------------------------------
# 3x3 conv + folded-BN bias + ReLU   (grid = (batch, Cout-tile, Cin-reduction))
# ----------------------------------------------------------------------------

def make_conv3x3_kernel(H, W, Wp):
    nrows = H * Wp                       # rows of the flattened output tile
    span = nrows + 2 * Wp                # rows covering ky = 0..2 for one kx

    def kernel(x_ref, w_ref, b_ref, o_ref, acc_ref):
        ci = pl.program_id(2)

        @pl.when(ci == 0)
        def _init():
            acc_ref[...] = jnp.zeros_like(acc_ref)

        x0 = x_ref[0]                    # (Hp*Wp, tkc) bf16, W-padded, row-flattened
        acc = acc_ref[...]
        # kx == 0 taps: 8-aligned row slices straight off the bf16 block (no copy).
        for ky in range(3):
            acc = acc + jnp.dot(x0[ky * Wp: ky * Wp + nrows], w_ref[ky * 3],
                                preferred_element_type=jnp.float32)
        # kx == 1, 2 taps need an odd sublane offset.  Do the shift on a single
        # f32 view (32-bit relayout is the robust path), downcast once per kx
        # and reuse the shifted bf16 slab for all three ky taps.
        # TODO(synk): switch to pltpu.roll on the bf16 slab once packed-dtype
        # sublane rotates lower reliably; that removes the remaining f32 temp.
        xf = x0.astype(jnp.float32)
        for kx in (1, 2):
            xs = xf[kx: kx + span].astype(jnp.bfloat16)
            for ky in range(3):
                acc = acc + jnp.dot(xs[ky * Wp: ky * Wp + nrows],
                                    w_ref[ky * 3 + kx],
                                    preferred_element_type=jnp.float32)
        acc_ref[...] = acc

        @pl.when(ci == pl.num_programs(2) - 1)
        def _finish():
            # BN scale is folded into the weights; only bias + ReLU here (f32).
            # Padded W columns are stored as-is (aligned store) and cropped in
            # the wrapper -- cheaper than an in-kernel unaligned crop.
            o_ref[0] = jnp.maximum(acc_ref[...] + b_ref[...], 0.0).astype(o_ref.dtype)

    return kernel


def conv3x3_bn_relu(x_nhwc, w, bias, *, out_dtype=jnp.bfloat16):
    """3x3 conv (stride 1, pad 1) with BN scale pre-folded into `w`, + bias + ReLU."""
    B, H, W, Cin = x_nhwc.shape
    Cout = w.shape[-1]
    Wp = _round_up(W + 2, 8)             # left pad 1, right pad >= 1, 8-aligned
    Hp = H + 3                           # top pad 1, bottom pad 2 (extra zero row)
    xpad = jnp.pad(x_nhwc.astype(jnp.bfloat16),
                   ((0, 0), (1, 2), (1, Wp - W - 1), (0, 0)))
    xflat = xpad.reshape(B, Hp * Wp, Cin)
    w9 = w.reshape(9, Cin, Cout).astype(jnp.bfloat16)
    b2 = bias.reshape(1, Cout).astype(jnp.float32)

    big_vmem = _vmem_capacity_bytes() >= 96 * 1024 * 1024
    # Large Cin-reduction tile => few f32-accumulator round trips (vst relief).
    tkc = _pick_tile(Cin, (512, 256, 128))
    # Cout tile: keep whole on 128 MiB parts (no redundant halo prep); split on
    # 64 MiB parts (v7x) to fit VMEM and feed the second TensorCore.
    tco = _pick_tile(Cout, (512, 256, 128) if big_vmem else (256, 128))
    n_ci = Cin // tkc
    n_co = Cout // tco

    cost = pl.CostEstimate(
        flops=2 * B * H * W * 9 * Cin * Cout,
        transcendentals=0,
        bytes_accessed=(n_co * xflat.size * 2 + B * w9.size * 2
                        + B * H * Wp * Cout * 2 + Cout * 4),
    )

    # TODO(synk): add H-spatial tiling with a 2-row halo (manual DMA) for very
    # large feature maps (>~96x96) where one batch element no longer fits VMEM.
    out = pl.pallas_call(
        make_conv3x3_kernel(H, W, Wp),
        out_shape=jax.ShapeDtypeStruct((B, H * Wp, Cout), out_dtype),
        grid=(B, n_co, n_ci),
        in_specs=[
            pl.BlockSpec((1, Hp * Wp, tkc), lambda b, co, ci: (b, 0, ci)),
            pl.BlockSpec((9, tkc, tco), lambda b, co, ci: (0, ci, co)),
            pl.BlockSpec((1, tco), lambda b, co, ci: (0, co)),
        ],
        out_specs=pl.BlockSpec((1, H * Wp, tco), lambda b, co, ci: (b, 0, co)),
        scratch_shapes=[pltpu.VMEM((H * Wp, tco), jnp.float32)],
        compiler_params=pltpu.CompilerParams(
            dimension_semantics=("parallel", "parallel", "arbitrary"),
            vmem_limit_bytes=(80 if big_vmem else 48) * 1024 * 1024),
        cost_estimate=cost,
    )(xflat, w9, b2)
    # Crop the padded W columns outside the hot loop (plain XLA slice).
    return out.reshape(B, H, Wp, Cout)[:, :, :W, :]


# ----------------------------------------------------------------------------
# 1x1 conv (matmul) + bias (+residual) (+ReLU), N-axis tiled with padding
# ----------------------------------------------------------------------------

def make_conv1x1_kernel(relu, residual):
    def kernel(*refs):
        if residual:
            x_ref, w_ref, b_ref, r_ref, o_ref = refs
        else:
            x_ref, w_ref, b_ref, o_ref = refs
        y = jnp.dot(x_ref[0], w_ref[...],
                    preferred_element_type=jnp.float32) + b_ref[...]
        if residual:
            y = y + r_ref[0].astype(jnp.float32)
        if relu:
            y = jnp.maximum(y, 0.0)
        o_ref[0] = y.astype(o_ref.dtype)
    return kernel


def conv1x1(x, w, bias, *, relu=False, residual=None, out_dtype=jnp.bfloat16):
    B, N, Cin = x.shape
    Cout = w.shape[-1]
    # Real N-axis tiling: pad N up to a tile multiple (zero rows are harmless
    # for a 1x1 conv and are cropped below) so the pipeline has depth and v7x
    # megacore can split over N as well as batch.
    tn = _pick_tile(N, (512, 256, 128))
    if tn == N and N > 512:
        tn = 512
    Np = _round_up(N, tn)

    def _pad_n(a):
        return a if a.shape[1] == Np else jnp.pad(
            a, ((0, 0), (0, Np - a.shape[1]), (0, 0)))

    args = [_pad_n(x.astype(jnp.bfloat16)), w.astype(jnp.bfloat16),
            bias.reshape(1, Cout).astype(jnp.float32)]
    in_specs = [
        pl.BlockSpec((1, tn, Cin), lambda b, n: (b, n, 0)),
        pl.BlockSpec((Cin, Cout), lambda b, n: (0, 0)),
        pl.BlockSpec((1, Cout), lambda b, n: (0, 0)),
    ]
    if residual is not None:
        in_specs.append(pl.BlockSpec((1, tn, Cout), lambda b, n: (b, n, 0)))
        args.append(_pad_n(residual.astype(jnp.bfloat16)))
    out = pl.pallas_call(
        make_conv1x1_kernel(relu, residual is not None),
        out_shape=jax.ShapeDtypeStruct((B, Np, Cout), out_dtype),
        grid=(B, Np // tn),
        in_specs=in_specs,
        out_specs=pl.BlockSpec((1, tn, Cout), lambda b, n: (b, n, 0)),
        compiler_params=pltpu.CompilerParams(
            dimension_semantics=("parallel", "parallel"),
            vmem_limit_bytes=32 * 1024 * 1024),
    )(*args)
    return out if Np == N else out[:, :N, :]


# ----------------------------------------------------------------------------
# EM attention unit (bases padded to 128 lanes, exactly masked)
# ----------------------------------------------------------------------------

def make_em_kernel(iteration_num, k_valid, k_padded):
    def kernel(xt_ref, xc_ref, mu_ref, o_ref):
        xt = xt_ref[0]                                   # (N, C)  bf16
        xc = xc_ref[0]                                   # (C, N)  bf16 (pre-transposed)
        mu = mu_ref[0]                                   # (C, Kp) bf16
        need_mask = k_padded > k_valid
        if need_mask:                                    # hoisted out of the EM loop
            col = lax.broadcasted_iota(jnp.int32, (1, k_padded), 1)
            pad_mask = col < k_valid
        z = None
        for _ in range(iteration_num):
            z = jnp.dot(xt, mu, preferred_element_type=jnp.float32)   # (N, Kp)
            if need_mask:
                z = jnp.where(pad_mask, z, -1e30)        # padded bases -> prob ~0
            z = z - jnp.max(z, axis=-1, keepdims=True)
            z = jnp.exp(z)
            z = z * pl.reciprocal(jnp.sum(z, axis=-1, keepdims=True),
                                  approx=True)           # softmax over K
            z_ = z * pl.reciprocal(1e-6 + jnp.sum(z, axis=0, keepdims=True),
                                   approx=True)          # normalize over N
            # mu <- l2norm(x @ z_): plain (C,N)@(N,Kp) matmul (no LHS transpose).
            mu_f = jnp.dot(xc, z_.astype(jnp.bfloat16),
                           preferred_element_type=jnp.float32)        # (C, Kp)
            mu = (mu_f * lax.rsqrt(jnp.sum(mu_f * mu_f, axis=0, keepdims=True)
                                   + 1e-12)).astype(jnp.bfloat16)     # l2-norm over C
        # y = (mu @ z^T)^T = z @ mu^T : transposed-RHS matmul (MXU-native).
        y = lax.dot_general(z.astype(jnp.bfloat16), mu,
                            (((1,), (1,)), ((), ())),
                            preferred_element_type=jnp.float32)       # (N, C)
        o_ref[0] = jnp.maximum(y, 0.0).astype(o_ref.dtype)
    return kernel


def em_attention(x_nc, mu0, *, iteration_num, out_dtype=jnp.bfloat16):
    B, N, C = x_nc.shape
    K = mu0.shape[-1]
    Kp = _round_up(K, 128)                       # lane-dense base count, masked exactly
    mu_p = jnp.pad(mu0, ((0, 0), (0, 0), (0, Kp - K))).astype(jnp.bfloat16)
    xt = x_nc.astype(jnp.bfloat16)
    xc = jnp.transpose(xt, (0, 2, 1))            # (B, C, N)
    cost = pl.CostEstimate(
        flops=2 * B * N * C * Kp * (2 * iteration_num + 1),
        transcendentals=B * N * Kp * iteration_num,
        bytes_accessed=B * N * C * 2 * 3 + B * C * Kp * 2,
    )
    return pl.pallas_call(
        make_em_kernel(iteration_num, K, Kp),
        out_shape=jax.ShapeDtypeStruct((B, N, C), out_dtype),
        grid=(B,),
        in_specs=[
            pl.BlockSpec((1, N, C), lambda b: (b, 0, 0)),
            pl.BlockSpec((1, C, N), lambda b: (b, 0, 0)),
            pl.BlockSpec((1, C, Kp), lambda b: (0, 0, 0)),
        ],
        out_specs=pl.BlockSpec((1, N, C), lambda b: (b, 0, 0)),
        compiler_params=pltpu.CompilerParams(
            dimension_semantics=("parallel",),
            vmem_limit_bytes=48 * 1024 * 1024),
        cost_estimate=cost,
    )(xt, xc, mu_p)


# ----------------------------------------------------------------------------
# Bilinear (align_corners=True) upsample, tiled over output rows
# ----------------------------------------------------------------------------

def make_interp_kernel(C, H, W, Wo):
    def kernel(x_ref, wy_ref, wxT_ref, o_ref):
        x = x_ref[0]                                      # (C, H, W) bf16
        # W-contraction for all classes at once: (C*H, W) @ (W, Wo), bf16 -> f32.
        t = jnp.dot(x.reshape(C * H, W), wxT_ref[...],
                    preferred_element_type=jnp.float32)
        t = t.reshape(C, H, Wo).astype(jnp.bfloat16)
        wy = wy_ref[...]                                  # (THo, H) bf16
        # H-contraction per class (C is small); Wo-lane-dense stores.
        for c in range(C):
            o_ref[0, c] = jnp.dot(wy, t[c],
                                  preferred_element_type=jnp.float32
                                  ).astype(o_ref.dtype)
    return kernel


def bilinear_matrix(out_size, in_size):
    """Row-interp matrix matching F.interpolate(mode='bilinear', align_corners=True)."""
    dst = jnp.arange(out_size, dtype=jnp.float32)
    src = dst * (in_size - 1) / max(out_size - 1, 1)
    i0 = jnp.clip(jnp.floor(src), 0, max(in_size - 2, 0)).astype(jnp.int32)
    frac = src - i0.astype(jnp.float32)
    m0 = jax.nn.one_hot(i0, in_size, dtype=jnp.float32) * (1.0 - frac)[:, None]
    m1 = jax.nn.one_hot(jnp.minimum(i0 + 1, in_size - 1), in_size,
                        dtype=jnp.float32) * frac[:, None]
    return m0 + m1


def bilinear_upsample(x_nchw, out_size):
    B, C, H, W = x_nchw.shape
    Ho, Wo = out_size
    # Tile output rows so each f32 block (and its double buffer) stays a few MB.
    THo = 128 if Ho > 128 else _round_up(Ho, 8)
    Hop = _round_up(Ho, THo)
    wy = bilinear_matrix(Ho, H)
    if Hop != Ho:
        wy = jnp.pad(wy, ((0, Hop - Ho), (0, 0)))
    wxT = bilinear_matrix(Wo, W).T
    out = pl.pallas_call(
        make_interp_kernel(C, H, W, Wo),
        out_shape=jax.ShapeDtypeStruct((B, C, Hop, Wo), jnp.float32),
        grid=(B, Hop // THo),
        in_specs=[
            pl.BlockSpec((1, C, H, W), lambda b, t: (b, 0, 0, 0)),
            pl.BlockSpec((THo, H), lambda b, t: (t, 0)),
            pl.BlockSpec((W, Wo), lambda b, t: (0, 0)),
        ],
        out_specs=pl.BlockSpec((1, C, THo, Wo), lambda b, t: (b, 0, t, 0)),
        compiler_params=pltpu.CompilerParams(
            dimension_semantics=("parallel", "parallel"),
            vmem_limit_bytes=32 * 1024 * 1024),
    )(x_nchw.astype(jnp.bfloat16), wy.astype(jnp.bfloat16),
      wxT.astype(jnp.bfloat16))
    return out if Hop == Ho else out[:, :, :Ho, :]


# ----------------------------------------------------------------------------
# Parameter construction (deterministic, synthetic -- mirrors __init__ shapes)
# ----------------------------------------------------------------------------

def fold_bn(key, c, eps=1e-5):
    k1, k2, k3, k4 = jax.random.split(key, 4)
    gamma = 1.0 + 0.1 * jax.random.normal(k1, (c,), jnp.float32)
    beta = 0.1 * jax.random.normal(k2, (c,), jnp.float32)
    mean = 0.1 * jax.random.normal(k3, (c,), jnp.float32)
    var = 0.5 + jax.random.uniform(k4, (c,), jnp.float32)
    scale = gamma / jnp.sqrt(var + eps)
    bias = beta - mean * scale
    return scale.reshape(1, c), bias.reshape(1, c)


def build_params(key, c_in, c_red, k_bases, c_mid, num_classes):
    keys = jax.random.split(key, 12)
    p = {}
    p['rw'] = jax.random.normal(keys[0], (3, 3, c_in, c_red), jnp.float32) * math.sqrt(2.0 / (9 * c_in))
    p['rscale'], p['rbias'] = fold_bn(keys[1], c_red)
    mu = jax.random.normal(keys[2], (1, c_red, k_bases), jnp.float32) * math.sqrt(2.0 / k_bases)
    p['mu'] = mu / (1e-6 + jnp.linalg.norm(mu, axis=1, keepdims=True))
    p['c1w'] = jax.random.normal(keys[3], (c_red, c_red), jnp.float32) * math.sqrt(2.0 / c_red)
    p['c1b'] = 0.05 * jax.random.normal(keys[4], (c_red,), jnp.float32)
    p['c2w'] = jax.random.normal(keys[5], (c_red, c_red), jnp.float32) * math.sqrt(2.0 / c_red)
    p['c2scale'], p['c2bias'] = fold_bn(keys[6], c_red)
    p['pw1'] = jax.random.normal(keys[7], (3, 3, c_red, c_mid), jnp.float32) * math.sqrt(2.0 / (9 * c_red))
    p['pscale'], p['pbias'] = fold_bn(keys[8], c_mid)
    p['pw2'] = jax.random.normal(keys[9], (c_mid, num_classes), jnp.float32) * math.sqrt(2.0 / c_mid)
    p['pb2'] = 0.05 * jax.random.normal(keys[10], (num_classes,), jnp.float32)
    return p


# ----------------------------------------------------------------------------
# Full forward (eval mode)
# ----------------------------------------------------------------------------

@functools.partial(jax.jit, static_argnames=("out_size", "iteration_num"))
def ema_head_forward(res5_nchw, params, *, out_size, iteration_num=3):
    # NCHW -> NHWC (lane-dense channels).
    x = jnp.transpose(res5_nchw, (0, 2, 3, 1))

    # Fold BN scales into conv weights (only a bias-add + ReLU remains in-kernel).
    rw = params['rw'] * params['rscale'].reshape(1, 1, 1, -1)
    pw1 = params['pw1'] * params['pscale'].reshape(1, 1, 1, -1)
    c2w = params['c2w'] * params['c2scale']

    # reduced_conv: 3x3, BN, ReLU
    x = conv3x3_bn_relu(x, rw, params['rbias'])               # (B,H,W,Cr) bf16
    B, H, W, C = x.shape
    N = H * W
    idn = x.reshape(B, N, C)

    # --- EMAUnit ---
    x1 = conv1x1(idn, params['c1w'], params['c1b'], relu=False)
    y = em_attention(x1, params['mu'], iteration_num=iteration_num)
    x2 = conv1x1(y, c2w, params['c2bias'], relu=True, residual=idn)
    x2 = x2.reshape(B, H, W, C)

    # --- predictor ---
    p = conv3x3_bn_relu(x2, pw1, params['pbias'])
    c_mid = p.shape[-1]
    nc = params['pw2'].shape[-1]
    ncp = _round_up(nc, 128)            # lane-dense classifier output, cropped below
    pw2 = jnp.pad(params['pw2'], ((0, 0), (0, ncp - nc)))
    pb2 = jnp.pad(params['pb2'], ((0, ncp - nc),))
    # Dropout2d(p=0.1) is identity at eval time.
    logits = conv1x1(p.reshape(B, N, c_mid), pw2, pb2, relu=False,
                     out_dtype=jnp.float32)[:, :, :nc]
    logits = jnp.transpose(logits.reshape(B, H, W, nc), (0, 3, 1, 2))  # NCHW

    # Bilinear upsample, align_corners=True.
    out = bilinear_upsample(logits, out_size)
    # TODO(synk): training branch (EM-momentum update of mu, Dropout2d sampling,
    # cross-entropy loss with ignore_index) is not part of the eval forward.
    return out


# ----------------------------------------------------------------------------
# Demo
# ----------------------------------------------------------------------------

if __name__ == "__main__":
    # Small stand-ins for the real config (2048 -> 512 -> 256, k=64, etc.)
    B, C_IN, H, W = 2, 32, 8, 8
    C_RED, K_BASES, C_MID, NUM_CLASSES = 16, 8, 16, 8
    OUT_SIZE = (16, 16)
    ITER = 3

    key = jax.random.PRNGKey(0)
    k_feat, k_par = jax.random.split(key)
    res5 = jax.random.normal(k_feat, (B, C_IN, H, W), jnp.float32)
    params = build_params(k_par, C_IN, C_RED, K_BASES, C_MID, NUM_CLASSES)

    out = ema_head_forward(res5, params, out_size=OUT_SIZE, iteration_num=ITER)
    out = jax.block_until_ready(out)
    assert out.shape == (B, NUM_CLASSES, OUT_SIZE[0], OUT_SIZE[1]), out.shape
    assert bool(jnp.all(jnp.isfinite(out)))
    print("KERNEL_OK")
</pallas_src>

<mosaic_0001>
module attributes {stable_mosaic.version = 11 : i64} {
  func.func @kernel(%arg0: i32, %arg1: i32, %arg2: memref<1x64x16xbf16, #tpu.memory_space<vmem>>, %arg3: memref<16x16xbf16, #tpu.memory_space<vmem>>, %arg4: memref<1x16xf32, #tpu.memory_space<vmem>>, %arg5: memref<1x64x16xbf16, #tpu.memory_space<vmem>>) attributes {dimension_semantics = [#tpu.dimension_semantics<parallel>, #tpu.dimension_semantics<parallel>], iteration_bounds = array<i64: 2, 1>, scalar_prefetch = 0 : i64, scratch_operands = 0 : i64, tpu.core_type = #tpu.core_type<tc>, window_params = [{transform_indices = @transform_0, window_bounds = array<i64: 1, 64, 16>}, {pipeline_mode = #tpu.pipeline_mode<synchronous>, transform_indices = @transform_1, window_bounds = array<i64: 16, 16>}, {pipeline_mode = #tpu.pipeline_mode<synchronous>, transform_indices = @transform_2, window_bounds = array<i64: 1, 16>}, {transform_indices = @transform_3, window_bounds = array<i64: 1, 64, 16>}]} {
    %c0 = arith.constant 0 : index
    %c0_0 = arith.constant 0 : index
    %c0_1 = arith.constant 0 : index
    %0 = vector.load %arg2[%c0, %c0_0, %c0_1] : memref<1x64x16xbf16, #tpu.memory_space<vmem>>, vector<1x64x16xbf16>
    %1 = vector.shape_cast %0 : vector<1x64x16xbf16> to vector<64x16xbf16>
    %c0_2 = arith.constant 0 : index
    %c0_3 = arith.constant 0 : index
    %2 = vector.load %arg3[%c0_2, %c0_3] : memref<16x16xbf16, #tpu.memory_space<vmem>>, vector<16x16xbf16>
    %cst = arith.constant dense<0.000000e+00> : vector<64x16xf32>
    %3 = tpu.matmul %1, %2, %cst {dimension_numbers = #tpu.dot_dimension_numbers<[1], [0], [0], [1], [0, 0, 1, 1], [], []>} : vector<64x16xbf16>, vector<16x16xbf16>, vector<64x16xf32> -> vector<64x16xf32>
    %c0_4 = arith.constant 0 : index
    %c0_5 = arith.constant 0 : index
    %4 = vector.load %arg4[%c0_4, %c0_5] : memref<1x16xf32, #tpu.memory_space<vmem>>, vector<1x16xf32>
    %5 = vector.broadcast %4 : vector<1x16xf32> to vector<64x16xf32>
    %6 = arith.addf %3, %5 : vector<64x16xf32>
    %7 = arith.truncf %6 : vector<64x16xf32> to vector<64x16xbf16>
    %c0_6 = arith.constant 0 : index
    %c0_7 = arith.constant 0 : index
    %c0_8 = arith.constant 0 : index
    %8 = vector.load %arg5[%c0_6, %c0_7, %c0_8] : memref<1x64x16xbf16, #tpu.memory_space<vmem>>, vector<1x64x16xbf16>
    %9 = vector.shape_cast %8 : vector<1x64x16xbf16> to vector<64x16xbf16>
    %10 = vector.shape_cast %7 : vector<64x16xbf16> to vector<1x64x16xbf16>
    tpu.vector_store %arg5[%c0_6, %c0_7, %c0_8], %10 {strides = array<i32>} : memref<1x64x16xbf16, #tpu.memory_space<vmem>>, vector<1x64x16xbf16>,
    return
  }
  func.func @transform_0(%arg0: i32, %arg1: i32) -> (i32, i32, i32) {
    %c0_i32 = arith.constant 0 : i32
    %c0_i32_0 = arith.constant 0 : i32
    return %arg0, %arg1, %c0_i32 : i32, i32, i32
  }
  func.func @transform_1(%arg0: i32, %arg1: i32) -> (i32, i32) {
    %c0_i32 = arith.constant 0 : i32
    %c0_i32_0 = arith.constant 0 : i32
    %c0_i32_1 = arith.constant 0 : i32
    return %c0_i32, %c0_i32_0 : i32, i32
  }
  func.func @transform_2(%arg0: i32, %arg1: i32) -> (i32, i32) {
    %c0_i32 = arith.constant 0 : i32
    %c0_i32_0 = arith.constant 0 : i32
    %c0_i32_1 = arith.constant 0 : i32
    return %c0_i32, %c0_i32_0 : i32, i32
  }
  func.func @transform_3(%arg0: i32, %arg1: i32) -> (i32, i32, i32) {
    %c0_i32 = arith.constant 0 : i32
    %c0_i32_0 = arith.constant 0 : i32
    return %arg0, %arg1, %c0_i32 : i32, i32, i32
  }
}

module attributes {stable_mosaic.version = 11 : i64} {
  func.func @kernel(%arg0: i32, %arg1: memref<1x64x16xbf16, #tpu.memory_space<vmem>>, %arg2: memref<1x16x64xbf16, #tpu.memory_space<vmem>>, %arg3: memref<1x16x128xbf16, #tpu.memory_space<vmem>>, %arg4: memref<1x64x16xbf16, #tpu.memory_space<vmem>>) attributes {dimension_semantics = [#tpu.dimension_semantics<parallel>], iteration_bounds = array<i64: 2>, scalar_prefetch = 0 : i64, scratch_operands = 0 : i64, tpu.core_type = #tpu.core_type<tc>, window_params = [{transform_indices = @transform_0, window_bounds = array<i64: 1, 64, 16>}, {transform_indices = @transform_1, window_bounds = array<i64: 1, 16, 64>}, {pipeline_mode = #tpu.pipeline_mode<synchronous>, transform_indices = @transform_2, window_bounds = array<i64: 1, 16, 128>}, {transform_indices = @transform_3, window_bounds = array<i64: 1, 64, 16>}]} {
    %c0 = arith.constant 0 : index
    %c0_0 = arith.constant 0 : index
    %c0_1 = arith.constant 0 : index
    %0 = vector.load %arg1[%c0, %c0_0, %c0_1] : memref<1x64x16xbf16, #tpu.memory_space<vmem>>, vector<1x64x16xbf16>
    %1 = vector.shape_cast %0 : vector<1x64x16xbf16> to vector<64x16xbf16>
    %c0_2 = arith.constant 0 : index
    %c0_3 = arith.constant 0 : index
    %c0_4 = arith.constant 0 : index
    %2 = vector.load %arg2[%c0_2, %c0_3, %c0_4] : memref<1x16x64xbf16, #tpu.memory_space<vmem>>, vector<1x16x64xbf16>
    %3 = vector.shape_cast %2 : vector<1x16x64xbf16> to vector<16x64xbf16>
    %c0_5 = arith.constant 0 : index
    %c0_6 = arith.constant 0 : index
    %c0_7 = arith.constant 0 : index
    %4 = vector.load %arg3[%c0_5, %c0_6, %c0_7] : memref<1x16x128xbf16, #tpu.memory_space<vmem>>, vector<1x16x128xbf16>
    %5 = vector.shape_cast %4 : vector<1x16x128xbf16> to vector<16x128xbf16>
    %6 = tpu.iota {dimensions = array<i32: 1>} : vector<1x128xi32>
    %c8_i32 = arith.constant 8 : i32
    %7 = vector.broadcast %c8_i32 : i32 to vector<1x128xi32>
    %8 = arith.cmpi slt, %6, %7 : vector<1x128xi32>
    %cst = arith.constant dense<0.000000e+00> : vector<64x128xf32>
    %9 = tpu.matmul %1, %5, %cst {dimension_numbers = #tpu.dot_dimension_numbers<[1], [0], [0], [1], [0, 0, 1, 1], [], []>} : vector<64x16xbf16>, vector<16x128xbf16>, vector<64x128xf32> -> vector<64x128xf32>
    %cst_8 = arith.constant -1.000000e+30 : f32
    %10 = vector.shape_cast %8 : vector<1x128xi1> to vector<1x128xi1>
    %11 = vector.broadcast %10 : vector<1x128xi1> to vector<64x128xi1>
    %12 = vector.broadcast %cst_8 : f32 to vector<64x128xf32>
    %13 = arith.select %11, %9, %12 : vector<64x128xi1>, vector<64x128xf32>
    %cst_9 = arith.constant dense<0xFF800000> : vector<64xf32>
    %14 = vector.multi_reduction <maximumf>, %13, %cst_9 [1] : vector<64x128xf32> to vector<64xf32>
    %15 = vector.shape_cast %14 : vector<64xf32> to vector<64x1xf32>
    %16 = vector.broadcast %15 : vector<64x1xf32> to vector<64x128xf32>
    %17 = arith.subf %13, %16 : vector<64x128xf32>
    %18 = math.exp %17 : vector<64x128xf32>
    %cst_10 = arith.constant dense<0.000000e+00> : vector<64xf32>
    %19 = vector.multi_reduction <add>, %18, %cst_10 [1] : vector<64x128xf32> to vector<64xf32>
    %20 = vector.shape_cast %19 : vector<64xf32> to vector<64x1xf32>
    %21 = tpu.reciprocal %20 {approx = true} : vector<64x1xf32> -> vector<64x1xf32>
    %22 = vector.broadcast %21 : vector<64x1xf32> to vector<64x128xf32>
    %23 = arith.mulf %18, %22 : vector<64x128xf32>
    %cst_11 = arith.constant dense<0.000000e+00> : vector<128xf32>
    %24 = vector.multi_reduction <add>, %23, %cst_11 [0] : vector<64x128xf32> to vector<128xf32>
    %25 = vector.shape_cast %24 : vector<128xf32> to vector<1x128xf32>
    %cst_12 = arith.constant 9.99999997E-7 : f32
    %26 = vector.broadcast %cst_12 : f32 to vector<1x128xf32>
    %27 = arith.addf %26, %25 : vector<1x128xf32>
    %28 = tpu.reciprocal %27 {approx = true} : vector<1x128xf32> -> vector<1x128xf32>
    %29 = vector.broadcast %28 : vector<1x128xf32> to vector<64x128xf32>
    %30 = arith.mulf %23, %29 : vector<64x128xf32>
    %31 = arith.truncf %30 : vector<64x128xf32> to vector<64x128xbf16>
    %cst_13 = arith.constant dense<0.000000e+00> : vector<16x128xf32>
    %32 = tpu.matmul %3, %31, %cst_13 {dimension_numbers = #tpu.dot_dimension_numbers<[1], [0], [0], [1], [0, 0, 1, 1], [], []>} : vector<16x64xbf16>, vector<64x128xbf16>, vector<16x128xf32> -> vector<16x128xf32>
    %33 = arith.mulf %32, %32 : vector<16x128xf32>
    %cst_14 = arith.constant dense<0.000000e+00> : vector<128xf32>
    %34 = vector.multi_reduction <add>, %33, %cst_14 [0] : vector<16x128xf32> to vector<128xf32>
    %35 = vector.shape_cast %34 : vector<128xf32> to vector<1x128xf32>
    %cst_15 = arith.constant 9.99999996E-13 : f32
    %36 = vector.broadcast %cst_15 : f32 to vector<1x128xf32>
    %37 = arith.addf %35, %36 : vector<1x128xf32>
    %38 = math.rsqrt %37 : vector<1x128xf32>
    %39 = vector.broadcast %38 : vector<1x128xf32> to vector<16x128xf32>
    %40 = arith.mulf %32, %39 : vector<16x128xf32>
    %41 = arith.truncf %40 : vector<16x128xf32> to vector<16x128xbf16>
    %cst_16 = arith.constant dense<0.000000e+00> : vector<64x128xf32>
    %42 = tpu.matmul %1, %41, %cst_16 {dimension_numbers = #tpu.dot_dimension_numbers<[1], [0], [0], [1], [0, 0, 1, 1], [], []>} : vector<64x16xbf16>, vector<16x128xbf16>, vector<64x128xf32> -> vector<64x128xf32>
    %cst_17 = arith.constant -1.000000e+30 : f32
    %43 = vector.shape_cast %8 : vector<1x128xi1> to vector<1x128xi1>
    %44 = vector.broadcast %43 : vector<1x128xi1> to vector<64x128xi1>
    %45 = vector.broadcast %cst_17 : f32 to vector<64x128xf32>
    %46 = arith.select %44, %42, %45 : vector<64x128xi1>, vector<64x128xf32>
    %cst_18 = arith.constant dense<0xFF800000> : vector<64xf32>
    %47 = vector.multi_reduction <maximumf>, %46, %cst_18 [1] : vector<64x128xf32> to vector<64xf32>
    %48 = vector.shape_cast %47 : vector<64xf32> to vector<64x1xf32>
    %49 = vector.broadcast %48 : vector<64x1xf32> to vector<64x128xf32>
    %50 = arith.subf %46, %49 : vector<64x128xf32>
    %51 = math.exp %50 : vector<64x128xf32>
    %cst_19 = arith.constant dense<0.000000e+00> : vector<64xf32>
    %52 = vector.multi_reduction <add>, %51, %cst_19 [1] : vector<64x128xf32> to vector<64xf32>
    %53 = vector.shape_cast %52 : vector<64xf32> to vector<64x1xf32>
    %54 = tpu.reciprocal %53 {approx = true} : vector<64x1xf32> -> vector<64x1xf32>
    %55 = vector.broadcast %54 : vector<64x1xf32> to vector<64x128xf32>
    %56 = arith.mulf %51, %55 : vector<64x128xf32>
    %cst_20 = arith.constant dense<0.000000e+00> : vector<128xf32>
    %57 = vector.multi_reduction <add>, %56, %cst_20 [0] : vector<64x128xf32> to vector<128xf32>
    %58 = vector.shape_cast %57 : vector<128xf32> to vector<1x128xf32>
    %cst_21 = arith.constant 9.99999997E-7 : f32
    %59 = vector.broadcast %cst_21 : f32 to vector<1x128xf32>
    %60 = arith.addf %59, %58 : vector<1x128xf32>
    %61 = tpu.reciprocal %60 {approx = true} : vector<1x128xf32> -> vector<1x128xf32>
    %62 = vector.broadcast %61 : vector<1x128xf32> to vector<64x128xf32>
    %63 = arith.mulf %56, %62 : vector<64x128xf32>
    %64 = arith.truncf %63 : vector<64x128xf32> to vector<64x128xbf16>
    %cst_22 = arith.constant dense<0.000000e+00> : vector<16x128xf32>
    %65 = tpu.matmul %3, %64, %cst_22 {dimension_numbers = #tpu.dot_dimension_numbers<[1], [0], [0], [1], [0, 0, 1, 1], [], []>} : vector<16x64xbf16>, vector<64x128xbf16>, vector<16x128xf32> -> vector<16x128xf32>
    %66 = arith.mulf %65, %65 : vector<16x128xf32>
    %cst_23 = arith.constant dense<0.000000e+00> : vector<128xf32>
    %67 = vector.multi_reduction <add>, %66, %cst_23 [0] : vector<16x128xf32> to vector<128xf32>
    %68 = vector.shape_cast %67 : vector<128xf32> to vector<1x128xf32>
    %cst_24 = arith.constant 9.99999996E-13 : f32
    %69 = vector.broadcast %cst_24 : f32 to vector<1x128xf32>
    %70 = arith.addf %68, %69 : vector<1x128xf32>
    %71 = math.rsqrt %70 : vector<1x128xf32>
    %72 = vector.broadcast %71 : vector<1x128xf32> to vector<16x128xf32>
    %73 = arith.mulf %65, %72 : vector<16x128xf32>
    %74 = arith.truncf %73 : vector<16x128xf32> to vector<16x128xbf16>
    %cst_25 = arith.constant dense<0.000000e+00> : vector<64x128xf32>
    %75 = tpu.matmul %1, %74, %cst_25 {dimension_numbers = #tpu.dot_dimension_numbers<[1], [0], [0], [1], [0, 0, 1, 1], [], []>} : vector<64x16xbf16>, vector<16x128xbf16>, vector<64x128xf32> -> vector<64x128xf32>
    %cst_26 = arith.constant -1.000000e+30 : f32
    %76 = vector.shape_cast %8 : vector<1x128xi1> to vector<1x128xi1>
    %77 = vector.broadcast %76 : vector<1x128xi1> to vector<64x128xi1>
    %78 = vector.broadcast %cst_26 : f32 to vector<64x128xf32>
    %79 = arith.select %77, %75, %78 : vector<64x128xi1>, vector<64x128xf32>
    %cst_27 = arith.constant dense<0xFF800000> : vector<64xf32>
    %80 = vector.multi_reduction <maximumf>, %79, %cst_27 [1] : vector<64x128xf32> to vector<64xf32>
    %81 = vector.shape_cast %80 : vector<64xf32> to vector<64x1xf32>
    %82 = vector.broadcast %81 : vector<64x1xf32> to vector<64x128xf32>
    %83 = arith.subf %79, %82 : vector<64x128xf32>
    %84 = math.exp %83 : vector<64x128xf32>
    %cst_28 = arith.constant dense<0.000000e+00> : vector<64xf32>
    %85 = vector.multi_reduction <add>, %84, %cst_28 [1] : vector<64x128xf32> to vector<64xf32>
    %86 = vector.shape_cast %85 : vector<64xf32> to vector<64x1xf32>
    %87 = tpu.reciprocal %86 {approx = true} : vector<64x1xf32> -> vector<64x1xf32>
    %88 = vector.broadcast %87 : vector<64x1xf32> to vector<64x128xf32>
    %89 = arith.mulf %84, %88 : vector<64x128xf32>
    %cst_29 = arith.constant dense<0.000000e+00> : vector<128xf32>
    %90 = vector.multi_reduction <add>, %89, %cst_29 [0] : vector<64x128xf32> to vector<128xf32>
    %91 = vector.shape_cast %90 : vector<128xf32> to vector<1x128xf32>
    %cst_30 = arith.constant 9.99999997E-7 : f32
    %92 = vector.broadcast %cst_30 : f32 to vector<1x128xf32>
    %93 = arith.addf %92, %91 : vector<1x128xf32>
    %94 = tpu.reciprocal %93 {approx = true} : vector<1x128xf32> -> vector<1x128xf32>
    %95 = vector.broadcast %94 : vector<1x128xf32> to vector<64x128xf32>
    %96 = arith.mulf %89, %95 : vector<64x128xf32>
    %97 = arith.truncf %96 : vector<64x128xf32> to vector<64x128xbf16>
    %cst_31 = arith.constant dense<0.000000e+00> : vector<16x128xf32>
    %98 = tpu.matmul %3, %97, %cst_31 {dimension_numbers = #tpu.dot_dimension_numbers<[1], [0], [0], [1], [0, 0, 1, 1], [], []>} : vector<16x64xbf16>, vector<64x128xbf16>, vector<16x128xf32> -> vector<16x128xf32>
    %99 = arith.mulf %98, %98 : vector<16x128xf32>
    %cst_32 = arith.constant dense<0.000000e+00> : vector<128xf32>
    %100 = vector.multi_reduction <add>, %99, %cst_32 [0] : vector<16x128xf32> to vector<128xf32>
    %101 = vector.shape_cast %100 : vector<128xf32> to vector<1x128xf32>
    %cst_33 = arith.constant 9.99999996E-13 : f32
    %102 = vector.broadcast %cst_33 : f32 to vector<1x128xf32>
    %103 = arith.addf %101, %102 : vector<1x128xf32>
    %104 = math.rsqrt %103 : vector<1x128xf32>
    %105 = vector.broadcast %104 : vector<1x128xf32> to vector<16x128xf32>
    %106 = arith.mulf %98, %105 : vector<16x128xf32>
    %107 = arith.truncf %106 : vector<16x128xf32> to vector<16x128xbf16>
    %108 = arith.truncf %89 : vector<64x128xf32> to vector<64x128xbf16>
    %cst_34 = arith.constant dense<0.000000e+00> : vector<64x16xf32>
    %109 = tpu.matmul %108, %107, %cst_34 {dimension_numbers = #tpu.dot_dimension_numbers<[1], [1], [0], [0], [0, 0, 1, 0], [], []>} : vector<64x128xbf16>, vector<16x128xbf16>, vector<64x16xf32> -> vector<64x16xf32>
    %cst_35 = arith.constant 0.000000e+00 : f32
    %110 = vector.broadcast %cst_35 : f32 to vector<64x16xf32>
    %111 = arith.maximumf %109, %110 : vector<64x16xf32>
    %112 = arith.truncf %111 : vector<64x16xf32> to vector<64x16xbf16>
    %c0_36 = arith.constant 0 : index
    %c0_37 = arith.constant 0 : index
    %c0_38 = arith.constant 0 : index
    %113 = vector.load %arg4[%c0_36, %c0_37, %c0_38] : memref<1x64x16xbf16, #tpu.memory_space<vmem>>, vector<1x64x16xbf16>
    %114 = vector.shape_cast %113 : vector<1x64x16xbf16> to vector<64x16xbf16>
    %115 = vector.shape_cast %112 : vector<64x16xbf16> to vector<1x64x16xbf16>
    tpu.vector_store %arg4[%c0_36, %c0_37, %c0_38], %115 {strides = array<i32>} : memref<1x64x16xbf16, #tpu.memory_space<vmem>>, vector<1x64x16xbf16>,
    return
  }
  func.func @transform_0(%arg0: i32) -> (i32, i32, i32) {
    %c0_i32 = arith.constant 0 : i32
    %c0_i32_0 = arith.constant 0 : i32
    %c0_i32_1 = arith.constant 0 : i32
    return %arg0, %c0_i32, %c0_i32_0 : i32, i32, i32
  }
  func.func @transform_1(%arg0: i32) -> (i32, i32, i32) {
    %c0_i32 = arith.constant 0 : i32
    %c0_i32_0 = arith.constant 0 : i32
    %c0_i32_1 = arith.constant 0 : i32
    return %arg0, %c0_i32, %c0_i32_0 : i32, i32, i32
  }
  func.func @transform_2(%arg0: i32) -> (i32, i32, i32) {
    %c0_i32 = arith.constant 0 : i32
    %c0_i32_0 = arith.constant 0 : i32
    %c0_i32_1 = arith.constant 0 : i32
    %c0_i32_2 = arith.constant 0 : i32
    return %c0_i32, %c0_i32_0, %c0_i32_1 : i32, i32, i32
  }
  func.func @transform_3(%arg0: i32) -> (i32, i32, i32) {
    %c0_i32 = arith.constant 0 : i32
    %c0_i32_0 = arith.constant 0 : i32
    %c0_i32_1 = arith.constant 0 : i32
    return %arg0, %c0_i32, %c0_i32_0 : i32, i32, i32
  }
}

module attributes {stable_mosaic.version = 11 : i64} {
  func.func @kernel(%arg0: i32, %arg1: i32, %arg2: i32, %arg3: memref<1x176x32xbf16, #tpu.memory_space<vmem>>, %arg4: memref<9x32x16xbf16, #tpu.memory_space<vmem>>, %arg5: memref<1x16xf32, #tpu.memory_space<vmem>>, %arg6: memref<1x128x16xbf16, #tpu.memory_space<vmem>>, %arg7: memref<128x16xf32, #tpu.memory_space<vmem>>) attributes {dimension_semantics = [#tpu.dimension_semantics<parallel>, #tpu.dimension_semantics<parallel>, #tpu.dimension_semantics<arbitrary>], iteration_bounds = array<i64: 2, 1, 1>, scalar_prefetch = 0 : i64, scratch_operands = 1 : i64, tpu.core_type = #tpu.core_type<tc>, window_params = [{transform_indices = @transform_0, window_bounds = array<i64: 1, 176, 32>}, {transform_indices = @transform_1, window_bounds = array<i64: 9, 32, 16>}, {transform_indices = @transform_2, window_bounds = array<i64: 1, 16>}, {transform_indices = @transform_3, window_bounds = array<i64: 1, 128, 16>}]} {
    %c0_i32 = arith.constant 0 : i32
    %0 = arith.cmpi eq, %arg2, %c0_i32 : i32
    %1 = arith.extui %0 : i1 to i32
    %c0_i32_0 = arith.constant 0 : i32
    %2 = arith.cmpi ne, %1, %c0_i32_0 : i32
    scf.if %2 {
      %cst_36 = arith.constant 0.000000e+00 : f32
      %60 = vector.broadcast %cst_36 : f32 to vector<128x16xf32>
      %c0_37 = arith.constant 0 : index
      %c0_38 = arith.constant 0 : index
      %61 = vector.load %arg7[%c0_37, %c0_38] : memref<128x16xf32, #tpu.memory_space<vmem>>, vector<128x16xf32>
      tpu.vector_store %arg7[%c0_37, %c0_38], %60 {strides = array<i32>} : memref<128x16xf32, #tpu.memory_space<vmem>>, vector<128x16xf32>,
    } else {
    }
    %c0 = arith.constant 0 : index
    %c0_1 = arith.constant 0 : index
    %c0_2 = arith.constant 0 : index
    %3 = vector.load %arg3[%c0, %c0_1, %c0_2] : memref<1x176x32xbf16, #tpu.memory_space<vmem>>, vector<1x176x32xbf16>
    %4 = vector.shape_cast %3 : vector<1x176x32xbf16> to vector<176x32xbf16>
    %c0_3 = arith.constant 0 : index
    %c0_4 = arith.constant 0 : index
    %5 = vector.load %arg7[%c0_3, %c0_4] : memref<128x16xf32, #tpu.memory_space<vmem>>, vector<128x16xf32>
    %6 = vector.extract_strided_slice %4 {offsets = [0, 0], sizes = [128, 32], strides = [1, 1]} : vector<176x32xbf16> to vector<128x32xbf16>
    %c0_5 = arith.constant 0 : index
    %c0_6 = arith.constant 0 : index
    %c0_7 = arith.constant 0 : index
    %7 = vector.load %arg4[%c0_5, %c0_6, %c0_7] : memref<9x32x16xbf16, #tpu.memory_space<vmem>>, vector<1x32x16xbf16>
    %8 = vector.shape_cast %7 : vector<1x32x16xbf16> to vector<32x16xbf16>
    %cst = arith.constant dense<0.000000e+00> : vector<128x16xf32>
    %9 = tpu.matmul %6, %8, %cst {dimension_numbers = #tpu.dot_dimension_numbers<[1], [0], [0], [1], [0, 0, 1, 1], [], []>} : vector<128x32xbf16>, vector<32x16xbf16>, vector<128x16xf32> -> vector<128x16xf32>
    %10 = arith.addf %5, %9 : vector<128x16xf32>
    %11 = vector.extract_strided_slice %4 {offsets = [16, 0], sizes = [128, 32], strides = [1, 1]} : vector<176x32xbf16> to vector<128x32xbf16>
    %c3 = arith.constant 3 : index
    %c0_8 = arith.constant 0 : index
    %c0_9 = arith.constant 0 : index
    %12 = vector.load %arg4[%c3, %c0_8, %c0_9] : memref<9x32x16xbf16, #tpu.memory_space<vmem>>, vector<1x32x16xbf16>
    %13 = vector.shape_cast %12 : vector<1x32x16xbf16> to vector<32x16xbf16>
    %cst_10 = arith.constant dense<0.000000e+00> : vector<128x16xf32>
    %14 = tpu.matmul %11, %13, %cst_10 {dimension_numbers = #tpu.dot_dimension_numbers<[1], [0], [0], [1], [0, 0, 1, 1], [], []>} : vector<128x32xbf16>, vector<32x16xbf16>, vector<128x16xf32> -> vector<128x16xf32>
    %15 = arith.addf %10, %14 : vector<128x16xf32>
    %16 = vector.extract_strided_slice %4 {offsets = [32, 0], sizes = [128, 32], strides = [1, 1]} : vector<176x32xbf16> to vector<128x32xbf16>
    %c6 = arith.constant 6 : index
    %c0_11 = arith.constant 0 : index
    %c0_12 = arith.constant 0 : index
    %17 = vector.load %arg4[%c6, %c0_11, %c0_12] : memref<9x32x16xbf16, #tpu.memory_space<vmem>>, vector<1x32x16xbf16>
    %18 = vector.shape_cast %17 : vector<1x32x16xbf16> to vector<32x16xbf16>
    %cst_13 = arith.constant dense<0.000000e+00> : vector<128x16xf32>
    %19 = tpu.matmul %16, %18, %cst_13 {dimension_numbers = #tpu.dot_dimension_numbers<[1], [0], [0], [1], [0, 0, 1, 1], [], []>} : vector<128x32xbf16>, vector<32x16xbf16>, vector<128x16xf32> -> vector<128x16xf32>
    %20 = arith.addf %15, %19 : vector<128x16xf32>
    %21 = arith.extf %4 : vector<176x32xbf16> to vector<176x32xf32>
    %22 = vector.extract_strided_slice %21 {offsets = [1, 0], sizes = [160, 32], strides = [1, 1]} : vector<176x32xf32> to vector<160x32xf32>
    %23 = arith.truncf %22 : vector<160x32xf32> to vector<160x32xbf16>
    %24 = vector.extract_strided_slice %23 {offsets = [0, 0], sizes = [128, 32], strides = [1, 1]} : vector<160x32xbf16> to vector<128x32xbf16>
    %c1 = arith.constant 1 : index
    %c0_14 = arith.constant 0 : index
    %c0_15 = arith.constant 0 : index
    %25 = vector.load %arg4[%c1, %c0_14, %c0_15] : memref<9x32x16xbf16, #tpu.memory_space<vmem>>, vector<1x32x16xbf16>
    %26 = vector.shape_cast %25 : vector<1x32x16xbf16> to vector<32x16xbf16>
    %cst_16 = arith.constant dense<0.000000e+00> : vector<128x16xf32>
    %27 = tpu.matmul %24, %26, %cst_16 {dimension_numbers = #tpu.dot_dimension_numbers<[1], [0], [0], [1], [0, 0, 1, 1], [], []>} : vector<128x32xbf16>, vector<32x16xbf16>, vector<128x16xf32> -> vector<128x16xf32>
    %28 = arith.addf %20, %27 : vector<128x16xf32>
    %29 = vector.extract_strided_slice %23 {offsets = [16, 0], sizes = [128, 32], strides = [1, 1]} : vector<160x32xbf16> to vector<128x32xbf16>
    %c4 = arith.constant 4 : index
    %c0_17 = arith.constant 0 : index
    %c0_18 = arith.constant 0 : index
    %30 = vector.load %arg4[%c4, %c0_17, %c0_18] : memref<9x32x16xbf16, #tpu.memory_space<vmem>>, vector<1x32x16xbf16>
    %31 = vector.shape_cast %30 : vector<1x32x16xbf16> to vector<32x16xbf16>
    %cst_19 = arith.constant dense<0.000000e+00> : vector<128x16xf32>
    %32 = tpu.matmul %29, %31, %cst_19 {dimension_numbers = #tpu.dot_dimension_numbers<[1], [0], [0], [1], [0, 0, 1, 1], [], []>} : vector<128x32xbf16>, vector<32x16xbf16>, vector<128x16xf32> -> vector<128x16xf32>
    %33 = arith.addf %28, %32 : vector<128x16xf32>
    %34 = vector.extract_strided_slice %23 {offsets = [32, 0], sizes = [128, 32], strides = [1, 1]} : vector<160x32xbf16> to vector<128x32xbf16>
    %c7 = arith.constant 7 : index
    %c0_20 = arith.constant 0 : index
    %c0_21 = arith.constant 0 : index
    %35 = vector.load %arg4[%c7, %c0_20, %c0_21] : memref<9x32x16xbf16, #tpu.memory_space<vmem>>, vector<1x32x16xbf16>
    %36 = vector.shape_cast %35 : vector<1x32x16xbf16> to vector<32x16xbf16>
    %cst_22 = arith.constant dense<0.000000e+00> : vector<128x16xf32>
    %37 = tpu.matmul %34, %36, %cst_22 {dimension_numbers = #tpu.dot_dimension_numbers<[1], [0], [0], [1], [0, 0, 1, 1], [], []>} : vector<128x32xbf16>, vector<32x16xbf16>, vector<128x16xf32> -> vector<128x16xf32>
    %38 = arith.addf %33, %37 : vector<128x16xf32>
    %39 = vector.extract_strided_slice %21 {offsets = [2, 0], sizes = [160, 32], strides = [1, 1]} : vector<176x32xf32> to vector<160x32xf32>
    %40 = arith.truncf %39 : vector<160x32xf32> to vector<160x32xbf16>
    %41 = vector.extract_strided_slice %40 {offsets = [0, 0], sizes = [128, 32], strides = [1, 1]} : vector<160x32xbf16> to vector<128x32xbf16>
    %c2 = arith.constant 2 : index
    %c0_23 = arith.constant 0 : index
    %c0_24 = arith.constant 0 : index
    %42 = vector.load %arg4[%c2, %c0_23, %c0_24] : memref<9x32x16xbf16, #tpu.memory_space<vmem>>, vector<1x32x16xbf16>
    %43 = vector.shape_cast %42 : vector<1x32x16xbf16> to vector<32x16xbf16>
    %cst_25 = arith.constant dense<0.000000e+00> : vector<128x16xf32>
    %44 = tpu.matmul %41, %43, %cst_25 {dimension_numbers = #tpu.dot_dimension_numbers<[1], [0], [0], [1], [0, 0, 1, 1], [], []>} : vector<128x32xbf16>, vector<32x16xbf16>, vector<128x16xf32> -> vector<128x16xf32>
    %45 = arith.addf %38, %44 : vector<128x16xf32>
    %46 = vector.extract_strided_slice %40 {offsets = [16, 0], sizes = [128, 32], strides = [1, 1]} : vector<160x32xbf16> to vector<128x32xbf16>
    %c5 = arith.constant 5 : index
    %c0_26 = arith.constant 0 : index
    %c0_27 = arith.constant 0 : index
    %47 = vector.load %arg4[%c5, %c0_26, %c0_27] : memref<9x32x16xbf16, #tpu.memory_space<vmem>>, vector<1x32x16xbf16>
    %48 = vector.shape_cast %47 : vector<1x32x16xbf16> to vector<32x16xbf16>
    %cst_28 = arith.constant dense<0.000000e+00> : vector<128x16xf32>
    %49 = tpu.matmul %46, %48, %cst_28 {dimension_numbers = #tpu.dot_dimension_numbers<[1], [0], [0], [1], [0, 0, 1, 1], [], []>} : vector<128x32xbf16>, vector<32x16xbf16>, vector<128x16xf32> -> vector<128x16xf32>
    %50 = arith.addf %45, %49 : vector<128x16xf32>
    %51 = vector.extract_strided_slice %40 {offsets = [32, 0], sizes = [128, 32], strides = [1, 1]} : vector<160x32xbf16> to vector<128x32xbf16>
    %c8 = arith.constant 8 : index
    %c0_29 = arith.constant 0 : index
    %c0_30 = arith.constant 0 : index
    %52 = vector.load %arg4[%c8, %c0_29, %c0_30] : memref<9x32x16xbf16, #tpu.memory_space<vmem>>, vector<1x32x16xbf16>
    %53 = vector.shape_cast %52 : vector<1x32x16xbf16> to vector<32x16xbf16>
    %cst_31 = arith.constant dense<0.000000e+00> : vector<128x16xf32>
    %54 = tpu.matmul %51, %53, %cst_31 {dimension_numbers = #tpu.dot_dimension_numbers<[1], [0], [0], [1], [0, 0, 1, 1], [], []>} : vector<128x32xbf16>, vector<32x16xbf16>, vector<128x16xf32> -> vector<128x16xf32>
    %55 = arith.addf %50, %54 : vector<128x16xf32>
    %c0_32 = arith.constant 0 : index
    %c0_33 = arith.constant 0 : index
    %56 = vector.load %arg7[%c0_32, %c0_33] : memref<128x16xf32, #tpu.memory_space<vmem>>, vector<128x16xf32>
    tpu.vector_store %arg7[%c0_32, %c0_33], %55 {strides = array<i32>} : memref<128x16xf32, #tpu.memory_space<vmem>>, vector<128x16xf32>,
    %c0_i32_34 = arith.constant 0 : i32
    %57 = arith.cmpi eq, %arg2, %c0_i32_34 : i32
    %58 = arith.extui %57 : i1 to i32
    %c0_i32_35 = arith.constant 0 : i32
    %59 = arith.cmpi ne, %58, %c0_i32_35 : i32
    scf.if %59 {
      %c0_36 = arith.constant 0 : index
      %c0_37 = arith.constant 0 : index
      %60 = vector.load %arg7[%c0_36, %c0_37] : memref<128x16xf32, #tpu.memory_space<vmem>>, vector<128x16xf32>
      %c0_38 = arith.constant 0 : index
      %c0_39 = arith.constant 0 : index
      %61 = vector.load %arg5[%c0_38, %c0_39] : memref<1x16xf32, #tpu.memory_space<vmem>>, vector<1x16xf32>
      %62 = vector.broadcast %61 : vector<1x16xf32> to vector<128x16xf32>
      %63 = arith.addf %60, %62 : vector<128x16xf32>
      %cst_40 = arith.constant 0.000000e+00 : f32
      %64 = vector.broadcast %cst_40 : f32 to vector<128x16xf32>
      %65 = arith.maximumf %63, %64 : vector<128x16xf32>
      %66 = arith.truncf %65 : vector<128x16xf32> to vector<128x16xbf16>
      %c0_41 = arith.constant 0 : index
      %c0_42 = arith.constant 0 : index
      %c0_43 = arith.constant 0 : index
      %67 = vector.load %arg6[%c0_41, %c0_42, %c0_43] : memref<1x128x16xbf16, #tpu.memory_space<vmem>>, vector<1x128x16xbf16>
      %68 = vector.shape_cast %67 : vector<1x128x16xbf16> to vector<128x16xbf16>
      %69 = vector.shape_cast %66 : vector<128x16xbf16> to vector<1x128x16xbf16>
      tpu.vector_store %arg6[%c0_41, %c0_42, %c0_43], %69 {strides = array<i32>} : memref<1x128x16xbf16, #tpu.memory_space<vmem>>, vector<1x128x16xbf16>,
    } else {
    }
    return
  }
  func.func @transform_0(%arg0: i32, %arg1: i32, %arg2: i32) -> (i32, i32, i32) {
    %c0_i32 = arith.constant 0 : i32
    %c0_i32_0 = arith.constant 0 : i32
    return %arg0, %c0_i32, %arg2 : i32, i32, i32
  }
  func.func @transform_1(%arg0: i32, %arg1: i32, %arg2: i32) -> (i32, i32, i32) {
    %c0_i32 = arith.constant 0 : i32
    %c0_i32_0 = arith.constant 0 : i32
    return %c0_i32, %arg2, %arg1 : i32, i32, i32
  }
  func.func @transform_2(%arg0: i32, %arg1: i32, %arg2: i32) -> (i32, i32) {
    %c0_i32 = arith.constant 0 : i32
    %c0_i32_0 = arith.constant 0 : i32
    return %c0_i32, %arg1 : i32, i32
  }
  func.func @transform_3(%arg0: i32, %arg1: i32, %arg2: i32) -> (i32, i32, i32) {
    %c0_i32 = arith.constant 0 : i32
    %c0_i32_0 = arith.constant 0 : i32
    return %arg0, %c0_i32, %arg1 : i32, i32, i32
  }
}

module attributes {stable_mosaic.version = 11 : i64} {
  func.func @kernel(%arg0: i32, %arg1: i32, %arg2: memref<1x64x16xbf16, #tpu.memory_space<vmem>>, %arg3: memref<16x16xbf16, #tpu.memory_space<vmem>>, %arg4: memref<1x16xf32, #tpu.memory_space<vmem>>, %arg5: memref<1x64x16xbf16, #tpu.memory_space<vmem>>, %arg6: memref<1x64x16xbf16, #tpu.memory_space<vmem>>) attributes {dimension_semantics = [#tpu.dimension_semantics<parallel>, #tpu.dimension_semantics<parallel>], iteration_bounds = array<i64: 2, 1>, scalar_prefetch = 0 : i64, scratch_operands = 0 : i64, tpu.core_type = #tpu.core_type<tc>, window_params = [{transform_indices = @transform_0, window_bounds = array<i64: 1, 64, 16>}, {pipeline_mode = #tpu.pipeline_mode<synchronous>, transform_indices = @transform_1, window_bounds = array<i64: 16, 16>}, {pipeline_mode = #tpu.pipeline_mode<synchronous>, transform_indices = @transform_2, window_bounds = array<i64: 1, 16>}, {transform_indices = @transform_3, window_bounds = array<i64: 1, 64, 16>}, {transform_indices = @transform_4, window_bounds = array<i64: 1, 64, 16>}]} {
    %c0 = arith.constant 0 : index
    %c0_0 = arith.constant 0 : index
    %c0_1 = arith.constant 0 : index
    %0 = vector.load %arg2[%c0, %c0_0, %c0_1] : memref<1x64x16xbf16, #tpu.memory_space<vmem>>, vector<1x64x16xbf16>
    %1 = vector.shape_cast %0 : vector<1x64x16xbf16> to vector<64x16xbf16>
    %c0_2 = arith.constant 0 : index
    %c0_3 = arith.constant 0 : index
    %2 = vector.load %arg3[%c0_2, %c0_3] : memref<16x16xbf16, #tpu.memory_space<vmem>>, vector<16x16xbf16>
    %cst = arith.constant dense<0.000000e+00> : vector<64x16xf32>
    %3 = tpu.matmul %1, %2, %cst {dimension_numbers = #tpu.dot_dimension_numbers<[1], [0], [0], [1], [0, 0, 1, 1], [], []>} : vector<64x16xbf16>, vector<16x16xbf16>, vector<64x16xf32> -> vector<64x16xf32>
    %c0_4 = arith.constant 0 : index
    %c0_5 = arith.constant 0 : index
    %4 = vector.load %arg4[%c0_4, %c0_5] : memref<1x16xf32, #tpu.memory_space<vmem>>, vector<1x16xf32>
    %5 = vector.broadcast %4 : vector<1x16xf32> to vector<64x16xf32>
    %6 = arith.addf %3, %5 : vector<64x16xf32>
    %c0_6 = arith.constant 0 : index
    %c0_7 = arith.constant 0 : index
    %c0_8 = arith.constant 0 : index
    %7 = vector.load %arg5[%c0_6, %c0_7, %c0_8] : memref<1x64x16xbf16, #tpu.memory_space<vmem>>, vector<1x64x16xbf16>
    %8 = vector.shape_cast %7 : vector<1x64x16xbf16> to vector<64x16xbf16>
    %9 = arith.extf %8 : vector<64x16xbf16> to vector<64x16xf32>
    %10 = arith.addf %6, %9 : vector<64x16xf32>
    %cst_9 = arith.constant 0.000000e+00 : f32
    %11 = vector.broadcast %cst_9 : f32 to vector<64x16xf32>
    %12 = arith.maximumf %10, %11 : vector<64x16xf32>
    %13 = arith.truncf %12 : vector<64x16xf32> to vector<64x16xbf16>
    %c0_10 = arith.constant 0 : index
    %c0_11 = arith.constant 0 : index
    %c0_12 = arith.constant 0 : index
    %14 = vector.load %arg6[%c0_10, %c0_11, %c0_12] : memref<1x64x16xbf16, #tpu.memory_space<vmem>>, vector<1x64x16xbf16>
    %15 = vector.shape_cast %14 : vector<1x64x16xbf16> to vector<64x16xbf16>
    %16 = vector.shape_cast %13 : vector<64x16xbf16> to vector<1x64x16xbf16>
    tpu.vector_store %arg6[%c0_10, %c0_11, %c0_12], %16 {strides = array<i32>} : memref<1x64x16xbf16, #tpu.memory_space<vmem>>, vector<1x64x16xbf16>,
    return
  }
  func.func @transform_0(%arg0: i32, %arg1: i32) -> (i32, i32, i32) {
    %c0_i32 = arith.constant 0 : i32
    %c0_i32_0 = arith.constant 0 : i32
    return %arg0, %arg1, %c0_i32 : i32, i32, i32
  }
  func.func @transform_1(%arg0: i32, %arg1: i32) -> (i32, i32) {
    %c0_i32 = arith.constant 0 : i32
    %c0_i32_0 = arith.constant 0 : i32
    %c0_i32_1 = arith.constant 0 : i32
    return %c0_i32, %c0_i32_0 : i32, i32
  }
  func.func @transform_2(%arg0: i32, %arg1: i32) -> (i32, i32) {
    %c0_i32 = arith.constant 0 : i32
    %c0_i32_0 = arith.constant 0 : i32
    %c0_i32_1 = arith.constant 0 : i32
    return %c0_i32, %c0_i32_0 : i32, i32
  }
  func.func @transform_3(%arg0: i32, %arg1: i32) -> (i32, i32, i32) {
    %c0_i32 = arith.constant 0 : i32
    %c0_i32_0 = arith.constant 0 : i32
    return %arg0, %arg1, %c0_i32 : i32, i32, i32
  }
  func.func @transform_4(%arg0: i32, %arg1: i32) -> (i32, i32, i32) {
    %c0_i32 = arith.constant 0 : i32
    %c0_i32_0 = arith.constant 0 : i32
    return %arg0, %arg1, %c0_i32 : i32, i32, i32
  }
}

module attributes {stable_mosaic.version = 11 : i64} {
  func.func @kernel(%arg0: i32, %arg1: i32, %arg2: i32, %arg3: memref<1x176x16xbf16, #tpu.memory_space<vmem>>, %arg4: memref<9x16x16xbf16, #tpu.memory_space<vmem>>, %arg5: memref<1x16xf32, #tpu.memory_space<vmem>>, %arg6: memref<1x128x16xbf16, #tpu.memory_space<vmem>>, %arg7: memref<128x16xf32, #tpu.memory_space<vmem>>) attributes {dimension_semantics = [#tpu.dimension_semantics<parallel>, #tpu.dimension_semantics<parallel>, #tpu.dimension_semantics<arbitrary>], iteration_bounds = array<i64: 2, 1, 1>, scalar_prefetch = 0 : i64, scratch_operands = 1 : i64, tpu.core_type = #tpu.core_type<tc>, window_params = [{transform_indices = @transform_0, window_bounds = array<i64: 1, 176, 16>}, {transform_indices = @transform_1, window_bounds = array<i64: 9, 16, 16>}, {transform_indices = @transform_2, window_bounds = array<i64: 1, 16>}, {transform_indices = @transform_3, window_bounds = array<i64: 1, 128, 16>}]} {
    %c0_i32 = arith.constant 0 : i32
    %0 = arith.cmpi eq, %arg2, %c0_i32 : i32
    %1 = arith.extui %0 : i1 to i32
    %c0_i32_0 = arith.constant 0 : i32
    %2 = arith.cmpi ne, %1, %c0_i32_0 : i32
    scf.if %2 {
      %cst_36 = arith.constant 0.000000e+00 : f32
      %60 = vector.broadcast %cst_36 : f32 to vector<128x16xf32>
      %c0_37 = arith.constant 0 : index
      %c0_38 = arith.constant 0 : index
      %61 = vector.load %arg7[%c0_37, %c0_38] : memref<128x16xf32, #tpu.memory_space<vmem>>, vector<128x16xf32>
      tpu.vector_store %arg7[%c0_37, %c0_38], %60 {strides = array<i32>} : memref<128x16xf32, #tpu.memory_space<vmem>>, vector<128x16xf32>,
    } else {
    }
    %c0 = arith.constant 0 : index
    %c0_1 = arith.constant 0 : index
    %c0_2 = arith.constant 0 : index
    %3 = vector.load %arg3[%c0, %c0_1, %c0_2] : memref<1x176x16xbf16, #tpu.memory_space<vmem>>, vector<1x176x16xbf16>
    %4 = vector.shape_cast %3 : vector<1x176x16xbf16> to vector<176x16xbf16>
    %c0_3 = arith.constant 0 : index
    %c0_4 = arith.constant 0 : index
    %5 = vector.load %arg7[%c0_3, %c0_4] : memref<128x16xf32, #tpu.memory_space<vmem>>, vector<128x16xf32>
    %6 = vector.extract_strided_slice %4 {offsets = [0, 0], sizes = [128, 16], strides = [1, 1]} : vector<176x16xbf16> to vector<128x16xbf16>
    %c0_5 = arith.constant 0 : index
    %c0_6 = arith.constant 0 : index
    %c0_7 = arith.constant 0 : index
    %7 = vector.load %arg4[%c0_5, %c0_6, %c0_7] : memref<9x16x16xbf16, #tpu.memory_space<vmem>>, vector<1x16x16xbf16>
    %8 = vector.shape_cast %7 : vector<1x16x16xbf16> to vector<16x16xbf16>
    %cst = arith.constant dense<0.000000e+00> : vector<128x16xf32>
    %9 = tpu.matmul %6, %8, %cst {dimension_numbers = #tpu.dot_dimension_numbers<[1], [0], [0], [1], [0, 0, 1, 1], [], []>} : vector<128x16xbf16>, vector<16x16xbf16>, vector<128x16xf32> -> vector<128x16xf32>
    %10 = arith.addf %5, %9 : vector<128x16xf32>
    %11 = vector.extract_strided_slice %4 {offsets = [16, 0], sizes = [128, 16], strides = [1, 1]} : vector<176x16xbf16> to vector<128x16xbf16>
    %c3 = arith.constant 3 : index
    %c0_8 = arith.constant 0 : index
    %c0_9 = arith.constant 0 : index
    %12 = vector.load %arg4[%c3, %c0_8, %c0_9] : memref<9x16x16xbf16, #tpu.memory_space<vmem>>, vector<1x16x16xbf16>
    %13 = vector.shape_cast %12 : vector<1x16x16xbf16> to vector<16x16xbf16>
    %cst_10 = arith.constant dense<0.000000e+00> : vector<128x16xf32>
    %14 = tpu.matmul %11, %13, %cst_10 {dimension_numbers = #tpu.dot_dimension_numbers<[1], [0], [0], [1], [0, 0, 1, 1], [], []>} : vector<128x16xbf16>, vector<16x16xbf16>, vector<128x16xf32> -> vector<128x16xf32>
    %15 = arith.addf %10, %14 : vector<128x16xf32>
    %16 = vector.extract_strided_slice %4 {offsets = [32, 0], sizes = [128, 16], strides = [1, 1]} : vector<176x16xbf16> to vector<128x16xbf16>
    %c6 = arith.constant 6 : index
    %c0_11 = arith.constant 0 : index
    %c0_12 = arith.constant 0 : index
    %17 = vector.load %arg4[%c6, %c0_11, %c0_12] : memref<9x16x16xbf16, #tpu.memory_space<vmem>>, vector<1x16x16xbf16>
    %18 = vector.shape_cast %17 : vector<1x16x16xbf16> to vector<16x16xbf16>
    %cst_13 = arith.constant dense<0.000000e+00> : vector<128x16xf32>
    %19 = tpu.matmul %16, %18, %cst_13 {dimension_numbers = #tpu.dot_dimension_numbers<[1], [0], [0], [1], [0, 0, 1, 1], [], []>} : vector<128x16xbf16>, vector<16x16xbf16>, vector<128x16xf32> -> vector<128x16xf32>
    %20 = arith.addf %15, %19 : vector<128x16xf32>
    %21 = arith.extf %4 : vector<176x16xbf16> to vector<176x16xf32>
    %22 = vector.extract_strided_slice %21 {offsets = [1, 0], sizes = [160, 16], strides = [1, 1]} : vector<176x16xf32> to vector<160x16xf32>
    %23 = arith.truncf %22 : vector<160x16xf32> to vector<160x16xbf16>
    %24 = vector.extract_strided_slice %23 {offsets = [0, 0], sizes = [128, 16], strides = [1, 1]} : vector<160x16xbf16> to vector<128x16xbf16>
    %c1 = arith.constant 1 : index
    %c0_14 = arith.constant 0 : index
    %c0_15 = arith.constant 0 : index
    %25 = vector.load %arg4[%c1, %c0_14, %c0_15] : memref<9x16x16xbf16, #tpu.memory_space<vmem>>, vector<1x16x16xbf16>
    %26 = vector.shape_cast %25 : vector<1x16x16xbf16> to vector<16x16xbf16>
    %cst_16 = arith.constant dense<0.000000e+00> : vector<128x16xf32>
    %27 = tpu.matmul %24, %26, %cst_16 {dimension_numbers = #tpu.dot_dimension_numbers<[1], [0], [0], [1], [0, 0, 1, 1], [], []>} : vector<128x16xbf16>, vector<16x16xbf16>, vector<128x16xf32> -> vector<128x16xf32>
    %28 = arith.addf %20, %27 : vector<128x16xf32>
    %29 = vector.extract_strided_slice %23 {offsets = [16, 0], sizes = [128, 16], strides = [1, 1]} : vector<160x16xbf16> to vector<128x16xbf16>
    %c4 = arith.constant 4 : index
    %c0_17 = arith.constant 0 : index
    %c0_18 = arith.constant 0 : index
    %30 = vector.load %arg4[%c4, %c0_17, %c0_18] : memref<9x16x16xbf16, #tpu.memory_space<vmem>>, vector<1x16x16xbf16>
    %31 = vector.shape_cast %30 : vector<1x16x16xbf16> to vector<16x16xbf16>
    %cst_19 = arith.constant dense<0.000000e+00> : vector<128x16xf32>
    %32 = tpu.matmul %29, %31, %cst_19 {dimension_numbers = #tpu.dot_dimension_numbers<[1], [0], [0], [1], [0, 0, 1, 1], [], []>} : vector<128x16xbf16>, vector<16x16xbf16>, vector<128x16xf32> -> vector<128x16xf32>
    %33 = arith.addf %28, %32 : vector<128x16xf32>
    %34 = vector.extract_strided_slice %23 {offsets = [32, 0], sizes = [128, 16], strides = [1, 1]} : vector<160x16xbf16> to vector<128x16xbf16>
    %c7 = arith.constant 7 : index
    %c0_20 = arith.constant 0 : index
    %c0_21 = arith.constant 0 : index
    %35 = vector.load %arg4[%c7, %c0_20, %c0_21] : memref<9x16x16xbf16, #tpu.memory_space<vmem>>, vector<1x16x16xbf16>
    %36 = vector.shape_cast %35 : vector<1x16x16xbf16> to vector<16x16xbf16>
    %cst_22 = arith.constant dense<0.000000e+00> : vector<128x16xf32>
    %37 = tpu.matmul %34, %36, %cst_22 {dimension_numbers = #tpu.dot_dimension_numbers<[1], [0], [0], [1], [0, 0, 1, 1], [], []>} : vector<128x16xbf16>, vector<16x16xbf16>, vector<128x16xf32> -> vector<128x16xf32>
    %38 = arith.addf %33, %37 : vector<128x16xf32>
    %39 = vector.extract_strided_slice %21 {offsets = [2, 0], sizes = [160, 16], strides = [1, 1]} : vector<176x16xf32> to vector<160x16xf32>
    %40 = arith.truncf %39 : vector<160x16xf32> to vector<160x16xbf16>
    %41 = vector.extract_strided_slice %40 {offsets = [0, 0], sizes = [128, 16], strides = [1, 1]} : vector<160x16xbf16> to vector<128x16xbf16>
    %c2 = arith.constant 2 : index
    %c0_23 = arith.constant 0 : index
    %c0_24 = arith.constant 0 : index
    %42 = vector.load %arg4[%c2, %c0_23, %c0_24] : memref<9x16x16xbf16, #tpu.memory_space<vmem>>, vector<1x16x16xbf16>
    %43 = vector.shape_cast %42 : vector<1x16x16xbf16> to vector<16x16xbf16>
    %cst_25 = arith.constant dense<0.000000e+00> : vector<128x16xf32>
    %44 = tpu.matmul %41, %43, %cst_25 {dimension_numbers = #tpu.dot_dimension_numbers<[1], [0], [0], [1], [0, 0, 1, 1], [], []>} : vector<128x16xbf16>, vector<16x16xbf16>, vector<128x16xf32> -> vector<128x16xf32>
    %45 = arith.addf %38, %44 : vector<128x16xf32>
    %46 = vector.extract_strided_slice %40 {offsets = [16, 0], sizes = [128, 16], strides = [1, 1]} : vector<160x16xbf16> to vector<128x16xbf16>
    %c5 = arith.constant 5 : index
    %c0_26 = arith.constant 0 : index
    %c0_27 = arith.constant 0 : index
    %47 = vector.load %arg4[%c5, %c0_26, %c0_27] : memref<9x16x16xbf16, #tpu.memory_space<vmem>>, vector<1x16x16xbf16>
    %48 = vector.shape_cast %47 : vector<1x16x16xbf16> to vector<16x16xbf16>
    %cst_28 = arith.constant dense<0.000000e+00> : vector<128x16xf32>
    %49 = tpu.matmul %46, %48, %cst_28 {dimension_numbers = #tpu.dot_dimension_numbers<[1], [0], [0], [1], [0, 0, 1, 1], [], []>} : vector<128x16xbf16>, vector<16x16xbf16>, vector<128x16xf32> -> vector<128x16xf32>
    %50 = arith.addf %45, %49 : vector<128x16xf32>
    %51 = vector.extract_strided_slice %40 {offsets = [32, 0], sizes = [128, 16], strides = [1, 1]} : vector<160x16xbf16> to vector<128x16xbf16>
    %c8 = arith.constant 8 : index
    %c0_29 = arith.constant 0 : index
    %c0_30 = arith.constant 0 : index
    %52 = vector.load %arg4[%c8, %c0_29, %c0_30] : memref<9x16x16xbf16, #tpu.memory_space<vmem>>, vector<1x16x16xbf16>
    %53 = vector.shape_cast %52 : vector<1x16x16xbf16> to vector<16x16xbf16>
    %cst_31 = arith.constant dense<0.000000e+00> : vector<128x16xf32>
    %54 = tpu.matmul %51, %53, %cst_31 {dimension_numbers = #tpu.dot_dimension_numbers<[1], [0], [0], [1], [0, 0, 1, 1], [], []>} : vector<128x16xbf16>, vector<16x16xbf16>, vector<128x16xf32> -> vector<128x16xf32>
    %55 = arith.addf %50, %54 : vector<128x16xf32>
    %c0_32 = arith.constant 0 : index
    %c0_33 = arith.constant 0 : index
    %56 = vector.load %arg7[%c0_32, %c0_33] : memref<128x16xf32, #tpu.memory_space<vmem>>, vector<128x16xf32>
    tpu.vector_store %arg7[%c0_32, %c0_33], %55 {strides = array<i32>} : memref<128x16xf32, #tpu.memory_space<vmem>>, vector<128x16xf32>,
    %c0_i32_34 = arith.constant 0 : i32
    %57 = arith.cmpi eq, %arg2, %c0_i32_34 : i32
    %58 = arith.extui %57 : i1 to i32
    %c0_i32_35 = arith.constant 0 : i32
    %59 = arith.cmpi ne, %58, %c0_i32_35 : i32
    scf.if %59 {
      %c0_36 = arith.constant 0 : index
      %c0_37 = arith.constant 0 : index
      %60 = vector.load %arg7[%c0_36, %c0_37] : memref<128x16xf32, #tpu.memory_space<vmem>>, vector<128x16xf32>
      %c0_38 = arith.constant 0 : index
      %c0_39 = arith.constant 0 : index
      %61 = vector.load %arg5[%c0_38, %c0_39] : memref<1x16xf32, #tpu.memory_space<vmem>>, vector<1x16xf32>
      %62 = vector.broadcast %61 : vector<1x16xf32> to vector<128x16xf32>
      %63 = arith.addf %60, %62 : vector<128x16xf32>
      %cst_40 = arith.constant 0.000000e+00 : f32
      %64 = vector.broadcast %cst_40 : f32 to vector<128x16xf32>
      %65 = arith.maximumf %63, %64 : vector<128x16xf32>
      %66 = arith.truncf %65 : vector<128x16xf32> to vector<128x16xbf16>
      %c0_41 = arith.constant 0 : index
      %c0_42 = arith.constant 0 : index
      %c0_43 = arith.constant 0 : index
      %67 = vector.load %arg6[%c0_41, %c0_42, %c0_43] : memref<1x128x16xbf16, #tpu.memory_space<vmem>>, vector<1x128x16xbf16>
      %68 = vector.shape_cast %67 : vector<1x128x16xbf16> to vector<128x16xbf16>
      %69 = vector.shape_cast %66 : vector<128x16xbf16> to vector<1x128x16xbf16>
      tpu.vector_store %arg6[%c0_41, %c0_42, %c0_43], %69 {strides = array<i32>} : memref<1x128x16xbf16, #tpu.memory_space<vmem>>, vector<1x128x16xbf16>,
    } else {
    }
    return
  }
  func.func @transform_0(%arg0: i32, %arg1: i32, %arg2: i32) -> (i32, i32, i32) {
    %c0_i32 = arith.constant 0 : i32
    %c0_i32_0 = arith.constant 0 : i32
    return %arg0, %c0_i32, %arg2 : i32, i32, i32
  }
  func.func @transform_1(%arg0: i32, %arg1: i32, %arg2: i32) -> (i32, i32, i32) {
    %c0_i32 = arith.constant 0 : i32
    %c0_i32_0 = arith.constant 0 : i32
    return %c0_i32, %arg2, %arg1 : i32, i32, i32
  }
  func.func @transform_2(%arg0: i32, %arg1: i32, %arg2: i32) -> (i32, i32) {
    %c0_i32 = arith.constant 0 : i32
    %c0_i32_0 = arith.constant 0 : i32
    return %c0_i32, %arg1 : i32, i32
  }
  func.func @transform_3(%arg0: i32, %arg1: i32, %arg2: i32) -> (i32, i32, i32) {
    %c0_i32 = arith.constant 0 : i32
    %c0_i32_0 = arith.constant 0 : i32
    return %arg0, %c0_i32, %arg1 : i32, i32, i32
  }
}

module attributes {stable_mosaic.version = 11 : i64} {
  func.func @kernel(%arg0: i32, %arg1: i32, %arg2: memref<1x64x16xbf16, #tpu.memory_space<vmem>>, %arg3: memref<16x128xbf16, #tpu.memory_space<vmem>>, %arg4: memref<1x128xf32, #tpu.memory_space<vmem>>, %arg5: memref<1x64x128xf32, #tpu.memory_space<vmem>>) attributes {dimension_semantics = [#tpu.dimension_semantics<parallel>, #tpu.dimension_semantics<parallel>], iteration_bounds = array<i64: 2, 1>, scalar_prefetch = 0 : i64, scratch_operands = 0 : i64, tpu.core_type = #tpu.core_type<tc>, window_params = [{transform_indices = @transform_0, window_bounds = array<i64: 1, 64, 16>}, {pipeline_mode = #tpu.pipeline_mode<synchronous>, transform_indices = @transform_1, window_bounds = array<i64: 16, 128>}, {pipeline_mode = #tpu.pipeline_mode<synchronous>, transform_indices = @transform_2, window_bounds = array<i64: 1, 128>}, {transform_indices = @transform_3, window_bounds = array<i64: 1, 64, 128>}]} {
    %c0 = arith.constant 0 : index
    %c0_0 = arith.constant 0 : index
    %c0_1 = arith.constant 0 : index
    %0 = vector.load %arg2[%c0, %c0_0, %c0_1] : memref<1x64x16xbf16, #tpu.memory_space<vmem>>, vector<1x64x16xbf16>
    %1 = vector.shape_cast %0 : vector<1x64x16xbf16> to vector<64x16xbf16>
    %c0_2 = arith.constant 0 : index
    %c0_3 = arith.constant 0 : index
    %2 = vector.load %arg3[%c0_2, %c0_3] : memref<16x128xbf16, #tpu.memory_space<vmem>>, vector<16x128xbf16>
    %cst = arith.constant dense<0.000000e+00> : vector<64x128xf32>
    %3 = tpu.matmul %1, %2, %cst {dimension_numbers = #tpu.dot_dimension_numbers<[1], [0], [0], [1], [0, 0, 1, 1], [], []>} : vector<64x16xbf16>, vector<16x128xbf16>, vector<64x128xf32> -> vector<64x128xf32>
    %c0_4 = arith.constant 0 : index
    %c0_5 = arith.constant 0 : index
    %4 = vector.load %arg4[%c0_4, %c0_5] : memref<1x128xf32, #tpu.memory_space<vmem>>, vector<1x128xf32>
    %5 = vector.broadcast %4 : vector<1x128xf32> to vector<64x128xf32>
    %6 = arith.addf %3, %5 : vector<64x128xf32>
    %c0_6 = arith.constant 0 : index
    %c0_7 = arith.constant 0 : index
    %c0_8 = arith.constant 0 : index
    %7 = vector.load %arg5[%c0_6, %c0_7, %c0_8] : memref<1x64x128xf32, #tpu.memory_space<vmem>>, vector<1x64x128xf32>
    %8 = vector.shape_cast %7 : vector<1x64x128xf32> to vector<64x128xf32>
    %9 = vector.shape_cast %6 : vector<64x128xf32> to vector<1x64x128xf32>
    tpu.vector_store %arg5[%c0_6, %c0_7, %c0_8], %9 {strides = array<i32>} : memref<1x64x128xf32, #tpu.memory_space<vmem>>, vector<1x64x128xf32>,
    return
  }
  func.func @transform_0(%arg0: i32, %arg1: i32) -> (i32, i32, i32) {
    %c0_i32 = arith.constant 0 : i32
    %c0_i32_0 = arith.constant 0 : i32
    return %arg0, %arg1, %c0_i32 : i32, i32, i32
  }
  func.func @transform_1(%arg0: i32, %arg1: i32) -> (i32, i32) {
    %c0_i32 = arith.constant 0 : i32
    %c0_i32_0 = arith.constant 0 : i32
    %c0_i32_1 = arith.constant 0 : i32
    return %c0_i32, %c0_i32_0 : i32, i32
  }
  func.func @transform_2(%arg0: i32, %arg1: i32) -> (i32, i32) {
    %c0_i32 = arith.constant 0 : i32
    %c0_i32_0 = arith.constant 0 : i32
    %c0_i32_1 = arith.constant 0 : i32
    return %c0_i32, %c0_i32_0 : i32, i32
  }
  func.func @transform_3(%arg0: i32, %arg1: i32) -> (i32, i32, i32) {
    %c0_i32 = arith.constant 0 : i32
    %c0_i32_0 = arith.constant 0 : i32
    return %arg0, %arg1, %c0_i32 : i32, i32, i32
  }
}

module attributes {stable_mosaic.version = 11 : i64} {
  func.func @kernel(%arg0: i32, %arg1: i32, %arg2: memref<1x8x8x8xbf16, #tpu.memory_space<vmem>>, %arg3: memref<16x8xbf16, #tpu.memory_space<vmem>>, %arg4: memref<8x16xbf16, #tpu.memory_space<vmem>>, %arg5: memref<1x8x16x16xf32, #tpu.memory_space<vmem>>) attributes {dimension_semantics = [#tpu.dimension_semantics<parallel>, #tpu.dimension_semantics<parallel>], iteration_bounds = array<i64: 2, 1>, scalar_prefetch = 0 : i64, scratch_operands = 0 : i64, tpu.core_type = #tpu.core_type<tc>, window_params = [{transform_indices = @transform_0, window_bounds = array<i64: 1, 8, 8, 8>}, {transform_indices = @transform_1, window_bounds = array<i64: 16, 8>}, {pipeline_mode = #tpu.pipeline_mode<synchronous>, transform_indices = @transform_2, window_bounds = array<i64: 8, 16>}, {transform_indices = @transform_3, window_bounds = array<i64: 1, 8, 16, 16>}]} {
    %c0 = arith.constant 0 : index
    %c0_0 = arith.constant 0 : index
    %c0_1 = arith.constant 0 : index
    %c0_2 = arith.constant 0 : index
    %0 = vector.load %arg2[%c0, %c0_0, %c0_1, %c0_2] : memref<1x8x8x8xbf16, #tpu.memory_space<vmem>>, vector<1x8x8x8xbf16>
    %1 = vector.shape_cast %0 : vector<1x8x8x8xbf16> to vector<8x8x8xbf16>
    %2 = vector.shape_cast %1 : vector<8x8x8xbf16> to vector<64x8xbf16>
    %c0_3 = arith.constant 0 : index
    %c0_4 = arith.constant 0 : index
    %3 = vector.load %arg4[%c0_3, %c0_4] : memref<8x16xbf16, #tpu.memory_space<vmem>>, vector<8x16xbf16>
    %cst = arith.constant dense<0.000000e+00> : vector<64x16xf32>
    %4 = tpu.matmul %2, %3, %cst {dimension_numbers = #tpu.dot_dimension_numbers<[1], [0], [0], [1], [0, 0, 1, 1], [], []>} : vector<64x8xbf16>, vector<8x16xbf16>, vector<64x16xf32> -> vector<64x16xf32>
    %5 = vector.shape_cast %4 : vector<64x16xf32> to vector<8x8x16xf32>
    %6 = arith.truncf %5 : vector<8x8x16xf32> to vector<8x8x16xbf16>
    %c0_5 = arith.constant 0 : index
    %c0_6 = arith.constant 0 : index
    %7 = vector.load %arg3[%c0_5, %c0_6] : memref<16x8xbf16, #tpu.memory_space<vmem>>, vector<16x8xbf16>
    %8 = vector.extract_strided_slice %6 {offsets = [0, 0, 0], sizes = [1, 8, 16], strides = [1, 1, 1]} : vector<8x8x16xbf16> to vector<1x8x16xbf16>
    %9 = vector.shape_cast %8 : vector<1x8x16xbf16> to vector<8x16xbf16>
    %cst_7 = arith.constant dense<0.000000e+00> : vector<16x16xf32>
    %10 = tpu.matmul %7, %9, %cst_7 {dimension_numbers = #tpu.dot_dimension_numbers<[1], [0], [0], [1], [0, 0, 1, 1], [], []>} : vector<16x8xbf16>, vector<8x16xbf16>, vector<16x16xf32> -> vector<16x16xf32>
    %c0_8 = arith.constant 0 : index
    %c0_9 = arith.constant 0 : index
    %c0_10 = arith.constant 0 : index
    %c0_11 = arith.constant 0 : index
    %11 = vector.load %arg5[%c0_8, %c0_9, %c0_10, %c0_11] : memref<1x8x16x16xf32, #tpu.memory_space<vmem>>, vector<1x1x16x16xf32>
    %12 = vector.shape_cast %11 : vector<1x1x16x16xf32> to vector<16x16xf32>
    %13 = vector.shape_cast %10 : vector<16x16xf32> to vector<1x1x16x16xf32>
    tpu.vector_store %arg5[%c0_8, %c0_9, %c0_10, %c0_11], %13 {strides = array<i32>} : memref<1x8x16x16xf32, #tpu.memory_space<vmem>>, vector<1x1x16x16xf32>,
    %14 = vector.extract_strided_slice %6 {offsets = [1, 0, 0], sizes = [1, 8, 16], strides = [1, 1, 1]} : vector<8x8x16xbf16> to vector<1x8x16xbf16>
    %15 = vector.shape_cast %14 : vector<1x8x16xbf16> to vector<8x16xbf16>
    %cst_12 = arith.constant dense<0.000000e+00> : vector<16x16xf32>
    %16 = tpu.matmul %7, %15, %cst_12 {dimension_numbers = #tpu.dot_dimension_numbers<[1], [0], [0], [1], [0, 0, 1, 1], [], []>} : vector<16x8xbf16>, vector<8x16xbf16>, vector<16x16xf32> -> vector<16x16xf32>
    %c0_13 = arith.constant 0 : index
    %c1 = arith.constant 1 : index
    %c0_14 = arith.constant 0 : index
    %c0_15 = arith.constant 0 : index
    %17 = vector.load %arg5[%c0_13, %c1, %c0_14, %c0_15] : memref<1x8x16x16xf32, #tpu.memory_space<vmem>>, vector<1x1x16x16xf32>
    %18 = vector.shape_cast %17 : vector<1x1x16x16xf32> to vector<16x16xf32>
    %19 = vector.shape_cast %16 : vector<16x16xf32> to vector<1x1x16x16xf32>
    tpu.vector_store %arg5[%c0_13, %c1, %c0_14, %c0_15], %19 {strides = array<i32>} : memref<1x8x16x16xf32, #tpu.memory_space<vmem>>, vector<1x1x16x16xf32>,
    %20 = vector.extract_strided_slice %6 {offsets = [2, 0, 0], sizes = [1, 8, 16], strides = [1, 1, 1]} : vector<8x8x16xbf16> to vector<1x8x16xbf16>
    %21 = vector.shape_cast %20 : vector<1x8x16xbf16> to vector<8x16xbf16>
    %cst_16 = arith.constant dense<0.000000e+00> : vector<16x16xf32>
    %22 = tpu.matmul %7, %21, %cst_16 {dimension_numbers = #tpu.dot_dimension_numbers<[1], [0], [0], [1], [0, 0, 1, 1], [], []>} : vector<16x8xbf16>, vector<8x16xbf16>, vector<16x16xf32> -> vector<16x16xf32>
    %c0_17 = arith.constant 0 : index
    %c2 = arith.constant 2 : index
    %c0_18 = arith.constant 0 : index
    %c0_19 = arith.constant 0 : index
    %23 = vector.load %arg5[%c0_17, %c2, %c0_18, %c0_19] : memref<1x8x16x16xf32, #tpu.memory_space<vmem>>, vector<1x1x16x16xf32>
    %24 = vector.shape_cast %23 : vector<1x1x16x16xf32> to vector<16x16xf32>
    %25 = vector.shape_cast %22 : vector<16x16xf32> to vector<1x1x16x16xf32>
    tpu.vector_store %arg5[%c0_17, %c2, %c0_18, %c0_19], %25 {strides = array<i32>} : memref<1x8x16x16xf32, #tpu.memory_space<vmem>>, vector<1x1x16x16xf32>,
    %26 = vector.extract_strided_slice %6 {offsets = [3, 0, 0], sizes = [1, 8, 16], strides = [1, 1, 1]} : vector<8x8x16xbf16> to vector<1x8x16xbf16>
    %27 = vector.shape_cast %26 : vector<1x8x16xbf16> to vector<8x16xbf16>
    %cst_20 = arith.constant dense<0.000000e+00> : vector<16x16xf32>
    %28 = tpu.matmul %7, %27, %cst_20 {dimension_numbers = #tpu.dot_dimension_numbers<[1], [0], [0], [1], [0, 0, 1, 1], [], []>} : vector<16x8xbf16>, vector<8x16xbf16>, vector<16x16xf32> -> vector<16x16xf32>
    %c0_21 = arith.constant 0 : index
    %c3 = arith.constant 3 : index
    %c0_22 = arith.constant 0 : index
    %c0_23 = arith.constant 0 : index
    %29 = vector.load %arg5[%c0_21, %c3, %c0_22, %c0_23] : memref<1x8x16x16xf32, #tpu.memory_space<vmem>>, vector<1x1x16x16xf32>
    %30 = vector.shape_cast %29 : vector<1x1x16x16xf32> to vector<16x16xf32>
    %31 = vector.shape_cast %28 : vector<16x16xf32> to vector<1x1x16x16xf32>
    tpu.vector_store %arg5[%c0_21, %c3, %c0_22, %c0_23], %31 {strides = array<i32>} : memref<1x8x16x16xf32, #tpu.memory_space<vmem>>, vector<1x1x16x16xf32>,
    %32 = vector.extract_strided_slice %6 {offsets = [4, 0, 0], sizes = [1, 8, 16], strides = [1, 1, 1]} : vector<8x8x16xbf16> to vector<1x8x16xbf16>
    %33 = vector.shape_cast %32 : vector<1x8x16xbf16> to vector<8x16xbf16>
    %cst_24 = arith.constant dense<0.000000e+00> : vector<16x16xf32>
    %34 = tpu.matmul %7, %33, %cst_24 {dimension_numbers = #tpu.dot_dimension_numbers<[1], [0], [0], [1], [0, 0, 1, 1], [], []>} : vector<16x8xbf16>, vector<8x16xbf16>, vector<16x16xf32> -> vector<16x16xf32>
    %c0_25 = arith.constant 0 : index
    %c4 = arith.constant 4 : index
    %c0_26 = arith.constant 0 : index
    %c0_27 = arith.constant 0 : index
    %35 = vector.load %arg5[%c0_25, %c4, %c0_26, %c0_27] : memref<1x8x16x16xf32, #tpu.memory_space<vmem>>, vector<1x1x16x16xf32>
    %36 = vector.shape_cast %35 : vector<1x1x16x16xf32> to vector<16x16xf32>
    %37 = vector.shape_cast %34 : vector<16x16xf32> to vector<1x1x16x16xf32>
    tpu.vector_store %arg5[%c0_25, %c4, %c0_26, %c0_27], %37 {strides = array<i32>} : memref<1x8x16x16xf32, #tpu.memory_space<vmem>>, vector<1x1x16x16xf32>,
    %38 = vector.extract_strided_slice %6 {offsets = [5, 0, 0], sizes = [1, 8, 16], strides = [1, 1, 1]} : vector<8x8x16xbf16> to vector<1x8x16xbf16>
    %39 = vector.shape_cast %38 : vector<1x8x16xbf16> to vector<8x16xbf16>
    %cst_28 = arith.constant dense<0.000000e+00> : vector<16x16xf32>
    %40 = tpu.matmul %7, %39, %cst_28 {dimension_numbers = #tpu.dot_dimension_numbers<[1], [0], [0], [1], [0, 0, 1, 1], [], []>} : vector<16x8xbf16>, vector<8x16xbf16>, vector<16x16xf32> -> vector<16x16xf32>
    %c0_29 = arith.constant 0 : index
    %c5 = arith.constant 5 : index
    %c0_30 = arith.constant 0 : index
    %c0_31 = arith.constant 0 : index
    %41 = vector.load %arg5[%c0_29, %c5, %c0_30, %c0_31] : memref<1x8x16x16xf32, #tpu.memory_space<vmem>>, vector<1x1x16x16xf32>
    %42 = vector.shape_cast %41 : vector<1x1x16x16xf32> to vector<16x16xf32>
    %43 = vector.shape_cast %40 : vector<16x16xf32> to vector<1x1x16x16xf32>
    tpu.vector_store %arg5[%c0_29, %c5, %c0_30, %c0_31], %43 {strides = array<i32>} : memref<1x8x16x16xf32, #tpu.memory_space<vmem>>, vector<1x1x16x16xf32>,
    %44 = vector.extract_strided_slice %6 {offsets = [6, 0, 0], sizes = [1, 8, 16], strides = [1, 1, 1]} : vector<8x8x16xbf16> to vector<1x8x16xbf16>
    %45 = vector.shape_cast %44 : vector<1x8x16xbf16> to vector<8x16xbf16>
    %cst_32 = arith.constant dense<0.000000e+00> : vector<16x16xf32>
    %46 = tpu.matmul %7, %45, %cst_32 {dimension_numbers = #tpu.dot_dimension_numbers<[1], [0], [0], [1], [0, 0, 1, 1], [], []>} : vector<16x8xbf16>, vector<8x16xbf16>, vector<16x16xf32> -> vector<16x16xf32>
    %c0_33 = arith.constant 0 : index
    %c6 = arith.constant 6 : index
    %c0_34 = arith.constant 0 : index
    %c0_35 = arith.constant 0 : index
    %47 = vector.load %arg5[%c0_33, %c6, %c0_34, %c0_35] : memref<1x8x16x16xf32, #tpu.memory_space<vmem>>, vector<1x1x16x16xf32>
    %48 = vector.shape_cast %47 : vector<1x1x16x16xf32> to vector<16x16xf32>
    %49 = vector.shape_cast %46 : vector<16x16xf32> to vector<1x1x16x16xf32>
    tpu.vector_store %arg5[%c0_33, %c6, %c0_34, %c0_35], %49 {strides = array<i32>} : memref<1x8x16x16xf32, #tpu.memory_space<vmem>>, vector<1x1x16x16xf32>,
    %50 = vector.extract_strided_slice %6 {offsets = [7, 0, 0], sizes = [1, 8, 16], strides = [1, 1, 1]} : vector<8x8x16xbf16> to vector<1x8x16xbf16>
    %51 = vector.shape_cast %50 : vector<1x8x16xbf16> to vector<8x16xbf16>
    %cst_36 = arith.constant dense<0.000000e+00> : vector<16x16xf32>
    %52 = tpu.matmul %7, %51, %cst_36 {dimension_numbers = #tpu.dot_dimension_numbers<[1], [0], [0], [1], [0, 0, 1, 1], [], []>} : vector<16x8xbf16>, vector<8x16xbf16>, vector<16x16xf32> -> vector<16x16xf32>
    %c0_37 = arith.constant 0 : index
    %c7 = arith.constant 7 : index
    %c0_38 = arith.constant 0 : index
    %c0_39 = arith.constant 0 : index
    %53 = vector.load %arg5[%c0_37, %c7, %c0_38, %c0_39] : memref<1x8x16x16xf32, #tpu.memory_space<vmem>>, vector<1x1x16x16xf32>
    %54 = vector.shape_cast %53 : vector<1x1x16x16xf32> to vector<16x16xf32>
    %55 = vector.shape_cast %52 : vector<16x16xf32> to vector<1x1x16x16xf32>
    tpu.vector_store %arg5[%c0_37, %c7, %c0_38, %c0_39], %55 {strides = array<i32>} : memref<1x8x16x16xf32, #tpu.memory_space<vmem>>, vector<1x1x16x16xf32>,
    return
  }
  func.func @transform_0(%arg0: i32, %arg1: i32) -> (i32, i32, i32, i32) {
    %c0_i32 = arith.constant 0 : i32
    %c0_i32_0 = arith.constant 0 : i32
    %c0_i32_1 = arith.constant 0 : i32
    %c0_i32_2 = arith.constant 0 : i32
    return %arg0, %c0_i32, %c0_i32_0, %c0_i32_1 : i32, i32, i32, i32
  }
  func.func @transform_1(%arg0: i32, %arg1: i32) -> (i32, i32) {
    %c0_i32 = arith.constant 0 : i32
    %c0_i32_0 = arith.constant 0 : i32
    return %arg1, %c0_i32 : i32, i32
  }
  func.func @transform_2(%arg0: i32, %arg1: i32) -> (i32, i32) {
    %c0_i32 = arith.constant 0 : i32
    %c0_i32_0 = arith.constant 0 : i32
    %c0_i32_1 = arith.constant 0 : i32
    return %c0_i32, %c0_i32_0 : i32, i32
  }
  func.func @transform_3(%arg0: i32, %arg1: i32) -> (i32, i32, i32, i32) {
    %c0_i32 = arith.constant 0 : i32
    %c0_i32_0 = arith.constant 0 : i32
    %c0_i32_1 = arith.constant 0 : i32
    return %arg0, %c0_i32, %arg1, %c0_i32_0 : i32, i32, i32, i32
  }
}

</mosaic_0001>

<llo_original>
// kernel: ema_head_forward.8
$region0: #{ema_head_forward.8}
  #allocation0 [shape = 'u32[]', space=smem, size = 0x4, offset = 0x4, fixed_abs, tag = 'smem constant byte address 0x4 - core index']
  #allocation1 [shape = 'u32[144,128]{1,0:T(1,128)}', space=vmem, size = 0x12000, scoped, tag = 'internal scratch']
  %s0 = inlined_call_operand.vmem [shape: bf16[2,64,16], index: 0, kind: input, shape index: {}]
  %s1 = inlined_call_operand.vmem [shape: bf16[16,16], index: 1, kind: input, shape index: {}]
  %s2 = inlined_call_operand.vmem [shape: f32[1,16], index: 2, kind: input, shape index: {}]
  %s3 = inlined_call_operand.vmem [shape: bf16[2,64,16], index: 3, kind: output, shape index: {}]
  %s4 = sld [smem:[#allocation0]]
  $region45: #{ema_head_forward.8} parent=0
    _
  %s6 = ssub.s32 1, %s4
  %s7 = scalar_select 0, %s6, %s4
  loop: start=0, step=1, limit=4
  $region2: #{ema_head_forward.8} parent=0 // loop_pre_header
    _
  $region3: #{ema_head_forward.8} parent=0 // loop_header
    %s9 = sphi 0, %s13
    %p10 = scmp.ge.s32.totalorder %s9, 4
    %s16 = sphi 0, %s28
    %s17 = sphi 0, %s24
    %s18 = sphi 0, %s16
    %s19 = sphi 0, %s17
    %s20 = sphi 0, %s18
    %s21 = sphi 0, %s19
    %s33 = sphi 0, %s35
    %s36 = sphi 0, %s33
    %s37 = sphi 0, %s36
    %s53 = sphi 0, %s37
    %s57 = sphi 0, %s57
    %s59 = sphi 0, %s57
    %s60 = sphi 0, %s59
    %s74 = sphi 0, %s60
    %s78 = sphi 0, %s78
    %s80 = sphi 0, %s78
    %s81 = sphi 0, %s80
    %s95 = sphi 0, %s81
    %s103 = sphi 0, %s105
    %s106 = sphi 0, %s103
    %s107 = sphi 0, %s106
    %s123 = sphi 0, %s107
  $region4: #{ema_head_forward.8} parent=0 // loop_header_branch
    %12 = sbr.rel (%p10) target = $region8
  $region5: #{ema_head_forward.8} parent=0 // loop_body
    %s14 = ssub.s32 %s9, 1
    %s15 = ssub.s32 %s9, 2
    %s22 = sadd.s32 1, %s17
    %p23 = scmp.ge.s32.totalorder %s22, 1
    %s24 = scalar_select %p23, 0, %s22
    %s25 = sadd.s32 1, %s16
    %s26 = scalar_select %p23, %s25, %s16
    %p27 = scmp.ge.s32.totalorder %s26, 2
    %s28 = scalar_select %p27, 0, %s26
    %s29 = ssub.s32 %s16, %s28
    %s30 = ssub.s32 %s17, %s24
    %s31 = sor.u32 %s29, %s30
    %p32 = scmp.eq.s32.totalorder %s31, 0
    %s34 = sadd.s32 %s33, 1
    %s35 = scalar_select %p32, %s33, %s34
    %p38 = pneg %p32
    %p39 = scmp.eq.s32.totalorder %s9, 1
    %p40 = por %p38, %p39
    %p41 = scmp.ne.s32.totalorder %s33, %s36
    %p42 = scmp.eq.s32.totalorder %s9, 0
    %p43 = por %p41, %p42
    %p44 = scmp.ne.s32.totalorder %s33, %s36
    %p45 = scmp.eq.s32.totalorder %s14, 1
    %p46 = por %p44, %p45
    %p47 = scmp.ne.s32.totalorder %s36, %s37
    %p48 = scmp.eq.s32.totalorder %s14, 0
    %p49 = por %p47, %p48
    %p50 = scmp.ne.s32.totalorder %s36, %s37
    %p51 = scmp.eq.s32.totalorder %s15, 1
    %p52 = por %p50, %p51
    %p54 = scmp.ne.s32.totalorder %s37, %s53
    %p55 = scmp.eq.s32.totalorder %s15, 0
    %p56 = por %p54, %p55
    %s58 = sadd.s32 %s57, 1
    %p61 = scmp.eq.s32.totalorder %s9, 1
    %p62 = scmp.ne.s32.totalorder %s57, %s59
    %p63 = scmp.eq.s32.totalorder %s9, 0
    %p64 = por %p62, %p63
    %p65 = scmp.ne.s32.totalorder %s57, %s59
    %p66 = scmp.eq.s32.totalorder %s14, 1
    %p67 = por %p65, %p66
    %p68 = scmp.ne.s32.totalorder %s59, %s60
    %p69 = scmp.eq.s32.totalorder %s14, 0
    %p70 = por %p68, %p69
    %p71 = scmp.ne.s32.totalorder %s59, %s60
    %p72 = scmp.eq.s32.totalorder %s15, 1
    %p73 = por %p71, %p72
    %p75 = scmp.ne.s32.totalorder %s60, %s74
    %p76 = scmp.eq.s32.totalorder %s15, 0
    %p77 = por %p75, %p76
    %s79 = sadd.s32 %s78, 1
    %p82 = scmp.eq.s32.totalorder %s9, 1
    %p83 = scmp.ne.s32.totalorder %s78, %s80
    %p84 = scmp.eq.s32.totalorder %s9, 0
    %p85 = por %p83, %p84
    %p86 = scmp.ne.s32.totalorder %s78, %s80
    %p87 = scmp.eq.s32.totalorder %s14, 1
    %p88 = por %p86, %p87
    %p89 = scmp.ne.s32.totalorder %s80, %s81
    %p90 = scmp.eq.s32.totalorder %s14, 0
    %p91 = por %p89, %p90
    %p92 = scmp.ne.s32.totalorder %s80, %s81
    %p93 = scmp.eq.s32.totalorder %s15, 1
    %p94 = por %p92, %p93
    %p96 = scmp.ne.s32.totalorder %s81, %s95
    %p97 = scmp.eq.s32.totalorder %s15, 0
    %p98 = por %p96, %p97
    %s99 = ssub.s32 %s16, %s28
    %s100 = ssub.s32 %s17, %s24
    %s101 = sor.u32 %s99, %s100
    %p102 = scmp.eq.s32.totalorder %s101, 0
    %s104 = sadd.s32 %s103, 1
    %s105 = scalar_select %p102, %s103, %s104
    %p108 = pneg %p102
    %p109 = scmp.eq.s32.totalorder %s9, 1
    %p110 = por %p108, %p109
    %p111 = scmp.ne.s32.totalorder %s103, %s106
    %p112 = scmp.eq.s32.totalorder %s9, 0
    %p113 = por %p111, %p112
    %p114 = scmp.ne.s32.totalorder %s103, %s106
    %p115 = scmp.eq.s32.totalorder %s14, 1
    %p116 = por %p114, %p115
    %p117 = scmp.ne.s32.totalorder %s106, %s107
    %p118 = scmp.eq.s32.totalorder %s14, 0
    %p119 = por %p117, %p118
    %p120 = scmp.ne.s32.totalorder %s106, %s107
    %p121 = scmp.eq.s32.totalorder %s15, 1
    %p122 = por %p120, %p121
    %p124 = scmp.ne.s32.totalorder %s107, %s123
    %p125 = scmp.eq.s32.totalorder %s15, 0
    %p126 = por %p124, %p125
    %p127 = scmp.le.s32.totalorder 1, %s9
    %p128 = scmp.lt.s32.totalorder %s9, 3
    %p129 = pnand %p127, %p128
    %p130 = pneg %p129
    // Predicated region
    $region9: #{ema_head_forward.8} parent=5 // pred_check
      _
    $region10: #{ema_head_forward.8} parent=5 // pred_check_branch
      %132 = sbr.rel (%p129) target = $region12
    $region11: #{ema_head_forward.8} parent=5 // pred_region
      %s133 = ssub.s32 %s9, 1
      // Predicated region
      $region13: #{ema_head_forward.8} parent=11 // pred_check
        %p134 = pneg %p70
      $region14: #{ema_head_forward.8} parent=11 // pred_check_branch
        %136 = sbr.rel (%p134) target = $region16
      $region15: #{ema_head_forward.8} parent=11 // pred_region
        _
      $region16: #{ema_head_forward.8} parent=11 // pred_fallthru
        _
      // Predicated region
      $region17: #{ema_head_forward.8} parent=11 // pred_check
        %p137 = pneg %p91
      $region18: #{ema_head_forward.8} parent=11 // pred_check_branch
        %139 = sbr.rel (%p137) target = $region20
      $region19: #{ema_head_forward.8} parent=11 // pred_region
        _
      $region20: #{ema_head_forward.8} parent=11 // pred_fallthru
        _
    $region12: #{ema_head_forward.8} parent=5 // pred_fallthru
      _
    %p140 = scmp.lt.s32.totalorder %s9, 2
    // Predicated region
    $region21: #{ema_head_forward.8} parent=5 // pred_check
      %p141 = pneg %p140
    $region22: #{ema_head_forward.8} parent=5 // pred_check_branch
      %143 = sbr.rel (%p141) target = $region24
    $region23: #{ema_head_forward.8} parent=5 // pred_region
      // Predicated region
      $region25: #{ema_head_forward.8} parent=23 // pred_check
        %p144 = pneg %p43
      $region26: #{ema_head_forward.8} parent=23 // pred_check_branch
        %146 = sbr.rel (%p144) target = $region28
      $region27: #{ema_head_forward.8} parent=23 // pred_region
        %s147 = smul.u32 8, %s17
        %p148 = scmp.lt.s32.totalorder %s16, 1
        %s149 = scalar_select %p148, %s16, 1
        %p150 = scmp.lt.s32.totalorder %s147, 7
        %s151 = scalar_select %p150, %s147, 7
        %s152 = smul.addr %s149, 8
        %s153 = sadd.s32 %s151, %s152
        %s154 = smul.addr %s153, 4
        %s155 = scalar_lea.vmem %s0, %s154
        %s156 = smul.u32 8, %s17
      $region28: #{ema_head_forward.8} parent=23 // pred_fallthru
        _
    $region24: #{ema_head_forward.8} parent=5 // pred_fallthru
      _
    %p157 = scmp.le.s32.totalorder 1, %s9
    %p158 = scmp.lt.s32.totalorder %s9, 3
    %p159 = pnand %p157, %p158
    %p160 = pneg %p159
    // Predicated region
    $region29: #{ema_head_forward.8} parent=5 // pred_check
      _
    $region30: #{ema_head_forward.8} parent=5 // pred_check_branch
      %162 = sbr.rel (%p159) target = $region32
    $region31: #{ema_head_forward.8} parent=5 // pred_region
      %s163 = ssub.s32 %s9, 1
      %s164 = smul.u32 8, %s19
      %p165 = scmp.lt.s32.totalorder %s18, 1
      %s166 = scalar_select %p165, %s18, 1
      %p167 = scmp.lt.s32.totalorder %s164, 7
      %s168 = scalar_select %p167, %s164, 7
      %s169 = smul.addr %s166, 8
      %s170 = sadd.s32 %s168, %s169
      %s171 = smul.addr %s170, 4
      %s172 = scalar_lea.vmem %s0, %s171
      %p173 = pneg %p49
      %p174 = pneg %p46
      %p175 = pneg %p70
      %p176 = pneg %p67
      %p177 = pneg %p91
      %p178 = pneg %p88
      %p179 = pneg %p119
      %p180 = pneg %p116
      %s181 = smul.u32 8, %s19
      %p182 = scmp.lt.s32.totalorder %s18, 1
      %s183 = scalar_select %p182, %s18, 1
      %p184 = scmp.lt.s32.totalorder %s181, 7
      %s185 = scalar_select %p184, %s181, 7
      %s186 = smul.addr %s183, 8
      %s187 = sadd.s32 %s185, %s186
      %s188 = smul.addr %s187, 4
      %s189 = scalar_lea.vmem %s3, %s188
      %s190 = smul.u32 8, %s19
      %p191 = scmp.lt.s32.totalorder %s18, 1
      %s192 = scalar_select %p191, %s18, 1
      %p193 = scmp.lt.s32.totalorder %s190, 7
      %s194 = scalar_select %p193, %s190, 7
      %s195 = smul.addr %s192, 8
      %s196 = sadd.s32 %s194, %s195
      %s197 = smul.addr %s196, 4
      %s198 = scalar_lea.vmem %s0, %s197
      %s199 = smul.u32 8, %s19
      %s200 = smul.u32 8, %s19
      %p201 = scmp.lt.s32.totalorder %s18, 1
      %s202 = scalar_select %p201, %s18, 1
      %p203 = scmp.lt.s32.totalorder %s200, 7
      %s204 = scalar_select %p203, %s200, 7
      %s205 = smul.addr %s202, 8
      %s206 = sadd.s32 %s204, %s205
      %s207 = smul.addr %s206, 4
      %s208 = scalar_lea.vmem %s3, %s207
      %s209 = smul.u32 8, %s19
      %v211 = vld [vmem:[%s198] sm:$0xf]
      %v212 = vld [vmem:[%s198 + $0x4] sm:$0xf]
      %v213 = vld [vmem:[%s198 + $0x8] sm:$0xf]
      %v214 = vld [vmem:[%s198 + $0xc] sm:$0xf]
      %v215 = vld [vmem:[%s198 + $0x10] sm:$0xf]
      %v216 = vld [vmem:[%s198 + $0x14] sm:$0xf]
      %v217 = vld [vmem:[%s198 + $0x18] sm:$0xf]
      %v218 = vld [vmem:[%s198 + $0x1c] sm:$0xf]
      %v219 = vld [vmem:[%s1] sm:$0xf]
      %v220 = vld [vmem:[%s1 + $0x4] sm:$0xf]
      %v221 = vld [vmem:[%s2] sm:$0x1]
      %v223 = vlaneseq
      %v224 = vshrl.u32 %v223, 7
      %v225 = vsub.s32 0, %v224
      %v226 = vrot.slane %v221, %v225
      %v236 = vunpack.c.l.b16 %v211
      %v237 = vunpack.c.l.b16 %v212
      %v238 = vunpack.c.l.b16 %v213
      %v239 = vunpack.c.l.b16 %v214
      %v240 = vunpack.c.l.b16 %v215
      %v241 = vunpack.c.l.b16 %v216
      %v242 = vunpack.c.l.b16 %v217
      %v243 = vunpack.c.l.b16 %v218
      %v244 = vpack.c.b16 %v237, %v236
      %v245 = vpack.c.b16 %v239, %v238
      %v246 = vpack.c.b16 %v241, %v240
      %v247 = vpack.c.b16 %v243, %v242
      %v250 = vunpack.c.l.b16 %v219
      %v251 = vunpack.c.l.b16 %v220
      %v252 = vpack.c.b16 %v251, %v250
      %vm254 = vcmask 130048
      %v256 = vsel %vm254, %v244, 0
      %v259 = vsel %vm254, %v245, 0
      %v262 = vsel %vm254, %v246, 0
      %v265 = vsel %vm254, %v247, 0
      %267 = vmatprep.subr.bf16.mxu0 0
      %268 = vmatpush1.bf16.msra.mxu0 %v252
      %269 = vmatprep.subr.bf16.mxu0 0
      %270 = vmatpush1.bf16.msra.mxu0 0
      %271 = vmatprep.subr.bf16.mxu0 0
      %272 = vmatpush1.bf16.msra.mxu0 0
      %273 = vmatprep.subr.bf16.mxu0 0
      %274 = vmatpush1.bf16.msra.mxu0 0
      %275 = vmatprep.subr.bf16.mxu0 0
      %276 = vmatpush1.bf16.msra.mxu0 0
      %277 = vmatprep.subr.bf16.mxu0 0
      %278 = vmatpush1.bf16.msra.mxu0 0
      %279 = vmatprep.subr.bf16.mxu0 0
      %280 = vmatpush1.bf16.msra.mxu0 0
      %281 = vmatprep.subr.bf16.mxu0 0
      %282 = vmatpush1.bf16.msra.mxu0 0
      %283 = vmatprep.subr.bf16.mxu0 0
      %284 = vmatpush1.bf16.msra.mxu0 0
      %285 = vmatprep.subr.bf16.mxu0 0
      %286 = vmatpush1.bf16.msra.mxu0 0
      %287 = vmatprep.subr.bf16.mxu0 0
      %288 = vmatpush1.bf16.msra.mxu0 0
      %289 = vmatprep.subr.bf16.mxu0 0
      %290 = vmatpush1.bf16.msra.mxu0 0
      %291 = vmatprep.subr.bf16.mxu0 0
      %292 = vmatpush1.bf16.msra.mxu0 0
      %293 = vmatprep.subr.bf16.mxu0 0
      %294 = vmatpush1.bf16.msra.mxu0 0
      %295 = vmatprep.subr.bf16.mxu0 0
      %296 = vmatpush1.bf16.msra.mxu0 0
      %297 = vmatprep.subr.bf16.mxu0 0
      %298 = vmatpush1.bf16.msra.mxu0 0
      %299 = vmatprep.mubr.bf16.mxu0 0
      %300 = vmatmul.mubr.bf16.gmra.mrb[0].mxu0 %v256
      %v301 = vpop.f32.mrb[0].mxu0
      %v302 = vadd.f32 %v226, %v301
      %v303 = vpop.f32.mrb[0].mxu0
      %v304 = vpop.f32.mrb[0].mxu0
      %v305 = vadd.f32 %v226, %v304
      %v306 = vpop.f32.mrb[0].mxu0
      %307 = vmatprep.mubr.bf16.mxu0 0
      %308 = vmatmul.mubr.bf16.gmra.mrb[0].mxu0 %v259
      %v309 = vpop.f32.mrb[0].mxu0
      %v310 = vadd.f32 %v226, %v309
      %v311 = vpop.f32.mrb[0].mxu0
      %v312 = vpop.f32.mrb[0].mxu0
      %v313 = vadd.f32 %v226, %v312
      %v314 = vpop.f32.mrb[0].mxu0
      %315 = vmatprep.mubr.bf16.mxu0 0
      %316 = vmatmul.mubr.bf16.gmra.mrb[0].mxu0 %v262
      %v317 = vpop.f32.mrb[0].mxu0
      %v318 = vadd.f32 %v226, %v317
      %v319 = vpop.f32.mrb[0].mxu0
      %v320 = vpop.f32.mrb[0].mxu0
      %v321 = vadd.f32 %v226, %v320
      %v322 = vpop.f32.mrb[0].mxu0
      %323 = vmatprep.mubr.bf16.mxu0 0
      %324 = vmatmul.mubr.bf16.gmra.mrb[0].mxu0 %v265
      %v325 = vpop.f32.mrb[0].mxu0
      %v326 = vadd.f32 %v226, %v325
      %v327 = vpop.f32.mrb[0].mxu0
      %v328 = vpop.f32.mrb[0].mxu0
      %v329 = vadd.f32 %v226, %v328
      %v330 = vpop.f32.mrb[0].mxu0
      %331 = vdwg.mxu0
      %v332 = vpack.c.bf16 %v305, %v302
      %v333 = vpack.c.bf16 %v313, %v310
      %v334 = vpack.c.bf16 %v321, %v318
      %v335 = vpack.c.bf16 %v329, %v326
      %v340 = vunpack.c.l.b16 %v332
      %v341 = vunpack.c.h.b16 %v332
      %v342 = vunpack.c.l.b16 %v333
      %v343 = vunpack.c.h.b16 %v333
      %v344 = vunpack.c.l.b16 %v334
      %v345 = vunpack.c.h.b16 %v334
      %v346 = vunpack.c.l.b16 %v335
      %v347 = vunpack.c.h.b16 %v335
      %v348 = vpack.c.b16 %v340, %v340
      %v349 = vpack.c.b16 %v341, %v341
      %v350 = vpack.c.b16 %v342, %v342
      %v351 = vpack.c.b16 %v343, %v343
      %v352 = vpack.c.b16 %v344, %v344
      %v353 = vpack.c.b16 %v345, %v345
      %v354 = vpack.c.b16 %v346, %v346
      %v355 = vpack.c.b16 %v347, %v347
      %vm364 = vcmask 125952
      %365 = vst.msk [vmem:[%s208] sm:$0xf] %vm364, %v348
      %366 = vst.msk [vmem:[%s208 + $0x4] sm:$0xf] %vm364, %v349
      %367 = vst.msk [vmem:[%s208 + $0x8] sm:$0xf] %vm364, %v350
      %368 = vst.msk [vmem:[%s208 + $0xc] sm:$0xf] %vm364, %v351
      %369 = vst.msk [vmem:[%s208 + $0x10] sm:$0xf] %vm364, %v352
      %370 = vst.msk [vmem:[%s208 + $0x14] sm:$0xf] %vm364, %v353
      %371 = vst.msk [vmem:[%s208 + $0x18] sm:$0xf] %vm364, %v354
      %372 = vst.msk [vmem:[%s208 + $0x1c] sm:$0xf] %vm364, %v355
      %s373 = smul.u32 8, %s19
      %p374 = scmp.lt.s32.totalorder %s18, 1
      %s375 = scalar_select %p374, %s18, 1
      %p376 = scmp.lt.s32.totalorder %s373, 7
      %s377 = scalar_select %p376, %s373, 7
      %s378 = smul.addr %s375, 8
      %s379 = sadd.s32 %s377, %s378
      %s380 = smul.addr %s379, 4
      %s381 = scalar_lea.vmem %s3, %s380
      // Predicated region
      $region33: #{ema_head_forward.8} parent=31 // pred_check
        %p382 = pneg %p116
      $region34: #{ema_head_forward.8} parent=31 // pred_check_branch
        %384 = sbr.rel (%p382) target = $region36
      $region35: #{ema_head_forward.8} parent=31 // pred_region
        %s385 = smul.u32 8, %s19
      $region36: #{ema_head_forward.8} parent=31 // pred_fallthru
        _
    $region32: #{ema_head_forward.8} parent=5 // pred_fallthru
      _
    %p386 = scmp.le.s32.totalorder 2, %s9
    // Predicated region
    $region37: #{ema_head_forward.8} parent=5 // pred_check
      %p387 = pneg %p386
    $region38: #{ema_head_forward.8} parent=5 // pred_check_branch
      %389 = sbr.rel (%p387) target = $region40
    $region39: #{ema_head_forward.8} parent=5 // pred_region
      %s390 = ssub.s32 %s9, 2
      // Predicated region
      $region41: #{ema_head_forward.8} parent=39 // pred_check
        %p391 = pneg %p122
      $region42: #{ema_head_forward.8} parent=39 // pred_check_branch
        %393 = sbr.rel (%p391) target = $region44
      $region43: #{ema_head_forward.8} parent=39 // pred_region
        %s394 = smul.u32 8, %s21
        %p395 = scmp.lt.s32.totalorder %s20, 1
        %s396 = scalar_select %p395, %s20, 1
        %p397 = scmp.lt.s32.totalorder %s394, 7
        %s398 = scalar_select %p397, %s394, 7
        %s399 = smul.addr %s396, 8
        %s400 = sadd.s32 %s398, %s399
        %s401 = smul.addr %s400, 4
        %s402 = scalar_lea.vmem %s3, %s401
      $region44: #{ema_head_forward.8} parent=39 // pred_fallthru
        _
    $region40: #{ema_head_forward.8} parent=5 // pred_fallthru
      _
  $region6: #{ema_head_forward.8} parent=0 // loop_footer
    %s13 = sadd.s32 1, %s9
  $region7: #{ema_head_forward.8} parent=0 // loop_footer_branch
    %8 = sbr.rel target = $region3
  $region8: #{ema_head_forward.8} parent=0 // loop_exit
    _

// kernel: ema_head_forward.10
$region0: #{ema_head_forward.10}
  #allocation0 [shape = 'u32[]', space=smem, size = 0x4, offset = 0x4, fixed_abs, tag = 'smem constant byte address 0x4 - core index']
  #allocation1 [shape = 'u32[144,128]{1,0:T(1,128)}', space=vmem, size = 0x12000, scoped, tag = 'internal scratch']
  %s0 = inlined_call_operand.vmem [shape: bf16[2,64,16], index: 0, kind: input, shape index: {}]
  %s1 = inlined_call_operand.vmem [shape: bf16[16,16], index: 1, kind: input, shape index: {}]
  %s2 = inlined_call_operand.vmem [shape: f32[1,16], index: 2, kind: input, shape index: {}]
  %s3 = inlined_call_operand.vmem [shape: bf16[2,64,16], index: 3, kind: input, shape index: {}]
  %s4 = inlined_call_operand.vmem [shape: bf16[2,64,16], index: 4, kind: output, shape index: {}]
  %s5 = sld [smem:[#allocation0]]
  $region49: #{ema_head_forward.10} parent=0
    _
  %s7 = ssub.s32 1, %s5
  %s8 = scalar_select 0, %s7, %s5
  loop: start=0, step=1, limit=4
  $region2: #{ema_head_forward.10} parent=0 // loop_pre_header
    _
  $region3: #{ema_head_forward.10} parent=0 // loop_header
    %s10 = sphi 0, %s14
    %p11 = scmp.ge.s32.totalorder %s10, 4
    %s17 = sphi 0, %s29
    %s18 = sphi 0, %s25
    %s19 = sphi 0, %s17
    %s20 = sphi 0, %s18
    %s21 = sphi 0, %s19
    %s22 = sphi 0, %s20
    %s34 = sphi 0, %s36
    %s37 = sphi 0, %s34
    %s38 = sphi 0, %s37
    %s54 = sphi 0, %s38
    %s58 = sphi 0, %s58
    %s60 = sphi 0, %s58
    %s61 = sphi 0, %s60
    %s75 = sphi 0, %s61
    %s79 = sphi 0, %s79
    %s81 = sphi 0, %s79
    %s82 = sphi 0, %s81
    %s96 = sphi 0, %s82
    %s104 = sphi 0, %s106
    %s107 = sphi 0, %s104
    %s108 = sphi 0, %s107
    %s124 = sphi 0, %s108
    %s132 = sphi 0, %s134
    %s135 = sphi 0, %s132
    %s136 = sphi 0, %s135
    %s152 = sphi 0, %s136
  $region4: #{ema_head_forward.10} parent=0 // loop_header_branch
    %13 = sbr.rel (%p11) target = $region8
  $region5: #{ema_head_forward.10} parent=0 // loop_body
    %s15 = ssub.s32 %s10, 1
    %s16 = ssub.s32 %s10, 2
    %s23 = sadd.s32 1, %s18
    %p24 = scmp.ge.s32.totalorder %s23, 1
    %s25 = scalar_select %p24, 0, %s23
    %s26 = sadd.s32 1, %s17
    %s27 = scalar_select %p24, %s26, %s17
    %p28 = scmp.ge.s32.totalorder %s27, 2
    %s29 = scalar_select %p28, 0, %s27
    %s30 = ssub.s32 %s17, %s29
    %s31 = ssub.s32 %s18, %s25
    %s32 = sor.u32 %s30, %s31
    %p33 = scmp.eq.s32.totalorder %s32, 0
    %s35 = sadd.s32 %s34, 1
    %s36 = scalar_select %p33, %s34, %s35
    %p39 = pneg %p33
    %p40 = scmp.eq.s32.totalorder %s10, 1
    %p41 = por %p39, %p40
    %p42 = scmp.ne.s32.totalorder %s34, %s37
    %p43 = scmp.eq.s32.totalorder %s10, 0
    %p44 = por %p42, %p43
    %p45 = scmp.ne.s32.totalorder %s34, %s37
    %p46 = scmp.eq.s32.totalorder %s15, 1
    %p47 = por %p45, %p46
    %p48 = scmp.ne.s32.totalorder %s37, %s38
    %p49 = scmp.eq.s32.totalorder %s15, 0
    %p50 = por %p48, %p49
    %p51 = scmp.ne.s32.totalorder %s37, %s38
    %p52 = scmp.eq.s32.totalorder %s16, 1
    %p53 = por %p51, %p52
    %p55 = scmp.ne.s32.totalorder %s38, %s54
    %p56 = scmp.eq.s32.totalorder %s16, 0
    %p57 = por %p55, %p56
    %s59 = sadd.s32 %s58, 1
    %p62 = scmp.eq.s32.totalorder %s10, 1
    %p63 = scmp.ne.s32.totalorder %s58, %s60
    %p64 = scmp.eq.s32.totalorder %s10, 0
    %p65 = por %p63, %p64
    %p66 = scmp.ne.s32.totalorder %s58, %s60
    %p67 = scmp.eq.s32.totalorder %s15, 1
    %p68 = por %p66, %p67
    %p69 = scmp.ne.s32.totalorder %s60, %s61
    %p70 = scmp.eq.s32.totalorder %s15, 0
    %p71 = por %p69, %p70
    %p72 = scmp.ne.s32.totalorder %s60, %s61
    %p73 = scmp.eq.s32.totalorder %s16, 1
    %p74 = por %p72, %p73
    %p76 = scmp.ne.s32.totalorder %s61, %s75
    %p77 = scmp.eq.s32.totalorder %s16, 0
    %p78 = por %p76, %p77
    %s80 = sadd.s32 %s79, 1
    %p83 = scmp.eq.s32.totalorder %s10, 1
    %p84 = scmp.ne.s32.totalorder %s79, %s81
    %p85 = scmp.eq.s32.totalorder %s10, 0
    %p86 = por %p84, %p85
    %p87 = scmp.ne.s32.totalorder %s79, %s81
    %p88 = scmp.eq.s32.totalorder %s15, 1
    %p89 = por %p87, %p88
    %p90 = scmp.ne.s32.totalorder %s81, %s82
    %p91 = scmp.eq.s32.totalorder %s15, 0
    %p92 = por %p90, %p91
    %p93 = scmp.ne.s32.totalorder %s81, %s82
    %p94 = scmp.eq.s32.totalorder %s16, 1
    %p95 = por %p93, %p94
    %p97 = scmp.ne.s32.totalorder %s82, %s96
    %p98 = scmp.eq.s32.totalorder %s16, 0
    %p99 = por %p97, %p98
    %s100 = ssub.s32 %s17, %s29
    %s101 = ssub.s32 %s18, %s25
    %s102 = sor.u32 %s100, %s101
    %p103 = scmp.eq.s32.totalorder %s102, 0
    %s105 = sadd.s32 %s104, 1
    %s106 = scalar_select %p103, %s104, %s105
    %p109 = pneg %p103
    %p110 = scmp.eq.s32.totalorder %s10, 1
    %p111 = por %p109, %p110
    %p112 = scmp.ne.s32.totalorder %s104, %s107
    %p113 = scmp.eq.s32.totalorder %s10, 0
    %p114 = por %p112, %p113
    %p115 = scmp.ne.s32.totalorder %s104, %s107
    %p116 = scmp.eq.s32.totalorder %s15, 1
    %p117 = por %p115, %p116
    %p118 = scmp.ne.s32.totalorder %s107, %s108
    %p119 = scmp.eq.s32.totalorder %s15, 0
    %p120 = por %p118, %p119
    %p121 = scmp.ne.s32.totalorder %s107, %s108
    %p122 = scmp.eq.s32.totalorder %s16, 1
    %p123 = por %p121, %p122
    %p125 = scmp.ne.s32.totalorder %s108, %s124
    %p126 = scmp.eq.s32.totalorder %s16, 0
    %p127 = por %p125, %p126
    %s128 = ssub.s32 %s17, %s29
    %s129 = ssub.s32 %s18, %s25
    %s130 = sor.u32 %s128, %s129
    %p131 = scmp.eq.s32.totalorder %s130, 0
    %s133 = sadd.s32 %s132, 1
    %s134 = scalar_select %p131, %s132, %s133
    %p137 = pneg %p131
    %p138 = scmp.eq.s32.totalorder %s10, 1
    %p139 = por %p137, %p138
    %p140 = scmp.ne.s32.totalorder %s132, %s135
    %p141 = scmp.eq.s32.totalorder %s10, 0
    %p142 = por %p140, %p141
    %p143 = scmp.ne.s32.totalorder %s132, %s135
    %p144 = scmp.eq.s32.totalorder %s15, 1
    %p145 = por %p143, %p144
    %p146 = scmp.ne.s32.totalorder %s135, %s136
    %p147 = scmp.eq.s32.totalorder %s15, 0
    %p148 = por %p146, %p147
    %p149 = scmp.ne.s32.totalorder %s135, %s136
    %p150 = scmp.eq.s32.totalorder %s16, 1
    %p151 = por %p149, %p150
    %p153 = scmp.ne.s32.totalorder %s136, %s152
    %p154 = scmp.eq.s32.totalorder %s16, 0
    %p155 = por %p153, %p154
    %p156 = scmp.le.s32.totalorder 1, %s10
    %p157 = scmp.lt.s32.totalorder %s10, 3
    %p158 = pnand %p156, %p157
    %p159 = pneg %p158
    // Predicated region
    $region9: #{ema_head_forward.10} parent=5 // pred_check
      _
    $region10: #{ema_head_forward.10} parent=5 // pred_check_branch
      %161 = sbr.rel (%p158) target = $region12
    $region11: #{ema_head_forward.10} parent=5 // pred_region
      %s162 = ssub.s32 %s10, 1
      // Predicated region
      $region13: #{ema_head_forward.10} parent=11 // pred_check
        %p163 = pneg %p71
      $region14: #{ema_head_forward.10} parent=11 // pred_check_branch
        %165 = sbr.rel (%p163) target = $region16
      $region15: #{ema_head_forward.10} parent=11 // pred_region
        _
      $region16: #{ema_head_forward.10} parent=11 // pred_fallthru
        _
      // Predicated region
      $region17: #{ema_head_forward.10} parent=11 // pred_check
        %p166 = pneg %p92
      $region18: #{ema_head_forward.10} parent=11 // pred_check_branch
        %168 = sbr.rel (%p166) target = $region20
      $region19: #{ema_head_forward.10} parent=11 // pred_region
        _
      $region20: #{ema_head_forward.10} parent=11 // pred_fallthru
        _
    $region12: #{ema_head_forward.10} parent=5 // pred_fallthru
      _
    %p169 = scmp.lt.s32.totalorder %s10, 2
    // Predicated region
    $region21: #{ema_head_forward.10} parent=5 // pred_check
      %p170 = pneg %p169
    $region22: #{ema_head_forward.10} parent=5 // pred_check_branch
      %172 = sbr.rel (%p170) target = $region24
    $region23: #{ema_head_forward.10} parent=5 // pred_region
      // Predicated region
      $region25: #{ema_head_forward.10} parent=23 // pred_check
        %p173 = pneg %p44
      $region26: #{ema_head_forward.10} parent=23 // pred_check_branch
        %175 = sbr.rel (%p173) target = $region28
      $region27: #{ema_head_forward.10} parent=23 // pred_region
        %s176 = smul.u32 8, %s18
        %p177 = scmp.lt.s32.totalorder %s17, 1
        %s178 = scalar_select %p177, %s17, 1
        %p179 = scmp.lt.s32.totalorder %s176, 7
        %s180 = scalar_select %p179, %s176, 7
        %s181 = smul.addr %s178, 8
        %s182 = sadd.s32 %s180, %s181
        %s183 = smul.addr %s182, 4
        %s184 = scalar_lea.vmem %s0, %s183
        %s185 = smul.u32 8, %s18
      $region28: #{ema_head_forward.10} parent=23 // pred_fallthru
        _
      // Predicated region
      $region29: #{ema_head_forward.10} parent=23 // pred_check
        %p186 = pneg %p114
      $region30: #{ema_head_forward.10} parent=23 // pred_check_branch
        %188 = sbr.rel (%p186) target = $region32
      $region31: #{ema_head_forward.10} parent=23 // pred_region
        %s189 = smul.u32 8, %s18
        %p190 = scmp.lt.s32.totalorder %s17, 1
        %s191 = scalar_select %p190, %s17, 1
        %p192 = scmp.lt.s32.totalorder %s189, 7
        %s193 = scalar_select %p192, %s189, 7
        %s194 = smul.addr %s191, 8
        %s195 = sadd.s32 %s193, %s194
        %s196 = smul.addr %s195, 4
        %s197 = scalar_lea.vmem %s3, %s196
        %s198 = smul.u32 8, %s18
      $region32: #{ema_head_forward.10} parent=23 // pred_fallthru
        _
    $region24: #{ema_head_forward.10} parent=5 // pred_fallthru
      _
    %p199 = scmp.le.s32.totalorder 1, %s10
    %p200 = scmp.lt.s32.totalorder %s10, 3
    %p201 = pnand %p199, %p200
    %p202 = pneg %p201
    // Predicated region
    $region33: #{ema_head_forward.10} parent=5 // pred_check
      _
    $region34: #{ema_head_forward.10} parent=5 // pred_check_branch
      %204 = sbr.rel (%p201) target = $region36
    $region35: #{ema_head_forward.10} parent=5 // pred_region
      %s205 = ssub.s32 %s10, 1
      %s206 = smul.u32 8, %s20
      %p207 = scmp.lt.s32.totalorder %s19, 1
      %s208 = scalar_select %p207, %s19, 1
      %p209 = scmp.lt.s32.totalorder %s206, 7
      %s210 = scalar_select %p209, %s206, 7
      %s211 = smul.addr %s208, 8
      %s212 = sadd.s32 %s210, %s211
      %s213 = smul.addr %s212, 4
      %s214 = scalar_lea.vmem %s0, %s213
      %p215 = pneg %p50
      %p216 = pneg %p47
      %p217 = pneg %p71
      %p218 = pneg %p68
      %p219 = pneg %p92
      %p220 = pneg %p89
      %s221 = smul.u32 8, %s20
      %p222 = scmp.lt.s32.totalorder %s19, 1
      %s223 = scalar_select %p222, %s19, 1
      %p224 = scmp.lt.s32.totalorder %s221, 7
      %s225 = scalar_select %p224, %s221, 7
      %s226 = smul.addr %s223, 8
      %s227 = sadd.s32 %s225, %s226
      %s228 = smul.addr %s227, 4
      %s229 = scalar_lea.vmem %s3, %s228
      %p230 = pneg %p120
      %p231 = pneg %p117
      %p232 = pneg %p148
      %p233 = pneg %p145
      %s234 = smul.u32 8, %s20
      %p235 = scmp.lt.s32.totalorder %s19, 1
      %s236 = scalar_select %p235, %s19, 1
      %p237 = scmp.lt.s32.totalorder %s234, 7
      %s238 = scalar_select %p237, %s234, 7
      %s239 = smul.addr %s236, 8
      %s240 = sadd.s32 %s238, %s239
      %s241 = smul.addr %s240, 4
      %s242 = scalar_lea.vmem %s4, %s241
      %s243 = smul.u32 8, %s20
      %p244 = scmp.lt.s32.totalorder %s19, 1
      %s245 = scalar_select %p244, %s19, 1
      %p246 = scmp.lt.s32.totalorder %s243, 7
      %s247 = scalar_select %p246, %s243, 7
      %s248 = smul.addr %s245, 8
      %s249 = sadd.s32 %s247, %s248
      %s250 = smul.addr %s249, 4
      %s251 = scalar_lea.vmem %s0, %s250
      %s252 = smul.u32 8, %s20
      %s253 = smul.u32 8, %s20
      %p254 = scmp.lt.s32.totalorder %s19, 1
      %s255 = scalar_select %p254, %s19, 1
      %p256 = scmp.lt.s32.totalorder %s253, 7
      %s257 = scalar_select %p256, %s253, 7
      %s258 = smul.addr %s255, 8
      %s259 = sadd.s32 %s257, %s258
      %s260 = smul.addr %s259, 4
      %s261 = scalar_lea.vmem %s3, %s260
      %s262 = smul.u32 8, %s20
      %s263 = smul.u32 8, %s20
      %p264 = scmp.lt.s32.totalorder %s19, 1
      %s265 = scalar_select %p264, %s19, 1
      %p266 = scmp.lt.s32.totalorder %s263, 7
      %s267 = scalar_select %p266, %s263, 7
      %s268 = smul.addr %s265, 8
      %s269 = sadd.s32 %s267, %s268
      %s270 = smul.addr %s269, 4
      %s271 = scalar_lea.vmem %s4, %s270
      %s272 = smul.u32 8, %s20
      %v274 = vld [vmem:[%s251] sm:$0xf]
      %v275 = vld [vmem:[%s251 + $0x4] sm:$0xf]
      %v276 = vld [vmem:[%s251 + $0x8] sm:$0xf]
      %v277 = vld [vmem:[%s251 + $0xc] sm:$0xf]
      %v278 = vld [vmem:[%s251 + $0x10] sm:$0xf]
      %v279 = vld [vmem:[%s251 + $0x14] sm:$0xf]
      %v280 = vld [vmem:[%s251 + $0x18] sm:$0xf]
      %v281 = vld [vmem:[%s251 + $0x1c] sm:$0xf]
      %v282 = vld [vmem:[%s1] sm:$0xf]
      %v283 = vld [vmem:[%s1 + $0x4] sm:$0xf]
      %v284 = vld [vmem:[%s2] sm:$0x1]
      %v286 = vlaneseq
      %v287 = vshrl.u32 %v286, 7
      %v288 = vsub.s32 0, %v287
      %v289 = vrot.slane %v284, %v288
      %v299 = vunpack.c.l.b16 %v274
      %v300 = vunpack.c.l.b16 %v275
      %v301 = vunpack.c.l.b16 %v276
      %v302 = vunpack.c.l.b16 %v277
      %v303 = vunpack.c.l.b16 %v278
      %v304 = vunpack.c.l.b16 %v279
      %v305 = vunpack.c.l.b16 %v280
      %v306 = vunpack.c.l.b16 %v281
      %v307 = vpack.c.b16 %v300, %v299
      %v308 = vpack.c.b16 %v302, %v301
      %v309 = vpack.c.b16 %v304, %v303
      %v310 = vpack.c.b16 %v306, %v305
      %v313 = vunpack.c.l.b16 %v282
      %v314 = vunpack.c.l.b16 %v283
      %v315 = vpack.c.b16 %v314, %v313
      %vm317 = vcmask 130048
      %v319 = vsel %vm317, %v307, 0
      %v322 = vsel %vm317, %v308, 0
      %v325 = vsel %vm317, %v309, 0
      %v328 = vsel %vm317, %v310, 0
      %330 = vmatprep.subr.bf16.mxu0 0
      %331 = vmatpush1.bf16.msra.mxu0 %v315
      %332 = vmatprep.subr.bf16.mxu0 0
      %333 = vmatpush1.bf16.msra.mxu0 0
      %334 = vmatprep.subr.bf16.mxu0 0
      %335 = vmatpush1.bf16.msra.mxu0 0
      %336 = vmatprep.subr.bf16.mxu0 0
      %337 = vmatpush1.bf16.msra.mxu0 0
      %338 = vmatprep.subr.bf16.mxu0 0
      %339 = vmatpush1.bf16.msra.mxu0 0
      %340 = vmatprep.subr.bf16.mxu0 0
      %341 = vmatpush1.bf16.msra.mxu0 0
      %342 = vmatprep.subr.bf16.mxu0 0
      %343 = vmatpush1.bf16.msra.mxu0 0
      %344 = vmatprep.subr.bf16.mxu0 0
      %345 = vmatpush1.bf16.msra.mxu0 0
      %346 = vmatprep.subr.bf16.mxu0 0
      %347 = vmatpush1.bf16.msra.mxu0 0
      %348 = vmatprep.subr.bf16.mxu0 0
      %349 = vmatpush1.bf16.msra.mxu0 0
      %350 = vmatprep.subr.bf16.mxu0 0
      %351 = vmatpush1.bf16.msra.mxu0 0
      %352 = vmatprep.subr.bf16.mxu0 0
      %353 = vmatpush1.bf16.msra.mxu0 0
      %354 = vmatprep.subr.bf16.mxu0 0
      %355 = vmatpush1.bf16.msra.mxu0 0
      %356 = vmatprep.subr.bf16.mxu0 0
      %357 = vmatpush1.bf16.msra.mxu0 0
      %358 = vmatprep.subr.bf16.mxu0 0
      %359 = vmatpush1.bf16.msra.mxu0 0
      %360 = vmatprep.subr.bf16.mxu0 0
      %361 = vmatpush1.bf16.msra.mxu0 0
      %362 = vmatprep.mubr.bf16.mxu0 0
      %363 = vmatmul.mubr.bf16.gmra.mrb[0].mxu0 %v319
      %v364 = vpop.f32.mrb[0].mxu0
      %v365 = vadd.f32 %v289, %v364
      %v366 = vpop.f32.mrb[0].mxu0
      %v367 = vpop.f32.mrb[0].mxu0
      %v368 = vadd.f32 %v289, %v367
      %v369 = vpop.f32.mrb[0].mxu0
      %370 = vmatprep.mubr.bf16.mxu0 0
      %371 = vmatmul.mubr.bf16.gmra.mrb[0].mxu0 %v322
      %v372 = vpop.f32.mrb[0].mxu0
      %v373 = vadd.f32 %v289, %v372
      %v374 = vpop.f32.mrb[0].mxu0
      %v375 = vpop.f32.mrb[0].mxu0
      %v376 = vadd.f32 %v289, %v375
      %v377 = vpop.f32.mrb[0].mxu0
      %378 = vmatprep.mubr.bf16.mxu0 0
      %379 = vmatmul.mubr.bf16.gmra.mrb[0].mxu0 %v325
      %v380 = vpop.f32.mrb[0].mxu0
      %v381 = vadd.f32 %v289, %v380
      %v382 = vpop.f32.mrb[0].mxu0
      %v383 = vpop.f32.mrb[0].mxu0
      %v384 = vadd.f32 %v289, %v383
      %v385 = vpop.f32.mrb[0].mxu0
      %386 = vmatprep.mubr.bf16.mxu0 0
      %387 = vmatmul.mubr.bf16.gmra.mrb[0].mxu0 %v328
      %v388 = vpop.f32.mrb[0].mxu0
      %v389 = vadd.f32 %v289, %v388
      %v390 = vpop.f32.mrb[0].mxu0
      %v391 = vpop.f32.mrb[0].mxu0
      %v392 = vadd.f32 %v289, %v391
      %v393 = vpop.f32.mrb[0].mxu0
      %394 = vdwg.mxu0
      %v395 = vld [vmem:[%s261] sm:$0xf]
      %v396 = vld [vmem:[%s261 + $0x4] sm:$0xf]
      %v397 = vld [vmem:[%s261 + $0x8] sm:$0xf]
      %v398 = vld [vmem:[%s261 + $0xc] sm:$0xf]
      %v399 = vld [vmem:[%s261 + $0x10] sm:$0xf]
      %v400 = vld [vmem:[%s261 + $0x14] sm:$0xf]
      %v401 = vld [vmem:[%s261 + $0x18] sm:$0xf]
      %v402 = vld [vmem:[%s261 + $0x1c] sm:$0xf]
      %v403 = vunpack.c.l.bf16 %v395
      %v404 = vunpack.c.l.bf16 %v396
      %v405 = vunpack.c.l.bf16 %v397
      %v406 = vunpack.c.l.bf16 %v398
      %v407 = vunpack.c.l.bf16 %v399
      %v408 = vunpack.c.l.bf16 %v400
      %v409 = vunpack.c.l.bf16 %v401
      %v410 = vunpack.c.l.bf16 %v402
      %v411 = vadd.f32 %v365, %v403
      %v412 = vadd.f32 %v368, %v404
      %v413 = vadd.f32 %v373, %v405
      %v414 = vadd.f32 %v376, %v406
      %v415 = vadd.f32 %v381, %v407
      %v416 = vadd.f32 %v384, %v408
      %v417 = vadd.f32 %v389, %v409
      %v418 = vadd.f32 %v392, %v410
      %v419 = vmax.f32 %v411, 0.0
      %v420 = vmax.f32 %v412, 0.0
      %v421 = vmax.f32 %v413, 0.0
      %v422 = vmax.f32 %v414, 0.0
      %v423 = vmax.f32 %v415, 0.0
      %v424 = vmax.f32 %v416, 0.0
      %v425 = vmax.f32 %v417, 0.0
      %v426 = vmax.f32 %v418, 0.0
      %v427 = vpack.c.bf16 %v420, %v419
      %v428 = vpack.c.bf16 %v422, %v421
      %v429 = vpack.c.bf16 %v424, %v423
      %v430 = vpack.c.bf16 %v426, %v425
      %v435 = vunpack.c.l.b16 %v427
      %v436 = vunpack.c.h.b16 %v427
      %v437 = vunpack.c.l.b16 %v428
      %v438 = vunpack.c.h.b16 %v428
      %v439 = vunpack.c.l.b16 %v429
      %v440 = vunpack.c.h.b16 %v429
      %v441 = vunpack.c.l.b16 %v430
      %v442 = vunpack.c.h.b16 %v430
      %v443 = vpack.c.b16 %v435, %v435
      %v444 = vpack.c.b16 %v436, %v436
      %v445 = vpack.c.b16 %v437, %v437
      %v446 = vpack.c.b16 %v438, %v438
      %v447 = vpack.c.b16 %v439, %v439
      %v448 = vpack.c.b16 %v440, %v440
      %v449 = vpack.c.b16 %v441, %v441
      %v450 = vpack.c.b16 %v442, %v442
      %vm459 = vcmask 125952
      %460 = vst.msk [vmem:[%s271] sm:$0xf] %vm459, %v443
      %461 = vst.msk [vmem:[%s271 + $0x4] sm:$0xf] %vm459, %v444
      %462 = vst.msk [vmem:[%s271 + $0x8] sm:$0xf] %vm459, %v445
      %463 = vst.msk [vmem:[%s271 + $0xc] sm:$0xf] %vm459, %v446
      %464 = vst.msk [vmem:[%s271 + $0x10] sm:$0xf] %vm459, %v447
      %465 = vst.msk [vmem:[%s271 + $0x14] sm:$0xf] %vm459, %v448
      %466 = vst.msk [vmem:[%s271 + $0x18] sm:$0xf] %vm459, %v449
      %467 = vst.msk [vmem:[%s271 + $0x1c] sm:$0xf] %vm459, %v450
      %s468 = smul.u32 8, %s20
      %p469 = scmp.lt.s32.totalorder %s19, 1
      %s470 = scalar_select %p469, %s19, 1
      %p471 = scmp.lt.s32.totalorder %s468, 7
      %s472 = scalar_select %p471, %s468, 7
      %s473 = smul.addr %s470, 8
      %s474 = sadd.s32 %s472, %s473
      %s475 = smul.addr %s474, 4
      %s476 = scalar_lea.vmem %s4, %s475
      // Predicated region
      $region37: #{ema_head_forward.10} parent=35 // pred_check
        %p477 = pneg %p145
      $region38: #{ema_head_forward.10} parent=35 // pred_check_branch
        %479 = sbr.rel (%p477) target = $region40
      $region39: #{ema_head_forward.10} parent=35 // pred_region
        %s480 = smul.u32 8, %s20
      $region40: #{ema_head_forward.10} parent=35 // pred_fallthru
        _
    $region36: #{ema_head_forward.10} parent=5 // pred_fallthru
      _
    %p481 = scmp.le.s32.totalorder 2, %s10
    // Predicated region
    $region41: #{ema_head_forward.10} parent=5 // pred_check
      %p482 = pneg %p481
    $region42: #{ema_head_forward.10} parent=5 // pred_check_branch
      %484 = sbr.rel (%p482) target = $region44
    $region43: #{ema_head_forward.10} parent=5 // pred_region
      %s485 = ssub.s32 %s10, 2
      // Predicated region
      $region45: #{ema_head_forward.10} parent=43 // pred_check
        %p486 = pneg %p151
      $region46: #{ema_head_forward.10} parent=43 // pred_check_branch
        %488 = sbr.rel (%p486) target = $region48
      $region47: #{ema_head_forward.10} parent=43 // pred_region
        %s489 = smul.u32 8, %s22
        %p490 = scmp.lt.s32.totalorder %s21, 1
        %s491 = scalar_select %p490, %s21, 1
        %p492 = scmp.lt.s32.totalorder %s489, 7
        %s493 = scalar_select %p492, %s489, 7
        %s494 = smul.addr %s491, 8
        %s495 = sadd.s32 %s493, %s494
        %s496 = smul.addr %s495, 4
        %s497 = scalar_lea.vmem %s4, %s496
      $region48: #{ema_head_forward.10} parent=43 // pred_fallthru
        _
    $region44: #{ema_head_forward.10} parent=5 // pred_fallthru
      _
  $region6: #{ema_head_forward.10} parent=0 // loop_footer
    %s14 = sadd.s32 1, %s10
  $region7: #{ema_head_forward.10} parent=0 // loop_footer_branch
    %9 = sbr.rel target = $region3
  $region8: #{ema_head_forward.10} parent=0 // loop_exit
    _

// kernel: ema_head_forward.9
$region0: #{ema_head_forward.9}
  #allocation0 [shape = 'u32[]', space=smem, size = 0x4, offset = 0x4, fixed_abs, tag = 'smem constant byte address 0x4 - core index']
  #allocation1 [shape = 'u32[144,128]{1,0:T(1,128)}', space=vmem, size = 0x12000, scoped, tag = 'internal scratch']
  %s0 = inlined_call_operand.vmem [shape: bf16[2,64,16], index: 0, kind: input, shape index: {}]
  %s1 = inlined_call_operand.vmem [shape: bf16[2,16,64], index: 1, kind: input, shape index: {}]
  %s2 = inlined_call_operand.vmem [shape: bf16[1,16,128], index: 2, kind: input, shape index: {}]
  %s3 = inlined_call_operand.vmem [shape: bf16[2,64,16], index: 3, kind: output, shape index: {}]
  %s4 = sld [smem:[#allocation0]]
  $region45: #{ema_head_forward.9} parent=0
    _
  %s6 = ssub.s32 1, %s4
  %s7 = scalar_select 0, %s6, %s4
  loop: start=0, step=1, limit=4
  $region2: #{ema_head_forward.9} parent=0 // loop_pre_header
    _
  $region3: #{ema_head_forward.9} parent=0 // loop_header
    %s9 = sphi 0, %s13
    %p10 = scmp.ge.s32.totalorder %s9, 4
    %s19 = sphi 0, %s21
    %s22 = sphi 0, %s19
    %s23 = sphi 0, %s22
    %s39 = sphi 0, %s23
    %s45 = sphi 0, %s47
    %s48 = sphi 0, %s45
    %s49 = sphi 0, %s48
    %s65 = sphi 0, %s49
    %s69 = sphi 0, %s69
    %s71 = sphi 0, %s69
    %s72 = sphi 0, %s71
    %s86 = sphi 0, %s72
    %s92 = sphi 0, %s94
    %s95 = sphi 0, %s92
    %s96 = sphi 0, %s95
    %s112 = sphi 0, %s96
  $region4: #{ema_head_forward.9} parent=0 // loop_header_branch
    %12 = sbr.rel (%p10) target = $region8
  $region5: #{ema_head_forward.9} parent=0 // loop_body
    %s14 = ssub.s32 %s9, 1
    %s15 = ssub.s32 %s9, 2
    %s16 = sadd.s32 %s9, 1
    %s17 = ssub.s32 %s9, %s16
    %p18 = scmp.eq.s32.totalorder %s17, 0
    %s20 = sadd.s32 %s19, 1
    %s21 = scalar_select %p18, %s19, %s20
    %p24 = pneg %p18
    %p25 = scmp.eq.s32.totalorder %s9, 1
    %p26 = por %p24, %p25
    %p27 = scmp.ne.s32.totalorder %s19, %s22
    %p28 = scmp.eq.s32.totalorder %s9, 0
    %p29 = por %p27, %p28
    %p30 = scmp.ne.s32.totalorder %s19, %s22
    %p31 = scmp.eq.s32.totalorder %s14, 1
    %p32 = por %p30, %p31
    %p33 = scmp.ne.s32.totalorder %s22, %s23
    %p34 = scmp.eq.s32.totalorder %s14, 0
    %p35 = por %p33, %p34
    %p36 = scmp.ne.s32.totalorder %s22, %s23
    %p37 = scmp.eq.s32.totalorder %s15, 1
    %p38 = por %p36, %p37
    %p40 = scmp.ne.s32.totalorder %s23, %s39
    %p41 = scmp.eq.s32.totalorder %s15, 0
    %p42 = por %p40, %p41
    %s43 = ssub.s32 %s9, %s16
    %p44 = scmp.eq.s32.totalorder %s43, 0
    %s46 = sadd.s32 %s45, 1
    %s47 = scalar_select %p44, %s45, %s46
    %p50 = pneg %p44
    %p51 = scmp.eq.s32.totalorder %s9, 1
    %p52 = por %p50, %p51
    %p53 = scmp.ne.s32.totalorder %s45, %s48
    %p54 = scmp.eq.s32.totalorder %s9, 0
    %p55 = por %p53, %p54
    %p56 = scmp.ne.s32.totalorder %s45, %s48
    %p57 = scmp.eq.s32.totalorder %s14, 1
    %p58 = por %p56, %p57
    %p59 = scmp.ne.s32.totalorder %s48, %s49
    %p60 = scmp.eq.s32.totalorder %s14, 0
    %p61 = por %p59, %p60
    %p62 = scmp.ne.s32.totalorder %s48, %s49
    %p63 = scmp.eq.s32.totalorder %s15, 1
    %p64 = por %p62, %p63
    %p66 = scmp.ne.s32.totalorder %s49, %s65
    %p67 = scmp.eq.s32.totalorder %s15, 0
    %p68 = por %p66, %p67
    %s70 = sadd.s32 %s69, 1
    %p73 = scmp.eq.s32.totalorder %s9, 1
    %p74 = scmp.ne.s32.totalorder %s69, %s71
    %p75 = scmp.eq.s32.totalorder %s9, 0
    %p76 = por %p74, %p75
    %p77 = scmp.ne.s32.totalorder %s69, %s71
    %p78 = scmp.eq.s32.totalorder %s14, 1
    %p79 = por %p77, %p78
    %p80 = scmp.ne.s32.totalorder %s71, %s72
    %p81 = scmp.eq.s32.totalorder %s14, 0
    %p82 = por %p80, %p81
    %p83 = scmp.ne.s32.totalorder %s71, %s72
    %p84 = scmp.eq.s32.totalorder %s15, 1
    %p85 = por %p83, %p84
    %p87 = scmp.ne.s32.totalorder %s72, %s86
    %p88 = scmp.eq.s32.totalorder %s15, 0
    %p89 = por %p87, %p88
    %s90 = ssub.s32 %s9, %s16
    %p91 = scmp.eq.s32.totalorder %s90, 0
    %s93 = sadd.s32 %s92, 1
    %s94 = scalar_select %p91, %s92, %s93
    %p97 = pneg %p91
    %p98 = scmp.eq.s32.totalorder %s9, 1
    %p99 = por %p97, %p98
    %p100 = scmp.ne.s32.totalorder %s92, %s95
    %p101 = scmp.eq.s32.totalorder %s9, 0
    %p102 = por %p100, %p101
    %p103 = scmp.ne.s32.totalorder %s92, %s95
    %p104 = scmp.eq.s32.totalorder %s14, 1
    %p105 = por %p103, %p104
    %p106 = scmp.ne.s32.totalorder %s95, %s96
    %p107 = scmp.eq.s32.totalorder %s14, 0
    %p108 = por %p106, %p107
    %p109 = scmp.ne.s32.totalorder %s95, %s96
    %p110 = scmp.eq.s32.totalorder %s15, 1
    %p111 = por %p109, %p110
    %p113 = scmp.ne.s32.totalorder %s96, %s112
    %p114 = scmp.eq.s32.totalorder %s15, 0
    %p115 = por %p113, %p114
    %p116 = scmp.le.s32.totalorder 1, %s9
    %p117 = scmp.lt.s32.totalorder %s9, 3
    %p118 = pnand %p116, %p117
    %p119 = pneg %p118
    // Predicated region
    $region9: #{ema_head_forward.9} parent=5 // pred_check
      _
    $region10: #{ema_head_forward.9} parent=5 // pred_check_branch
      %121 = sbr.rel (%p118) target = $region12
    $region11: #{ema_head_forward.9} parent=5 // pred_region
      %s122 = ssub.s32 %s9, 1
      // Predicated region
      $region13: #{ema_head_forward.9} parent=11 // pred_check
        %p123 = pneg %p82
      $region14: #{ema_head_forward.9} parent=11 // pred_check_branch
        %125 = sbr.rel (%p123) target = $region16
      $region15: #{ema_head_forward.9} parent=11 // pred_region
        _
      $region16: #{ema_head_forward.9} parent=11 // pred_fallthru
        _
    $region12: #{ema_head_forward.9} parent=5 // pred_fallthru
      _
    %p126 = scmp.lt.s32.totalorder %s9, 2
    // Predicated region
    $region17: #{ema_head_forward.9} parent=5 // pred_check
      %p127 = pneg %p126
    $region18: #{ema_head_forward.9} parent=5 // pred_check_branch
      %129 = sbr.rel (%p127) target = $region20
    $region19: #{ema_head_forward.9} parent=5 // pred_region
      // Predicated region
      $region21: #{ema_head_forward.9} parent=19 // pred_check
        %p130 = pneg %p29
      $region22: #{ema_head_forward.9} parent=19 // pred_check_branch
        %132 = sbr.rel (%p130) target = $region24
      $region23: #{ema_head_forward.9} parent=19 // pred_region
        %p133 = scmp.lt.s32.totalorder %s9, 1
        %s134 = scalar_select %p133, %s9, 1
        %s135 = smul.addr %s134, 8
        %s136 = smul.addr %s135, 4
        %s137 = scalar_lea.vmem %s0, %s136
      $region24: #{ema_head_forward.9} parent=19 // pred_fallthru
        _
      // Predicated region
      $region25: #{ema_head_forward.9} parent=19 // pred_check
        %p138 = pneg %p55
      $region26: #{ema_head_forward.9} parent=19 // pred_check_branch
        %140 = sbr.rel (%p138) target = $region28
      $region27: #{ema_head_forward.9} parent=19 // pred_region
        %p141 = scmp.lt.s32.totalorder %s9, 1
        %s142 = scalar_select %p141, %s9, 1
        %s143 = smul.addr %s142, 2
        %s144 = smul.addr %s143, 4
        %s145 = scalar_lea.vmem %s1, %s144
      $region28: #{ema_head_forward.9} parent=19 // pred_fallthru
        _
    $region20: #{ema_head_forward.9} parent=5 // pred_fallthru
      _
    %p146 = scmp.le.s32.totalorder 1, %s9
    %p147 = scmp.lt.s32.totalorder %s9, 3
    %p148 = pnand %p146, %p147
    %p149 = pneg %p148
    // Predicated region
    $region29: #{ema_head_forward.9} parent=5 // pred_check
      _
    $region30: #{ema_head_forward.9} parent=5 // pred_check_branch
      %151 = sbr.rel (%p148) target = $region32
    $region31: #{ema_head_forward.9} parent=5 // pred_region
      %s152 = ssub.s32 %s9, 1
      %p153 = scmp.lt.s32.totalorder %s14, 1
      %s154 = scalar_select %p153, %s14, 1
      %s155 = smul.addr %s154, 8
      %s156 = smul.addr %s155, 4
      %s157 = scalar_lea.vmem %s0, %s156
      %p158 = pneg %p35
      %p159 = pneg %p32
      %p160 = scmp.lt.s32.totalorder %s14, 1
      %s161 = scalar_select %p160, %s14, 1
      %s162 = smul.addr %s161, 2
      %s163 = smul.addr %s162, 4
      %s164 = scalar_lea.vmem %s1, %s163
      %p165 = pneg %p61
      %p166 = pneg %p58
      %p167 = pneg %p82
      %p168 = pneg %p79
      %p169 = pneg %p108
      %p170 = pneg %p105
      %p171 = scmp.lt.s32.totalorder %s14, 1
      %s172 = scalar_select %p171, %s14, 1
      %s173 = smul.addr %s172, 8
      %s174 = smul.addr %s173, 4
      %s175 = scalar_lea.vmem %s3, %s174
      %p176 = scmp.lt.s32.totalorder %s14, 1
      %s177 = scalar_select %p176, %s14, 1
      %s178 = smul.addr %s177, 8
      %s179 = smul.addr %s178, 4
      %s180 = scalar_lea.vmem %s0, %s179
      %p181 = scmp.lt.s32.totalorder %s14, 1
      %s182 = scalar_select %p181, %s14, 1
      %s183 = smul.addr %s182, 2
      %s184 = smul.addr %s183, 4
      %s185 = scalar_lea.vmem %s1, %s184
      %p186 = scmp.lt.s32.totalorder %s14, 1
      %s187 = scalar_select %p186, %s14, 1
      %s188 = smul.addr %s187, 8
      %s189 = smul.addr %s188, 4
      %s190 = scalar_lea.vmem %s3, %s189
      %v192 = vld [vmem:[%s180] sm:$0xf]
      %v193 = vld [vmem:[%s180 + $0x4] sm:$0xf]
      %v194 = vld [vmem:[%s180 + $0x8] sm:$0xf]
      %v195 = vld [vmem:[%s180 + $0xc] sm:$0xf]
      %v196 = vld [vmem:[%s180 + $0x10] sm:$0xf]
      %v197 = vld [vmem:[%s180 + $0x14] sm:$0xf]
      %v198 = vld [vmem:[%s180 + $0x18] sm:$0xf]
      %v199 = vld [vmem:[%s180 + $0x1c] sm:$0xf]
      %v200 = vld [vmem:[%s185] sm:$0xf]
      %v201 = vld [vmem:[%s185 + $0x4] sm:$0xf]
      %v202 = vld [vmem:[%s2] sm:$0xf]
      %v203 = vld [vmem:[%s2 + $0x4] sm:$0xf]
      %v204 = vlaneseq
      %v205 = vand.u32 %v204, 127
      %vm206 = vcmp.lt.s32.totalorder %v205, 8
      %v215 = vunpack.c.l.b16 %v192
      %v216 = vunpack.c.l.b16 %v193
      %v217 = vunpack.c.l.b16 %v194
      %v218 = vunpack.c.l.b16 %v195
      %v219 = vunpack.c.l.b16 %v196
      %v220 = vunpack.c.l.b16 %v197
      %v221 = vunpack.c.l.b16 %v198
      %v222 = vunpack.c.l.b16 %v199
      %v223 = vpack.c.b16 %v216, %v215
      %v224 = vpack.c.b16 %v218, %v217
      %v225 = vpack.c.b16 %v220, %v219
      %v226 = vpack.c.b16 %v222, %v221
      %v229 = vunpack.c.l.b16 %v202
      %v230 = vunpack.c.l.b16 %v203
      %v231 = vpack.c.b16 %v230, %v229
      %vm233 = vcmask 130048
      %v235 = vsel %vm233, %v223, 0
      %v238 = vsel %vm233, %v224, 0
      %v241 = vsel %vm233, %v225, 0
      %v244 = vsel %vm233, %v226, 0
      %246 = vmatprep.subr.bf16.mxu0 0
      %247 = vmatpush1.bf16.msra.mxu0 %v231
      %248 = vmatprep.subr.bf16.mxu0 0
      %249 = vmatpush1.bf16.msra.mxu0 0
      %250 = vmatprep.subr.bf16.mxu0 0
      %251 = vmatpush1.bf16.msra.mxu0 0
      %252 = vmatprep.subr.bf16.mxu0 0
      %253 = vmatpush1.bf16.msra.mxu0 0
      %254 = vmatprep.subr.bf16.mxu0 0
      %255 = vmatpush1.bf16.msra.mxu0 0
      %256 = vmatprep.subr.bf16.mxu0 0
      %257 = vmatpush1.bf16.msra.mxu0 0
      %258 = vmatprep.subr.bf16.mxu0 0
      %259 = vmatpush1.bf16.msra.mxu0 0
      %260 = vmatprep.subr.bf16.mxu0 0
      %261 = vmatpush1.bf16.msra.mxu0 0
      %262 = vmatprep.subr.bf16.mxu0 0
      %263 = vmatpush1.bf16.msra.mxu0 0
      %264 = vmatprep.subr.bf16.mxu0 0
      %265 = vmatpush1.bf16.msra.mxu0 0
      %266 = vmatprep.subr.bf16.mxu0 0
      %267 = vmatpush1.bf16.msra.mxu0 0
      %268 = vmatprep.subr.bf16.mxu0 0
      %269 = vmatpush1.bf16.msra.mxu0 0
      %270 = vmatprep.subr.bf16.mxu0 0
      %271 = vmatpush1.bf16.msra.mxu0 0
      %272 = vmatprep.subr.bf16.mxu0 0
      %273 = vmatpush1.bf16.msra.mxu0 0
      %274 = vmatprep.subr.bf16.mxu0 0
      %275 = vmatpush1.bf16.msra.mxu0 0
      %276 = vmatprep.subr.bf16.mxu0 0
      %277 = vmatpush1.bf16.msra.mxu0 0
      %278 = vmatprep.mubr.bf16.mxu0 0
      %279 = vmatmul.mubr.bf16.gmra.mrb[0].mxu0 %v235
      %v280 = vpop.f32.mrb[0].mxu0
      %v281 = vadd.f32 0.0, %v280
      %v282 = vpop.f32.mrb[0].mxu0
      %v283 = vpop.f32.mrb[0].mxu0
      %v284 = vadd.f32 0.0, %v283
      %v285 = vpop.f32.mrb[0].mxu0
      %286 = vmatprep.mubr.bf16.mxu0 0
      %287 = vmatmul.mubr.bf16.gmra.mrb[0].mxu0 %v238
      %v288 = vpop.f32.mrb[0].mxu0
      %v289 = vadd.f32 0.0, %v288
      %v290 = vpop.f32.mrb[0].mxu0
      %v291 = vpop.f32.mrb[0].mxu0
      %v292 = vadd.f32 0.0, %v291
      %v293 = vpop.f32.mrb[0].mxu0
      %294 = vmatprep.mubr.bf16.mxu0 0
      %295 = vmatmul.mubr.bf16.gmra.mrb[0].mxu0 %v241
      %v296 = vpop.f32.mrb[0].mxu0
      %v297 = vadd.f32 0.0, %v296
      %v298 = vpop.f32.mrb[0].mxu0
      %v299 = vpop.f32.mrb[0].mxu0
      %v300 = vadd.f32 0.0, %v299
      %v301 = vpop.f32.mrb[0].mxu0
      %302 = vmatprep.mubr.bf16.mxu0 0
      %303 = vmatmul.mubr.bf16.gmra.mrb[0].mxu0 %v244
      %v304 = vpop.f32.mrb[0].mxu0
      %v305 = vadd.f32 0.0, %v304
      %v306 = vpop.f32.mrb[0].mxu0
      %v307 = vpop.f32.mrb[0].mxu0
      %v308 = vadd.f32 0.0, %v307
      %v309 = vpop.f32.mrb[0].mxu0
      %310 = vdwg.mxu0
      %v311 = vsel %vm206, 1, 0
      %vm312 = vcmp.eq.s32.totalorder %v311, 1
      %v313 = vsel %vm312, %v281, -1e+30
      %v314 = vsel %vm312, %v284, -1e+30
      %v315 = vsel %vm312, %v289, -1e+30
      %v316 = vsel %vm312, %v292, -1e+30
      %v317 = vsel %vm312, %v297, -1e+30
      %v318 = vsel %vm312, %v300, -1e+30
      %v319 = vsel %vm312, %v305, -1e+30
      %v320 = vsel %vm312, %v308, -1e+30
      %321 = vmax.xlane.f32.xlu0 %v313
      %v322 = vpop.xlane.xlu0 %321
      %323 = vmax.xlane.f32.xlu0 %v314
      %v324 = vpop.xlane.xlu0 %323
      %325 = vmax.xlane.f32.xlu0 %v315
      %v326 = vpop.xlane.xlu0 %325
      %327 = vmax.xlane.f32.xlu0 %v316
      %v328 = vpop.xlane.xlu0 %327
      %329 = vmax.xlane.f32.xlu0 %v317
      %v330 = vpop.xlane.xlu0 %329
      %331 = vmax.xlane.f32.xlu0 %v318
      %v332 = vpop.xlane.xlu0 %331
      %333 = vmax.xlane.f32.xlu0 %v319
      %v334 = vpop.xlane.xlu0 %333
      %335 = vmax.xlane.f32.xlu0 %v320
      %v336 = vpop.xlane.xlu0 %335
      %v337 = vsub.f32 %v313, %v322
      %v338 = vsub.f32 %v314, %v324
      %v339 = vsub.f32 %v315, %v326
      %v340 = vsub.f32 %v316, %v328
      %v341 = vsub.f32 %v317, %v330
      %v342 = vsub.f32 %v318, %v332
      %v343 = vsub.f32 %v319, %v334
      %v344 = vsub.f32 %v320, %v336
      %v345 = vmul.f32 %v337, 1.442695
      %v346 = vpow.pop %v345
      %v347 = vmul.f32 %v338, 1.442695
      %v348 = vpow.pop %v347
      %v349 = vmul.f32 %v339, 1.442695
      %v350 = vpow.pop %v349
      %v351 = vmul.f32 %v340, 1.442695
      %v352 = vpow.pop %v351
      %v353 = vmul.f32 %v341, 1.442695
      %v354 = vpow.pop %v353
      %v355 = vmul.f32 %v342, 1.442695
      %v356 = vpow.pop %v355
      %v357 = vmul.f32 %v343, 1.442695
      %v358 = vpow.pop %v357
      %v359 = vmul.f32 %v344, 1.442695
      %v360 = vpow.pop %v359
      %361 = vadd.xlane.f32.xlu0 %v346
      %v362 = vpop.xlane.xlu0 %361
      %363 = vadd.xlane.f32.xlu0 %v348
      %v364 = vpop.xlane.xlu0 %363
      %365 = vadd.xlane.f32.xlu0 %v350
      %v366 = vpop.xlane.xlu0 %365
      %367 = vadd.xlane.f32.xlu0 %v352
      %v368 = vpop.xlane.xlu0 %367
      %369 = vadd.xlane.f32.xlu0 %v354
      %v370 = vpop.xlane.xlu0 %369
      %371 = vadd.xlane.f32.xlu0 %v356
      %v372 = vpop.xlane.xlu0 %371
      %373 = vadd.xlane.f32.xlu0 %v358
      %v374 = vpop.xlane.xlu0 %373
      %375 = vadd.xlane.f32.xlu0 %v360
      %v376 = vpop.xlane.xlu0 %375
      %v377 = vrcp.pop %v362
      %v378 = vrcp.pop %v364
      %v379 = vrcp.pop %v366
      %v380 = vrcp.pop %v368
      %v381 = vrcp.pop %v370
      %v382 = vrcp.pop %v372
      %v383 = vrcp.pop %v374
      %v384 = vrcp.pop %v376
      %v385 = vmul.f32 %v346, %v377
      %v386 = vmul.f32 %v348, %v378
      %v387 = vmul.f32 %v350, %v379
      %v388 = vmul.f32 %v352, %v380
      %v389 = vmul.f32 %v354, %v381
      %v390 = vmul.f32 %v356, %v382
      %v391 = vmul.f32 %v358, %v383
      %v392 = vmul.f32 %v360, %v384
      %v393 = vadd.f32 %v385, %v386
      %v394 = vadd.f32 %v393, %v387
      %v395 = vadd.f32 %v394, %v388
      %v396 = vadd.f32 %v395, %v389
      %v397 = vadd.f32 %v396, %v390
      %v398 = vadd.f32 %v397, %v391
      %v399 = vadd.f32 %v398, %v392
      %v400 = vrot.slane %v399, 4
      %v401 = vadd.f32 %v399, %v400
      %v402 = vrot.slane %v401, 2
      %v403 = vadd.f32 %v401, %v402
      %v404 = vrot.slane %v403, 1
      %v405 = vadd.f32 %v403, %v404
      %v406 = vadd.f32 %v405, 1e-06
      %v407 = vrcp.pop %v406
      %v408 = vmul.f32 %v385, %v407
      %v409 = vmul.f32 %v386, %v407
      %v410 = vmul.f32 %v387, %v407
      %v411 = vmul.f32 %v388, %v407
      %v412 = vmul.f32 %v389, %v407
      %v413 = vmul.f32 %v390, %v407
      %v414 = vmul.f32 %v391, %v407
      %v415 = vmul.f32 %v392, %v407
      %v416 = vpack.c.bf16 %v409, %v408
      %v417 = vpack.c.bf16 %v411, %v410
      %v418 = vpack.c.bf16 %v413, %v412
      %v419 = vpack.c.bf16 %v415, %v414
      %v422 = vunpack.c.l.b16 %v200
      %v423 = vunpack.c.l.b16 %v201
      %v424 = vpack.c.b16 %v423, %v422
      %vm425 = vcmask 523264
      %v427 = vsel %vm425, %v424, 0
      %429 = vmatprep.subr.bf16.mxu0 0
      %430 = vmatpush1.bf16.msra.mxu0 %v416
      %431 = vmatprep.subr.bf16.mxu0 0
      %432 = vmatpush1.bf16.msra.mxu0 %v417
      %433 = vmatprep.subr.bf16.mxu0 0
      %434 = vmatpush1.bf16.msra.mxu0 %v418
      %435 = vmatprep.subr.bf16.mxu0 0
      %436 = vmatpush1.bf16.msra.mxu0 %v419
      %437 = vmatprep.subr.bf16.mxu0 0
      %438 = vmatpush1.bf16.msra.mxu0 0
      %439 = vmatprep.subr.bf16.mxu0 0
      %440 = vmatpush1.bf16.msra.mxu0 0
      %441 = vmatprep.subr.bf16.mxu0 0
      %442 = vmatpush1.bf16.msra.mxu0 0
      %443 = vmatprep.subr.bf16.mxu0 0
      %444 = vmatpush1.bf16.msra.mxu0 0
      %445 = vmatprep.subr.bf16.mxu0 0
      %446 = vmatpush1.bf16.msra.mxu0 0
      %447 = vmatprep.subr.bf16.mxu0 0
      %448 = vmatpush1.bf16.msra.mxu0 0
      %449 = vmatprep.subr.bf16.mxu0 0
      %450 = vmatpush1.bf16.msra.mxu0 0
      %451 = vmatprep.subr.bf16.mxu0 0
      %452 = vmatpush1.bf16.msra.mxu0 0
      %453 = vmatprep.subr.bf16.mxu0 0
      %454 = vmatpush1.bf16.msra.mxu0 0
      %455 = vmatprep.subr.bf16.mxu0 0
      %456 = vmatpush1.bf16.msra.mxu0 0
      %457 = vmatprep.subr.bf16.mxu0 0
      %458 = vmatpush1.bf16.msra.mxu0 0
      %459 = vmatprep.subr.bf16.mxu0 0
      %460 = vmatpush1.bf16.msra.mxu0 0
      %461 = vmatprep.mubr.bf16.mxu0 0
      %462 = vmatmul.mubr.bf16.gmra.mrb[0].mxu0 %v427
      %v463 = vpop.f32.mrb[0].mxu0
      %v464 = vadd.f32 0.0, %v463
      %v465 = vpop.f32.mrb[0].mxu0
      %v466 = vpop.f32.mrb[0].mxu0
      %v467 = vadd.f32 0.0, %v466
      %v468 = vpop.f32.mrb[0].mxu0
      %469 = vdwg.mxu0
      %v470 = vmul.f32 %v464, %v464
      %v471 = vmul.f32 %v467, %v467
      %v472 = vadd.f32 %v470, %v471
      %v473 = vrot.slane %v472, 4
      %v474 = vadd.f32 %v472, %v473
      %v475 = vrot.slane %v474, 2
      %v476 = vadd.f32 %v474, %v475
      %v477 = vrot.slane %v476, 1
      %v478 = vadd.f32 %v476, %v477
      %v479 = vadd.f32 %v478, 1e-12
      %v480 = vrsqrt.pop %v479
      %v481 = vmul.f32 %v464, %v480
      %v482 = vmul.f32 %v467, %v480
      %v483 = vpack.c.bf16 %v482, %v481
      %484 = vmatprep.subr.bf16.mxu0 0
      %485 = vmatpush1.bf16.msra.mxu0 %v483
      %486 = vmatprep.subr.bf16.mxu0 0
      %487 = vmatpush1.bf16.msra.mxu0 0
      %488 = vmatprep.subr.bf16.mxu0 0
      %489 = vmatpush1.bf16.msra.mxu0 0
      %490 = vmatprep.subr.bf16.mxu0 0
      %491 = vmatpush1.bf16.msra.mxu0 0
      %492 = vmatprep.subr.bf16.mxu0 0
      %493 = vmatpush1.bf16.msra.mxu0 0
      %494 = vmatprep.subr.bf16.mxu0 0
      %495 = vmatpush1.bf16.msra.mxu0 0
      %496 = vmatprep.subr.bf16.mxu0 0
      %497 = vmatpush1.bf16.msra.mxu0 0
      %498 = vmatprep.subr.bf16.mxu0 0
      %499 = vmatpush1.bf16.msra.mxu0 0
      %500 = vmatprep.subr.bf16.mxu0 0
      %501 = vmatpush1.bf16.msra.mxu0 0
      %502 = vmatprep.subr.bf16.mxu0 0
      %503 = vmatpush1.bf16.msra.mxu0 0
      %504 = vmatprep.subr.bf16.mxu0 0
      %505 = vmatpush1.bf16.msra.mxu0 0
      %506 = vmatprep.subr.bf16.mxu0 0
      %507 = vmatpush1.bf16.msra.mxu0 0
      %508 = vmatprep.subr.bf16.mxu0 0
      %509 = vmatpush1.bf16.msra.mxu0 0
      %510 = vmatprep.subr.bf16.mxu0 0
      %511 = vmatpush1.bf16.msra.mxu0 0
      %512 = vmatprep.subr.bf16.mxu0 0
      %513 = vmatpush1.bf16.msra.mxu0 0
      %514 = vmatprep.subr.bf16.mxu0 0
      %515 = vmatpush1.bf16.msra.mxu0 0
      %516 = vmatprep.mubr.bf16.mxu0 0
      %517 = vmatmul.mubr.bf16.gmra.mrb[0].mxu0 %v235
      %v518 = vpop.f32.mrb[0].mxu0
      %v519 = vadd.f32 0.0, %v518
      %v520 = vpop.f32.mrb[0].mxu0
      %v521 = vpop.f32.mrb[0].mxu0
      %v522 = vadd.f32 0.0, %v521
      %v523 = vpop.f32.mrb[0].mxu0
      %524 = vmatprep.mubr.bf16.mxu0 0
      %525 = vmatmul.mubr.bf16.gmra.mrb[0].mxu0 %v238
      %v526 = vpop.f32.mrb[0].mxu0
      %v527 = vadd.f32 0.0, %v526
      %v528 = vpop.f32.mrb[0].mxu0
      %v529 = vpop.f32.mrb[0].mxu0
      %v530 = vadd.f32 0.0, %v529
      %v531 = vpop.f32.mrb[0].mxu0
      %532 = vmatprep.mubr.bf16.mxu0 0
      %533 = vmatmul.mubr.bf16.gmra.mrb[0].mxu0 %v241
      %v534 = vpop.f32.mrb[0].mxu0
      %v535 = vadd.f32 0.0, %v534
      %v536 = vpop.f32.mrb[0].mxu0
      %v537 = vpop.f32.mrb[0].mxu0
      %v538 = vadd.f32 0.0, %v537
      %v539 = vpop.f32.mrb[0].mxu0
      %540 = vmatprep.mubr.bf16.mxu0 0
      %541 = vmatmul.mubr.bf16.gmra.mrb[0].mxu0 %v244
      %v542 = vpop.f32.mrb[0].mxu0
      %v543 = vadd.f32 0.0, %v542
      %v544 = vpop.f32.mrb[0].mxu0
      %v545 = vpop.f32.mrb[0].mxu0
      %v546 = vadd.f32 0.0, %v545
      %v547 = vpop.f32.mrb[0].mxu0
      %548 = vdwg.mxu0
      %v549 = vsel %vm312, %v519, -1e+30
      %v550 = vsel %vm312, %v522, -1e+30
      %v551 = vsel %vm312, %v527, -1e+30
      %v552 = vsel %vm312, %v530, -1e+30
      %v553 = vsel %vm312, %v535, -1e+30
      %v554 = vsel %vm312, %v538, -1e+30
      %v555 = vsel %vm312, %v543, -1e+30
      %v556 = vsel %vm312, %v546, -1e+30
      %557 = vmax.xlane.f32.xlu0 %v549
      %v558 = vpop.xlane.xlu0 %557
      %559 = vmax.xlane.f32.xlu0 %v550
      %v560 = vpop.xlane.xlu0 %559
      %561 = vmax.xlane.f32.xlu0 %v551
      %v562 = vpop.xlane.xlu0 %561
      %563 = vmax.xlane.f32.xlu0 %v552
      %v564 = vpop.xlane.xlu0 %563
      %565 = vmax.xlane.f32.xlu0 %v553
      %v566 = vpop.xlane.xlu0 %565
      %567 = vmax.xlane.f32.xlu0 %v554
      %v568 = vpop.xlane.xlu0 %567
      %569 = vmax.xlane.f32.xlu0 %v555
      %v570 = vpop.xlane.xlu0 %569
      %571 = vmax.xlane.f32.xlu0 %v556
      %v572 = vpop.xlane.xlu0 %571
      %v573 = vsub.f32 %v549, %v558
      %v574 = vsub.f32 %v550, %v560
      %v575 = vsub.f32 %v551, %v562
      %v576 = vsub.f32 %v552, %v564
      %v577 = vsub.f32 %v553, %v566
      %v578 = vsub.f32 %v554, %v568
      %v579 = vsub.f32 %v555, %v570
      %v580 = vsub.f32 %v556, %v572
      %v581 = vmul.f32 %v573, 1.442695
      %v582 = vpow.pop %v581
      %v583 = vmul.f32 %v574, 1.442695
      %v584 = vpow.pop %v583
      %v585 = vmul.f32 %v575, 1.442695
      %v586 = vpow.pop %v585
      %v587 = vmul.f32 %v576, 1.442695
      %v588 = vpow.pop %v587
      %v589 = vmul.f32 %v577, 1.442695
      %v590 = vpow.pop %v589
      %v591 = vmul.f32 %v578, 1.442695
      %v592 = vpow.pop %v591
      %v593 = vmul.f32 %v579, 1.442695
      %v594 = vpow.pop %v593
      %v595 = vmul.f32 %v580, 1.442695
      %v596 = vpow.pop %v595
      %597 = vadd.xlane.f32.xlu0 %v582
      %v598 = vpop.xlane.xlu0 %597
      %599 = vadd.xlane.f32.xlu0 %v584
      %v600 = vpop.xlane.xlu0 %599
      %601 = vadd.xlane.f32.xlu0 %v586
      %v602 = vpop.xlane.xlu0 %601
      %603 = vadd.xlane.f32.xlu0 %v588
      %v604 = vpop.xlane.xlu0 %603
      %605 = vadd.xlane.f32.xlu0 %v590
      %v606 = vpop.xlane.xlu0 %605
      %607 = vadd.xlane.f32.xlu0 %v592
      %v608 = vpop.xlane.xlu0 %607
      %609 = vadd.xlane.f32.xlu0 %v594
      %v610 = vpop.xlane.xlu0 %609
      %611 = vadd.xlane.f32.xlu0 %v596
      %v612 = vpop.xlane.xlu0 %611
      %v613 = vrcp.pop %v598
      %v614 = vrcp.pop %v600
      %v615 = vrcp.pop %v602
      %v616 = vrcp.pop %v604
      %v617 = vrcp.pop %v606
      %v618 = vrcp.pop %v608
      %v619 = vrcp.pop %v610
      %v620 = vrcp.pop %v612
      %v621 = vmul.f32 %v582, %v613
      %v622 = vmul.f32 %v584, %v614
      %v623 = vmul.f32 %v586, %v615
      %v624 = vmul.f32 %v588, %v616
      %v625 = vmul.f32 %v590, %v617
      %v626 = vmul.f32 %v592, %v618
      %v627 = vmul.f32 %v594, %v619
      %v628 = vmul.f32 %v596, %v620
      %v629 = vadd.f32 %v621, %v622
      %v630 = vadd.f32 %v629, %v623
      %v631 = vadd.f32 %v630, %v624
      %v632 = vadd.f32 %v631, %v625
      %v633 = vadd.f32 %v632, %v626
      %v634 = vadd.f32 %v633, %v627
      %v635 = vadd.f32 %v634, %v628
      %v636 = vrot.slane %v635, 4
      %v637 = vadd.f32 %v635, %v636
      %v638 = vrot.slane %v637, 2
      %v639 = vadd.f32 %v637, %v638
      %v640 = vrot.slane %v639, 1
      %v641 = vadd.f32 %v639, %v640
      %v642 = vadd.f32 %v641, 1e-06
      %v643 = vrcp.pop %v642
      %v644 = vmul.f32 %v621, %v643
      %v645 = vmul.f32 %v622, %v643
      %v646 = vmul.f32 %v623, %v643
      %v647 = vmul.f32 %v624, %v643
      %v648 = vmul.f32 %v625, %v643
      %v649 = vmul.f32 %v626, %v643
      %v650 = vmul.f32 %v627, %v643
      %v651 = vmul.f32 %v628, %v643
      %v652 = vpack.c.bf16 %v645, %v644
      %v653 = vpack.c.bf16 %v647, %v646
      %v654 = vpack.c.bf16 %v649, %v648
      %v655 = vpack.c.bf16 %v651, %v650
      %656 = vmatprep.subr.bf16.mxu0 0
      %657 = vmatpush1.bf16.msra.mxu0 %v652
      %658 = vmatprep.subr.bf16.mxu0 0
      %659 = vmatpush1.bf16.msra.mxu0 %v653
      %660 = vmatprep.subr.bf16.mxu0 0
      %661 = vmatpush1.bf16.msra.mxu0 %v654
      %662 = vmatprep.subr.bf16.mxu0 0
      %663 = vmatpush1.bf16.msra.mxu0 %v655
      %664 = vmatprep.subr.bf16.mxu0 0
      %665 = vmatpush1.bf16.msra.mxu0 0
      %666 = vmatprep.subr.bf16.mxu0 0
      %667 = vmatpush1.bf16.msra.mxu0 0
      %668 = vmatprep.subr.bf16.mxu0 0
      %669 = vmatpush1.bf16.msra.mxu0 0
      %670 = vmatprep.subr.bf16.mxu0 0
      %671 = vmatpush1.bf16.msra.mxu0 0
      %672 = vmatprep.subr.bf16.mxu0 0
      %673 = vmatpush1.bf16.msra.mxu0 0
      %674 = vmatprep.subr.bf16.mxu0 0
      %675 = vmatpush1.bf16.msra.mxu0 0
      %676 = vmatprep.subr.bf16.mxu0 0
      %677 = vmatpush1.bf16.msra.mxu0 0
      %678 = vmatprep.subr.bf16.mxu0 0
      %679 = vmatpush1.bf16.msra.mxu0 0
      %680 = vmatprep.subr.bf16.mxu0 0
      %681 = vmatpush1.bf16.msra.mxu0 0
      %682 = vmatprep.subr.bf16.mxu0 0
      %683 = vmatpush1.bf16.msra.mxu0 0
      %684 = vmatprep.subr.bf16.mxu0 0
      %685 = vmatpush1.bf16.msra.mxu0 0
      %686 = vmatprep.subr.bf16.mxu0 0
      %687 = vmatpush1.bf16.msra.mxu0 0
      %688 = vmatprep.mubr.bf16.mxu0 0
      %689 = vmatmul.mubr.bf16.gmra.mrb[0].mxu0 %v427
      %v690 = vpop.f32.mrb[0].mxu0
      %v691 = vadd.f32 0.0, %v690
      %v692 = vpop.f32.mrb[0].mxu0
      %v693 = vpop.f32.mrb[0].mxu0
      %v694 = vadd.f32 0.0, %v693
      %v695 = vpop.f32.mrb[0].mxu0
      %696 = vdwg.mxu0
      %v697 = vmul.f32 %v691, %v691
      %v698 = vmul.f32 %v694, %v694
      %v699 = vadd.f32 %v697, %v698
      %v700 = vrot.slane %v699, 4
      %v701 = vadd.f32 %v699, %v700
      %v702 = vrot.slane %v701, 2
      %v703 = vadd.f32 %v701, %v702
      %v704 = vrot.slane %v703, 1
      %v705 = vadd.f32 %v703, %v704
      %v706 = vadd.f32 %v705, 1e-12
      %v707 = vrsqrt.pop %v706
      %v708 = vmul.f32 %v691, %v707
      %v709 = vmul.f32 %v694, %v707
      %v710 = vpack.c.bf16 %v709, %v708
      %711 = vmatprep.subr.bf16.mxu0 0
      %712 = vmatpush1.bf16.msra.mxu0 %v710
      %713 = vmatprep.subr.bf16.mxu0 0
      %714 = vmatpush1.bf16.msra.mxu0 0
      %715 = vmatprep.subr.bf16.mxu0 0
      %716 = vmatpush1.bf16.msra.mxu0 0
      %717 = vmatprep.subr.bf16.mxu0 0
      %718 = vmatpush1.bf16.msra.mxu0 0
      %719 = vmatprep.subr.bf16.mxu0 0
      %720 = vmatpush1.bf16.msra.mxu0 0
      %721 = vmatprep.subr.bf16.mxu0 0
      %722 = vmatpush1.bf16.msra.mxu0 0
      %723 = vmatprep.subr.bf16.mxu0 0
      %724 = vmatpush1.bf16.msra.mxu0 0
      %725 = vmatprep.subr.bf16.mxu0 0
      %726 = vmatpush1.bf16.msra.mxu0 0
      %727 = vmatprep.subr.bf16.mxu0 0
      %728 = vmatpush1.bf16.msra.mxu0 0
      %729 = vmatprep.subr.bf16.mxu0 0
      %730 = vmatpush1.bf16.msra.mxu0 0
      %731 = vmatprep.subr.bf16.mxu0 0
      %732 = vmatpush1.bf16.msra.mxu0 0
      %733 = vmatprep.subr.bf16.mxu0 0
      %734 = vmatpush1.bf16.msra.mxu0 0
      %735 = vmatprep.subr.bf16.mxu0 0
      %736 = vmatpush1.bf16.msra.mxu0 0
      %737 = vmatprep.subr.bf16.mxu0 0
      %738 = vmatpush1.bf16.msra.mxu0 0
      %739 = vmatprep.subr.bf16.mxu0 0
      %740 = vmatpush1.bf16.msra.mxu0 0
      %741 = vmatprep.subr.bf16.mxu0 0
      %742 = vmatpush1.bf16.msra.mxu0 0
      %743 = vmatprep.mubr.bf16.mxu0 0
      %744 = vmatmul.mubr.bf16.gmra.mrb[0].mxu0 %v235
      %v745 = vpop.f32.mrb[0].mxu0
      %v746 = vadd.f32 0.0, %v745
      %v747 = vpop.f32.mrb[0].mxu0
      %v748 = vpop.f32.mrb[0].mxu0
      %v749 = vadd.f32 0.0, %v748
      %v750 = vpop.f32.mrb[0].mxu0
      %751 = vmatprep.mubr.bf16.mxu0 0
      %752 = vmatmul.mubr.bf16.gmra.mrb[0].mxu0 %v238
      %v753 = vpop.f32.mrb[0].mxu0
      %v754 = vadd.f32 0.0, %v753
      %v755 = vpop.f32.mrb[0].mxu0
      %v756 = vpop.f32.mrb[0].mxu0
      %v757 = vadd.f32 0.0, %v756
      %v758 = vpop.f32.mrb[0].mxu0
      %759 = vmatprep.mubr.bf16.mxu0 0
      %760 = vmatmul.mubr.bf16.gmra.mrb[0].mxu0 %v241
      %v761 = vpop.f32.mrb[0].mxu0
      %v762 = vadd.f32 0.0, %v761
      %v763 = vpop.f32.mrb[0].mxu0
      %v764 = vpop.f32.mrb[0].mxu0
      %v765 = vadd.f32 0.0, %v764
      %v766 = vpop.f32.mrb[0].mxu0
      %767 = vmatprep.mubr.bf16.mxu0 0
      %768 = vmatmul.mubr.bf16.gmra.mrb[0].mxu0 %v244
      %v769 = vpop.f32.mrb[0].mxu0
      %v770 = vadd.f32 0.0, %v769
      %v771 = vpop.f32.mrb[0].mxu0
      %v772 = vpop.f32.mrb[0].mxu0
      %v773 = vadd.f32 0.0, %v772
      %v774 = vpop.f32.mrb[0].mxu0
      %775 = vdwg.mxu0
      %v776 = vsel %vm312, %v746, -1e+30
      %v777 = vsel %vm312, %v749, -1e+30
      %v778 = vsel %vm312, %v754, -1e+30
      %v779 = vsel %vm312, %v757, -1e+30
      %v780 = vsel %vm312, %v762, -1e+30
      %v781 = vsel %vm312, %v765, -1e+30
      %v782 = vsel %vm312, %v770, -1e+30
      %v783 = vsel %vm312, %v773, -1e+30
      %784 = vmax.xlane.f32.xlu0 %v776
      %v785 = vpop.xlane.xlu0 %784
      %786 = vmax.xlane.f32.xlu0 %v777
      %v787 = vpop.xlane.xlu0 %786
      %788 = vmax.xlane.f32.xlu0 %v778
      %v789 = vpop.xlane.xlu0 %788
      %790 = vmax.xlane.f32.xlu0 %v779
      %v791 = vpop.xlane.xlu0 %790
      %792 = vmax.xlane.f32.xlu0 %v780
      %v793 = vpop.xlane.xlu0 %792
      %794 = vmax.xlane.f32.xlu0 %v781
      %v795 = vpop.xlane.xlu0 %794
      %796 = vmax.xlane.f32.xlu0 %v782
      %v797 = vpop.xlane.xlu0 %796
      %798 = vmax.xlane.f32.xlu0 %v783
      %v799 = vpop.xlane.xlu0 %798
      %v800 = vsub.f32 %v776, %v785
      %v801 = vsub.f32 %v777, %v787
      %v802 = vsub.f32 %v778, %v789
      %v803 = vsub.f32 %v779, %v791
      %v804 = vsub.f32 %v780, %v793
      %v805 = vsub.f32 %v781, %v795
      %v806 = vsub.f32 %v782, %v797
      %v807 = vsub.f32 %v783, %v799
      %v808 = vmul.f32 %v800, 1.442695
      %v809 = vpow.pop %v808
      %v810 = vmul.f32 %v801, 1.442695
      %v811 = vpow.pop %v810
      %v812 = vmul.f32 %v802, 1.442695
      %v813 = vpow.pop %v812
      %v814 = vmul.f32 %v803, 1.442695
      %v815 = vpow.pop %v814
      %v816 = vmul.f32 %v804, 1.442695
      %v817 = vpow.pop %v816
      %v818 = vmul.f32 %v805, 1.442695
      %v819 = vpow.pop %v818
      %v820 = vmul.f32 %v806, 1.442695
      %v821 = vpow.pop %v820
      %v822 = vmul.f32 %v807, 1.442695
      %v823 = vpow.pop %v822
      %824 = vadd.xlane.f32.xlu0 %v809
      %v825 = vpop.xlane.xlu0 %824
      %826 = vadd.xlane.f32.xlu0 %v811
      %v827 = vpop.xlane.xlu0 %826
      %828 = vadd.xlane.f32.xlu0 %v813
      %v829 = vpop.xlane.xlu0 %828
      %830 = vadd.xlane.f32.xlu0 %v815
      %v831 = vpop.xlane.xlu0 %830
      %832 = vadd.xlane.f32.xlu0 %v817
      %v833 = vpop.xlane.xlu0 %832
      %834 = vadd.xlane.f32.xlu0 %v819
      %v835 = vpop.xlane.xlu0 %834
      %836 = vadd.xlane.f32.xlu0 %v821
      %v837 = vpop.xlane.xlu0 %836
      %838 = vadd.xlane.f32.xlu0 %v823
      %v839 = vpop.xlane.xlu0 %838
      %v840 = vrcp.pop %v825
      %v841 = vrcp.pop %v827
      %v842 = vrcp.pop %v829
      %v843 = vrcp.pop %v831
      %v844 = vrcp.pop %v833
      %v845 = vrcp.pop %v835
      %v846 = vrcp.pop %v837
      %v847 = vrcp.pop %v839
      %v848 = vmul.f32 %v809, %v840
      %v849 = vmul.f32 %v811, %v841
      %v850 = vmul.f32 %v813, %v842
      %v851 = vmul.f32 %v815, %v843
      %v852 = vmul.f32 %v817, %v844
      %v853 = vmul.f32 %v819, %v845
      %v854 = vmul.f32 %v821, %v846
      %v855 = vmul.f32 %v823, %v847
      %v856 = vadd.f32 %v848, %v849
      %v857 = vadd.f32 %v856, %v850
      %v858 = vadd.f32 %v857, %v851
      %v859 = vadd.f32 %v858, %v852
      %v860 = vadd.f32 %v859, %v853
      %v861 = vadd.f32 %v860, %v854
      %v862 = vadd.f32 %v861, %v855
      %v863 = vrot.slane %v862, 4
      %v864 = vadd.f32 %v862, %v863
      %v865 = vrot.slane %v864, 2
      %v866 = vadd.f32 %v864, %v865
      %v867 = vrot.slane %v866, 1
      %v868 = vadd.f32 %v866, %v867
      %v869 = vadd.f32 %v868, 1e-06
      %v870 = vrcp.pop %v869
      %v871 = vmul.f32 %v848, %v870
      %v872 = vmul.f32 %v849, %v870
      %v873 = vmul.f32 %v850, %v870
      %v874 = vmul.f32 %v851, %v870
      %v875 = vmul.f32 %v852, %v870
      %v876 = vmul.f32 %v853, %v870
      %v877 = vmul.f32 %v854, %v870
      %v878 = vmul.f32 %v855, %v870
      %v879 = vpack.c.bf16 %v872, %v871
      %v880 = vpack.c.bf16 %v874, %v873
      %v881 = vpack.c.bf16 %v876, %v875
      %v882 = vpack.c.bf16 %v878, %v877
      %883 = vmatprep.subr.bf16.mxu0 0
      %884 = vmatpush1.bf16.msra.mxu0 %v879
      %885 = vmatprep.subr.bf16.mxu0 0
      %886 = vmatpush1.bf16.msra.mxu0 %v880
      %887 = vmatprep.subr.bf16.mxu0 0
      %888 = vmatpush1.bf16.msra.mxu0 %v881
      %889 = vmatprep.subr.bf16.mxu0 0
      %890 = vmatpush1.bf16.msra.mxu0 %v882
      %891 = vmatprep.subr.bf16.mxu0 0
      %892 = vmatpush1.bf16.msra.mxu0 0
      %893 = vmatprep.subr.bf16.mxu0 0
      %894 = vmatpush1.bf16.msra.mxu0 0
      %895 = vmatprep.subr.bf16.mxu0 0
      %896 = vmatpush1.bf16.msra.mxu0 0
      %897 = vmatprep.subr.bf16.mxu0 0
      %898 = vmatpush1.bf16.msra.mxu0 0
      %899 = vmatprep.subr.bf16.mxu0 0
      %900 = vmatpush1.bf16.msra.mxu0 0
      %901 = vmatprep.subr.bf16.mxu0 0
      %902 = vmatpush1.bf16.msra.mxu0 0
      %903 = vmatprep.subr.bf16.mxu0 0
      %904 = vmatpush1.bf16.msra.mxu0 0
      %905 = vmatprep.subr.bf16.mxu0 0
      %906 = vmatpush1.bf16.msra.mxu0 0
      %907 = vmatprep.subr.bf16.mxu0 0
      %908 = vmatpush1.bf16.msra.mxu0 0
      %909 = vmatprep.subr.bf16.mxu0 0
      %910 = vmatpush1.bf16.msra.mxu0 0
      %911 = vmatprep.subr.bf16.mxu0 0
      %912 = vmatpush1.bf16.msra.mxu0 0
      %913 = vmatprep.subr.bf16.mxu0 0
      %914 = vmatpush1.bf16.msra.mxu0 0
      %915 = vmatprep.mubr.bf16.mxu0 0
      %916 = vmatmul.mubr.bf16.gmra.mrb[0].mxu0 %v427
      %v917 = vpop.f32.mrb[0].mxu0
      %v918 = vadd.f32 0.0, %v917
      %v919 = vpop.f32.mrb[0].mxu0
      %v920 = vpop.f32.mrb[0].mxu0
      %v921 = vadd.f32 0.0, %v920
      %v922 = vpop.f32.mrb[0].mxu0
      %923 = vdwg.mxu0
      %v924 = vmul.f32 %v918, %v918
      %v925 = vmul.f32 %v921, %v921
      %v926 = vadd.f32 %v924, %v925
      %v927 = vrot.slane %v926, 4
      %v928 = vadd.f32 %v926, %v927
      %v929 = vrot.slane %v928, 2
      %v930 = vadd.f32 %v928, %v929
      %v931 = vrot.slane %v930, 1
      %v932 = vadd.f32 %v930, %v931
      %v933 = vadd.f32 %v932, 1e-12
      %v934 = vrsqrt.pop %v933
      %v935 = vmul.f32 %v918, %v934
      %v936 = vmul.f32 %v921, %v934
      %v937 = vpack.c.bf16 %v936, %v935
      %v938 = vpack.c.bf16 %v849, %v848
      %v939 = vpack.c.bf16 %v851, %v850
      %v940 = vpack.c.bf16 %v853, %v852
      %v941 = vpack.c.bf16 %v855, %v854
      %942 = vmatprep.subr.bf16.mxu0 0
      %943 = vmatpush1.bf16.xpose.msra.mxu0 %v937
      %944 = vmatprep.subr.bf16.mxu0 0
      %945 = vmatpush1.bf16.xpose.msra.mxu0 0
      %946 = vmatprep.subr.bf16.mxu0 0
      %947 = vmatpush1.bf16.xpose.msra.mxu0 0
      %948 = vmatprep.subr.bf16.mxu0 0
      %949 = vmatpush1.bf16.xpose.msra.mxu0 0
      %950 = vmatprep.subr.bf16.mxu0 0
      %951 = vmatpush1.bf16.xpose.msra.mxu0 0
      %952 = vmatprep.subr.bf16.mxu0 0
      %953 = vmatpush1.bf16.xpose.msra.mxu0 0
      %954 = vmatprep.subr.bf16.mxu0 0
      %955 = vmatpush1.bf16.xpose.msra.mxu0 0
      %956 = vmatprep.subr.bf16.mxu0 0
      %957 = vmatpush1.bf16.xpose.msra.mxu0 0
      %958 = vmatprep.subr.bf16.mxu0 0
      %959 = vmatpush1.bf16.xpose.msra.mxu0 0
      %960 = vmatprep.subr.bf16.mxu0 0
      %961 = vmatpush1.bf16.xpose.msra.mxu0 0
      %962 = vmatprep.subr.bf16.mxu0 0
      %963 = vmatpush1.bf16.xpose.msra.mxu0 0
      %964 = vmatprep.subr.bf16.mxu0 0
      %965 = vmatpush1.bf16.xpose.msra.mxu0 0
      %966 = vmatprep.subr.bf16.mxu0 0
      %967 = vmatpush1.bf16.xpose.msra.mxu0 0
      %968 = vmatprep.subr.bf16.mxu0 0
      %969 = vmatpush1.bf16.xpose.msra.mxu0 0
      %970 = vmatprep.subr.bf16.mxu0 0
      %971 = vmatpush1.bf16.xpose.msra.mxu0 0
      %972 = vmatprep.subr.bf16.mxu0 0
      %973 = vmatpush1.bf16.xpose.msra.mxu0 0
      %974 = vmatprep.mubr.bf16.mxu0 0
      %975 = vmatmul.mubr.bf16.gmra.mrb[0].mxu0 %v938
      %v976 = vpop.f32.mrb[0].mxu0
      %v977 = vadd.f32 0.0, %v976
      %v978 = vpop.f32.mrb[0].mxu0
      %v979 = vpop.f32.mrb[0].mxu0
      %v980 = vadd.f32 0.0, %v979
      %v981 = vpop.f32.mrb[0].mxu0
      %982 = vmatprep.mubr.bf16.mxu0 0
      %983 = vmatmul.mubr.bf16.gmra.mrb[0].mxu0 %v939
      %v984 = vpop.f32.mrb[0].mxu0
      %v985 = vadd.f32 0.0, %v984
      %v986 = vpop.f32.mrb[0].mxu0
      %v987 = vpop.f32.mrb[0].mxu0
      %v988 = vadd.f32 0.0, %v987
      %v989 = vpop.f32.mrb[0].mxu0
      %990 = vmatprep.mubr.bf16.mxu0 0
      %991 = vmatmul.mubr.bf16.gmra.mrb[0].mxu0 %v940
      %v992 = vpop.f32.mrb[0].mxu0
      %v993 = vadd.f32 0.0, %v992
      %v994 = vpop.f32.mrb[0].mxu0
      %v995 = vpop.f32.mrb[0].mxu0
      %v996 = vadd.f32 0.0, %v995
      %v997 = vpop.f32.mrb[0].mxu0
      %998 = vmatprep.mubr.bf16.mxu0 0
      %999 = vmatmul.mubr.bf16.gmra.mrb[0].mxu0 %v941
      %v1000 = vpop.f32.mrb[0].mxu0
      %v1001 = vadd.f32 0.0, %v1000
      %v1002 = vpop.f32.mrb[0].mxu0
      %v1003 = vpop.f32.mrb[0].mxu0
      %v1004 = vadd.f32 0.0, %v1003
      %v1005 = vpop.f32.mrb[0].mxu0
      %1006 = vdwg.mxu0
      %v1007 = vmax.f32 %v977, 0.0
      %v1008 = vmax.f32 %v980, 0.0
      %v1009 = vmax.f32 %v985, 0.0
      %v1010 = vmax.f32 %v988, 0.0
      %v1011 = vmax.f32 %v993, 0.0
      %v1012 = vmax.f32 %v996, 0.0
      %v1013 = vmax.f32 %v1001, 0.0
      %v1014 = vmax.f32 %v1004, 0.0
      %v1015 = vpack.c.bf16 %v1008, %v1007
      %v1016 = vpack.c.bf16 %v1010, %v1009
      %v1017 = vpack.c.bf16 %v1012, %v1011
      %v1018 = vpack.c.bf16 %v1014, %v1013
      %v1023 = vunpack.c.l.b16 %v1015
      %v1024 = vunpack.c.h.b16 %v1015
      %v1025 = vunpack.c.l.b16 %v1016
      %v1026 = vunpack.c.h.b16 %v1016
      %v1027 = vunpack.c.l.b16 %v1017
      %v1028 = vunpack.c.h.b16 %v1017
      %v1029 = vunpack.c.l.b16 %v1018
      %v1030 = vunpack.c.h.b16 %v1018
      %v1031 = vpack.c.b16 %v1023, %v1023
      %v1032 = vpack.c.b16 %v1024, %v1024
      %v1033 = vpack.c.b16 %v1025, %v1025
      %v1034 = vpack.c.b16 %v1026, %v1026
      %v1035 = vpack.c.b16 %v1027, %v1027
      %v1036 = vpack.c.b16 %v1028, %v1028
      %v1037 = vpack.c.b16 %v1029, %v1029
      %v1038 = vpack.c.b16 %v1030, %v1030
      %vm1047 = vcmask 125952
      %1048 = vst.msk [vmem:[%s190] sm:$0xf] %vm1047, %v1031
      %1049 = vst.msk [vmem:[%s190 + $0x4] sm:$0xf] %vm1047, %v1032
      %1050 = vst.msk [vmem:[%s190 + $0x8] sm:$0xf] %vm1047, %v1033
      %1051 = vst.msk [vmem:[%s190 + $0xc] sm:$0xf] %vm1047, %v1034
      %1052 = vst.msk [vmem:[%s190 + $0x10] sm:$0xf] %vm1047, %v1035
      %1053 = vst.msk [vmem:[%s190 + $0x14] sm:$0xf] %vm1047, %v1036
      %1054 = vst.msk [vmem:[%s190 + $0x18] sm:$0xf] %vm1047, %v1037
      %1055 = vst.msk [vmem:[%s190 + $0x1c] sm:$0xf] %vm1047, %v1038
      %p1056 = scmp.lt.s32.totalorder %s14, 1
      %s1057 = scalar_select %p1056, %s14, 1
      %s1058 = smul.addr %s1057, 8
      %s1059 = smul.addr %s1058, 4
      %s1060 = scalar_lea.vmem %s3, %s1059
      // Predicated region
      $region33: #{ema_head_forward.9} parent=31 // pred_check
        %p1061 = pneg %p105
      $region34: #{ema_head_forward.9} parent=31 // pred_check_branch
        %1063 = sbr.rel (%p1061) target = $region36
      $region35: #{ema_head_forward.9} parent=31 // pred_region
        _
      $region36: #{ema_head_forward.9} parent=31 // pred_fallthru
        _
    $region32: #{ema_head_forward.9} parent=5 // pred_fallthru
      _
    %p1064 = scmp.le.s32.totalorder 2, %s9
    // Predicated region
    $region37: #{ema_head_forward.9} parent=5 // pred_check
      %p1065 = pneg %p1064
    $region38: #{ema_head_forward.9} parent=5 // pred_check_branch
      %1067 = sbr.rel (%p1065) target = $region40
    $region39: #{ema_head_forward.9} parent=5 // pred_region
      %s1068 = ssub.s32 %s9, 2
      // Predicated region
      $region41: #{ema_head_forward.9} parent=39 // pred_check
        %p1069 = pneg %p111
      $region42: #{ema_head_forward.9} parent=39 // pred_check_branch
        %1071 = sbr.rel (%p1069) target = $region44
      $region43: #{ema_head_forward.9} parent=39 // pred_region
        %p1072 = scmp.lt.s32.totalorder %s15, 1
        %s1073 = scalar_select %p1072, %s15, 1
        %s1074 = smul.addr %s1073, 8
        %s1075 = smul.addr %s1074, 4
        %s1076 = scalar_lea.vmem %s3, %s1075
      $region44: #{ema_head_forward.9} parent=39 // pred_fallthru
        _
    $region40: #{ema_head_forward.9} parent=5 // pred_fallthru
      _
  $region6: #{ema_head_forward.9} parent=0 // loop_footer
    %s13 = sadd.s32 1, %s9
  $region7: #{ema_head_forward.9} parent=0 // loop_footer_branch
    %8 = sbr.rel target = $region3
  $region8: #{ema_head_forward.9} parent=0 // loop_exit
    _

// kernel: ema_head_forward.7
$region0: #{ema_head_forward.7}
  #allocation0 [shape = 'u32[]', space=smem, size = 0x4, offset = 0x4, fixed_abs, tag = 'smem constant byte address 0x4 - core index']
  #allocation1 [shape = 'u32[144,128]{1,0:T(1,128)}', space=vmem, size = 0x12000, scoped, tag = 'internal scratch']
  #allocation2 [shape = 'f32[128,16]{1,0:T(8,128)}', space=vmem, size = 0x10000, scoped, tag = 'scratch operand']
  %s0 = inlined_call_operand.vmem [shape: bf16[2,176,32], index: 0, kind: input, shape index: {}]
  %s1 = inlined_call_operand.vmem [shape: bf16[9,32,16], index: 1, kind: input, shape index: {}]
  %s2 = inlined_call_operand.vmem [shape: f32[1,16], index: 2, kind: input, shape index: {}]
  %s3 = inlined_call_operand.vmem [shape: bf16[2,128,16], index: 3, kind: output, shape index: {}]
  %s4 = sld [smem:[#allocation0]]
  $region53: #{ema_head_forward.7} parent=0
    _
  %s6 = ssub.s32 1, %s4
  %s7 = scalar_select 0, %s6, %s4
  loop: start=0, step=1, limit=4
  $region2: #{ema_head_forward.7} parent=0 // loop_pre_header
    _
  $region3: #{ema_head_forward.7} parent=0 // loop_header
    %s9 = sphi 0, %s13
    %p10 = scmp.ge.s32.totalorder %s9, 4
    %s16 = sphi 0, %s35
    %s17 = sphi 0, %s31
    %s18 = sphi 0, %s27
    %s19 = sphi 0, %s16
    %s20 = sphi 0, %s17
    %s21 = sphi 0, %s18
    %s22 = sphi 0, %s19
    %s23 = sphi 0, %s20
    %s24 = sphi 0, %s21
    %s40 = sphi 0, %s42
    %s43 = sphi 0, %s40
    %s44 = sphi 0, %s43
    %s60 = sphi 0, %s44
    %s68 = sphi 0, %s70
    %s71 = sphi 0, %s68
    %s72 = sphi 0, %s71
    %s88 = sphi 0, %s72
    %s94 = sphi 0, %s96
    %s97 = sphi 0, %s94
    %s98 = sphi 0, %s97
    %s114 = sphi 0, %s98
    %s122 = sphi 0, %s124
    %s125 = sphi 0, %s122
    %s126 = sphi 0, %s125
    %s142 = sphi 0, %s126
  $region4: #{ema_head_forward.7} parent=0 // loop_header_branch
    %12 = sbr.rel (%p10) target = $region8
  $region5: #{ema_head_forward.7} parent=0 // loop_body
    %s14 = ssub.s32 %s9, 1
    %s15 = ssub.s32 %s9, 2
    %s25 = sadd.s32 1, %s18
    %p26 = scmp.ge.s32.totalorder %s25, 1
    %s27 = scalar_select %p26, 0, %s25
    %s28 = sadd.s32 1, %s17
    %s29 = scalar_select %p26, %s28, %s17
    %p30 = scmp.ge.s32.totalorder %s29, 1
    %s31 = scalar_select %p30, 0, %s29
    %s32 = sadd.s32 1, %s16
    %s33 = scalar_select %p30, %s32, %s16
    %p34 = scmp.ge.s32.totalorder %s33, 2
    %s35 = scalar_select %p34, 0, %s33
    %s36 = ssub.s32 %s16, %s35
    %s37 = ssub.s32 %s18, %s27
    %s38 = sor.u32 %s36, %s37
    %p39 = scmp.eq.s32.totalorder %s38, 0
    %s41 = sadd.s32 %s40, 1
    %s42 = scalar_select %p39, %s40, %s41
    %p45 = pneg %p39
    %p46 = scmp.eq.s32.totalorder %s9, 1
    %p47 = por %p45, %p46
    %p48 = scmp.ne.s32.totalorder %s40, %s43
    %p49 = scmp.eq.s32.totalorder %s9, 0
    %p50 = por %p48, %p49
    %p51 = scmp.ne.s32.totalorder %s40, %s43
    %p52 = scmp.eq.s32.totalorder %s14, 1
    %p53 = por %p51, %p52
    %p54 = scmp.ne.s32.totalorder %s43, %s44
    %p55 = scmp.eq.s32.totalorder %s14, 0
    %p56 = por %p54, %p55
    %p57 = scmp.ne.s32.totalorder %s43, %s44
    %p58 = scmp.eq.s32.totalorder %s15, 1
    %p59 = por %p57, %p58
    %p61 = scmp.ne.s32.totalorder %s44, %s60
    %p62 = scmp.eq.s32.totalorder %s15, 0
    %p63 = por %p61, %p62
    %s64 = ssub.s32 %s18, %s27
    %s65 = ssub.s32 %s17, %s31
    %s66 = sor.u32 %s64, %s65
    %p67 = scmp.eq.s32.totalorder %s66, 0
    %s69 = sadd.s32 %s68, 1
    %s70 = scalar_select %p67, %s68, %s69
    %p73 = pneg %p67
    %p74 = scmp.eq.s32.totalorder %s9, 1
    %p75 = por %p73, %p74
    %p76 = scmp.ne.s32.totalorder %s68, %s71
    %p77 = scmp.eq.s32.totalorder %s9, 0
    %p78 = por %p76, %p77
    %p79 = scmp.ne.s32.totalorder %s68, %s71
    %p80 = scmp.eq.s32.totalorder %s14, 1
    %p81 = por %p79, %p80
    %p82 = scmp.ne.s32.totalorder %s71, %s72
    %p83 = scmp.eq.s32.totalorder %s14, 0
    %p84 = por %p82, %p83
    %p85 = scmp.ne.s32.totalorder %s71, %s72
    %p86 = scmp.eq.s32.totalorder %s15, 1
    %p87 = por %p85, %p86
    %p89 = scmp.ne.s32.totalorder %s72, %s88
    %p90 = scmp.eq.s32.totalorder %s15, 0
    %p91 = por %p89, %p90
    %s92 = ssub.s32 %s17, %s31
    %p93 = scmp.eq.s32.totalorder %s92, 0
    %s95 = sadd.s32 %s94, 1
    %s96 = scalar_select %p93, %s94, %s95
    %p99 = pneg %p93
    %p100 = scmp.eq.s32.totalorder %s9, 1
    %p101 = por %p99, %p100
    %p102 = scmp.ne.s32.totalorder %s94, %s97
    %p103 = scmp.eq.s32.totalorder %s9, 0
    %p104 = por %p102, %p103
    %p105 = scmp.ne.s32.totalorder %s94, %s97
    %p106 = scmp.eq.s32.totalorder %s14, 1
    %p107 = por %p105, %p106
    %p108 = scmp.ne.s32.totalorder %s97, %s98
    %p109 = scmp.eq.s32.totalorder %s14, 0
    %p110 = por %p108, %p109
    %p111 = scmp.ne.s32.totalorder %s97, %s98
    %p112 = scmp.eq.s32.totalorder %s15, 1
    %p113 = por %p111, %p112
    %p115 = scmp.ne.s32.totalorder %s98, %s114
    %p116 = scmp.eq.s32.totalorder %s15, 0
    %p117 = por %p115, %p116
    %s118 = ssub.s32 %s16, %s35
    %s119 = ssub.s32 %s17, %s31
    %s120 = sor.u32 %s118, %s119
    %p121 = scmp.eq.s32.totalorder %s120, 0
    %s123 = sadd.s32 %s122, 1
    %s124 = scalar_select %p121, %s122, %s123
    %p127 = pneg %p121
    %p128 = scmp.eq.s32.totalorder %s9, 1
    %p129 = por %p127, %p128
    %p130 = scmp.ne.s32.totalorder %s122, %s125
    %p131 = scmp.eq.s32.totalorder %s9, 0
    %p132 = por %p130, %p131
    %p133 = scmp.ne.s32.totalorder %s122, %s125
    %p134 = scmp.eq.s32.totalorder %s14, 1
    %p135 = por %p133, %p134
    %p136 = scmp.ne.s32.totalorder %s125, %s126
    %p137 = scmp.eq.s32.totalorder %s14, 0
    %p138 = por %p136, %p137
    %p139 = scmp.ne.s32.totalorder %s125, %s126
    %p140 = scmp.eq.s32.totalorder %s15, 1
    %p141 = por %p139, %p140
    %p143 = scmp.ne.s32.totalorder %s126, %s142
    %p144 = scmp.eq.s32.totalorder %s15, 0
    %p145 = por %p143, %p144
    %p146 = scmp.le.s32.totalorder 1, %s9
    %p147 = scmp.lt.s32.totalorder %s9, 3
    %p148 = pnand %p146, %p147
    %p149 = pneg %p148
    // Predicated region
    $region9: #{ema_head_forward.7} parent=5 // pred_check
      _
    $region10: #{ema_head_forward.7} parent=5 // pred_check_branch
      %151 = sbr.rel (%p148) target = $region12
    $region11: #{ema_head_forward.7} parent=5 // pred_region
      %s152 = ssub.s32 %s9, 1
      // Predicated region
      $region13: #{ema_head_forward.7} parent=11 // pred_check
        %p153 = pneg %p84
      $region14: #{ema_head_forward.7} parent=11 // pred_check_branch
        %155 = sbr.rel (%p153) target = $region16
      $region15: #{ema_head_forward.7} parent=11 // pred_region
        %s156 = smul.u32 4, %s21
        %p157 = scmp.lt.s32.totalorder %s156, 3
        %s158 = scalar_select %p157, %s156, 3
        %p159 = scmp.lt.s32.totalorder %s20, 0
        %s160 = scalar_select %p159, %s20, 0
        %s161 = sadd.s32 %s160, %s158
        %s162 = smul.addr %s161, 4
        %s163 = scalar_lea.vmem %s1, %s162
        %s164 = smul.u32 4, %s21
      $region16: #{ema_head_forward.7} parent=11 // pred_fallthru
        _
      // Predicated region
      $region17: #{ema_head_forward.7} parent=11 // pred_check
        %p165 = pneg %p110
      $region18: #{ema_head_forward.7} parent=11 // pred_check_branch
        %167 = sbr.rel (%p165) target = $region20
      $region19: #{ema_head_forward.7} parent=11 // pred_region
        %p168 = scmp.lt.s32.totalorder %s20, 0
        %s169 = scalar_select %p168, %s20, 0
        %s170 = scalar_lea.vmem %s2, %s169
      $region20: #{ema_head_forward.7} parent=11 // pred_fallthru
        _
    $region12: #{ema_head_forward.7} parent=5 // pred_fallthru
      _
    %p171 = scmp.lt.s32.totalorder %s9, 2
    // Predicated region
    $region21: #{ema_head_forward.7} parent=5 // pred_check
      %p172 = pneg %p171
    $region22: #{ema_head_forward.7} parent=5 // pred_check_branch
      %174 = sbr.rel (%p172) target = $region24
    $region23: #{ema_head_forward.7} parent=5 // pred_region
      // Predicated region
      $region25: #{ema_head_forward.7} parent=23 // pred_check
        %p175 = pneg %p50
      $region26: #{ema_head_forward.7} parent=23 // pred_check_branch
        %177 = sbr.rel (%p175) target = $region28
      $region27: #{ema_head_forward.7} parent=23 // pred_region
        %p178 = scmp.lt.s32.totalorder %s16, 1
        %s179 = scalar_select %p178, %s16, 1
        %p180 = scmp.lt.s32.totalorder %s18, 0
        %s181 = scalar_select %p180, %s18, 0
        %s182 = smul.addr %s179, 22
        %s183 = sadd.s32 %s181, %s182
        %s184 = smul.addr %s183, 4
        %s185 = scalar_lea.vmem %s0, %s184
      $region28: #{ema_head_forward.7} parent=23 // pred_fallthru
        _
    $region24: #{ema_head_forward.7} parent=5 // pred_fallthru
      _
    %p186 = scmp.le.s32.totalorder 1, %s9
    %p187 = scmp.lt.s32.totalorder %s9, 3
    %p188 = pnand %p186, %p187
    %p189 = pneg %p188
    // Predicated region
    $region29: #{ema_head_forward.7} parent=5 // pred_check
      _
    $region30: #{ema_head_forward.7} parent=5 // pred_check_branch
      %191 = sbr.rel (%p188) target = $region32
    $region31: #{ema_head_forward.7} parent=5 // pred_region
      %s192 = ssub.s32 %s9, 1
      %p193 = scmp.lt.s32.totalorder %s19, 1
      %s194 = scalar_select %p193, %s19, 1
      %p195 = scmp.lt.s32.totalorder %s21, 0
      %s196 = scalar_select %p195, %s21, 0
      %s197 = smul.addr %s194, 22
      %s198 = sadd.s32 %s196, %s197
      %s199 = smul.addr %s198, 4
      %s200 = scalar_lea.vmem %s0, %s199
      %p201 = pneg %p56
      %p202 = pneg %p53
      %s203 = smul.u32 4, %s21
      %p204 = scmp.lt.s32.totalorder %s203, 3
      %s205 = scalar_select %p204, %s203, 3
      %p206 = scmp.lt.s32.totalorder %s20, 0
      %s207 = scalar_select %p206, %s20, 0
      %s208 = sadd.s32 %s207, %s205
      %s209 = smul.addr %s208, 4
      %s210 = scalar_lea.vmem %s1, %s209
      %p211 = pneg %p84
      %p212 = pneg %p81
      %p213 = scmp.lt.s32.totalorder %s20, 0
      %s214 = scalar_select %p213, %s20, 0
      %s215 = scalar_lea.vmem %s2, %s214
      %p216 = pneg %p110
      %p217 = pneg %p107
      %p218 = pneg %p138
      %p219 = pneg %p135
      %p220 = scmp.lt.s32.totalorder %s19, 1
      %s221 = scalar_select %p220, %s19, 1
      %p222 = scmp.lt.s32.totalorder %s20, 0
      %s223 = scalar_select %p222, %s20, 0
      %s224 = smul.addr %s221, 16
      %s225 = sadd.s32 %s223, %s224
      %s226 = smul.addr %s225, 4
      %s227 = scalar_lea.vmem %s3, %s226
      %p228 = scmp.lt.s32.totalorder %s19, 1
      %s229 = scalar_select %p228, %s19, 1
      %p230 = scmp.lt.s32.totalorder %s21, 0
      %s231 = scalar_select %p230, %s21, 0
      %s232 = smul.addr %s229, 22
      %s233 = sadd.s32 %s231, %s232
      %s234 = smul.addr %s233, 4
      %s235 = scalar_lea.vmem %s0, %s234
      %s236 = smul.u32 4, %s21
      %p237 = scmp.lt.s32.totalorder %s236, 3
      %s238 = scalar_select %p237, %s236, 3
      %p239 = scmp.lt.s32.totalorder %s20, 0
      %s240 = scalar_select %p239, %s20, 0
      %s241 = sadd.s32 %s240, %s238
      %s242 = smul.addr %s241, 4
      %s243 = scalar_lea.vmem %s1, %s242
      %s244 = smul.u32 4, %s21
      %p245 = scmp.lt.s32.totalorder %s20, 0
      %s246 = scalar_select %p245, %s20, 0
      %s247 = scalar_lea.vmem %s2, %s246
      %p248 = scmp.lt.s32.totalorder %s19, 1
      %s249 = scalar_select %p248, %s19, 1
      %p250 = scmp.lt.s32.totalorder %s20, 0
      %s251 = scalar_select %p250, %s20, 0
      %s252 = smul.addr %s249, 16
      %s253 = sadd.s32 %s251, %s252
      %s254 = smul.addr %s253, 4
      %s255 = scalar_lea.vmem %s3, %s254
      %p257 = scmp.eq.s32.totalorder %s21, 0
      // Predicated region
      $region33: #{ema_head_forward.7} parent=31 // pred_check
        %p258 = pneg %p257
      $region34: #{ema_head_forward.7} parent=31 // pred_check_branch
        %260 = sbr.rel (%p258) target = $region36
      $region35: #{ema_head_forward.7} parent=31 // pred_region
        %vm261 = vcmask 130048
        %262 = vst.msk [vmem:[#allocation2] sm:$0xff] %vm261, 0.0
        %263 = vst.msk [vmem:[#allocation2 + $0x8] sm:$0xff] %vm261, 0.0
        %264 = vst.msk [vmem:[#allocation2 + $0x10] sm:$0xff] %vm261, 0.0
        %265 = vst.msk [vmem:[#allocation2 + $0x18] sm:$0xff] %vm261, 0.0
        %266 = vst.msk [vmem:[#allocation2 + $0x20] sm:$0xff] %vm261, 0.0
        %267 = vst.msk [vmem:[#allocation2 + $0x28] sm:$0xff] %vm261, 0.0
        %268 = vst.msk [vmem:[#allocation2 + $0x30] sm:$0xff] %vm261, 0.0
        %269 = vst.msk [vmem:[#allocation2 + $0x38] sm:$0xff] %vm261, 0.0
        %270 = vst.msk [vmem:[#allocation2 + $0x40] sm:$0xff] %vm261, 0.0
        %271 = vst.msk [vmem:[#allocation2 + $0x48] sm:$0xff] %vm261, 0.0
        %272 = vst.msk [vmem:[#allocation2 + $0x50] sm:$0xff] %vm261, 0.0
        %273 = vst.msk [vmem:[#allocation2 + $0x58] sm:$0xff] %vm261, 0.0
        %274 = vst.msk [vmem:[#allocation2 + $0x60] sm:$0xff] %vm261, 0.0
        %275 = vst.msk [vmem:[#allocation2 + $0x68] sm:$0xff] %vm261, 0.0
        %276 = vst.msk [vmem:[#allocation2 + $0x70] sm:$0xff] %vm261, 0.0
        %277 = vst.msk [vmem:[#allocation2 + $0x78] sm:$0xff] %vm261, 0.0
      $region36: #{ema_head_forward.7} parent=31 // pred_fallthru
        _
      %v278 = vld [vmem:[%s235] sm:$0xf]
      %v279 = vld [vmem:[%s235 + $0x4] sm:$0xf]
      %v280 = vld [vmem:[%s235 + $0x8] sm:$0xf]
      %v281 = vld [vmem:[%s235 + $0xc] sm:$0xf]
      %v282 = vld [vmem:[%s235 + $0x10] sm:$0xf]
      %v283 = vld [vmem:[%s235 + $0x14] sm:$0xf]
      %v284 = vld [vmem:[%s235 + $0x18] sm:$0xf]
      %v285 = vld [vmem:[%s235 + $0x1c] sm:$0xf]
      %v286 = vld [vmem:[%s235 + $0x20] sm:$0xf]
      %v287 = vld [vmem:[%s235 + $0x24] sm:$0xf]
      %v288 = vld [vmem:[%s235 + $0x28] sm:$0xf]
      %v289 = vld [vmem:[%s235 + $0x2c] sm:$0xf]
      %v290 = vld [vmem:[%s235 + $0x30] sm:$0xf]
      %v291 = vld [vmem:[%s235 + $0x34] sm:$0xf]
      %v292 = vld [vmem:[%s235 + $0x38] sm:$0xf]
      %v293 = vld [vmem:[%s235 + $0x3c] sm:$0xf]
      %v294 = vld [vmem:[%s235 + $0x40] sm:$0xf]
      %v295 = vld [vmem:[%s235 + $0x44] sm:$0xf]
      %v296 = vld [vmem:[%s235 + $0x48] sm:$0xf]
      %v297 = vld [vmem:[%s235 + $0x4c] sm:$0xf]
      %v298 = vld [vmem:[%s235 + $0x50] sm:$0xf]
      %v299 = vld [vmem:[#allocation2] sm:$0xff]
      %v300 = vld [vmem:[#allocation2 + $0x8] sm:$0xff]
      %v301 = vld [vmem:[#allocation2 + $0x10] sm:$0xff]
      %v302 = vld [vmem:[#allocation2 + $0x18] sm:$0xff]
      %v303 = vld [vmem:[#allocation2 + $0x20] sm:$0xff]
      %v304 = vld [vmem:[#allocation2 + $0x28] sm:$0xff]
      %v305 = vld [vmem:[#allocation2 + $0x30] sm:$0xff]
      %v306 = vld [vmem:[#allocation2 + $0x38] sm:$0xff]
      %v307 = vld [vmem:[#allocation2 + $0x40] sm:$0xff]
      %v308 = vld [vmem:[#allocation2 + $0x48] sm:$0xff]
      %v309 = vld [vmem:[#allocation2 + $0x50] sm:$0xff]
      %v310 = vld [vmem:[#allocation2 + $0x58] sm:$0xff]
      %v311 = vld [vmem:[#allocation2 + $0x60] sm:$0xff]
      %v312 = vld [vmem:[#allocation2 + $0x68] sm:$0xff]
      %v313 = vld [vmem:[#allocation2 + $0x70] sm:$0xff]
      %v314 = vld [vmem:[#allocation2 + $0x78] sm:$0xff]
      %v315 = vld [vmem:[%s243] sm:$0xf]
      %v316 = vld [vmem:[%s243 + $0x4] sm:$0xf]
      %v317 = vld [vmem:[%s243 + $0x8] sm:$0xf]
      %v318 = vld [vmem:[%s243 + $0xc] sm:$0xf]
      %v335 = vunpack.c.l.b16 %v278
      %v336 = vunpack.c.l.b16 %v279
      %v337 = vunpack.c.l.b16 %v280
      %v338 = vunpack.c.l.b16 %v281
      %v339 = vunpack.c.l.b16 %v282
      %v340 = vunpack.c.l.b16 %v283
      %v341 = vunpack.c.l.b16 %v284
      %v342 = vunpack.c.l.b16 %v285
      %v343 = vunpack.c.l.b16 %v286
      %v344 = vunpack.c.l.b16 %v287
      %v345 = vunpack.c.l.b16 %v288
      %v346 = vunpack.c.l.b16 %v289
      %v347 = vunpack.c.l.b16 %v290
      %v348 = vunpack.c.l.b16 %v291
      %v349 = vunpack.c.l.b16 %v292
      %v350 = vunpack.c.l.b16 %v293
      %v351 = vpack.c.b16 %v336, %v335
      %v352 = vpack.c.b16 %v338, %v337
      %v353 = vpack.c.b16 %v340, %v339
      %v354 = vpack.c.b16 %v342, %v341
      %v355 = vpack.c.b16 %v344, %v343
      %v356 = vpack.c.b16 %v346, %v345
      %v357 = vpack.c.b16 %v348, %v347
      %v358 = vpack.c.b16 %v350, %v349
      %v363 = vunpack.c.l.b16 %v315
      %v364 = vunpack.c.l.b16 %v316
      %v365 = vunpack.c.l.b16 %v317
      %v366 = vunpack.c.l.b16 %v318
      %v367 = vpack.c.b16 %v364, %v363
      %v368 = vpack.c.b16 %v366, %v365
      %vm371 = vcmask 261120
      %v373 = vsel %vm371, %v351, 0
      %v376 = vsel %vm371, %v352, 0
      %v379 = vsel %vm371, %v353, 0
      %v382 = vsel %vm371, %v354, 0
      %v385 = vsel %vm371, %v355, 0
      %v388 = vsel %vm371, %v356, 0
      %v391 = vsel %vm371, %v357, 0
      %v394 = vsel %vm371, %v358, 0
      %396 = vmatprep.subr.bf16.mxu0 0
      %397 = vmatpush1.bf16.msra.mxu0 %v367
      %398 = vmatprep.subr.bf16.mxu0 0
      %399 = vmatpush1.bf16.msra.mxu0 %v368
      %400 = vmatprep.subr.bf16.mxu0 0
      %401 = vmatpush1.bf16.msra.mxu0 0
      %402 = vmatprep.subr.bf16.mxu0 0
      %403 = vmatpush1.bf16.msra.mxu0 0
      %404 = vmatprep.subr.bf16.mxu0 0
      %405 = vmatpush1.bf16.msra.mxu0 0
      %406 = vmatprep.subr.bf16.mxu0 0
      %407 = vmatpush1.bf16.msra.mxu0 0
      %408 = vmatprep.subr.bf16.mxu0 0
      %409 = vmatpush1.bf16.msra.mxu0 0
      %410 = vmatprep.subr.bf16.mxu0 0
      %411 = vmatpush1.bf16.msra.mxu0 0
      %412 = vmatprep.subr.bf16.mxu0 0
      %413 = vmatpush1.bf16.msra.mxu0 0
      %414 = vmatprep.subr.bf16.mxu0 0
      %415 = vmatpush1.bf16.msra.mxu0 0
      %416 = vmatprep.subr.bf16.mxu0 0
      %417 = vmatpush1.bf16.msra.mxu0 0
      %418 = vmatprep.subr.bf16.mxu0 0
      %419 = vmatpush1.bf16.msra.mxu0 0
      %420 = vmatprep.subr.bf16.mxu0 0
      %421 = vmatpush1.bf16.msra.mxu0 0
      %422 = vmatprep.subr.bf16.mxu0 0
      %423 = vmatpush1.bf16.msra.mxu0 0
      %424 = vmatprep.subr.bf16.mxu0 0
      %425 = vmatpush1.bf16.msra.mxu0 0
      %426 = vmatprep.subr.bf16.mxu0 0
      %427 = vmatpush1.bf16.msra.mxu0 0
      %428 = vmatprep.mubr.bf16.mxu0 0
      %429 = vmatmul.mubr.bf16.gmra.mrb[0].mxu0 %v373
      %v430 = vpop.f32.mrb[0].mxu0
      %v431 = vadd.f32 0.0, %v430
      %v432 = vpop.f32.mrb[0].mxu0
      %v433 = vpop.f32.mrb[0].mxu0
      %v434 = vadd.f32 0.0, %v433
      %v435 = vpop.f32.mrb[0].mxu0
      %436 = vmatprep.mubr.bf16.mxu0 0
      %437 = vmatmul.mubr.bf16.gmra.mrb[0].mxu0 %v376
      %v438 = vpop.f32.mrb[0].mxu0
      %v439 = vadd.f32 0.0, %v438
      %v440 = vpop.f32.mrb[0].mxu0
      %v441 = vpop.f32.mrb[0].mxu0
      %v442 = vadd.f32 0.0, %v441
      %v443 = vpop.f32.mrb[0].mxu0
      %444 = vmatprep.mubr.bf16.mxu0 0
      %445 = vmatmul.mubr.bf16.gmra.mrb[0].mxu0 %v379
      %v446 = vpop.f32.mrb[0].mxu0
      %v447 = vadd.f32 0.0, %v446
      %v448 = vpop.f32.mrb[0].mxu0
      %v449 = vpop.f32.mrb[0].mxu0
      %v450 = vadd.f32 0.0, %v449
      %v451 = vpop.f32.mrb[0].mxu0
      %452 = vmatprep.mubr.bf16.mxu0 0
      %453 = vmatmul.mubr.bf16.gmra.mrb[0].mxu0 %v382
      %v454 = vpop.f32.mrb[0].mxu0
      %v455 = vadd.f32 0.0, %v454
      %v456 = vpop.f32.mrb[0].mxu0
      %v457 = vpop.f32.mrb[0].mxu0
      %v458 = vadd.f32 0.0, %v457
      %v459 = vpop.f32.mrb[0].mxu0
      %460 = vmatprep.mubr.bf16.mxu0 0
      %461 = vmatmul.mubr.bf16.gmra.mrb[0].mxu0 %v385
      %v462 = vpop.f32.mrb[0].mxu0
      %v463 = vadd.f32 0.0, %v462
      %v464 = vpop.f32.mrb[0].mxu0
      %v465 = vpop.f32.mrb[0].mxu0
      %v466 = vadd.f32 0.0, %v465
      %v467 = vpop.f32.mrb[0].mxu0
      %468 = vmatprep.mubr.bf16.mxu0 0
      %469 = vmatmul.mubr.bf16.gmra.mrb[0].mxu0 %v388
      %v470 = vpop.f32.mrb[0].mxu0
      %v471 = vadd.f32 0.0, %v470
      %v472 = vpop.f32.mrb[0].mxu0
      %v473 = vpop.f32.mrb[0].mxu0
      %v474 = vadd.f32 0.0, %v473
      %v475 = vpop.f32.mrb[0].mxu0
      %476 = vmatprep.mubr.bf16.mxu0 0
      %477 = vmatmul.mubr.bf16.gmra.mrb[0].mxu0 %v391
      %v478 = vpop.f32.mrb[0].mxu0
      %v479 = vadd.f32 0.0, %v478
      %v480 = vpop.f32.mrb[0].mxu0
      %v481 = vpop.f32.mrb[0].mxu0
      %v482 = vadd.f32 0.0, %v481
      %v483 = vpop.f32.mrb[0].mxu0
      %484 = vmatprep.mubr.bf16.mxu0 0
      %485 = vmatmul.mubr.bf16.gmra.mrb[0].mxu0 %v394
      %v486 = vpop.f32.mrb[0].mxu0
      %v487 = vadd.f32 0.0, %v486
      %v488 = vpop.f32.mrb[0].mxu0
      %v489 = vpop.f32.mrb[0].mxu0
      %v490 = vadd.f32 0.0, %v489
      %v491 = vpop.f32.mrb[0].mxu0
      %492 = vdwg.mxu0
      %v493 = vadd.f32 %v299, %v431
      %v494 = vadd.f32 %v300, %v434
      %v495 = vadd.f32 %v301, %v439
      %v496 = vadd.f32 %v302, %v442
      %v497 = vadd.f32 %v303, %v447
      %v498 = vadd.f32 %v304, %v450
      %v499 = vadd.f32 %v305, %v455
      %v500 = vadd.f32 %v306, %v458
      %v501 = vadd.f32 %v307, %v463
      %v502 = vadd.f32 %v308, %v466
      %v503 = vadd.f32 %v309, %v471
      %v504 = vadd.f32 %v310, %v474
      %v505 = vadd.f32 %v311, %v479
      %v506 = vadd.f32 %v312, %v482
      %v507 = vadd.f32 %v313, %v487
      %v508 = vadd.f32 %v314, %v490
      %s509 = scalar_lea.vmem %s243, 48
      %v510 = vld [vmem:[%s509] sm:$0xf]
      %v511 = vld [vmem:[%s509 + $0x4] sm:$0xf]
      %v512 = vld [vmem:[%s509 + $0x8] sm:$0xf]
      %v513 = vld [vmem:[%s509 + $0xc] sm:$0xf]
      %v516 = vunpack.c.l.b16 %v294
      %v517 = vunpack.c.l.b16 %v295
      %v518 = vpack.c.b16 %v517, %v516
      %v523 = vunpack.c.l.b16 %v510
      %v524 = vunpack.c.l.b16 %v511
      %v525 = vunpack.c.l.b16 %v512
      %v526 = vunpack.c.l.b16 %v513
      %v527 = vpack.c.b16 %v524, %v523
      %v528 = vpack.c.b16 %v526, %v525
      %v532 = vsel %vm371, %v518, 0
      %534 = vmatprep.subr.bf16.mxu0 0
      %535 = vmatpush1.bf16.msra.mxu0 %v527
      %536 = vmatprep.subr.bf16.mxu0 0
      %537 = vmatpush1.bf16.msra.mxu0 %v528
      %538 = vmatprep.subr.bf16.mxu0 0
      %539 = vmatpush1.bf16.msra.mxu0 0
      %540 = vmatprep.subr.bf16.mxu0 0
      %541 = vmatpush1.bf16.msra.mxu0 0
      %542 = vmatprep.subr.bf16.mxu0 0
      %543 = vmatpush1.bf16.msra.mxu0 0
      %544 = vmatprep.subr.bf16.mxu0 0
      %545 = vmatpush1.bf16.msra.mxu0 0
      %546 = vmatprep.subr.bf16.mxu0 0
      %547 = vmatpush1.bf16.msra.mxu0 0
      %548 = vmatprep.subr.bf16.mxu0 0
      %549 = vmatpush1.bf16.msra.mxu0 0
      %550 = vmatprep.subr.bf16.mxu0 0
      %551 = vmatpush1.bf16.msra.mxu0 0
      %552 = vmatprep.subr.bf16.mxu0 0
      %553 = vmatpush1.bf16.msra.mxu0 0
      %554 = vmatprep.subr.bf16.mxu0 0
      %555 = vmatpush1.bf16.msra.mxu0 0
      %556 = vmatprep.subr.bf16.mxu0 0
      %557 = vmatpush1.bf16.msra.mxu0 0
      %558 = vmatprep.subr.bf16.mxu0 0
      %559 = vmatpush1.bf16.msra.mxu0 0
      %560 = vmatprep.subr.bf16.mxu0 0
      %561 = vmatpush1.bf16.msra.mxu0 0
      %562 = vmatprep.subr.bf16.mxu0 0
      %563 = vmatpush1.bf16.msra.mxu0 0
      %564 = vmatprep.subr.bf16.mxu0 0
      %565 = vmatpush1.bf16.msra.mxu0 0
      %566 = vmatprep.mubr.bf16.mxu0 0
      %567 = vmatmul.mubr.bf16.gmra.mrb[0].mxu0 %v376
      %v568 = vpop.f32.mrb[0].mxu0
      %v569 = vadd.f32 0.0, %v568
      %v570 = vpop.f32.mrb[0].mxu0
      %v571 = vpop.f32.mrb[0].mxu0
      %v572 = vadd.f32 0.0, %v571
      %v573 = vpop.f32.mrb[0].mxu0
      %574 = vmatprep.mubr.bf16.mxu0 0
      %575 = vmatmul.mubr.bf16.gmra.mrb[0].mxu0 %v379
      %v576 = vpop.f32.mrb[0].mxu0
      %v577 = vadd.f32 0.0, %v576
      %v578 = vpop.f32.mrb[0].mxu0
      %v579 = vpop.f32.mrb[0].mxu0
      %v580 = vadd.f32 0.0, %v579
      %v581 = vpop.f32.mrb[0].mxu0
      %582 = vmatprep.mubr.bf16.mxu0 0
      %583 = vmatmul.mubr.bf16.gmra.mrb[0].mxu0 %v382
      %v584 = vpop.f32.mrb[0].mxu0
      %v585 = vadd.f32 0.0, %v584
      %v586 = vpop.f32.mrb[0].mxu0
      %v587 = vpop.f32.mrb[0].mxu0
      %v588 = vadd.f32 0.0, %v587
      %v589 = vpop.f32.mrb[0].mxu0
      %590 = vmatprep.mubr.bf16.mxu0 0
      %591 = vmatmul.mubr.bf16.gmra.mrb[0].mxu0 %v385
      %v592 = vpop.f32.mrb[0].mxu0
      %v593 = vadd.f32 0.0, %v592
      %v594 = vpop.f32.mrb[0].mxu0
      %v595 = vpop.f32.mrb[0].mxu0
      %v596 = vadd.f32 0.0, %v595
      %v597 = vpop.f32.mrb[0].mxu0
      %598 = vmatprep.mubr.bf16.mxu0 0
      %599 = vmatmul.mubr.bf16.gmra.mrb[0].mxu0 %v388
      %v600 = vpop.f32.mrb[0].mxu0
      %v601 = vadd.f32 0.0, %v600
      %v602 = vpop.f32.mrb[0].mxu0
      %v603 = vpop.f32.mrb[0].mxu0
      %v604 = vadd.f32 0.0, %v603
      %v605 = vpop.f32.mrb[0].mxu0
      %606 = vmatprep.mubr.bf16.mxu0 0
      %607 = vmatmul.mubr.bf16.gmra.mrb[0].mxu0 %v391
      %v608 = vpop.f32.mrb[0].mxu0
      %v609 = vadd.f32 0.0, %v608
      %v610 = vpop.f32.mrb[0].mxu0
      %v611 = vpop.f32.mrb[0].mxu0
      %v612 = vadd.f32 0.0, %v611
      %v613 = vpop.f32.mrb[0].mxu0
      %614 = vmatprep.mubr.bf16.mxu0 0
      %615 = vmatmul.mubr.bf16.gmra.mrb[0].mxu0 %v394
      %v616 = vpop.f32.mrb[0].mxu0
      %v617 = vadd.f32 0.0, %v616
      %v618 = vpop.f32.mrb[0].mxu0
      %v619 = vpop.f32.mrb[0].mxu0
      %v620 = vadd.f32 0.0, %v619
      %v621 = vpop.f32.mrb[0].mxu0
      %622 = vmatprep.mubr.bf16.mxu0 0
      %623 = vmatmul.mubr.bf16.gmra.mrb[0].mxu0 %v532
      %v624 = vpop.f32.mrb[0].mxu0
      %v625 = vadd.f32 0.0, %v624
      %v626 = vpop.f32.mrb[0].mxu0
      %v627 = vpop.f32.mrb[0].mxu0
      %v628 = vadd.f32 0.0, %v627
      %v629 = vpop.f32.mrb[0].mxu0
      %630 = vdwg.mxu0
      %v631 = vadd.f32 %v493, %v569
      %v632 = vadd.f32 %v494, %v572
      %v633 = vadd.f32 %v495, %v577
      %v634 = vadd.f32 %v496, %v580
      %v635 = vadd.f32 %v497, %v585
      %v636 = vadd.f32 %v498, %v588
      %v637 = vadd.f32 %v499, %v593
      %v638 = vadd.f32 %v500, %v596
      %v639 = vadd.f32 %v501, %v601
      %v640 = vadd.f32 %v502, %v604
      %v641 = vadd.f32 %v503, %v609
      %v642 = vadd.f32 %v504, %v612
      %v643 = vadd.f32 %v505, %v617
      %v644 = vadd.f32 %v506, %v620
      %v645 = vadd.f32 %v507, %v625
      %v646 = vadd.f32 %v508, %v628
      %s647 = scalar_lea.vmem %s243, 96
      %v648 = vld [vmem:[%s647] sm:$0xf]
      %v649 = vld [vmem:[%s647 + $0x4] sm:$0xf]
      %v650 = vld [vmem:[%s647 + $0x8] sm:$0xf]
      %v651 = vld [vmem:[%s647 + $0xc] sm:$0xf]
      %v654 = vunpack.c.l.b16 %v296
      %v655 = vunpack.c.l.b16 %v297
      %v656 = vpack.c.b16 %v655, %v654
      %v661 = vunpack.c.l.b16 %v648
      %v662 = vunpack.c.l.b16 %v649
      %v663 = vunpack.c.l.b16 %v650
      %v664 = vunpack.c.l.b16 %v651
      %v665 = vpack.c.b16 %v662, %v661
      %v666 = vpack.c.b16 %v664, %v663
      %v670 = vsel %vm371, %v656, 0
      %672 = vmatprep.subr.bf16.mxu0 0
      %673 = vmatpush1.bf16.msra.mxu0 %v665
      %674 = vmatprep.subr.bf16.mxu0 0
      %675 = vmatpush1.bf16.msra.mxu0 %v666
      %676 = vmatprep.subr.bf16.mxu0 0
      %677 = vmatpush1.bf16.msra.mxu0 0
      %678 = vmatprep.subr.bf16.mxu0 0
      %679 = vmatpush1.bf16.msra.mxu0 0
      %680 = vmatprep.subr.bf16.mxu0 0
      %681 = vmatpush1.bf16.msra.mxu0 0
      %682 = vmatprep.subr.bf16.mxu0 0
      %683 = vmatpush1.bf16.msra.mxu0 0
      %684 = vmatprep.subr.bf16.mxu0 0
      %685 = vmatpush1.bf16.msra.mxu0 0
      %686 = vmatprep.subr.bf16.mxu0 0
      %687 = vmatpush1.bf16.msra.mxu0 0
      %688 = vmatprep.subr.bf16.mxu0 0
      %689 = vmatpush1.bf16.msra.mxu0 0
      %690 = vmatprep.subr.bf16.mxu0 0
      %691 = vmatpush1.bf16.msra.mxu0 0
      %692 = vmatprep.subr.bf16.mxu0 0
      %693 = vmatpush1.bf16.msra.mxu0 0
      %694 = vmatprep.subr.bf16.mxu0 0
      %695 = vmatpush1.bf16.msra.mxu0 0
      %696 = vmatprep.subr.bf16.mxu0 0
      %697 = vmatpush1.bf16.msra.mxu0 0
      %698 = vmatprep.subr.bf16.mxu0 0
      %699 = vmatpush1.bf16.msra.mxu0 0
      %700 = vmatprep.subr.bf16.mxu0 0
      %701 = vmatpush1.bf16.msra.mxu0 0
      %702 = vmatprep.subr.bf16.mxu0 0
      %703 = vmatpush1.bf16.msra.mxu0 0
      %704 = vmatprep.mubr.bf16.mxu0 0
      %705 = vmatmul.mubr.bf16.gmra.mrb[0].mxu0 %v379
      %v706 = vpop.f32.mrb[0].mxu0
      %v707 = vadd.f32 0.0, %v706
      %v708 = vpop.f32.mrb[0].mxu0
      %v709 = vpop.f32.mrb[0].mxu0
      %v710 = vadd.f32 0.0, %v709
      %v711 = vpop.f32.mrb[0].mxu0
      %712 = vmatprep.mubr.bf16.mxu0 0
      %713 = vmatmul.mubr.bf16.gmra.mrb[0].mxu0 %v382
      %v714 = vpop.f32.mrb[0].mxu0
      %v715 = vadd.f32 0.0, %v714
      %v716 = vpop.f32.mrb[0].mxu0
      %v717 = vpop.f32.mrb[0].mxu0
      %v718 = vadd.f32 0.0, %v717
      %v719 = vpop.f32.mrb[0].mxu0
      %720 = vmatprep.mubr.bf16.mxu0 0
      %721 = vmatmul.mubr.bf16.gmra.mrb[0].mxu0 %v385
      %v722 = vpop.f32.mrb[0].mxu0
      %v723 = vadd.f32 0.0, %v722
      %v724 = vpop.f32.mrb[0].mxu0
      %v725 = vpop.f32.mrb[0].mxu0
      %v726 = vadd.f32 0.0, %v725
      %v727 = vpop.f32.mrb[0].mxu0
      %728 = vmatprep.mubr.bf16.mxu0 0
      %729 = vmatmul.mubr.bf16.gmra.mrb[0].mxu0 %v388
      %v730 = vpop.f32.mrb[0].mxu0
      %v731 = vadd.f32 0.0, %v730
      %v732 = vpop.f32.mrb[0].mxu0
      %v733 = vpop.f32.mrb[0].mxu0
      %v734 = vadd.f32 0.0, %v733
      %v735 = vpop.f32.mrb[0].mxu0
      %736 = vmatprep.mubr.bf16.mxu0 0
      %737 = vmatmul.mubr.bf16.gmra.mrb[0].mxu0 %v391
      %v738 = vpop.f32.mrb[0].mxu0
      %v739 = vadd.f32 0.0, %v738
      %v740 = vpop.f32.mrb[0].mxu0
      %v741 = vpop.f32.mrb[0].mxu0
      %v742 = vadd.f32 0.0, %v741
      %v743 = vpop.f32.mrb[0].mxu0
      %744 = vmatprep.mubr.bf16.mxu0 0
      %745 = vmatmul.mubr.bf16.gmra.mrb[0].mxu0 %v394
      %v746 = vpop.f32.mrb[0].mxu0
      %v747 = vadd.f32 0.0, %v746
      %v748 = vpop.f32.mrb[0].mxu0
      %v749 = vpop.f32.mrb[0].mxu0
      %v750 = vadd.f32 0.0, %v749
      %v751 = vpop.f32.mrb[0].mxu0
      %752 = vmatprep.mubr.bf16.mxu0 0
      %753 = vmatmul.mubr.bf16.gmra.mrb[0].mxu0 %v532
      %v754 = vpop.f32.mrb[0].mxu0
      %v755 = vadd.f32 0.0, %v754
      %v756 = vpop.f32.mrb[0].mxu0
      %v757 = vpop.f32.mrb[0].mxu0
      %v758 = vadd.f32 0.0, %v757
      %v759 = vpop.f32.mrb[0].mxu0
      %760 = vmatprep.mubr.bf16.mxu0 0
      %761 = vmatmul.mubr.bf16.gmra.mrb[0].mxu0 %v670
      %v762 = vpop.f32.mrb[0].mxu0
      %v763 = vadd.f32 0.0, %v762
      %v764 = vpop.f32.mrb[0].mxu0
      %v765 = vpop.f32.mrb[0].mxu0
      %v766 = vadd.f32 0.0, %v765
      %v767 = vpop.f32.mrb[0].mxu0
      %768 = vdwg.mxu0
      %v769 = vadd.f32 %v631, %v707
      %v770 = vadd.f32 %v632, %v710
      %v771 = vadd.f32 %v633, %v715
      %v772 = vadd.f32 %v634, %v718
      %v773 = vadd.f32 %v635, %v723
      %v774 = vadd.f32 %v636, %v726
      %v775 = vadd.f32 %v637, %v731
      %v776 = vadd.f32 %v638, %v734
      %v777 = vadd.f32 %v639, %v739
      %v778 = vadd.f32 %v640, %v742
      %v779 = vadd.f32 %v641, %v747
      %v780 = vadd.f32 %v642, %v750
      %v781 = vadd.f32 %v643, %v755
      %v782 = vadd.f32 %v644, %v758
      %v783 = vadd.f32 %v645, %v763
      %v784 = vadd.f32 %v646, %v766
      %v785 = vunpack.c.l.bf16 %v278
      %v786 = vunpack.c.l.bf16 %v279
      %v787 = vunpack.c.l.bf16 %v280
      %v788 = vunpack.c.l.bf16 %v281
      %v789 = vunpack.c.l.bf16 %v282
      %v790 = vunpack.c.l.bf16 %v283
      %v791 = vunpack.c.l.bf16 %v284
      %v792 = vunpack.c.l.bf16 %v285
      %v793 = vunpack.c.l.bf16 %v286
      %v794 = vunpack.c.l.bf16 %v287
      %v795 = vunpack.c.l.bf16 %v288
      %v796 = vunpack.c.l.bf16 %v289
      %v797 = vunpack.c.l.bf16 %v290
      %v798 = vunpack.c.l.bf16 %v291
      %v799 = vunpack.c.l.bf16 %v292
      %v800 = vunpack.c.l.bf16 %v293
      %v801 = vunpack.c.l.bf16 %v294
      %v802 = vunpack.c.l.bf16 %v295
      %v803 = vunpack.c.l.bf16 %v296
      %v804 = vunpack.c.l.bf16 %v297
      %v805 = vunpack.c.l.bf16 %v298
      %v806 = vpack.c.bf16 %v786, %v785
      %v807 = vpack.c.bf16 %v788, %v787
      %v808 = vpack.c.bf16 %v790, %v789
      %v809 = vpack.c.bf16 %v792, %v791
      %v810 = vpack.c.bf16 %v794, %v793
      %v811 = vpack.c.bf16 %v796, %v795
      %v812 = vpack.c.bf16 %v798, %v797
      %v813 = vpack.c.bf16 %v800, %v799
      %v814 = vpack.c.bf16 %v802, %v801
      %v815 = vpack.c.bf16 %v804, %v803
      %v816 = vpack.c.bf16 %v805, %v805
      %s817 = scalar_lea.vmem %s243, 16
      %v818 = vld [vmem:[%s817] sm:$0xf]
      %v819 = vld [vmem:[%s817 + $0x4] sm:$0xf]
      %v820 = vld [vmem:[%s817 + $0x8] sm:$0xf]
      %v821 = vld [vmem:[%s817 + $0xc] sm:$0xf]
      %vm822 = vsmask.f32 7424
      %v824 = vshrl.u32 %v806, 16
      %v826 = vshll.u32 %v806, 16
      %v828 = vrot.slane %v826, 1
      %v829 = vor.u32 %v824, %v828
      %v831 = vshll.u32 %v807, 16
      %v833 = vrot.slane %v831, 1
      %v834 = vsel %vm822, %v829, %v833
      %v835 = vshrl.u32 %v807, 16
      %v837 = vor.u32 %v835, %v833
      %v839 = vshll.u32 %v808, 16
      %v841 = vrot.slane %v839, 1
      %v842 = vsel %vm822, %v837, %v841
      %v843 = vshrl.u32 %v808, 16
      %v845 = vor.u32 %v843, %v841
      %v847 = vshll.u32 %v809, 16
      %v849 = vrot.slane %v847, 1
      %v850 = vsel %vm822, %v845, %v849
      %v851 = vshrl.u32 %v809, 16
      %v853 = vor.u32 %v851, %v849
      %v855 = vshll.u32 %v810, 16
      %v857 = vrot.slane %v855, 1
      %v858 = vsel %vm822, %v853, %v857
      %v859 = vshrl.u32 %v810, 16
      %v861 = vor.u32 %v859, %v857
      %v863 = vshll.u32 %v811, 16
      %v865 = vrot.slane %v863, 1
      %v866 = vsel %vm822, %v861, %v865
      %v867 = vshrl.u32 %v811, 16
      %v869 = vor.u32 %v867, %v865
      %v871 = vshll.u32 %v812, 16
      %v873 = vrot.slane %v871, 1
      %v874 = vsel %vm822, %v869, %v873
      %v875 = vshrl.u32 %v812, 16
      %v877 = vor.u32 %v875, %v873
      %v879 = vshll.u32 %v813, 16
      %v881 = vrot.slane %v879, 1
      %v882 = vsel %vm822, %v877, %v881
      %v883 = vshrl.u32 %v813, 16
      %v885 = vor.u32 %v883, %v881
      %v887 = vshll.u32 %v814, 16
      %v889 = vrot.slane %v887, 1
      %v890 = vsel %vm822, %v885, %v889
      %v895 = vunpack.c.l.b16 %v818
      %v896 = vunpack.c.l.b16 %v819
      %v897 = vunpack.c.l.b16 %v820
      %v898 = vunpack.c.l.b16 %v821
      %v899 = vpack.c.b16 %v896, %v895
      %v900 = vpack.c.b16 %v898, %v897
      %v904 = vsel %vm371, %v834, 0
      %v907 = vsel %vm371, %v842, 0
      %v910 = vsel %vm371, %v850, 0
      %v913 = vsel %vm371, %v858, 0
      %v916 = vsel %vm371, %v866, 0
      %v919 = vsel %vm371, %v874, 0
      %v922 = vsel %vm371, %v882, 0
      %v925 = vsel %vm371, %v890, 0
      %927 = vmatprep.subr.bf16.mxu0 0
      %928 = vmatpush1.bf16.msra.mxu0 %v899
      %929 = vmatprep.subr.bf16.mxu0 0
      %930 = vmatpush1.bf16.msra.mxu0 %v900
      %931 = vmatprep.subr.bf16.mxu0 0
      %932 = vmatpush1.bf16.msra.mxu0 0
      %933 = vmatprep.subr.bf16.mxu0 0
      %934 = vmatpush1.bf16.msra.mxu0 0
      %935 = vmatprep.subr.bf16.mxu0 0
      %936 = vmatpush1.bf16.msra.mxu0 0
      %937 = vmatprep.subr.bf16.mxu0 0
      %938 = vmatpush1.bf16.msra.mxu0 0
      %939 = vmatprep.subr.bf16.mxu0 0
      %940 = vmatpush1.bf16.msra.mxu0 0
      %941 = vmatprep.subr.bf16.mxu0 0
      %942 = vmatpush1.bf16.msra.mxu0 0
      %943 = vmatprep.subr.bf16.mxu0 0
      %944 = vmatpush1.bf16.msra.mxu0 0
      %945 = vmatprep.subr.bf16.mxu0 0
      %946 = vmatpush1.bf16.msra.mxu0 0
      %947 = vmatprep.subr.bf16.mxu0 0
      %948 = vmatpush1.bf16.msra.mxu0 0
      %949 = vmatprep.subr.bf16.mxu0 0
      %950 = vmatpush1.bf16.msra.mxu0 0
      %951 = vmatprep.subr.bf16.mxu0 0
      %952 = vmatpush1.bf16.msra.mxu0 0
      %953 = vmatprep.subr.bf16.mxu0 0
      %954 = vmatpush1.bf16.msra.mxu0 0
      %955 = vmatprep.subr.bf16.mxu0 0
      %956 = vmatpush1.bf16.msra.mxu0 0
      %957 = vmatprep.subr.bf16.mxu0 0
      %958 = vmatpush1.bf16.msra.mxu0 0
      %959 = vmatprep.mubr.bf16.mxu0 0
      %960 = vmatmul.mubr.bf16.gmra.mrb[0].mxu0 %v904
      %v961 = vpop.f32.mrb[0].mxu0
      %v962 = vadd.f32 0.0, %v961
      %v963 = vpop.f32.mrb[0].mxu0
      %v964 = vpop.f32.mrb[0].mxu0
      %v965 = vadd.f32 0.0, %v964
      %v966 = vpop.f32.mrb[0].mxu0
      %967 = vmatprep.mubr.bf16.mxu0 0
      %968 = vmatmul.mubr.bf16.gmra.mrb[0].mxu0 %v907
      %v969 = vpop.f32.mrb[0].mxu0
      %v970 = vadd.f32 0.0, %v969
      %v971 = vpop.f32.mrb[0].mxu0
      %v972 = vpop.f32.mrb[0].mxu0
      %v973 = vadd.f32 0.0, %v972
      %v974 = vpop.f32.mrb[0].mxu0
      %975 = vmatprep.mubr.bf16.mxu0 0
      %976 = vmatmul.mubr.bf16.gmra.mrb[0].mxu0 %v910
      %v977 = vpop.f32.mrb[0].mxu0
      %v978 = vadd.f32 0.0, %v977
      %v979 = vpop.f32.mrb[0].mxu0
      %v980 = vpop.f32.mrb[0].mxu0
      %v981 = vadd.f32 0.0, %v980
      %v982 = vpop.f32.mrb[0].mxu0
      %983 = vmatprep.mubr.bf16.mxu0 0
      %984 = vmatmul.mubr.bf16.gmra.mrb[0].mxu0 %v913
      %v985 = vpop.f32.mrb[0].mxu0
      %v986 = vadd.f32 0.0, %v985
      %v987 = vpop.f32.mrb[0].mxu0
      %v988 = vpop.f32.mrb[0].mxu0
      %v989 = vadd.f32 0.0, %v988
      %v990 = vpop.f32.mrb[0].mxu0
      %991 = vmatprep.mubr.bf16.mxu0 0
      %992 = vmatmul.mubr.bf16.gmra.mrb[0].mxu0 %v916
      %v993 = vpop.f32.mrb[0].mxu0
      %v994 = vadd.f32 0.0, %v993
      %v995 = vpop.f32.mrb[0].mxu0
      %v996 = vpop.f32.mrb[0].mxu0
      %v997 = vadd.f32 0.0, %v996
      %v998 = vpop.f32.mrb[0].mxu0
      %999 = vmatprep.mubr.bf16.mxu0 0
      %1000 = vmatmul.mubr.bf16.gmra.mrb[0].mxu0 %v919
      %v1001 = vpop.f32.mrb[0].mxu0
      %v1002 = vadd.f32 0.0, %v1001
      %v1003 = vpop.f32.mrb[0].mxu0
      %v1004 = vpop.f32.mrb[0].mxu0
      %v1005 = vadd.f32 0.0, %v1004
      %v1006 = vpop.f32.mrb[0].mxu0
      %1007 = vmatprep.mubr.bf16.mxu0 0
      %1008 = vmatmul.mubr.bf16.gmra.mrb[0].mxu0 %v922
      %v1009 = vpop.f32.mrb[0].mxu0
      %v1010 = vadd.f32 0.0, %v1009
      %v1011 = vpop.f32.mrb[0].mxu0
      %v1012 = vpop.f32.mrb[0].mxu0
      %v1013 = vadd.f32 0.0, %v1012
      %v1014 = vpop.f32.mrb[0].mxu0
      %1015 = vmatprep.mubr.bf16.mxu0 0
      %1016 = vmatmul.mubr.bf16.gmra.mrb[0].mxu0 %v925
      %v1017 = vpop.f32.mrb[0].mxu0
      %v1018 = vadd.f32 0.0, %v1017
      %v1019 = vpop.f32.mrb[0].mxu0
      %v1020 = vpop.f32.mrb[0].mxu0
      %v1021 = vadd.f32 0.0, %v1020
      %v1022 = vpop.f32.mrb[0].mxu0
      %1023 = vdwg.mxu0
      %v1024 = vadd.f32 %v769, %v962
      %v1025 = vadd.f32 %v770, %v965
      %v1026 = vadd.f32 %v771, %v970
      %v1027 = vadd.f32 %v772, %v973
      %v1028 = vadd.f32 %v773, %v978
      %v1029 = vadd.f32 %v774, %v981
      %v1030 = vadd.f32 %v775, %v986
      %v1031 = vadd.f32 %v776, %v989
      %v1032 = vadd.f32 %v777, %v994
      %v1033 = vadd.f32 %v778, %v997
      %v1034 = vadd.f32 %v779, %v1002
      %v1035 = vadd.f32 %v780, %v1005
      %v1036 = vadd.f32 %v781, %v1010
      %v1037 = vadd.f32 %v782, %v1013
      %v1038 = vadd.f32 %v783, %v1018
      %v1039 = vadd.f32 %v784, %v1021
      %s1040 = scalar_lea.vmem %s243, 64
      %v1041 = vld [vmem:[%s1040] sm:$0xf]
      %v1042 = vld [vmem:[%s1040 + $0x4] sm:$0xf]
      %v1043 = vld [vmem:[%s1040 + $0x8] sm:$0xf]
      %v1044 = vld [vmem:[%s1040 + $0xc] sm:$0xf]
      %v1045 = vshrl.u32 %v814, 16
      %v1047 = vor.u32 %v1045, %v889
      %v1049 = vshll.u32 %v815, 16
      %v1051 = vrot.slane %v1049, 1
      %v1052 = vsel %vm822, %v1047, %v1051
      %v1057 = vunpack.c.l.b16 %v1041
      %v1058 = vunpack.c.l.b16 %v1042
      %v1059 = vunpack.c.l.b16 %v1043
      %v1060 = vunpack.c.l.b16 %v1044
      %v1061 = vpack.c.b16 %v1058, %v1057
      %v1062 = vpack.c.b16 %v1060, %v1059
      %v1066 = vsel %vm371, %v1052, 0
      %1068 = vmatprep.subr.bf16.mxu0 0
      %1069 = vmatpush1.bf16.msra.mxu0 %v1061
      %1070 = vmatprep.subr.bf16.mxu0 0
      %1071 = vmatpush1.bf16.msra.mxu0 %v1062
      %1072 = vmatprep.subr.bf16.mxu0 0
      %1073 = vmatpush1.bf16.msra.mxu0 0
      %1074 = vmatprep.subr.bf16.mxu0 0
      %1075 = vmatpush1.bf16.msra.mxu0 0
      %1076 = vmatprep.subr.bf16.mxu0 0
      %1077 = vmatpush1.bf16.msra.mxu0 0
      %1078 = vmatprep.subr.bf16.mxu0 0
      %1079 = vmatpush1.bf16.msra.mxu0 0
      %1080 = vmatprep.subr.bf16.mxu0 0
      %1081 = vmatpush1.bf16.msra.mxu0 0
      %1082 = vmatprep.subr.bf16.mxu0 0
      %1083 = vmatpush1.bf16.msra.mxu0 0
      %1084 = vmatprep.subr.bf16.mxu0 0
      %1085 = vmatpush1.bf16.msra.mxu0 0
      %1086 = vmatprep.subr.bf16.mxu0 0
      %1087 = vmatpush1.bf16.msra.mxu0 0
      %1088 = vmatprep.subr.bf16.mxu0 0
      %1089 = vmatpush1.bf16.msra.mxu0 0
      %1090 = vmatprep.subr.bf16.mxu0 0
      %1091 = vmatpush1.bf16.msra.mxu0 0
      %1092 = vmatprep.subr.bf16.mxu0 0
      %1093 = vmatpush1.bf16.msra.mxu0 0
      %1094 = vmatprep.subr.bf16.mxu0 0
      %1095 = vmatpush1.bf16.msra.mxu0 0
      %1096 = vmatprep.subr.bf16.mxu0 0
      %1097 = vmatpush1.bf16.msra.mxu0 0
      %1098 = vmatprep.subr.bf16.mxu0 0
      %1099 = vmatpush1.bf16.msra.mxu0 0
      %1100 = vmatprep.mubr.bf16.mxu0 0
      %1101 = vmatmul.mubr.bf16.gmra.mrb[0].mxu0 %v907
      %v1102 = vpop.f32.mrb[0].mxu0
      %v1103 = vadd.f32 0.0, %v1102
      %v1104 = vpop.f32.mrb[0].mxu0
      %v1105 = vpop.f32.mrb[0].mxu0
      %v1106 = vadd.f32 0.0, %v1105
      %v1107 = vpop.f32.mrb[0].mxu0
      %1108 = vmatprep.mubr.bf16.mxu0 0
      %1109 = vmatmul.mubr.bf16.gmra.mrb[0].mxu0 %v910
      %v1110 = vpop.f32.mrb[0].mxu0
      %v1111 = vadd.f32 0.0, %v1110
      %v1112 = vpop.f32.mrb[0].mxu0
      %v1113 = vpop.f32.mrb[0].mxu0
      %v1114 = vadd.f32 0.0, %v1113
      %v1115 = vpop.f32.mrb[0].mxu0
      %1116 = vmatprep.mubr.bf16.mxu0 0
      %1117 = vmatmul.mubr.bf16.gmra.mrb[0].mxu0 %v913
      %v1118 = vpop.f32.mrb[0].mxu0
      %v1119 = vadd.f32 0.0, %v1118
      %v1120 = vpop.f32.mrb[0].mxu0
      %v1121 = vpop.f32.mrb[0].mxu0
      %v1122 = vadd.f32 0.0, %v1121
      %v1123 = vpop.f32.mrb[0].mxu0
      %1124 = vmatprep.mubr.bf16.mxu0 0
      %1125 = vmatmul.mubr.bf16.gmra.mrb[0].mxu0 %v916
      %v1126 = vpop.f32.mrb[0].mxu0
      %v1127 = vadd.f32 0.0, %v1126
      %v1128 = vpop.f32.mrb[0].mxu0
      %v1129 = vpop.f32.mrb[0].mxu0
      %v1130 = vadd.f32 0.0, %v1129
      %v1131 = vpop.f32.mrb[0].mxu0
      %1132 = vmatprep.mubr.bf16.mxu0 0
      %1133 = vmatmul.mubr.bf16.gmra.mrb[0].mxu0 %v919
      %v1134 = vpop.f32.mrb[0].mxu0
      %v1135 = vadd.f32 0.0, %v1134
      %v1136 = vpop.f32.mrb[0].mxu0
      %v1137 = vpop.f32.mrb[0].mxu0
      %v1138 = vadd.f32 0.0, %v1137
      %v1139 = vpop.f32.mrb[0].mxu0
      %1140 = vmatprep.mubr.bf16.mxu0 0
      %1141 = vmatmul.mubr.bf16.gmra.mrb[0].mxu0 %v922
      %v1142 = vpop.f32.mrb[0].mxu0
      %v1143 = vadd.f32 0.0, %v1142
      %v1144 = vpop.f32.mrb[0].mxu0
      %v1145 = vpop.f32.mrb[0].mxu0
      %v1146 = vadd.f32 0.0, %v1145
      %v1147 = vpop.f32.mrb[0].mxu0
      %1148 = vmatprep.mubr.bf16.mxu0 0
      %1149 = vmatmul.mubr.bf16.gmra.mrb[0].mxu0 %v925
      %v1150 = vpop.f32.mrb[0].mxu0
      %v1151 = vadd.f32 0.0, %v1150
      %v1152 = vpop.f32.mrb[0].mxu0
      %v1153 = vpop.f32.mrb[0].mxu0
      %v1154 = vadd.f32 0.0, %v1153
      %v1155 = vpop.f32.mrb[0].mxu0
      %1156 = vmatprep.mubr.bf16.mxu0 0
      %1157 = vmatmul.mubr.bf16.gmra.mrb[0].mxu0 %v1066
      %v1158 = vpop.f32.mrb[0].mxu0
      %v1159 = vadd.f32 0.0, %v1158
      %v1160 = vpop.f32.mrb[0].mxu0
      %v1161 = vpop.f32.mrb[0].mxu0
      %v1162 = vadd.f32 0.0, %v1161
      %v1163 = vpop.f32.mrb[0].mxu0
      %1164 = vdwg.mxu0
      %v1165 = vadd.f32 %v1024, %v1103
      %v1166 = vadd.f32 %v1025, %v1106
      %v1167 = vadd.f32 %v1026, %v1111
      %v1168 = vadd.f32 %v1027, %v1114
      %v1169 = vadd.f32 %v1028, %v1119
      %v1170 = vadd.f32 %v1029, %v1122
      %v1171 = vadd.f32 %v1030, %v1127
      %v1172 = vadd.f32 %v1031, %v1130
      %v1173 = vadd.f32 %v1032, %v1135
      %v1174 = vadd.f32 %v1033, %v1138
      %v1175 = vadd.f32 %v1034, %v1143
      %v1176 = vadd.f32 %v1035, %v1146
      %v1177 = vadd.f32 %v1036, %v1151
      %v1178 = vadd.f32 %v1037, %v1154
      %v1179 = vadd.f32 %v1038, %v1159
      %v1180 = vadd.f32 %v1039, %v1162
      %s1181 = scalar_lea.vmem %s243, 112
      %v1182 = vld [vmem:[%s1181] sm:$0xf]
      %v1183 = vld [vmem:[%s1181 + $0x4] sm:$0xf]
      %v1184 = vld [vmem:[%s1181 + $0x8] sm:$0xf]
      %v1185 = vld [vmem:[%s1181 + $0xc] sm:$0xf]
      %v1186 = vshrl.u32 %v815, 16
      %v1188 = vor.u32 %v1186, %v1051
      %v1190 = vshll.u32 %v816, 16
      %v1192 = vrot.slane %v1190, 1
      %v1193 = vsel %vm822, %v1188, %v1192
      %v1198 = vunpack.c.l.b16 %v1182
      %v1199 = vunpack.c.l.b16 %v1183
      %v1200 = vunpack.c.l.b16 %v1184
      %v1201 = vunpack.c.l.b16 %v1185
      %v1202 = vpack.c.b16 %v1199, %v1198
      %v1203 = vpack.c.b16 %v1201, %v1200
      %v1207 = vsel %vm371, %v1193, 0
      %1209 = vmatprep.subr.bf16.mxu0 0
      %1210 = vmatpush1.bf16.msra.mxu0 %v1202
      %1211 = vmatprep.subr.bf16.mxu0 0
      %1212 = vmatpush1.bf16.msra.mxu0 %v1203
      %1213 = vmatprep.subr.bf16.mxu0 0
      %1214 = vmatpush1.bf16.msra.mxu0 0
      %1215 = vmatprep.subr.bf16.mxu0 0
      %1216 = vmatpush1.bf16.msra.mxu0 0
      %1217 = vmatprep.subr.bf16.mxu0 0
      %1218 = vmatpush1.bf16.msra.mxu0 0
      %1219 = vmatprep.subr.bf16.mxu0 0
      %1220 = vmatpush1.bf16.msra.mxu0 0
      %1221 = vmatprep.subr.bf16.mxu0 0
      %1222 = vmatpush1.bf16.msra.mxu0 0
      %1223 = vmatprep.subr.bf16.mxu0 0
      %1224 = vmatpush1.bf16.msra.mxu0 0
      %1225 = vmatprep.subr.bf16.mxu0 0
      %1226 = vmatpush1.bf16.msra.mxu0 0
      %1227 = vmatprep.subr.bf16.mxu0 0
      %1228 = vmatpush1.bf16.msra.mxu0 0
      %1229 = vmatprep.subr.bf16.mxu0 0
      %1230 = vmatpush1.bf16.msra.mxu0 0
      %1231 = vmatprep.subr.bf16.mxu0 0
      %1232 = vmatpush1.bf16.msra.mxu0 0
      %1233 = vmatprep.subr.bf16.mxu0 0
      %1234 = vmatpush1.bf16.msra.mxu0 0
      %1235 = vmatprep.subr.bf16.mxu0 0
      %1236 = vmatpush1.bf16.msra.mxu0 0
      %1237 = vmatprep.subr.bf16.mxu0 0
      %1238 = vmatpush1.bf16.msra.mxu0 0
      %1239 = vmatprep.subr.bf16.mxu0 0
      %1240 = vmatpush1.bf16.msra.mxu0 0
      %1241 = vmatprep.mubr.bf16.mxu0 0
      %1242 = vmatmul.mubr.bf16.gmra.mrb[0].mxu0 %v910
      %v1243 = vpop.f32.mrb[0].mxu0
      %v1244 = vadd.f32 0.0, %v1243
      %v1245 = vpop.f32.mrb[0].mxu0
      %v1246 = vpop.f32.mrb[0].mxu0
      %v1247 = vadd.f32 0.0, %v1246
      %v1248 = vpop.f32.mrb[0].mxu0
      %1249 = vmatprep.mubr.bf16.mxu0 0
      %1250 = vmatmul.mubr.bf16.gmra.mrb[0].mxu0 %v913
      %v1251 = vpop.f32.mrb[0].mxu0
      %v1252 = vadd.f32 0.0, %v1251
      %v1253 = vpop.f32.mrb[0].mxu0
      %v1254 = vpop.f32.mrb[0].mxu0
      %v1255 = vadd.f32 0.0, %v1254
      %v1256 = vpop.f32.mrb[0].mxu0
      %1257 = vmatprep.mubr.bf16.mxu0 0
      %1258 = vmatmul.mubr.bf16.gmra.mrb[0].mxu0 %v916
      %v1259 = vpop.f32.mrb[0].mxu0
      %v1260 = vadd.f32 0.0, %v1259
      %v1261 = vpop.f32.mrb[0].mxu0
      %v1262 = vpop.f32.mrb[0].mxu0
      %v1263 = vadd.f32 0.0, %v1262
      %v1264 = vpop.f32.mrb[0].mxu0
      %1265 = vmatprep.mubr.bf16.mxu0 0
      %1266 = vmatmul.mubr.bf16.gmra.mrb[0].mxu0 %v919
      %v1267 = vpop.f32.mrb[0].mxu0
      %v1268 = vadd.f32 0.0, %v1267
      %v1269 = vpop.f32.mrb[0].mxu0
      %v1270 = vpop.f32.mrb[0].mxu0
      %v1271 = vadd.f32 0.0, %v1270
      %v1272 = vpop.f32.mrb[0].mxu0
      %1273 = vmatprep.mubr.bf16.mxu0 0
      %1274 = vmatmul.mubr.bf16.gmra.mrb[0].mxu0 %v922
      %v1275 = vpop.f32.mrb[0].mxu0
      %v1276 = vadd.f32 0.0, %v1275
      %v1277 = vpop.f32.mrb[0].mxu0
      %v1278 = vpop.f32.mrb[0].mxu0
      %v1279 = vadd.f32 0.0, %v1278
      %v1280 = vpop.f32.mrb[0].mxu0
      %1281 = vmatprep.mubr.bf16.mxu0 0
      %1282 = vmatmul.mubr.bf16.gmra.mrb[0].mxu0 %v925
      %v1283 = vpop.f32.mrb[0].mxu0
      %v1284 = vadd.f32 0.0, %v1283
      %v1285 = vpop.f32.mrb[0].mxu0
      %v1286 = vpop.f32.mrb[0].mxu0
      %v1287 = vadd.f32 0.0, %v1286
      %v1288 = vpop.f32.mrb[0].mxu0
      %1289 = vmatprep.mubr.bf16.mxu0 0
      %1290 = vmatmul.mubr.bf16.gmra.mrb[0].mxu0 %v1066
      %v1291 = vpop.f32.mrb[0].mxu0
      %v1292 = vadd.f32 0.0, %v1291
      %v1293 = vpop.f32.mrb[0].mxu0
      %v1294 = vpop.f32.mrb[0].mxu0
      %v1295 = vadd.f32 0.0, %v1294
      %v1296 = vpop.f32.mrb[0].mxu0
      %1297 = vmatprep.mubr.bf16.mxu0 0
      %1298 = vmatmul.mubr.bf16.gmra.mrb[0].mxu0 %v1207
      %v1299 = vpop.f32.mrb[0].mxu0
      %v1300 = vadd.f32 0.0, %v1299
      %v1301 = vpop.f32.mrb[0].mxu0
      %v1302 = vpop.f32.mrb[0].mxu0
      %v1303 = vadd.f32 0.0, %v1302
      %v1304 = vpop.f32.mrb[0].mxu0
      %1305 = vdwg.mxu0
      %v1306 = vadd.f32 %v1165, %v1244
      %v1307 = vadd.f32 %v1166, %v1247
      %v1308 = vadd.f32 %v1167, %v1252
      %v1309 = vadd.f32 %v1168, %v1255
      %v1310 = vadd.f32 %v1169, %v1260
      %v1311 = vadd.f32 %v1170, %v1263
      %v1312 = vadd.f32 %v1171, %v1268
      %v1313 = vadd.f32 %v1172, %v1271
      %v1314 = vadd.f32 %v1173, %v1276
      %v1315 = vadd.f32 %v1174, %v1279
      %v1316 = vadd.f32 %v1175, %v1284
      %v1317 = vadd.f32 %v1176, %v1287
      %v1318 = vadd.f32 %v1177, %v1292
      %v1319 = vadd.f32 %v1178, %v1295
      %v1320 = vadd.f32 %v1179, %v1300
      %v1321 = vadd.f32 %v1180, %v1303
      %s1322 = scalar_lea.vmem %s243, 32
      %v1323 = vld [vmem:[%s1322] sm:$0xf]
      %v1324 = vld [vmem:[%s1322 + $0x4] sm:$0xf]
      %v1325 = vld [vmem:[%s1322 + $0x8] sm:$0xf]
      %v1326 = vld [vmem:[%s1322 + $0xc] sm:$0xf]
      %vm1336 = vcmask 1046528
      %v1337 = vrot.slane %v806, 1
      %v1338 = vrot.slane %v807, 1
      %v1339 = vsel %vm1336, %v1337, %v1338
      %v1340 = vrot.slane %v808, 1
      %v1341 = vsel %vm1336, %v1338, %v1340
      %v1342 = vrot.slane %v809, 1
      %v1343 = vsel %vm1336, %v1340, %v1342
      %v1344 = vrot.slane %v810, 1
      %v1345 = vsel %vm1336, %v1342, %v1344
      %v1346 = vrot.slane %v811, 1
      %v1347 = vsel %vm1336, %v1344, %v1346
      %v1348 = vrot.slane %v812, 1
      %v1349 = vsel %vm1336, %v1346, %v1348
      %v1350 = vrot.slane %v813, 1
      %v1351 = vsel %vm1336, %v1348, %v1350
      %v1352 = vrot.slane %v814, 1
      %v1353 = vsel %vm1336, %v1350, %v1352
      %v1358 = vunpack.c.l.b16 %v1323
      %v1359 = vunpack.c.l.b16 %v1324
      %v1360 = vunpack.c.l.b16 %v1325
      %v1361 = vunpack.c.l.b16 %v1326
      %v1362 = vpack.c.b16 %v1359, %v1358
      %v1363 = vpack.c.b16 %v1361, %v1360
      %v1367 = vsel %vm371, %v1339, 0
      %v1370 = vsel %vm371, %v1341, 0
      %v1373 = vsel %vm371, %v1343, 0
      %v1376 = vsel %vm371, %v1345, 0
      %v1379 = vsel %vm371, %v1347, 0
      %v1382 = vsel %vm371, %v1349, 0
      %v1385 = vsel %vm371, %v1351, 0
      %v1388 = vsel %vm371, %v1353, 0
      %1390 = vmatprep.subr.bf16.mxu0 0
      %1391 = vmatpush1.bf16.msra.mxu0 %v1362
      %1392 = vmatprep.subr.bf16.mxu0 0
      %1393 = vmatpush1.bf16.msra.mxu0 %v1363
      %1394 = vmatprep.subr.bf16.mxu0 0
      %1395 = vmatpush1.bf16.msra.mxu0 0
      %1396 = vmatprep.subr.bf16.mxu0 0
      %1397 = vmatpush1.bf16.msra.mxu0 0
      %1398 = vmatprep.subr.bf16.mxu0 0
      %1399 = vmatpush1.bf16.msra.mxu0 0
      %1400 = vmatprep.subr.bf16.mxu0 0
      %1401 = vmatpush1.bf16.msra.mxu0 0
      %1402 = vmatprep.subr.bf16.mxu0 0
      %1403 = vmatpush1.bf16.msra.mxu0 0
      %1404 = vmatprep.subr.bf16.mxu0 0
      %1405 = vmatpush1.bf16.msra.mxu0 0
      %1406 = vmatprep.subr.bf16.mxu0 0
      %1407 = vmatpush1.bf16.msra.mxu0 0
      %1408 = vmatprep.subr.bf16.mxu0 0
      %1409 = vmatpush1.bf16.msra.mxu0 0
      %1410 = vmatprep.subr.bf16.mxu0 0
      %1411 = vmatpush1.bf16.msra.mxu0 0
      %1412 = vmatprep.subr.bf16.mxu0 0
      %1413 = vmatpush1.bf16.msra.mxu0 0
      %1414 = vmatprep.subr.bf16.mxu0 0
      %1415 = vmatpush1.bf16.msra.mxu0 0
      %1416 = vmatprep.subr.bf16.mxu0 0
      %1417 = vmatpush1.bf16.msra.mxu0 0
      %1418 = vmatprep.subr.bf16.mxu0 0
      %1419 = vmatpush1.bf16.msra.mxu0 0
      %1420 = vmatprep.subr.bf16.mxu0 0
      %1421 = vmatpush1.bf16.msra.mxu0 0
      %1422 = vmatprep.mubr.bf16.mxu0 0
      %1423 = vmatmul.mubr.bf16.gmra.mrb[0].mxu0 %v1367
      %v1424 = vpop.f32.mrb[0].mxu0
      %v1425 = vadd.f32 0.0, %v1424
      %v1426 = vpop.f32.mrb[0].mxu0
      %v1427 = vpop.f32.mrb[0].mxu0
      %v1428 = vadd.f32 0.0, %v1427
      %v1429 = vpop.f32.mrb[0].mxu0
      %1430 = vmatprep.mubr.bf16.mxu0 0
      %1431 = vmatmul.mubr.bf16.gmra.mrb[0].mxu0 %v1370
      %v1432 = vpop.f32.mrb[0].mxu0
      %v1433 = vadd.f32 0.0, %v1432
      %v1434 = vpop.f32.mrb[0].mxu0
      %v1435 = vpop.f32.mrb[0].mxu0
      %v1436 = vadd.f32 0.0, %v1435
      %v1437 = vpop.f32.mrb[0].mxu0
      %1438 = vmatprep.mubr.bf16.mxu0 0
      %1439 = vmatmul.mubr.bf16.gmra.mrb[0].mxu0 %v1373
      %v1440 = vpop.f32.mrb[0].mxu0
      %v1441 = vadd.f32 0.0, %v1440
      %v1442 = vpop.f32.mrb[0].mxu0
      %v1443 = vpop.f32.mrb[0].mxu0
      %v1444 = vadd.f32 0.0, %v1443
      %v1445 = vpop.f32.mrb[0].mxu0
      %1446 = vmatprep.mubr.bf16.mxu0 0
      %1447 = vmatmul.mubr.bf16.gmra.mrb[0].mxu0 %v1376
      %v1448 = vpop.f32.mrb[0].mxu0
      %v1449 = vadd.f32 0.0, %v1448
      %v1450 = vpop.f32.mrb[0].mxu0
      %v1451 = vpop.f32.mrb[0].mxu0
      %v1452 = vadd.f32 0.0, %v1451
      %v1453 = vpop.f32.mrb[0].mxu0
      %1454 = vmatprep.mubr.bf16.mxu0 0
      %1455 = vmatmul.mubr.bf16.gmra.mrb[0].mxu0 %v1379
      %v1456 = vpop.f32.mrb[0].mxu0
      %v1457 = vadd.f32 0.0, %v1456
      %v1458 = vpop.f32.mrb[0].mxu0
      %v1459 = vpop.f32.mrb[0].mxu0
      %v1460 = vadd.f32 0.0, %v1459
      %v1461 = vpop.f32.mrb[0].mxu0
      %1462 = vmatprep.mubr.bf16.mxu0 0
      %1463 = vmatmul.mubr.bf16.gmra.mrb[0].mxu0 %v1382
      %v1464 = vpop.f32.mrb[0].mxu0
      %v1465 = vadd.f32 0.0, %v1464
      %v1466 = vpop.f32.mrb[0].mxu0
      %v1467 = vpop.f32.mrb[0].mxu0
      %v1468 = vadd.f32 0.0, %v1467
      %v1469 = vpop.f32.mrb[0].mxu0
      %1470 = vmatprep.mubr.bf16.mxu0 0
      %1471 = vmatmul.mubr.bf16.gmra.mrb[0].mxu0 %v1385
      %v1472 = vpop.f32.mrb[0].mxu0
      %v1473 = vadd.f32 0.0, %v1472
      %v1474 = vpop.f32.mrb[0].mxu0
      %v1475 = vpop.f32.mrb[0].mxu0
      %v1476 = vadd.f32 0.0, %v1475
      %v1477 = vpop.f32.mrb[0].mxu0
      %1478 = vmatprep.mubr.bf16.mxu0 0
      %1479 = vmatmul.mubr.bf16.gmra.mrb[0].mxu0 %v1388
      %v1480 = vpop.f32.mrb[0].mxu0
      %v1481 = vadd.f32 0.0, %v1480
      %v1482 = vpop.f32.mrb[0].mxu0
      %v1483 = vpop.f32.mrb[0].mxu0
      %v1484 = vadd.f32 0.0, %v1483
      %v1485 = vpop.f32.mrb[0].mxu0
      %1486 = vdwg.mxu0
      %v1487 = vadd.f32 %v1306, %v1425
      %v1488 = vadd.f32 %v1307, %v1428
      %v1489 = vadd.f32 %v1308, %v1433
      %v1490 = vadd.f32 %v1309, %v1436
      %v1491 = vadd.f32 %v1310, %v1441
      %v1492 = vadd.f32 %v1311, %v1444
      %v1493 = vadd.f32 %v1312, %v1449
      %v1494 = vadd.f32 %v1313, %v1452
      %v1495 = vadd.f32 %v1314, %v1457
      %v1496 = vadd.f32 %v1315, %v1460
      %v1497 = vadd.f32 %v1316, %v1465
      %v1498 = vadd.f32 %v1317, %v1468
      %v1499 = vadd.f32 %v1318, %v1473
      %v1500 = vadd.f32 %v1319, %v1476
      %v1501 = vadd.f32 %v1320, %v1481
      %v1502 = vadd.f32 %v1321, %v1484
      %s1503 = scalar_lea.vmem %s243, 80
      %v1504 = vld [vmem:[%s1503] sm:$0xf]
      %v1505 = vld [vmem:[%s1503 + $0x4] sm:$0xf]
      %v1506 = vld [vmem:[%s1503 + $0x8] sm:$0xf]
      %v1507 = vld [vmem:[%s1503 + $0xc] sm:$0xf]
      %v1509 = vrot.slane %v815, 1
      %v1510 = vsel %vm1336, %v1352, %v1509
      %v1515 = vunpack.c.l.b16 %v1504
      %v1516 = vunpack.c.l.b16 %v1505
      %v1517 = vunpack.c.l.b16 %v1506
      %v1518 = vunpack.c.l.b16 %v1507
      %v1519 = vpack.c.b16 %v1516, %v1515
      %v1520 = vpack.c.b16 %v1518, %v1517
      %v1524 = vsel %vm371, %v1510, 0
      %1526 = vmatprep.subr.bf16.mxu0 0
      %1527 = vmatpush1.bf16.msra.mxu0 %v1519
      %1528 = vmatprep.subr.bf16.mxu0 0
      %1529 = vmatpush1.bf16.msra.mxu0 %v1520
      %1530 = vmatprep.subr.bf16.mxu0 0
      %1531 = vmatpush1.bf16.msra.mxu0 0
      %1532 = vmatprep.subr.bf16.mxu0 0
      %1533 = vmatpush1.bf16.msra.mxu0 0
      %1534 = vmatprep.subr.bf16.mxu0 0
      %1535 = vmatpush1.bf16.msra.mxu0 0
      %1536 = vmatprep.subr.bf16.mxu0 0
      %1537 = vmatpush1.bf16.msra.mxu0 0
      %1538 = vmatprep.subr.bf16.mxu0 0
      %1539 = vmatpush1.bf16.msra.mxu0 0
      %1540 = vmatprep.subr.bf16.mxu0 0
      %1541 = vmatpush1.bf16.msra.mxu0 0
      %1542 = vmatprep.subr.bf16.mxu0 0
      %1543 = vmatpush1.bf16.msra.mxu0 0
      %1544 = vmatprep.subr.bf16.mxu0 0
      %1545 = vmatpush1.bf16.msra.mxu0 0
      %1546 = vmatprep.subr.bf16.mxu0 0
      %1547 = vmatpush1.bf16.msra.mxu0 0
      %1548 = vmatprep.subr.bf16.mxu0 0
      %1549 = vmatpush1.bf16.msra.mxu0 0
      %1550 = vmatprep.subr.bf16.mxu0 0
      %1551 = vmatpush1.bf16.msra.mxu0 0
      %1552 = vmatprep.subr.bf16.mxu0 0
      %1553 = vmatpush1.bf16.msra.mxu0 0
      %1554 = vmatprep.subr.bf16.mxu0 0
      %1555 = vmatpush1.bf16.msra.mxu0 0
      %1556 = vmatprep.subr.bf16.mxu0 0
      %1557 = vmatpush1.bf16.msra.mxu0 0
      %1558 = vmatprep.mubr.bf16.mxu0 0
      %1559 = vmatmul.mubr.bf16.gmra.mrb[0].mxu0 %v1370
      %v1560 = vpop.f32.mrb[0].mxu0
      %v1561 = vadd.f32 0.0, %v1560
      %v1562 = vpop.f32.mrb[0].mxu0
      %v1563 = vpop.f32.mrb[0].mxu0
      %v1564 = vadd.f32 0.0, %v1563
      %v1565 = vpop.f32.mrb[0].mxu0
      %1566 = vmatprep.mubr.bf16.mxu0 0
      %1567 = vmatmul.mubr.bf16.gmra.mrb[0].mxu0 %v1373
      %v1568 = vpop.f32.mrb[0].mxu0
      %v1569 = vadd.f32 0.0, %v1568
      %v1570 = vpop.f32.mrb[0].mxu0
      %v1571 = vpop.f32.mrb[0].mxu0
      %v1572 = vadd.f32 0.0, %v1571
      %v1573 = vpop.f32.mrb[0].mxu0
      %1574 = vmatprep.mubr.bf16.mxu0 0
      %1575 = vmatmul.mubr.bf16.gmra.mrb[0].mxu0 %v1376
      %v1576 = vpop.f32.mrb[0].mxu0
      %v1577 = vadd.f32 0.0, %v1576
      %v1578 = vpop.f32.mrb[0].mxu0
      %v1579 = vpop.f32.mrb[0].mxu0
      %v1580 = vadd.f32 0.0, %v1579
      %v1581 = vpop.f32.mrb[0].mxu0
      %1582 = vmatprep.mubr.bf16.mxu0 0
      %1583 = vmatmul.mubr.bf16.gmra.mrb[0].mxu0 %v1379
      %v1584 = vpop.f32.mrb[0].mxu0
      %v1585 = vadd.f32 0.0, %v1584
      %v1586 = vpop.f32.mrb[0].mxu0
      %v1587 = vpop.f32.mrb[0].mxu0
      %v1588 = vadd.f32 0.0, %v1587
      %v1589 = vpop.f32.mrb[0].mxu0
      %1590 = vmatprep.mubr.bf16.mxu0 0
      %1591 = vmatmul.mubr.bf16.gmra.mrb[0].mxu0 %v1382
      %v1592 = vpop.f32.mrb[0].mxu0
      %v1593 = vadd.f32 0.0, %v1592
      %v1594 = vpop.f32.mrb[0].mxu0
      %v1595 = vpop.f32.mrb[0].mxu0
      %v1596 = vadd.f32 0.0, %v1595
      %v1597 = vpop.f32.mrb[0].mxu0
      %1598 = vmatprep.mubr.bf16.mxu0 0
      %1599 = vmatmul.mubr.bf16.gmra.mrb[0].mxu0 %v1385
      %v1600 = vpop.f32.mrb[0].mxu0
      %v1601 = vadd.f32 0.0, %v1600
      %v1602 = vpop.f32.mrb[0].mxu0
      %v1603 = vpop.f32.mrb[0].mxu0
      %v1604 = vadd.f32 0.0, %v1603
      %v1605 = vpop.f32.mrb[0].mxu0
      %1606 = vmatprep.mubr.bf16.mxu0 0
      %1607 = vmatmul.mubr.bf16.gmra.mrb[0].mxu0 %v1388
      %v1608 = vpop.f32.mrb[0].mxu0
      %v1609 = vadd.f32 0.0, %v1608
      %v1610 = vpop.f32.mrb[0].mxu0
      %v1611 = vpop.f32.mrb[0].mxu0
      %v1612 = vadd.f32 0.0, %v1611
      %v1613 = vpop.f32.mrb[0].mxu0
      %1614 = vmatprep.mubr.bf16.mxu0 0
      %1615 = vmatmul.mubr.bf16.gmra.mrb[0].mxu0 %v1524
      %v1616 = vpop.f32.mrb[0].mxu0
      %v1617 = vadd.f32 0.0, %v1616
      %v1618 = vpop.f32.mrb[0].mxu0
      %v1619 = vpop.f32.mrb[0].mxu0
      %v1620 = vadd.f32 0.0, %v1619
      %v1621 = vpop.f32.mrb[0].mxu0
      %1622 = vdwg.mxu0
      %v1623 = vadd.f32 %v1487, %v1561
      %v1624 = vadd.f32 %v1488, %v1564
      %v1625 = vadd.f32 %v1489, %v1569
      %v1626 = vadd.f32 %v1490, %v1572
      %v1627 = vadd.f32 %v1491, %v1577
      %v1628 = vadd.f32 %v1492, %v1580
      %v1629 = vadd.f32 %v1493, %v1585
      %v1630 = vadd.f32 %v1494, %v1588
      %v1631 = vadd.f32 %v1495, %v1593
      %v1632 = vadd.f32 %v1496, %v1596
      %v1633 = vadd.f32 %v1497, %v1601
      %v1634 = vadd.f32 %v1498, %v1604
      %v1635 = vadd.f32 %v1499, %v1609
      %v1636 = vadd.f32 %v1500, %v1612
      %v1637 = vadd.f32 %v1501, %v1617
      %v1638 = vadd.f32 %v1502, %v1620
      %s1639 = scalar_lea.vmem %s243, 128
      %v1640 = vld [vmem:[%s1639] sm:$0xf]
      %v1641 = vld [vmem:[%s1639 + $0x4] sm:$0xf]
      %v1642 = vld [vmem:[%s1639 + $0x8] sm:$0xf]
      %v1643 = vld [vmem:[%s1639 + $0xc] sm:$0xf]
      %v1645 = vrot.slane %v816, 1
      %v1646 = vsel %vm1336, %v1509, %v1645
      %v1651 = vunpack.c.l.b16 %v1640
      %v1652 = vunpack.c.l.b16 %v1641
      %v1653 = vunpack.c.l.b16 %v1642
      %v1654 = vunpack.c.l.b16 %v1643
      %v1655 = vpack.c.b16 %v1652, %v1651
      %v1656 = vpack.c.b16 %v1654, %v1653
      %v1660 = vsel %vm371, %v1646, 0
      %1662 = vmatprep.subr.bf16.mxu0 0
      %1663 = vmatpush1.bf16.msra.mxu0 %v1655
      %1664 = vmatprep.subr.bf16.mxu0 0
      %1665 = vmatpush1.bf16.msra.mxu0 %v1656
      %1666 = vmatprep.subr.bf16.mxu0 0
      %1667 = vmatpush1.bf16.msra.mxu0 0
      %1668 = vmatprep.subr.bf16.mxu0 0
      %1669 = vmatpush1.bf16.msra.mxu0 0
      %1670 = vmatprep.subr.bf16.mxu0 0
      %1671 = vmatpush1.bf16.msra.mxu0 0
      %1672 = vmatprep.subr.bf16.mxu0 0
      %1673 = vmatpush1.bf16.msra.mxu0 0
      %1674 = vmatprep.subr.bf16.mxu0 0
      %1675 = vmatpush1.bf16.msra.mxu0 0
      %1676 = vmatprep.subr.bf16.mxu0 0
      %1677 = vmatpush1.bf16.msra.mxu0 0
      %1678 = vmatprep.subr.bf16.mxu0 0
      %1679 = vmatpush1.bf16.msra.mxu0 0
      %1680 = vmatprep.subr.bf16.mxu0 0
      %1681 = vmatpush1.bf16.msra.mxu0 0
      %1682 = vmatprep.subr.bf16.mxu0 0
      %1683 = vmatpush1.bf16.msra.mxu0 0
      %1684 = vmatprep.subr.bf16.mxu0 0
      %1685 = vmatpush1.bf16.msra.mxu0 0
      %1686 = vmatprep.subr.bf16.mxu0 0
      %1687 = vmatpush1.bf16.msra.mxu0 0
      %1688 = vmatprep.subr.bf16.mxu0 0
      %1689 = vmatpush1.bf16.msra.mxu0 0
      %1690 = vmatprep.subr.bf16.mxu0 0
      %1691 = vmatpush1.bf16.msra.mxu0 0
      %1692 = vmatprep.subr.bf16.mxu0 0
      %1693 = vmatpush1.bf16.msra.mxu0 0
      %1694 = vmatprep.mubr.bf16.mxu0 0
      %1695 = vmatmul.mubr.bf16.gmra.mrb[0].mxu0 %v1373
      %v1696 = vpop.f32.mrb[0].mxu0
      %v1697 = vadd.f32 0.0, %v1696
      %v1698 = vpop.f32.mrb[0].mxu0
      %v1699 = vpop.f32.mrb[0].mxu0
      %v1700 = vadd.f32 0.0, %v1699
      %v1701 = vpop.f32.mrb[0].mxu0
      %1702 = vmatprep.mubr.bf16.mxu0 0
      %1703 = vmatmul.mubr.bf16.gmra.mrb[0].mxu0 %v1376
      %v1704 = vpop.f32.mrb[0].mxu0
      %v1705 = vadd.f32 0.0, %v1704
      %v1706 = vpop.f32.mrb[0].mxu0
      %v1707 = vpop.f32.mrb[0].mxu0
      %v1708 = vadd.f32 0.0, %v1707
      %v1709 = vpop.f32.mrb[0].mxu0
      %1710 = vmatprep.mubr.bf16.mxu0 0
      %1711 = vmatmul.mubr.bf16.gmra.mrb[0].mxu0 %v1379
      %v1712 = vpop.f32.mrb[0].mxu0
      %v1713 = vadd.f32 0.0, %v1712
      %v1714 = vpop.f32.mrb[0].mxu0
      %v1715 = vpop.f32.mrb[0].mxu0
      %v1716 = vadd.f32 0.0, %v1715
      %v1717 = vpop.f32.mrb[0].mxu0
      %1718 = vmatprep.mubr.bf16.mxu0 0
      %1719 = vmatmul.mubr.bf16.gmra.mrb[0].mxu0 %v1382
      %v1720 = vpop.f32.mrb[0].mxu0
      %v1721 = vadd.f32 0.0, %v1720
      %v1722 = vpop.f32.mrb[0].mxu0
      %v1723 = vpop.f32.mrb[0].mxu0
      %v1724 = vadd.f32 0.0, %v1723
      %v1725 = vpop.f32.mrb[0].mxu0
      %1726 = vmatprep.mubr.bf16.mxu0 0
      %1727 = vmatmul.mubr.bf16.gmra.mrb[0].mxu0 %v1385
      %v1728 = vpop.f32.mrb[0].mxu0
      %v1729 = vadd.f32 0.0, %v1728
      %v1730 = vpop.f32.mrb[0].mxu0
      %v1731 = vpop.f32.mrb[0].mxu0
      %v1732 = vadd.f32 0.0, %v1731
      %v1733 = vpop.f32.mrb[0].mxu0
      %1734 = vmatprep.mubr.bf16.mxu0 0
      %1735 = vmatmul.mubr.bf16.gmra.mrb[0].mxu0 %v1388
      %v1736 = vpop.f32.mrb[0].mxu0
      %v1737 = vadd.f32 0.0, %v1736
      %v1738 = vpop.f32.mrb[0].mxu0
      %v1739 = vpop.f32.mrb[0].mxu0
      %v1740 = vadd.f32 0.0, %v1739
      %v1741 = vpop.f32.mrb[0].mxu0
      %1742 = vmatprep.mubr.bf16.mxu0 0
      %1743 = vmatmul.mubr.bf16.gmra.mrb[0].mxu0 %v1524
      %v1744 = vpop.f32.mrb[0].mxu0
      %v1745 = vadd.f32 0.0, %v1744
      %v1746 = vpop.f32.mrb[0].mxu0
      %v1747 = vpop.f32.mrb[0].mxu0
      %v1748 = vadd.f32 0.0, %v1747
      %v1749 = vpop.f32.mrb[0].mxu0
      %1750 = vmatprep.mubr.bf16.mxu0 0
      %1751 = vmatmul.mubr.bf16.gmra.mrb[0].mxu0 %v1660
      %v1752 = vpop.f32.mrb[0].mxu0
      %v1753 = vadd.f32 0.0, %v1752
      %v1754 = vpop.f32.mrb[0].mxu0
      %v1755 = vpop.f32.mrb[0].mxu0
      %v1756 = vadd.f32 0.0, %v1755
      %v1757 = vpop.f32.mrb[0].mxu0
      %1758 = vdwg.mxu0
      %v1759 = vadd.f32 %v1623, %v1697
      %v1760 = vadd.f32 %v1624, %v1700
      %v1761 = vadd.f32 %v1625, %v1705
      %v1762 = vadd.f32 %v1626, %v1708
      %v1763 = vadd.f32 %v1627, %v1713
      %v1764 = vadd.f32 %v1628, %v1716
      %v1765 = vadd.f32 %v1629, %v1721
      %v1766 = vadd.f32 %v1630, %v1724
      %v1767 = vadd.f32 %v1631, %v1729
      %v1768 = vadd.f32 %v1632, %v1732
      %v1769 = vadd.f32 %v1633, %v1737
      %v1770 = vadd.f32 %v1634, %v1740
      %v1771 = vadd.f32 %v1635, %v1745
      %v1772 = vadd.f32 %v1636, %v1748
      %v1773 = vadd.f32 %v1637, %v1753
      %v1774 = vadd.f32 %v1638, %v1756
      %vm1775 = vcmask 130048
      %1776 = vst.msk [vmem:[#allocation2] sm:$0xff] %vm1775, %v1759
      %1777 = vst.msk [vmem:[#allocation2 + $0x8] sm:$0xff] %vm1775, %v1760
      %1778 = vst.msk [vmem:[#allocation2 + $0x10] sm:$0xff] %vm1775, %v1761
      %1779 = vst.msk [vmem:[#allocation2 + $0x18] sm:$0xff] %vm1775, %v1762
      %1780 = vst.msk [vmem:[#allocation2 + $0x20] sm:$0xff] %vm1775, %v1763
      %1781 = vst.msk [vmem:[#allocation2 + $0x28] sm:$0xff] %vm1775, %v1764
      %1782 = vst.msk [vmem:[#allocation2 + $0x30] sm:$0xff] %vm1775, %v1765
      %1783 = vst.msk [vmem:[#allocation2 + $0x38] sm:$0xff] %vm1775, %v1766
      %1784 = vst.msk [vmem:[#allocation2 + $0x40] sm:$0xff] %vm1775, %v1767
      %1785 = vst.msk [vmem:[#allocation2 + $0x48] sm:$0xff] %vm1775, %v1768
      %1786 = vst.msk [vmem:[#allocation2 + $0x50] sm:$0xff] %vm1775, %v1769
      %1787 = vst.msk [vmem:[#allocation2 + $0x58] sm:$0xff] %vm1775, %v1770
      %1788 = vst.msk [vmem:[#allocation2 + $0x60] sm:$0xff] %vm1775, %v1771
      %1789 = vst.msk [vmem:[#allocation2 + $0x68] sm:$0xff] %vm1775, %v1772
      %1790 = vst.msk [vmem:[#allocation2 + $0x70] sm:$0xff] %vm1775, %v1773
      %1791 = vst.msk [vmem:[#allocation2 + $0x78] sm:$0xff] %vm1775, %v1774
      // Predicated region
      $region37: #{ema_head_forward.7} parent=31 // pred_check
        %p1792 = pneg %p257
      $region38: #{ema_head_forward.7} parent=31 // pred_check_branch
        %1794 = sbr.rel (%p1792) target = $region40
      $region39: #{ema_head_forward.7} parent=31 // pred_region
        %v1795 = vld [vmem:[#allocation2] sm:$0xff]
        %v1796 = vld [vmem:[#allocation2 + $0x8] sm:$0xff]
        %v1797 = vld [vmem:[#allocation2 + $0x10] sm:$0xff]
        %v1798 = vld [vmem:[#allocation2 + $0x18] sm:$0xff]
        %v1799 = vld [vmem:[#allocation2 + $0x20] sm:$0xff]
        %v1800 = vld [vmem:[#allocation2 + $0x28] sm:$0xff]
        %v1801 = vld [vmem:[#allocation2 + $0x30] sm:$0xff]
        %v1802 = vld [vmem:[#allocation2 + $0x38] sm:$0xff]
        %v1803 = vld [vmem:[#allocation2 + $0x40] sm:$0xff]
        %v1804 = vld [vmem:[#allocation2 + $0x48] sm:$0xff]
        %v1805 = vld [vmem:[#allocation2 + $0x50] sm:$0xff]
        %v1806 = vld [vmem:[#allocation2 + $0x58] sm:$0xff]
        %v1807 = vld [vmem:[#allocation2 + $0x60] sm:$0xff]
        %v1808 = vld [vmem:[#allocation2 + $0x68] sm:$0xff]
        %v1809 = vld [vmem:[#allocation2 + $0x70] sm:$0xff]
        %v1810 = vld [vmem:[#allocation2 + $0x78] sm:$0xff]
        %v1811 = vld [vmem:[%s247] sm:$0x1]
        %v1813 = vlaneseq
        %v1814 = vshrl.u32 %v1813, 7
        %v1815 = vsub.s32 0, %v1814
        %v1816 = vrot.slane %v1811, %v1815
        %v1818 = vadd.f32 %v1795, %v1816
        %v1819 = vadd.f32 %v1796, %v1816
        %v1820 = vadd.f32 %v1797, %v1816
        %v1821 = vadd.f32 %v1798, %v1816
        %v1822 = vadd.f32 %v1799, %v1816
        %v1823 = vadd.f32 %v1800, %v1816
        %v1824 = vadd.f32 %v1801, %v1816
        %v1825 = vadd.f32 %v1802, %v1816
        %v1826 = vadd.f32 %v1803, %v1816
        %v1827 = vadd.f32 %v1804, %v1816
        %v1828 = vadd.f32 %v1805, %v1816
        %v1829 = vadd.f32 %v1806, %v1816
        %v1830 = vadd.f32 %v1807, %v1816
        %v1831 = vadd.f32 %v1808, %v1816
        %v1832 = vadd.f32 %v1809, %v1816
        %v1833 = vadd.f32 %v1810, %v1816
        %v1834 = vmax.f32 %v1818, 0.0
        %v1835 = vmax.f32 %v1819, 0.0
        %v1836 = vmax.f32 %v1820, 0.0
        %v1837 = vmax.f32 %v1821, 0.0
        %v1838 = vmax.f32 %v1822, 0.0
        %v1839 = vmax.f32 %v1823, 0.0
        %v1840 = vmax.f32 %v1824, 0.0
        %v1841 = vmax.f32 %v1825, 0.0
        %v1842 = vmax.f32 %v1826, 0.0
        %v1843 = vmax.f32 %v1827, 0.0
        %v1844 = vmax.f32 %v1828, 0.0
        %v1845 = vmax.f32 %v1829, 0.0
        %v1846 = vmax.f32 %v1830, 0.0
        %v1847 = vmax.f32 %v1831, 0.0
        %v1848 = vmax.f32 %v1832, 0.0
        %v1849 = vmax.f32 %v1833, 0.0
        %v1850 = vpack.c.bf16 %v1835, %v1834
        %v1851 = vpack.c.bf16 %v1837, %v1836
        %v1852 = vpack.c.bf16 %v1839, %v1838
        %v1853 = vpack.c.bf16 %v1841, %v1840
        %v1854 = vpack.c.bf16 %v1843, %v1842
        %v1855 = vpack.c.bf16 %v1845, %v1844
        %v1856 = vpack.c.bf16 %v1847, %v1846
        %v1857 = vpack.c.bf16 %v1849, %v1848
        %v1866 = vunpack.c.l.b16 %v1850
        %v1867 = vunpack.c.h.b16 %v1850
        %v1868 = vunpack.c.l.b16 %v1851
        %v1869 = vunpack.c.h.b16 %v1851
        %v1870 = vunpack.c.l.b16 %v1852
        %v1871 = vunpack.c.h.b16 %v1852
        %v1872 = vunpack.c.l.b16 %v1853
        %v1873 = vunpack.c.h.b16 %v1853
        %v1874 = vunpack.c.l.b16 %v1854
        %v1875 = vunpack.c.h.b16 %v1854
        %v1876 = vunpack.c.l.b16 %v1855
        %v1877 = vunpack.c.h.b16 %v1855
        %v1878 = vunpack.c.l.b16 %v1856
        %v1879 = vunpack.c.h.b16 %v1856
        %v1880 = vunpack.c.l.b16 %v1857
        %v1881 = vunpack.c.h.b16 %v1857
        %v1882 = vpack.c.b16 %v1866, %v1866
        %v1883 = vpack.c.b16 %v1867, %v1867
        %v1884 = vpack.c.b16 %v1868, %v1868
        %v1885 = vpack.c.b16 %v1869, %v1869
        %v1886 = vpack.c.b16 %v1870, %v1870
        %v1887 = vpack.c.b16 %v1871, %v1871
        %v1888 = vpack.c.b16 %v1872, %v1872
        %v1889 = vpack.c.b16 %v1873, %v1873
        %v1890 = vpack.c.b16 %v1874, %v1874
        %v1891 = vpack.c.b16 %v1875, %v1875
        %v1892 = vpack.c.b16 %v1876, %v1876
        %v1893 = vpack.c.b16 %v1877, %v1877
        %v1894 = vpack.c.b16 %v1878, %v1878
        %v1895 = vpack.c.b16 %v1879, %v1879
        %v1896 = vpack.c.b16 %v1880, %v1880
        %v1897 = vpack.c.b16 %v1881, %v1881
        %vm1914 = vcmask 125952
        %1915 = vst.msk [vmem:[%s255] sm:$0xf] %vm1914, %v1882
        %1916 = vst.msk [vmem:[%s255 + $0x4] sm:$0xf] %vm1914, %v1883
        %1917 = vst.msk [vmem:[%s255 + $0x8] sm:$0xf] %vm1914, %v1884
        %1918 = vst.msk [vmem:[%s255 + $0xc] sm:$0xf] %vm1914, %v1885
        %1919 = vst.msk [vmem:[%s255 + $0x10] sm:$0xf] %vm1914, %v1886
        %1920 = vst.msk [vmem:[%s255 + $0x14] sm:$0xf] %vm1914, %v1887
        %1921 = vst.msk [vmem:[%s255 + $0x18] sm:$0xf] %vm1914, %v1888
        %1922 = vst.msk [vmem:[%s255 + $0x1c] sm:$0xf] %vm1914, %v1889
        %1923 = vst.msk [vmem:[%s255 + $0x20] sm:$0xf] %vm1914, %v1890
        %1924 = vst.msk [vmem:[%s255 + $0x24] sm:$0xf] %vm1914, %v1891
        %1925 = vst.msk [vmem:[%s255 + $0x28] sm:$0xf] %vm1914, %v1892
        %1926 = vst.msk [vmem:[%s255 + $0x2c] sm:$0xf] %vm1914, %v1893
        %1927 = vst.msk [vmem:[%s255 + $0x30] sm:$0xf] %vm1914, %v1894
        %1928 = vst.msk [vmem:[%s255 + $0x34] sm:$0xf] %vm1914, %v1895
        %1929 = vst.msk [vmem:[%s255 + $0x38] sm:$0xf] %vm1914, %v1896
        %1930 = vst.msk [vmem:[%s255 + $0x3c] sm:$0xf] %vm1914, %v1897
      $region40: #{ema_head_forward.7} parent=31 // pred_fallthru
        _
      %p1931 = scmp.lt.s32.totalorder %s19, 1
      %s1932 = scalar_select %p1931, %s19, 1
      %p1933 = scmp.lt.s32.totalorder %s20, 0
      %s1934 = scalar_select %p1933, %s20, 0
      %s1935 = smul.addr %s1932, 16
      %s1936 = sadd.s32 %s1934, %s1935
      %s1937 = smul.addr %s1936, 4
      %s1938 = scalar_lea.vmem %s3, %s1937
      // Predicated region
      $region41: #{ema_head_forward.7} parent=31 // pred_check
        %p1939 = pneg %p135
      $region42: #{ema_head_forward.7} parent=31 // pred_check_branch
        %1941 = sbr.rel (%p1939) target = $region44
      $region43: #{ema_head_forward.7} parent=31 // pred_region
        _
      $region44: #{ema_head_forward.7} parent=31 // pred_fallthru
        _
    $region32: #{ema_head_forward.7} parent=5 // pred_fallthru
      _
    %p1942 = scmp.le.s32.totalorder 2, %s9
    // Predicated region
    $region45: #{ema_head_forward.7} parent=5 // pred_check
      %p1943 = pneg %p1942
    $region46: #{ema_head_forward.7} parent=5 // pred_check_branch
      %1945 = sbr.rel (%p1943) target = $region48
    $region47: #{ema_head_forward.7} parent=5 // pred_region
      %s1946 = ssub.s32 %s9, 2
      // Predicated region
      $region49: #{ema_head_forward.7} parent=47 // pred_check
        %p1947 = pneg %p141
      $region50: #{ema_head_forward.7} parent=47 // pred_check_branch
        %1949 = sbr.rel (%p1947) target = $region52
      $region51: #{ema_head_forward.7} parent=47 // pred_region
        %p1950 = scmp.lt.s32.totalorder %s22, 1
        %s1951 = scalar_select %p1950, %s22, 1
        %p1952 = scmp.lt.s32.totalorder %s23, 0
        %s1953 = scalar_select %p1952, %s23, 0
        %s1954 = smul.addr %s1951, 16
        %s1955 = sadd.s32 %s1953, %s1954
        %s1956 = smul.addr %s1955, 4
        %s1957 = scalar_lea.vmem %s3, %s1956
      $region52: #{ema_head_forward.7} parent=47 // pred_fallthru
        _
    $region48: #{ema_head_forward.7} parent=5 // pred_fallthru
      _
  $region6: #{ema_head_forward.7} parent=0 // loop_footer
    %s13 = sadd.s32 1, %s9
  $region7: #{ema_head_forward.7} parent=0 // loop_footer_branch
    %8 = sbr.rel target = $region3
  $region8: #{ema_head_forward.7} parent=0 // loop_exit
    _

// kernel: ema_head_forward.12
$region0: #{ema_head_forward.12}
  #allocation0 [shape = 'u32[]', space=smem, size = 0x4, offset = 0x4, fixed_abs, tag = 'smem constant byte address 0x4 - core index']
  #allocation1 [shape = 'u32[144,128]{1,0:T(1,128)}', space=vmem, size = 0x12000, scoped, tag = 'internal scratch']
  %s0 = inlined_call_operand.vmem [shape: bf16[2,64,16], index: 0, kind: input, shape index: {}]
  %s1 = inlined_call_operand.vmem [shape: bf16[16,128], index: 1, kind: input, shape index: {}]
  %s2 = inlined_call_operand.vmem [shape: f32[1,128], index: 2, kind: input, shape index: {}]
  %s3 = inlined_call_operand.vmem [shape: f32[2,64,128], index: 3, kind: output, shape index: {}]
  %s4 = sld [smem:[#allocation0]]
  $region45: #{ema_head_forward.12} parent=0
    _
  %s6 = ssub.s32 1, %s4
  %s7 = scalar_select 0, %s6, %s4
  loop: start=0, step=1, limit=4
  $region2: #{ema_head_forward.12} parent=0 // loop_pre_header
    _
  $region3: #{ema_head_forward.12} parent=0 // loop_header
    %s9 = sphi 0, %s13
    %p10 = scmp.ge.s32.totalorder %s9, 4
    %s16 = sphi 0, %s28
    %s17 = sphi 0, %s24
    %s18 = sphi 0, %s16
    %s19 = sphi 0, %s17
    %s20 = sphi 0, %s18
    %s21 = sphi 0, %s19
    %s33 = sphi 0, %s35
    %s36 = sphi 0, %s33
    %s37 = sphi 0, %s36
    %s53 = sphi 0, %s37
    %s57 = sphi 0, %s57
    %s59 = sphi 0, %s57
    %s60 = sphi 0, %s59
    %s74 = sphi 0, %s60
    %s78 = sphi 0, %s78
    %s80 = sphi 0, %s78
    %s81 = sphi 0, %s80
    %s95 = sphi 0, %s81
    %s103 = sphi 0, %s105
    %s106 = sphi 0, %s103
    %s107 = sphi 0, %s106
    %s123 = sphi 0, %s107
  $region4: #{ema_head_forward.12} parent=0 // loop_header_branch
    %12 = sbr.rel (%p10) target = $region8
  $region5: #{ema_head_forward.12} parent=0 // loop_body
    %s14 = ssub.s32 %s9, 1
    %s15 = ssub.s32 %s9, 2
    %s22 = sadd.s32 1, %s17
    %p23 = scmp.ge.s32.totalorder %s22, 1
    %s24 = scalar_select %p23, 0, %s22
    %s25 = sadd.s32 1, %s16
    %s26 = scalar_select %p23, %s25, %s16
    %p27 = scmp.ge.s32.totalorder %s26, 2
    %s28 = scalar_select %p27, 0, %s26
    %s29 = ssub.s32 %s16, %s28
    %s30 = ssub.s32 %s17, %s24
    %s31 = sor.u32 %s29, %s30
    %p32 = scmp.eq.s32.totalorder %s31, 0
    %s34 = sadd.s32 %s33, 1
    %s35 = scalar_select %p32, %s33, %s34
    %p38 = pneg %p32
    %p39 = scmp.eq.s32.totalorder %s9, 1
    %p40 = por %p38, %p39
    %p41 = scmp.ne.s32.totalorder %s33, %s36
    %p42 = scmp.eq.s32.totalorder %s9, 0
    %p43 = por %p41, %p42
    %p44 = scmp.ne.s32.totalorder %s33, %s36
    %p45 = scmp.eq.s32.totalorder %s14, 1
    %p46 = por %p44, %p45
    %p47 = scmp.ne.s32.totalorder %s36, %s37
    %p48 = scmp.eq.s32.totalorder %s14, 0
    %p49 = por %p47, %p48
    %p50 = scmp.ne.s32.totalorder %s36, %s37
    %p51 = scmp.eq.s32.totalorder %s15, 1
    %p52 = por %p50, %p51
    %p54 = scmp.ne.s32.totalorder %s37, %s53
    %p55 = scmp.eq.s32.totalorder %s15, 0
    %p56 = por %p54, %p55
    %s58 = sadd.s32 %s57, 1
    %p61 = scmp.eq.s32.totalorder %s9, 1
    %p62 = scmp.ne.s32.totalorder %s57, %s59
    %p63 = scmp.eq.s32.totalorder %s9, 0
    %p64 = por %p62, %p63
    %p65 = scmp.ne.s32.totalorder %s57, %s59
    %p66 = scmp.eq.s32.totalorder %s14, 1
    %p67 = por %p65, %p66
    %p68 = scmp.ne.s32.totalorder %s59, %s60
    %p69 = scmp.eq.s32.totalorder %s14, 0
    %p70 = por %p68, %p69
    %p71 = scmp.ne.s32.totalorder %s59, %s60
    %p72 = scmp.eq.s32.totalorder %s15, 1
    %p73 = por %p71, %p72
    %p75 = scmp.ne.s32.totalorder %s60, %s74
    %p76 = scmp.eq.s32.totalorder %s15, 0
    %p77 = por %p75, %p76
    %s79 = sadd.s32 %s78, 1
    %p82 = scmp.eq.s32.totalorder %s9, 1
    %p83 = scmp.ne.s32.totalorder %s78, %s80
    %p84 = scmp.eq.s32.totalorder %s9, 0
    %p85 = por %p83, %p84
    %p86 = scmp.ne.s32.totalorder %s78, %s80
    %p87 = scmp.eq.s32.totalorder %s14, 1
    %p88 = por %p86, %p87
    %p89 = scmp.ne.s32.totalorder %s80, %s81
    %p90 = scmp.eq.s32.totalorder %s14, 0
    %p91 = por %p89, %p90
    %p92 = scmp.ne.s32.totalorder %s80, %s81
    %p93 = scmp.eq.s32.totalorder %s15, 1
    %p94 = por %p92, %p93
    %p96 = scmp.ne.s32.totalorder %s81, %s95
    %p97 = scmp.eq.s32.totalorder %s15, 0
    %p98 = por %p96, %p97
    %s99 = ssub.s32 %s16, %s28
    %s100 = ssub.s32 %s17, %s24
    %s101 = sor.u32 %s99, %s100
    %p102 = scmp.eq.s32.totalorder %s101, 0
    %s104 = sadd.s32 %s103, 1
    %s105 = scalar_select %p102, %s103, %s104
    %p108 = pneg %p102
    %p109 = scmp.eq.s32.totalorder %s9, 1
    %p110 = por %p108, %p109
    %p111 = scmp.ne.s32.totalorder %s103, %s106
    %p112 = scmp.eq.s32.totalorder %s9, 0
    %p113 = por %p111, %p112
    %p114 = scmp.ne.s32.totalorder %s103, %s106
    %p115 = scmp.eq.s32.totalorder %s14, 1
    %p116 = por %p114, %p115
    %p117 = scmp.ne.s32.totalorder %s106, %s107
    %p118 = scmp.eq.s32.totalorder %s14, 0
    %p119 = por %p117, %p118
    %p120 = scmp.ne.s32.totalorder %s106, %s107
    %p121 = scmp.eq.s32.totalorder %s15, 1
    %p122 = por %p120, %p121
    %p124 = scmp.ne.s32.totalorder %s107, %s123
    %p125 = scmp.eq.s32.totalorder %s15, 0
    %p126 = por %p124, %p125
    %p127 = scmp.le.s32.totalorder 1, %s9
    %p128 = scmp.lt.s32.totalorder %s9, 3
    %p129 = pnand %p127, %p128
    %p130 = pneg %p129
    // Predicated region
    $region9: #{ema_head_forward.12} parent=5 // pred_check
      _
    $region10: #{ema_head_forward.12} parent=5 // pred_check_branch
      %132 = sbr.rel (%p129) target = $region12
    $region11: #{ema_head_forward.12} parent=5 // pred_region
      %s133 = ssub.s32 %s9, 1
      // Predicated region
      $region13: #{ema_head_forward.12} parent=11 // pred_check
        %p134 = pneg %p70
      $region14: #{ema_head_forward.12} parent=11 // pred_check_branch
        %136 = sbr.rel (%p134) target = $region16
      $region15: #{ema_head_forward.12} parent=11 // pred_region
        _
      $region16: #{ema_head_forward.12} parent=11 // pred_fallthru
        _
      // Predicated region
      $region17: #{ema_head_forward.12} parent=11 // pred_check
        %p137 = pneg %p91
      $region18: #{ema_head_forward.12} parent=11 // pred_check_branch
        %139 = sbr.rel (%p137) target = $region20
      $region19: #{ema_head_forward.12} parent=11 // pred_region
        _
      $region20: #{ema_head_forward.12} parent=11 // pred_fallthru
        _
    $region12: #{ema_head_forward.12} parent=5 // pred_fallthru
      _
    %p140 = scmp.lt.s32.totalorder %s9, 2
    // Predicated region
    $region21: #{ema_head_forward.12} parent=5 // pred_check
      %p141 = pneg %p140
    $region22: #{ema_head_forward.12} parent=5 // pred_check_branch
      %143 = sbr.rel (%p141) target = $region24
    $region23: #{ema_head_forward.12} parent=5 // pred_region
      // Predicated region
      $region25: #{ema_head_forward.12} parent=23 // pred_check
        %p144 = pneg %p43
      $region26: #{ema_head_forward.12} parent=23 // pred_check_branch
        %146 = sbr.rel (%p144) target = $region28
      $region27: #{ema_head_forward.12} parent=23 // pred_region
        %s147 = smul.u32 8, %s17
        %p148 = scmp.lt.s32.totalorder %s16, 1
        %s149 = scalar_select %p148, %s16, 1
        %p150 = scmp.lt.s32.totalorder %s147, 7
        %s151 = scalar_select %p150, %s147, 7
        %s152 = smul.addr %s149, 8
        %s153 = sadd.s32 %s151, %s152
        %s154 = smul.addr %s153, 4
        %s155 = scalar_lea.vmem %s0, %s154
        %s156 = smul.u32 8, %s17
      $region28: #{ema_head_forward.12} parent=23 // pred_fallthru
        _
    $region24: #{ema_head_forward.12} parent=5 // pred_fallthru
      _
    %p157 = scmp.le.s32.totalorder 1, %s9
    %p158 = scmp.lt.s32.totalorder %s9, 3
    %p159 = pnand %p157, %p158
    %p160 = pneg %p159
    // Predicated region
    $region29: #{ema_head_forward.12} parent=5 // pred_check
      _
    $region30: #{ema_head_forward.12} parent=5 // pred_check_branch
      %162 = sbr.rel (%p159) target = $region32
    $region31: #{ema_head_forward.12} parent=5 // pred_region
      %s163 = ssub.s32 %s9, 1
      %s164 = smul.u32 8, %s19
      %p165 = scmp.lt.s32.totalorder %s18, 1
      %s166 = scalar_select %p165, %s18, 1
      %p167 = scmp.lt.s32.totalorder %s164, 7
      %s168 = scalar_select %p167, %s164, 7
      %s169 = smul.addr %s166, 8
      %s170 = sadd.s32 %s168, %s169
      %s171 = smul.addr %s170, 4
      %s172 = scalar_lea.vmem %s0, %s171
      %p173 = pneg %p49
      %p174 = pneg %p46
      %p175 = pneg %p70
      %p176 = pneg %p67
      %p177 = pneg %p91
      %p178 = pneg %p88
      %p179 = pneg %p119
      %p180 = pneg %p116
      %s181 = smul.u32 8, %s19
      %p182 = scmp.lt.s32.totalorder %s18, 1
      %s183 = scalar_select %p182, %s18, 1
      %p184 = scmp.lt.s32.totalorder %s181, 7
      %s185 = scalar_select %p184, %s181, 7
      %s186 = smul.addr %s183, 8
      %s187 = sadd.s32 %s185, %s186
      %s188 = smul.addr %s187, 8
      %s189 = scalar_lea.vmem %s3, %s188
      %s190 = smul.u32 8, %s19
      %p191 = scmp.lt.s32.totalorder %s18, 1
      %s192 = scalar_select %p191, %s18, 1
      %p193 = scmp.lt.s32.totalorder %s190, 7
      %s194 = scalar_select %p193, %s190, 7
      %s195 = smul.addr %s192, 8
      %s196 = sadd.s32 %s194, %s195
      %s197 = smul.addr %s196, 4
      %s198 = scalar_lea.vmem %s0, %s197
      %s199 = smul.u32 8, %s19
      %s200 = smul.u32 8, %s19
      %p201 = scmp.lt.s32.totalorder %s18, 1
      %s202 = scalar_select %p201, %s18, 1
      %p203 = scmp.lt.s32.totalorder %s200, 7
      %s204 = scalar_select %p203, %s200, 7
      %s205 = smul.addr %s202, 8
      %s206 = sadd.s32 %s204, %s205
      %s207 = smul.addr %s206, 8
      %s208 = scalar_lea.vmem %s3, %s207
      %s209 = smul.u32 8, %s19
      %v211 = vld [vmem:[%s198] sm:$0xf]
      %v212 = vld [vmem:[%s198 + $0x4] sm:$0xf]
      %v213 = vld [vmem:[%s198 + $0x8] sm:$0xf]
      %v214 = vld [vmem:[%s198 + $0xc] sm:$0xf]
      %v215 = vld [vmem:[%s198 + $0x10] sm:$0xf]
      %v216 = vld [vmem:[%s198 + $0x14] sm:$0xf]
      %v217 = vld [vmem:[%s198 + $0x18] sm:$0xf]
      %v218 = vld [vmem:[%s198 + $0x1c] sm:$0xf]
      %v219 = vld [vmem:[%s1] sm:$0xf]
      %v220 = vld [vmem:[%s1 + $0x4] sm:$0xf]
      %v221 = vld [vmem:[%s2] sm:$0x1]
      %v223 = vlaneseq
      %v224 = vshrl.u32 %v223, 7
      %v225 = vsub.s32 0, %v224
      %v226 = vrot.slane %v221, %v225
      %v236 = vunpack.c.l.b16 %v211
      %v237 = vunpack.c.l.b16 %v212
      %v238 = vunpack.c.l.b16 %v213
      %v239 = vunpack.c.l.b16 %v214
      %v240 = vunpack.c.l.b16 %v215
      %v241 = vunpack.c.l.b16 %v216
      %v242 = vunpack.c.l.b16 %v217
      %v243 = vunpack.c.l.b16 %v218
      %v244 = vpack.c.b16 %v237, %v236
      %v245 = vpack.c.b16 %v239, %v238
      %v246 = vpack.c.b16 %v241, %v240
      %v247 = vpack.c.b16 %v243, %v242
      %v250 = vunpack.c.l.b16 %v219
      %v251 = vunpack.c.l.b16 %v220
      %v252 = vpack.c.b16 %v251, %v250
      %vm254 = vcmask 130048
      %v256 = vsel %vm254, %v244, 0
      %v259 = vsel %vm254, %v245, 0
      %v262 = vsel %vm254, %v246, 0
      %v265 = vsel %vm254, %v247, 0
      %267 = vmatprep.subr.bf16.mxu0 0
      %268 = vmatpush1.bf16.msra.mxu0 %v252
      %269 = vmatprep.subr.bf16.mxu0 0
      %270 = vmatpush1.bf16.msra.mxu0 0
      %271 = vmatprep.subr.bf16.mxu0 0
      %272 = vmatpush1.bf16.msra.mxu0 0
      %273 = vmatprep.subr.bf16.mxu0 0
      %274 = vmatpush1.bf16.msra.mxu0 0
      %275 = vmatprep.subr.bf16.mxu0 0
      %276 = vmatpush1.bf16.msra.mxu0 0
      %277 = vmatprep.subr.bf16.mxu0 0
      %278 = vmatpush1.bf16.msra.mxu0 0
      %279 = vmatprep.subr.bf16.mxu0 0
      %280 = vmatpush1.bf16.msra.mxu0 0
      %281 = vmatprep.subr.bf16.mxu0 0
      %282 = vmatpush1.bf16.msra.mxu0 0
      %283 = vmatprep.subr.bf16.mxu0 0
      %284 = vmatpush1.bf16.msra.mxu0 0
      %285 = vmatprep.subr.bf16.mxu0 0
      %286 = vmatpush1.bf16.msra.mxu0 0
      %287 = vmatprep.subr.bf16.mxu0 0
      %288 = vmatpush1.bf16.msra.mxu0 0
      %289 = vmatprep.subr.bf16.mxu0 0
      %290 = vmatpush1.bf16.msra.mxu0 0
      %291 = vmatprep.subr.bf16.mxu0 0
      %292 = vmatpush1.bf16.msra.mxu0 0
      %293 = vmatprep.subr.bf16.mxu0 0
      %294 = vmatpush1.bf16.msra.mxu0 0
      %295 = vmatprep.subr.bf16.mxu0 0
      %296 = vmatpush1.bf16.msra.mxu0 0
      %297 = vmatprep.subr.bf16.mxu0 0
      %298 = vmatpush1.bf16.msra.mxu0 0
      %299 = vmatprep.mubr.bf16.mxu0 0
      %300 = vmatmul.mubr.bf16.gmra.mrb[0].mxu0 %v256
      %v301 = vpop.f32.mrb[0].mxu0
      %v302 = vadd.f32 %v226, %v301
      %v303 = vpop.f32.mrb[0].mxu0
      %v304 = vpop.f32.mrb[0].mxu0
      %v305 = vadd.f32 %v226, %v304
      %v306 = vpop.f32.mrb[0].mxu0
      %307 = vmatprep.mubr.bf16.mxu0 0
      %308 = vmatmul.mubr.bf16.gmra.mrb[0].mxu0 %v259
      %v309 = vpop.f32.mrb[0].mxu0
      %v310 = vadd.f32 %v226, %v309
      %v311 = vpop.f32.mrb[0].mxu0
      %v312 = vpop.f32.mrb[0].mxu0
      %v313 = vadd.f32 %v226, %v312
      %v314 = vpop.f32.mrb[0].mxu0
      %315 = vmatprep.mubr.bf16.mxu0 0
      %316 = vmatmul.mubr.bf16.gmra.mrb[0].mxu0 %v262
      %v317 = vpop.f32.mrb[0].mxu0
      %v318 = vadd.f32 %v226, %v317
      %v319 = vpop.f32.mrb[0].mxu0
      %v320 = vpop.f32.mrb[0].mxu0
      %v321 = vadd.f32 %v226, %v320
      %v322 = vpop.f32.mrb[0].mxu0
      %323 = vmatprep.mubr.bf16.mxu0 0
      %324 = vmatmul.mubr.bf16.gmra.mrb[0].mxu0 %v265
      %v325 = vpop.f32.mrb[0].mxu0
      %v326 = vadd.f32 %v226, %v325
      %v327 = vpop.f32.mrb[0].mxu0
      %v328 = vpop.f32.mrb[0].mxu0
      %v329 = vadd.f32 %v226, %v328
      %v330 = vpop.f32.mrb[0].mxu0
      %331 = vdwg.mxu0
      %332 = vst [vmem:[%s208] sm:$0xff] %v302
      %333 = vst [vmem:[%s208 + $0x8] sm:$0xff] %v305
      %334 = vst [vmem:[%s208 + $0x10] sm:$0xff] %v310
      %335 = vst [vmem:[%s208 + $0x18] sm:$0xff] %v313
      %336 = vst [vmem:[%s208 + $0x20] sm:$0xff] %v318
      %337 = vst [vmem:[%s208 + $0x28] sm:$0xff] %v321
      %338 = vst [vmem:[%s208 + $0x30] sm:$0xff] %v326
      %339 = vst [vmem:[%s208 + $0x38] sm:$0xff] %v329
      %s340 = smul.u32 8, %s19
      %p341 = scmp.lt.s32.totalorder %s18, 1
      %s342 = scalar_select %p341, %s18, 1
      %p343 = scmp.lt.s32.totalorder %s340, 7
      %s344 = scalar_select %p343, %s340, 7
      %s345 = smul.addr %s342, 8
      %s346 = sadd.s32 %s344, %s345
      %s347 = smul.addr %s346, 8
      %s348 = scalar_lea.vmem %s3, %s347
      // Predicated region
      $region33: #{ema_head_forward.12} parent=31 // pred_check
        %p349 = pneg %p116
      $region34: #{ema_head_forward.12} parent=31 // pred_check_branch
        %351 = sbr.rel (%p349) target = $region36
      $region35: #{ema_head_forward.12} parent=31 // pred_region
        %s352 = smul.u32 8, %s19
      $region36: #{ema_head_forward.12} parent=31 // pred_fallthru
        _
    $region32: #{ema_head_forward.12} parent=5 // pred_fallthru
      _
    %p353 = scmp.le.s32.totalorder 2, %s9
    // Predicated region
    $region37: #{ema_head_forward.12} parent=5 // pred_check
      %p354 = pneg %p353
    $region38: #{ema_head_forward.12} parent=5 // pred_check_branch
      %356 = sbr.rel (%p354) target = $region40
    $region39: #{ema_head_forward.12} parent=5 // pred_region
      %s357 = ssub.s32 %s9, 2
      // Predicated region
      $region41: #{ema_head_forward.12} parent=39 // pred_check
        %p358 = pneg %p122
      $region42: #{ema_head_forward.12} parent=39 // pred_check_branch
        %360 = sbr.rel (%p358) target = $region44
      $region43: #{ema_head_forward.12} parent=39 // pred_region
        %s361 = smul.u32 8, %s21
        %p362 = scmp.lt.s32.totalorder %s20, 1
        %s363 = scalar_select %p362, %s20, 1
        %p364 = scmp.lt.s32.totalorder %s361, 7
        %s365 = scalar_select %p364, %s361, 7
        %s366 = smul.addr %s363, 8
        %s367 = sadd.s32 %s365, %s366
        %s368 = smul.addr %s367, 8
        %s369 = scalar_lea.vmem %s3, %s368
      $region44: #{ema_head_forward.12} parent=39 // pred_fallthru
        _
    $region40: #{ema_head_forward.12} parent=5 // pred_fallthru
      _
  $region6: #{ema_head_forward.12} parent=0 // loop_footer
    %s13 = sadd.s32 1, %s9
  $region7: #{ema_head_forward.12} parent=0 // loop_footer_branch
    %8 = sbr.rel target = $region3
  $region8: #{ema_head_forward.12} parent=0 // loop_exit
    _

// kernel: ema_head_forward.11
$region0: #{ema_head_forward.11}
  #allocation0 [shape = 'u32[]', space=smem, size = 0x4, offset = 0x4, fixed_abs, tag = 'smem constant byte address 0x4 - core index']
  #allocation1 [shape = 'u32[144,128]{1,0:T(1,128)}', space=vmem, size = 0x12000, scoped, tag = 'internal scratch']
  #allocation2 [shape = 'f32[128,16]{1,0:T(8,128)}', space=vmem, size = 0x10000, scoped, tag = 'scratch operand']
  %s0 = inlined_call_operand.vmem [shape: bf16[2,176,16], index: 0, kind: input, shape index: {}]
  %s1 = inlined_call_operand.vmem [shape: bf16[9,16,16], index: 1, kind: input, shape index: {}]
  %s2 = inlined_call_operand.vmem [shape: f32[1,16], index: 2, kind: input, shape index: {}]
  %s3 = inlined_call_operand.vmem [shape: bf16[2,128,16], index: 3, kind: output, shape index: {}]
  %s4 = sld [smem:[#allocation0]]
  $region53: #{ema_head_forward.11} parent=0
    _
  %s6 = ssub.s32 1, %s4
  %s7 = scalar_select 0, %s6, %s4
  loop: start=0, step=1, limit=4
  $region2: #{ema_head_forward.11} parent=0 // loop_pre_header
    _
  $region3: #{ema_head_forward.11} parent=0 // loop_header
    %s9 = sphi 0, %s13
    %p10 = scmp.ge.s32.totalorder %s9, 4
    %s16 = sphi 0, %s35
    %s17 = sphi 0, %s31
    %s18 = sphi 0, %s27
    %s19 = sphi 0, %s16
    %s20 = sphi 0, %s17
    %s21 = sphi 0, %s18
    %s22 = sphi 0, %s19
    %s23 = sphi 0, %s20
    %s24 = sphi 0, %s21
    %s40 = sphi 0, %s42
    %s43 = sphi 0, %s40
    %s44 = sphi 0, %s43
    %s60 = sphi 0, %s44
    %s68 = sphi 0, %s70
    %s71 = sphi 0, %s68
    %s72 = sphi 0, %s71
    %s88 = sphi 0, %s72
    %s94 = sphi 0, %s96
    %s97 = sphi 0, %s94
    %s98 = sphi 0, %s97
    %s114 = sphi 0, %s98
    %s122 = sphi 0, %s124
    %s125 = sphi 0, %s122
    %s126 = sphi 0, %s125
    %s142 = sphi 0, %s126
  $region4: #{ema_head_forward.11} parent=0 // loop_header_branch
    %12 = sbr.rel (%p10) target = $region8
  $region5: #{ema_head_forward.11} parent=0 // loop_body
    %s14 = ssub.s32 %s9, 1
    %s15 = ssub.s32 %s9, 2
    %s25 = sadd.s32 1, %s18
    %p26 = scmp.ge.s32.totalorder %s25, 1
    %s27 = scalar_select %p26, 0, %s25
    %s28 = sadd.s32 1, %s17
    %s29 = scalar_select %p26, %s28, %s17
    %p30 = scmp.ge.s32.totalorder %s29, 1
    %s31 = scalar_select %p30, 0, %s29
    %s32 = sadd.s32 1, %s16
    %s33 = scalar_select %p30, %s32, %s16
    %p34 = scmp.ge.s32.totalorder %s33, 2
    %s35 = scalar_select %p34, 0, %s33
    %s36 = ssub.s32 %s16, %s35
    %s37 = ssub.s32 %s18, %s27
    %s38 = sor.u32 %s36, %s37
    %p39 = scmp.eq.s32.totalorder %s38, 0
    %s41 = sadd.s32 %s40, 1
    %s42 = scalar_select %p39, %s40, %s41
    %p45 = pneg %p39
    %p46 = scmp.eq.s32.totalorder %s9, 1
    %p47 = por %p45, %p46
    %p48 = scmp.ne.s32.totalorder %s40, %s43
    %p49 = scmp.eq.s32.totalorder %s9, 0
    %p50 = por %p48, %p49
    %p51 = scmp.ne.s32.totalorder %s40, %s43
    %p52 = scmp.eq.s32.totalorder %s14, 1
    %p53 = por %p51, %p52
    %p54 = scmp.ne.s32.totalorder %s43, %s44
    %p55 = scmp.eq.s32.totalorder %s14, 0
    %p56 = por %p54, %p55
    %p57 = scmp.ne.s32.totalorder %s43, %s44
    %p58 = scmp.eq.s32.totalorder %s15, 1
    %p59 = por %p57, %p58
    %p61 = scmp.ne.s32.totalorder %s44, %s60
    %p62 = scmp.eq.s32.totalorder %s15, 0
    %p63 = por %p61, %p62
    %s64 = ssub.s32 %s18, %s27
    %s65 = ssub.s32 %s17, %s31
    %s66 = sor.u32 %s64, %s65
    %p67 = scmp.eq.s32.totalorder %s66, 0
    %s69 = sadd.s32 %s68, 1
    %s70 = scalar_select %p67, %s68, %s69
    %p73 = pneg %p67
    %p74 = scmp.eq.s32.totalorder %s9, 1
    %p75 = por %p73, %p74
    %p76 = scmp.ne.s32.totalorder %s68, %s71
    %p77 = scmp.eq.s32.totalorder %s9, 0
    %p78 = por %p76, %p77
    %p79 = scmp.ne.s32.totalorder %s68, %s71
    %p80 = scmp.eq.s32.totalorder %s14, 1
    %p81 = por %p79, %p80
    %p82 = scmp.ne.s32.totalorder %s71, %s72
    %p83 = scmp.eq.s32.totalorder %s14, 0
    %p84 = por %p82, %p83
    %p85 = scmp.ne.s32.totalorder %s71, %s72
    %p86 = scmp.eq.s32.totalorder %s15, 1
    %p87 = por %p85, %p86
    %p89 = scmp.ne.s32.totalorder %s72, %s88
    %p90 = scmp.eq.s32.totalorder %s15, 0
    %p91 = por %p89, %p90
    %s92 = ssub.s32 %s17, %s31
    %p93 = scmp.eq.s32.totalorder %s92, 0
    %s95 = sadd.s32 %s94, 1
    %s96 = scalar_select %p93, %s94, %s95
    %p99 = pneg %p93
    %p100 = scmp.eq.s32.totalorder %s9, 1
    %p101 = por %p99, %p100
    %p102 = scmp.ne.s32.totalorder %s94, %s97
    %p103 = scmp.eq.s32.totalorder %s9, 0
    %p104 = por %p102, %p103
    %p105 = scmp.ne.s32.totalorder %s94, %s97
    %p106 = scmp.eq.s32.totalorder %s14, 1
    %p107 = por %p105, %p106
    %p108 = scmp.ne.s32.totalorder %s97, %s98
    %p109 = scmp.eq.s32.totalorder %s14, 0
    %p110 = por %p108, %p109
    %p111 = scmp.ne.s32.totalorder %s97, %s98
    %p112 = scmp.eq.s32.totalorder %s15, 1
    %p113 = por %p111, %p112
    %p115 = scmp.ne.s32.totalorder %s98, %s114
    %p116 = scmp.eq.s32.totalorder %s15, 0
    %p117 = por %p115, %p116
    %s118 = ssub.s32 %s16, %s35
    %s119 = ssub.s32 %s17, %s31
    %s120 = sor.u32 %s118, %s119
    %p121 = scmp.eq.s32.totalorder %s120, 0
    %s123 = sadd.s32 %s122, 1
    %s124 = scalar_select %p121, %s122, %s123
    %p127 = pneg %p121
    %p128 = scmp.eq.s32.totalorder %s9, 1
    %p129 = por %p127, %p128
    %p130 = scmp.ne.s32.totalorder %s122, %s125
    %p131 = scmp.eq.s32.totalorder %s9, 0
    %p132 = por %p130, %p131
    %p133 = scmp.ne.s32.totalorder %s122, %s125
    %p134 = scmp.eq.s32.totalorder %s14, 1
    %p135 = por %p133, %p134
    %p136 = scmp.ne.s32.totalorder %s125, %s126
    %p137 = scmp.eq.s32.totalorder %s14, 0
    %p138 = por %p136, %p137
    %p139 = scmp.ne.s32.totalorder %s125, %s126
    %p140 = scmp.eq.s32.totalorder %s15, 1
    %p141 = por %p139, %p140
    %p143 = scmp.ne.s32.totalorder %s126, %s142
    %p144 = scmp.eq.s32.totalorder %s15, 0
    %p145 = por %p143, %p144
    %p146 = scmp.le.s32.totalorder 1, %s9
    %p147 = scmp.lt.s32.totalorder %s9, 3
    %p148 = pnand %p146, %p147
    %p149 = pneg %p148
    // Predicated region
    $region9: #{ema_head_forward.11} parent=5 // pred_check
      _
    $region10: #{ema_head_forward.11} parent=5 // pred_check_branch
      %151 = sbr.rel (%p148) target = $region12
    $region11: #{ema_head_forward.11} parent=5 // pred_region
      %s152 = ssub.s32 %s9, 1
      // Predicated region
      $region13: #{ema_head_forward.11} parent=11 // pred_check
        %p153 = pneg %p84
      $region14: #{ema_head_forward.11} parent=11 // pred_check_branch
        %155 = sbr.rel (%p153) target = $region16
      $region15: #{ema_head_forward.11} parent=11 // pred_region
        %s156 = smul.u32 2, %s21
        %p157 = scmp.lt.s32.totalorder %s156, 1
        %s158 = scalar_select %p157, %s156, 1
        %p159 = scmp.lt.s32.totalorder %s20, 0
        %s160 = scalar_select %p159, %s20, 0
        %s161 = sadd.s32 %s160, %s158
        %s162 = smul.addr %s161, 4
        %s163 = scalar_lea.vmem %s1, %s162
        %s164 = smul.u32 2, %s21
      $region16: #{ema_head_forward.11} parent=11 // pred_fallthru
        _
      // Predicated region
      $region17: #{ema_head_forward.11} parent=11 // pred_check
        %p165 = pneg %p110
      $region18: #{ema_head_forward.11} parent=11 // pred_check_branch
        %167 = sbr.rel (%p165) target = $region20
      $region19: #{ema_head_forward.11} parent=11 // pred_region
        %p168 = scmp.lt.s32.totalorder %s20, 0
        %s169 = scalar_select %p168, %s20, 0
        %s170 = scalar_lea.vmem %s2, %s169
      $region20: #{ema_head_forward.11} parent=11 // pred_fallthru
        _
    $region12: #{ema_head_forward.11} parent=5 // pred_fallthru
      _
    %p171 = scmp.lt.s32.totalorder %s9, 2
    // Predicated region
    $region21: #{ema_head_forward.11} parent=5 // pred_check
      %p172 = pneg %p171
    $region22: #{ema_head_forward.11} parent=5 // pred_check_branch
      %174 = sbr.rel (%p172) target = $region24
    $region23: #{ema_head_forward.11} parent=5 // pred_region
      // Predicated region
      $region25: #{ema_head_forward.11} parent=23 // pred_check
        %p175 = pneg %p50
      $region26: #{ema_head_forward.11} parent=23 // pred_check_branch
        %177 = sbr.rel (%p175) target = $region28
      $region27: #{ema_head_forward.11} parent=23 // pred_region
        %p178 = scmp.lt.s32.totalorder %s16, 1
        %s179 = scalar_select %p178, %s16, 1
        %p180 = scmp.lt.s32.totalorder %s18, 0
        %s181 = scalar_select %p180, %s18, 0
        %s182 = smul.addr %s179, 22
        %s183 = sadd.s32 %s181, %s182
        %s184 = smul.addr %s183, 4
        %s185 = scalar_lea.vmem %s0, %s184
      $region28: #{ema_head_forward.11} parent=23 // pred_fallthru
        _
    $region24: #{ema_head_forward.11} parent=5 // pred_fallthru
      _
    %p186 = scmp.le.s32.totalorder 1, %s9
    %p187 = scmp.lt.s32.totalorder %s9, 3
    %p188 = pnand %p186, %p187
    %p189 = pneg %p188
    // Predicated region
    $region29: #{ema_head_forward.11} parent=5 // pred_check
      _
    $region30: #{ema_head_forward.11} parent=5 // pred_check_branch
      %191 = sbr.rel (%p188) target = $region32
    $region31: #{ema_head_forward.11} parent=5 // pred_region
      %s192 = ssub.s32 %s9, 1
      %p193 = scmp.lt.s32.totalorder %s19, 1
      %s194 = scalar_select %p193, %s19, 1
      %p195 = scmp.lt.s32.totalorder %s21, 0
      %s196 = scalar_select %p195, %s21, 0
      %s197 = smul.addr %s194, 22
      %s198 = sadd.s32 %s196, %s197
      %s199 = smul.addr %s198, 4
      %s200 = scalar_lea.vmem %s0, %s199
      %p201 = pneg %p56
      %p202 = pneg %p53
      %s203 = smul.u32 2, %s21
      %p204 = scmp.lt.s32.totalorder %s203, 1
      %s205 = scalar_select %p204, %s203, 1
      %p206 = scmp.lt.s32.totalorder %s20, 0
      %s207 = scalar_select %p206, %s20, 0
      %s208 = sadd.s32 %s207, %s205
      %s209 = smul.addr %s208, 4
      %s210 = scalar_lea.vmem %s1, %s209
      %p211 = pneg %p84
      %p212 = pneg %p81
      %p213 = scmp.lt.s32.totalorder %s20, 0
      %s214 = scalar_select %p213, %s20, 0
      %s215 = scalar_lea.vmem %s2, %s214
      %p216 = pneg %p110
      %p217 = pneg %p107
      %p218 = pneg %p138
      %p219 = pneg %p135
      %p220 = scmp.lt.s32.totalorder %s19, 1
      %s221 = scalar_select %p220, %s19, 1
      %p222 = scmp.lt.s32.totalorder %s20, 0
      %s223 = scalar_select %p222, %s20, 0
      %s224 = smul.addr %s221, 16
      %s225 = sadd.s32 %s223, %s224
      %s226 = smul.addr %s225, 4
      %s227 = scalar_lea.vmem %s3, %s226
      %p228 = scmp.lt.s32.totalorder %s19, 1
      %s229 = scalar_select %p228, %s19, 1
      %p230 = scmp.lt.s32.totalorder %s21, 0
      %s231 = scalar_select %p230, %s21, 0
      %s232 = smul.addr %s229, 22
      %s233 = sadd.s32 %s231, %s232
      %s234 = smul.addr %s233, 4
      %s235 = scalar_lea.vmem %s0, %s234
      %s236 = smul.u32 2, %s21
      %p237 = scmp.lt.s32.totalorder %s236, 1
      %s238 = scalar_select %p237, %s236, 1
      %p239 = scmp.lt.s32.totalorder %s20, 0
      %s240 = scalar_select %p239, %s20, 0
      %s241 = sadd.s32 %s240, %s238
      %s242 = smul.addr %s241, 4
      %s243 = scalar_lea.vmem %s1, %s242
      %s244 = smul.u32 2, %s21
      %p245 = scmp.lt.s32.totalorder %s20, 0
      %s246 = scalar_select %p245, %s20, 0
      %s247 = scalar_lea.vmem %s2, %s246
      %p248 = scmp.lt.s32.totalorder %s19, 1
      %s249 = scalar_select %p248, %s19, 1
      %p250 = scmp.lt.s32.totalorder %s20, 0
      %s251 = scalar_select %p250, %s20, 0
      %s252 = smul.addr %s249, 16
      %s253 = sadd.s32 %s251, %s252
      %s254 = smul.addr %s253, 4
      %s255 = scalar_lea.vmem %s3, %s254
      %p257 = scmp.eq.s32.totalorder %s21, 0
      // Predicated region
      $region33: #{ema_head_forward.11} parent=31 // pred_check
        %p258 = pneg %p257
      $region34: #{ema_head_forward.11} parent=31 // pred_check_branch
        %260 = sbr.rel (%p258) target = $region36
      $region35: #{ema_head_forward.11} parent=31 // pred_region
        %vm261 = vcmask 130048
        %262 = vst.msk [vmem:[#allocation2] sm:$0xff] %vm261, 0.0
        %263 = vst.msk [vmem:[#allocation2 + $0x8] sm:$0xff] %vm261, 0.0
        %264 = vst.msk [vmem:[#allocation2 + $0x10] sm:$0xff] %vm261, 0.0
        %265 = vst.msk [vmem:[#allocation2 + $0x18] sm:$0xff] %vm261, 0.0
        %266 = vst.msk [vmem:[#allocation2 + $0x20] sm:$0xff] %vm261, 0.0
        %267 = vst.msk [vmem:[#allocation2 + $0x28] sm:$0xff] %vm261, 0.0
        %268 = vst.msk [vmem:[#allocation2 + $0x30] sm:$0xff] %vm261, 0.0
        %269 = vst.msk [vmem:[#allocation2 + $0x38] sm:$0xff] %vm261, 0.0
        %270 = vst.msk [vmem:[#allocation2 + $0x40] sm:$0xff] %vm261, 0.0
        %271 = vst.msk [vmem:[#allocation2 + $0x48] sm:$0xff] %vm261, 0.0
        %272 = vst.msk [vmem:[#allocation2 + $0x50] sm:$0xff] %vm261, 0.0
        %273 = vst.msk [vmem:[#allocation2 + $0x58] sm:$0xff] %vm261, 0.0
        %274 = vst.msk [vmem:[#allocation2 + $0x60] sm:$0xff] %vm261, 0.0
        %275 = vst.msk [vmem:[#allocation2 + $0x68] sm:$0xff] %vm261, 0.0
        %276 = vst.msk [vmem:[#allocation2 + $0x70] sm:$0xff] %vm261, 0.0
        %277 = vst.msk [vmem:[#allocation2 + $0x78] sm:$0xff] %vm261, 0.0
      $region36: #{ema_head_forward.11} parent=31 // pred_fallthru
        _
      %v278 = vld [vmem:[%s235] sm:$0xf]
      %v279 = vld [vmem:[%s235 + $0x4] sm:$0xf]
      %v280 = vld [vmem:[%s235 + $0x8] sm:$0xf]
      %v281 = vld [vmem:[%s235 + $0xc] sm:$0xf]
      %v282 = vld [vmem:[%s235 + $0x10] sm:$0xf]
      %v283 = vld [vmem:[%s235 + $0x14] sm:$0xf]
      %v284 = vld [vmem:[%s235 + $0x18] sm:$0xf]
      %v285 = vld [vmem:[%s235 + $0x1c] sm:$0xf]
      %v286 = vld [vmem:[%s235 + $0x20] sm:$0xf]
      %v287 = vld [vmem:[%s235 + $0x24] sm:$0xf]
      %v288 = vld [vmem:[%s235 + $0x28] sm:$0xf]
      %v289 = vld [vmem:[%s235 + $0x2c] sm:$0xf]
      %v290 = vld [vmem:[%s235 + $0x30] sm:$0xf]
      %v291 = vld [vmem:[%s235 + $0x34] sm:$0xf]
      %v292 = vld [vmem:[%s235 + $0x38] sm:$0xf]
      %v293 = vld [vmem:[%s235 + $0x3c] sm:$0xf]
      %v294 = vld [vmem:[%s235 + $0x40] sm:$0xf]
      %v295 = vld [vmem:[%s235 + $0x44] sm:$0xf]
      %v296 = vld [vmem:[%s235 + $0x48] sm:$0xf]
      %v297 = vld [vmem:[%s235 + $0x4c] sm:$0xf]
      %v298 = vld [vmem:[%s235 + $0x50] sm:$0xf]
      %v299 = vld [vmem:[#allocation2] sm:$0xff]
      %v300 = vld [vmem:[#allocation2 + $0x8] sm:$0xff]
      %v301 = vld [vmem:[#allocation2 + $0x10] sm:$0xff]
      %v302 = vld [vmem:[#allocation2 + $0x18] sm:$0xff]
      %v303 = vld [vmem:[#allocation2 + $0x20] sm:$0xff]
      %v304 = vld [vmem:[#allocation2 + $0x28] sm:$0xff]
      %v305 = vld [vmem:[#allocation2 + $0x30] sm:$0xff]
      %v306 = vld [vmem:[#allocation2 + $0x38] sm:$0xff]
      %v307 = vld [vmem:[#allocation2 + $0x40] sm:$0xff]
      %v308 = vld [vmem:[#allocation2 + $0x48] sm:$0xff]
      %v309 = vld [vmem:[#allocation2 + $0x50] sm:$0xff]
      %v310 = vld [vmem:[#allocation2 + $0x58] sm:$0xff]
      %v311 = vld [vmem:[#allocation2 + $0x60] sm:$0xff]
      %v312 = vld [vmem:[#allocation2 + $0x68] sm:$0xff]
      %v313 = vld [vmem:[#allocation2 + $0x70] sm:$0xff]
      %v314 = vld [vmem:[#allocation2 + $0x78] sm:$0xff]
      %v315 = vld [vmem:[%s243] sm:$0xf]
      %v316 = vld [vmem:[%s243 + $0x4] sm:$0xf]
      %v333 = vunpack.c.l.b16 %v278
      %v334 = vunpack.c.l.b16 %v279
      %v335 = vunpack.c.l.b16 %v280
      %v336 = vunpack.c.l.b16 %v281
      %v337 = vunpack.c.l.b16 %v282
      %v338 = vunpack.c.l.b16 %v283
      %v339 = vunpack.c.l.b16 %v284
      %v340 = vunpack.c.l.b16 %v285
      %v341 = vunpack.c.l.b16 %v286
      %v342 = vunpack.c.l.b16 %v287
      %v343 = vunpack.c.l.b16 %v288
      %v344 = vunpack.c.l.b16 %v289
      %v345 = vunpack.c.l.b16 %v290
      %v346 = vunpack.c.l.b16 %v291
      %v347 = vunpack.c.l.b16 %v292
      %v348 = vunpack.c.l.b16 %v293
      %v349 = vpack.c.b16 %v334, %v333
      %v350 = vpack.c.b16 %v336, %v335
      %v351 = vpack.c.b16 %v338, %v337
      %v352 = vpack.c.b16 %v340, %v339
      %v353 = vpack.c.b16 %v342, %v341
      %v354 = vpack.c.b16 %v344, %v343
      %v355 = vpack.c.b16 %v346, %v345
      %v356 = vpack.c.b16 %v348, %v347
      %v359 = vunpack.c.l.b16 %v315
      %v360 = vunpack.c.l.b16 %v316
      %v361 = vpack.c.b16 %v360, %v359
      %vm363 = vcmask 130048
      %v365 = vsel %vm363, %v349, 0
      %v368 = vsel %vm363, %v350, 0
      %v371 = vsel %vm363, %v351, 0
      %v374 = vsel %vm363, %v352, 0
      %v377 = vsel %vm363, %v353, 0
      %v380 = vsel %vm363, %v354, 0
      %v383 = vsel %vm363, %v355, 0
      %v386 = vsel %vm363, %v356, 0
      %388 = vmatprep.subr.bf16.mxu0 0
      %389 = vmatpush1.bf16.msra.mxu0 %v361
      %390 = vmatprep.subr.bf16.mxu0 0
      %391 = vmatpush1.bf16.msra.mxu0 0
      %392 = vmatprep.subr.bf16.mxu0 0
      %393 = vmatpush1.bf16.msra.mxu0 0
      %394 = vmatprep.subr.bf16.mxu0 0
      %395 = vmatpush1.bf16.msra.mxu0 0
      %396 = vmatprep.subr.bf16.mxu0 0
      %397 = vmatpush1.bf16.msra.mxu0 0
      %398 = vmatprep.subr.bf16.mxu0 0
      %399 = vmatpush1.bf16.msra.mxu0 0
      %400 = vmatprep.subr.bf16.mxu0 0
      %401 = vmatpush1.bf16.msra.mxu0 0
      %402 = vmatprep.subr.bf16.mxu0 0
      %403 = vmatpush1.bf16.msra.mxu0 0
      %404 = vmatprep.subr.bf16.mxu0 0
      %405 = vmatpush1.bf16.msra.mxu0 0
      %406 = vmatprep.subr.bf16.mxu0 0
      %407 = vmatpush1.bf16.msra.mxu0 0
      %408 = vmatprep.subr.bf16.mxu0 0
      %409 = vmatpush1.bf16.msra.mxu0 0
      %410 = vmatprep.subr.bf16.mxu0 0
      %411 = vmatpush1.bf16.msra.mxu0 0
      %412 = vmatprep.subr.bf16.mxu0 0
      %413 = vmatpush1.bf16.msra.mxu0 0
      %414 = vmatprep.subr.bf16.mxu0 0
      %415 = vmatpush1.bf16.msra.mxu0 0
      %416 = vmatprep.subr.bf16.mxu0 0
      %417 = vmatpush1.bf16.msra.mxu0 0
      %418 = vmatprep.subr.bf16.mxu0 0
      %419 = vmatpush1.bf16.msra.mxu0 0
      %420 = vmatprep.mubr.bf16.mxu0 0
      %421 = vmatmul.mubr.bf16.gmra.mrb[0].mxu0 %v365
      %v422 = vpop.f32.mrb[0].mxu0
      %v423 = vadd.f32 0.0, %v422
      %v424 = vpop.f32.mrb[0].mxu0
      %v425 = vpop.f32.mrb[0].mxu0
      %v426 = vadd.f32 0.0, %v425
      %v427 = vpop.f32.mrb[0].mxu0
      %428 = vmatprep.mubr.bf16.mxu0 0
      %429 = vmatmul.mubr.bf16.gmra.mrb[0].mxu0 %v368
      %v430 = vpop.f32.mrb[0].mxu0
      %v431 = vadd.f32 0.0, %v430
      %v432 = vpop.f32.mrb[0].mxu0
      %v433 = vpop.f32.mrb[0].mxu0
      %v434 = vadd.f32 0.0, %v433
      %v435 = vpop.f32.mrb[0].mxu0
      %436 = vmatprep.mubr.bf16.mxu0 0
      %437 = vmatmul.mubr.bf16.gmra.mrb[0].mxu0 %v371
      %v438 = vpop.f32.mrb[0].mxu0
      %v439 = vadd.f32 0.0, %v438
      %v440 = vpop.f32.mrb[0].mxu0
      %v441 = vpop.f32.mrb[0].mxu0
      %v442 = vadd.f32 0.0, %v441
      %v443 = vpop.f32.mrb[0].mxu0
      %444 = vmatprep.mubr.bf16.mxu0 0
      %445 = vmatmul.mubr.bf16.gmra.mrb[0].mxu0 %v374
      %v446 = vpop.f32.mrb[0].mxu0
      %v447 = vadd.f32 0.0, %v446
      %v448 = vpop.f32.mrb[0].mxu0
      %v449 = vpop.f32.mrb[0].mxu0
      %v450 = vadd.f32 0.0, %v449
      %v451 = vpop.f32.mrb[0].mxu0
      %452 = vmatprep.mubr.bf16.mxu0 0
      %453 = vmatmul.mubr.bf16.gmra.mrb[0].mxu0 %v377
      %v454 = vpop.f32.mrb[0].mxu0
      %v455 = vadd.f32 0.0, %v454
      %v456 = vpop.f32.mrb[0].mxu0
      %v457 = vpop.f32.mrb[0].mxu0
      %v458 = vadd.f32 0.0, %v457
      %v459 = vpop.f32.mrb[0].mxu0
      %460 = vmatprep.mubr.bf16.mxu0 0
      %461 = vmatmul.mubr.bf16.gmra.mrb[0].mxu0 %v380
      %v462 = vpop.f32.mrb[0].mxu0
      %v463 = vadd.f32 0.0, %v462
      %v464 = vpop.f32.mrb[0].mxu0
      %v465 = vpop.f32.mrb[0].mxu0
      %v466 = vadd.f32 0.0, %v465
      %v467 = vpop.f32.mrb[0].mxu0
      %468 = vmatprep.mubr.bf16.mxu0 0
      %469 = vmatmul.mubr.bf16.gmra.mrb[0].mxu0 %v383
      %v470 = vpop.f32.mrb[0].mxu0
      %v471 = vadd.f32 0.0, %v470
      %v472 = vpop.f32.mrb[0].mxu0
      %v473 = vpop.f32.mrb[0].mxu0
      %v474 = vadd.f32 0.0, %v473
      %v475 = vpop.f32.mrb[0].mxu0
      %476 = vmatprep.mubr.bf16.mxu0 0
      %477 = vmatmul.mubr.bf16.gmra.mrb[0].mxu0 %v386
      %v478 = vpop.f32.mrb[0].mxu0
      %v479 = vadd.f32 0.0, %v478
      %v480 = vpop.f32.mrb[0].mxu0
      %v481 = vpop.f32.mrb[0].mxu0
      %v482 = vadd.f32 0.0, %v481
      %v483 = vpop.f32.mrb[0].mxu0
      %484 = vdwg.mxu0
      %v485 = vadd.f32 %v299, %v423
      %v486 = vadd.f32 %v300, %v426
      %v487 = vadd.f32 %v301, %v431
      %v488 = vadd.f32 %v302, %v434
      %v489 = vadd.f32 %v303, %v439
      %v490 = vadd.f32 %v304, %v442
      %v491 = vadd.f32 %v305, %v447
      %v492 = vadd.f32 %v306, %v450
      %v493 = vadd.f32 %v307, %v455
      %v494 = vadd.f32 %v308, %v458
      %v495 = vadd.f32 %v309, %v463
      %v496 = vadd.f32 %v310, %v466
      %v497 = vadd.f32 %v311, %v471
      %v498 = vadd.f32 %v312, %v474
      %v499 = vadd.f32 %v313, %v479
      %v500 = vadd.f32 %v314, %v482
      %s501 = scalar_lea.vmem %s243, 24
      %v502 = vld [vmem:[%s501] sm:$0xf]
      %v503 = vld [vmem:[%s501 + $0x4] sm:$0xf]
      %v506 = vunpack.c.l.b16 %v294
      %v507 = vunpack.c.l.b16 %v295
      %v508 = vpack.c.b16 %v507, %v506
      %v511 = vunpack.c.l.b16 %v502
      %v512 = vunpack.c.l.b16 %v503
      %v513 = vpack.c.b16 %v512, %v511
      %v516 = vsel %vm363, %v508, 0
      %518 = vmatprep.subr.bf16.mxu0 0
      %519 = vmatpush1.bf16.msra.mxu0 %v513
      %520 = vmatprep.subr.bf16.mxu0 0
      %521 = vmatpush1.bf16.msra.mxu0 0
      %522 = vmatprep.subr.bf16.mxu0 0
      %523 = vmatpush1.bf16.msra.mxu0 0
      %524 = vmatprep.subr.bf16.mxu0 0
      %525 = vmatpush1.bf16.msra.mxu0 0
      %526 = vmatprep.subr.bf16.mxu0 0
      %527 = vmatpush1.bf16.msra.mxu0 0
      %528 = vmatprep.subr.bf16.mxu0 0
      %529 = vmatpush1.bf16.msra.mxu0 0
      %530 = vmatprep.subr.bf16.mxu0 0
      %531 = vmatpush1.bf16.msra.mxu0 0
      %532 = vmatprep.subr.bf16.mxu0 0
      %533 = vmatpush1.bf16.msra.mxu0 0
      %534 = vmatprep.subr.bf16.mxu0 0
      %535 = vmatpush1.bf16.msra.mxu0 0
      %536 = vmatprep.subr.bf16.mxu0 0
      %537 = vmatpush1.bf16.msra.mxu0 0
      %538 = vmatprep.subr.bf16.mxu0 0
      %539 = vmatpush1.bf16.msra.mxu0 0
      %540 = vmatprep.subr.bf16.mxu0 0
      %541 = vmatpush1.bf16.msra.mxu0 0
      %542 = vmatprep.subr.bf16.mxu0 0
      %543 = vmatpush1.bf16.msra.mxu0 0
      %544 = vmatprep.subr.bf16.mxu0 0
      %545 = vmatpush1.bf16.msra.mxu0 0
      %546 = vmatprep.subr.bf16.mxu0 0
      %547 = vmatpush1.bf16.msra.mxu0 0
      %548 = vmatprep.subr.bf16.mxu0 0
      %549 = vmatpush1.bf16.msra.mxu0 0
      %550 = vmatprep.mubr.bf16.mxu0 0
      %551 = vmatmul.mubr.bf16.gmra.mrb[0].mxu0 %v368
      %v552 = vpop.f32.mrb[0].mxu0
      %v553 = vadd.f32 0.0, %v552
      %v554 = vpop.f32.mrb[0].mxu0
      %v555 = vpop.f32.mrb[0].mxu0
      %v556 = vadd.f32 0.0, %v555
      %v557 = vpop.f32.mrb[0].mxu0
      %558 = vmatprep.mubr.bf16.mxu0 0
      %559 = vmatmul.mubr.bf16.gmra.mrb[0].mxu0 %v371
      %v560 = vpop.f32.mrb[0].mxu0
      %v561 = vadd.f32 0.0, %v560
      %v562 = vpop.f32.mrb[0].mxu0
      %v563 = vpop.f32.mrb[0].mxu0
      %v564 = vadd.f32 0.0, %v563
      %v565 = vpop.f32.mrb[0].mxu0
      %566 = vmatprep.mubr.bf16.mxu0 0
      %567 = vmatmul.mubr.bf16.gmra.mrb[0].mxu0 %v374
      %v568 = vpop.f32.mrb[0].mxu0
      %v569 = vadd.f32 0.0, %v568
      %v570 = vpop.f32.mrb[0].mxu0
      %v571 = vpop.f32.mrb[0].mxu0
      %v572 = vadd.f32 0.0, %v571
      %v573 = vpop.f32.mrb[0].mxu0
      %574 = vmatprep.mubr.bf16.mxu0 0
      %575 = vmatmul.mubr.bf16.gmra.mrb[0].mxu0 %v377
      %v576 = vpop.f32.mrb[0].mxu0
      %v577 = vadd.f32 0.0, %v576
      %v578 = vpop.f32.mrb[0].mxu0
      %v579 = vpop.f32.mrb[0].mxu0
      %v580 = vadd.f32 0.0, %v579
      %v581 = vpop.f32.mrb[0].mxu0
      %582 = vmatprep.mubr.bf16.mxu0 0
      %583 = vmatmul.mubr.bf16.gmra.mrb[0].mxu0 %v380
      %v584 = vpop.f32.mrb[0].mxu0
      %v585 = vadd.f32 0.0, %v584
      %v586 = vpop.f32.mrb[0].mxu0
      %v587 = vpop.f32.mrb[0].mxu0
      %v588 = vadd.f32 0.0, %v587
      %v589 = vpop.f32.mrb[0].mxu0
      %590 = vmatprep.mubr.bf16.mxu0 0
      %591 = vmatmul.mubr.bf16.gmra.mrb[0].mxu0 %v383
      %v592 = vpop.f32.mrb[0].mxu0
      %v593 = vadd.f32 0.0, %v592
      %v594 = vpop.f32.mrb[0].mxu0
      %v595 = vpop.f32.mrb[0].mxu0
      %v596 = vadd.f32 0.0, %v595
      %v597 = vpop.f32.mrb[0].mxu0
      %598 = vmatprep.mubr.bf16.mxu0 0
      %599 = vmatmul.mubr.bf16.gmra.mrb[0].mxu0 %v386
      %v600 = vpop.f32.mrb[0].mxu0
      %v601 = vadd.f32 0.0, %v600
      %v602 = vpop.f32.mrb[0].mxu0
      %v603 = vpop.f32.mrb[0].mxu0
      %v604 = vadd.f32 0.0, %v603
      %v605 = vpop.f32.mrb[0].mxu0
      %606 = vmatprep.mubr.bf16.mxu0 0
      %607 = vmatmul.mubr.bf16.gmra.mrb[0].mxu0 %v516
      %v608 = vpop.f32.mrb[0].mxu0
      %v609 = vadd.f32 0.0, %v608
      %v610 = vpop.f32.mrb[0].mxu0
      %v611 = vpop.f32.mrb[0].mxu0
      %v612 = vadd.f32 0.0, %v611
      %v613 = vpop.f32.mrb[0].mxu0
      %614 = vdwg.mxu0
      %v615 = vadd.f32 %v485, %v553
      %v616 = vadd.f32 %v486, %v556
      %v617 = vadd.f32 %v487, %v561
      %v618 = vadd.f32 %v488, %v564
      %v619 = vadd.f32 %v489, %v569
      %v620 = vadd.f32 %v490, %v572
      %v621 = vadd.f32 %v491, %v577
      %v622 = vadd.f32 %v492, %v580
      %v623 = vadd.f32 %v493, %v585
      %v624 = vadd.f32 %v494, %v588
      %v625 = vadd.f32 %v495, %v593
      %v626 = vadd.f32 %v496, %v596
      %v627 = vadd.f32 %v497, %v601
      %v628 = vadd.f32 %v498, %v604
      %v629 = vadd.f32 %v499, %v609
      %v630 = vadd.f32 %v500, %v612
      %s631 = scalar_lea.vmem %s243, 48
      %v632 = vld [vmem:[%s631] sm:$0xf]
      %v633 = vld [vmem:[%s631 + $0x4] sm:$0xf]
      %v636 = vunpack.c.l.b16 %v296
      %v637 = vunpack.c.l.b16 %v297
      %v638 = vpack.c.b16 %v637, %v636
      %v641 = vunpack.c.l.b16 %v632
      %v642 = vunpack.c.l.b16 %v633
      %v643 = vpack.c.b16 %v642, %v641
      %v646 = vsel %vm363, %v638, 0
      %648 = vmatprep.subr.bf16.mxu0 0
      %649 = vmatpush1.bf16.msra.mxu0 %v643
      %650 = vmatprep.subr.bf16.mxu0 0
      %651 = vmatpush1.bf16.msra.mxu0 0
      %652 = vmatprep.subr.bf16.mxu0 0
      %653 = vmatpush1.bf16.msra.mxu0 0
      %654 = vmatprep.subr.bf16.mxu0 0
      %655 = vmatpush1.bf16.msra.mxu0 0
      %656 = vmatprep.subr.bf16.mxu0 0
      %657 = vmatpush1.bf16.msra.mxu0 0
      %658 = vmatprep.subr.bf16.mxu0 0
      %659 = vmatpush1.bf16.msra.mxu0 0
      %660 = vmatprep.subr.bf16.mxu0 0
      %661 = vmatpush1.bf16.msra.mxu0 0
      %662 = vmatprep.subr.bf16.mxu0 0
      %663 = vmatpush1.bf16.msra.mxu0 0
      %664 = vmatprep.subr.bf16.mxu0 0
      %665 = vmatpush1.bf16.msra.mxu0 0
      %666 = vmatprep.subr.bf16.mxu0 0
      %667 = vmatpush1.bf16.msra.mxu0 0
      %668 = vmatprep.subr.bf16.mxu0 0
      %669 = vmatpush1.bf16.msra.mxu0 0
      %670 = vmatprep.subr.bf16.mxu0 0
      %671 = vmatpush1.bf16.msra.mxu0 0
      %672 = vmatprep.subr.bf16.mxu0 0
      %673 = vmatpush1.bf16.msra.mxu0 0
      %674 = vmatprep.subr.bf16.mxu0 0
      %675 = vmatpush1.bf16.msra.mxu0 0
      %676 = vmatprep.subr.bf16.mxu0 0
      %677 = vmatpush1.bf16.msra.mxu0 0
      %678 = vmatprep.subr.bf16.mxu0 0
      %679 = vmatpush1.bf16.msra.mxu0 0
      %680 = vmatprep.mubr.bf16.mxu0 0
      %681 = vmatmul.mubr.bf16.gmra.mrb[0].mxu0 %v371
      %v682 = vpop.f32.mrb[0].mxu0
      %v683 = vadd.f32 0.0, %v682
      %v684 = vpop.f32.mrb[0].mxu0
      %v685 = vpop.f32.mrb[0].mxu0
      %v686 = vadd.f32 0.0, %v685
      %v687 = vpop.f32.mrb[0].mxu0
      %688 = vmatprep.mubr.bf16.mxu0 0
      %689 = vmatmul.mubr.bf16.gmra.mrb[0].mxu0 %v374
      %v690 = vpop.f32.mrb[0].mxu0
      %v691 = vadd.f32 0.0, %v690
      %v692 = vpop.f32.mrb[0].mxu0
      %v693 = vpop.f32.mrb[0].mxu0
      %v694 = vadd.f32 0.0, %v693
      %v695 = vpop.f32.mrb[0].mxu0
      %696 = vmatprep.mubr.bf16.mxu0 0
      %697 = vmatmul.mubr.bf16.gmra.mrb[0].mxu0 %v377
      %v698 = vpop.f32.mrb[0].mxu0
      %v699 = vadd.f32 0.0, %v698
      %v700 = vpop.f32.mrb[0].mxu0
      %v701 = vpop.f32.mrb[0].mxu0
      %v702 = vadd.f32 0.0, %v701
      %v703 = vpop.f32.mrb[0].mxu0
      %704 = vmatprep.mubr.bf16.mxu0 0
      %705 = vmatmul.mubr.bf16.gmra.mrb[0].mxu0 %v380
      %v706 = vpop.f32.mrb[0].mxu0
      %v707 = vadd.f32 0.0, %v706
      %v708 = vpop.f32.mrb[0].mxu0
      %v709 = vpop.f32.mrb[0].mxu0
      %v710 = vadd.f32 0.0, %v709
      %v711 = vpop.f32.mrb[0].mxu0
      %712 = vmatprep.mubr.bf16.mxu0 0
      %713 = vmatmul.mubr.bf16.gmra.mrb[0].mxu0 %v383
      %v714 = vpop.f32.mrb[0].mxu0
      %v715 = vadd.f32 0.0, %v714
      %v716 = vpop.f32.mrb[0].mxu0
      %v717 = vpop.f32.mrb[0].mxu0
      %v718 = vadd.f32 0.0, %v717
      %v719 = vpop.f32.mrb[0].mxu0
      %720 = vmatprep.mubr.bf16.mxu0 0
      %721 = vmatmul.mubr.bf16.gmra.mrb[0].mxu0 %v386
      %v722 = vpop.f32.mrb[0].mxu0
      %v723 = vadd.f32 0.0, %v722
      %v724 = vpop.f32.mrb[0].mxu0
      %v725 = vpop.f32.mrb[0].mxu0
      %v726 = vadd.f32 0.0, %v725
      %v727 = vpop.f32.mrb[0].mxu0
      %728 = vmatprep.mubr.bf16.mxu0 0
      %729 = vmatmul.mubr.bf16.gmra.mrb[0].mxu0 %v516
      %v730 = vpop.f32.mrb[0].mxu0
      %v731 = vadd.f32 0.0, %v730
      %v732 = vpop.f32.mrb[0].mxu0
      %v733 = vpop.f32.mrb[0].mxu0
      %v734 = vadd.f32 0.0, %v733
      %v735 = vpop.f32.mrb[0].mxu0
      %736 = vmatprep.mubr.bf16.mxu0 0
      %737 = vmatmul.mubr.bf16.gmra.mrb[0].mxu0 %v646
      %v738 = vpop.f32.mrb[0].mxu0
      %v739 = vadd.f32 0.0, %v738
      %v740 = vpop.f32.mrb[0].mxu0
      %v741 = vpop.f32.mrb[0].mxu0
      %v742 = vadd.f32 0.0, %v741
      %v743 = vpop.f32.mrb[0].mxu0
      %744 = vdwg.mxu0
      %v745 = vadd.f32 %v615, %v683
      %v746 = vadd.f32 %v616, %v686
      %v747 = vadd.f32 %v617, %v691
      %v748 = vadd.f32 %v618, %v694
      %v749 = vadd.f32 %v619, %v699
      %v750 = vadd.f32 %v620, %v702
      %v751 = vadd.f32 %v621, %v707
      %v752 = vadd.f32 %v622, %v710
      %v753 = vadd.f32 %v623, %v715
      %v754 = vadd.f32 %v624, %v718
      %v755 = vadd.f32 %v625, %v723
      %v756 = vadd.f32 %v626, %v726
      %v757 = vadd.f32 %v627, %v731
      %v758 = vadd.f32 %v628, %v734
      %v759 = vadd.f32 %v629, %v739
      %v760 = vadd.f32 %v630, %v742
      %v761 = vunpack.c.l.bf16 %v278
      %v762 = vunpack.c.l.bf16 %v279
      %v763 = vunpack.c.l.bf16 %v280
      %v764 = vunpack.c.l.bf16 %v281
      %v765 = vunpack.c.l.bf16 %v282
      %v766 = vunpack.c.l.bf16 %v283
      %v767 = vunpack.c.l.bf16 %v284
      %v768 = vunpack.c.l.bf16 %v285
      %v769 = vunpack.c.l.bf16 %v286
      %v770 = vunpack.c.l.bf16 %v287
      %v771 = vunpack.c.l.bf16 %v288
      %v772 = vunpack.c.l.bf16 %v289
      %v773 = vunpack.c.l.bf16 %v290
      %v774 = vunpack.c.l.bf16 %v291
      %v775 = vunpack.c.l.bf16 %v292
      %v776 = vunpack.c.l.bf16 %v293
      %v777 = vunpack.c.l.bf16 %v294
      %v778 = vunpack.c.l.bf16 %v295
      %v779 = vunpack.c.l.bf16 %v296
      %v780 = vunpack.c.l.bf16 %v297
      %v781 = vunpack.c.l.bf16 %v298
      %v782 = vpack.c.bf16 %v762, %v761
      %v783 = vpack.c.bf16 %v764, %v763
      %v784 = vpack.c.bf16 %v766, %v765
      %v785 = vpack.c.bf16 %v768, %v767
      %v786 = vpack.c.bf16 %v770, %v769
      %v787 = vpack.c.bf16 %v772, %v771
      %v788 = vpack.c.bf16 %v774, %v773
      %v789 = vpack.c.bf16 %v776, %v775
      %v790 = vpack.c.bf16 %v778, %v777
      %v791 = vpack.c.bf16 %v780, %v779
      %v792 = vpack.c.bf16 %v781, %v781
      %s793 = scalar_lea.vmem %s243, 8
      %v794 = vld [vmem:[%s793] sm:$0xf]
      %v795 = vld [vmem:[%s793 + $0x4] sm:$0xf]
      %vm796 = vsmask.f32 7424
      %v798 = vshrl.u32 %v782, 16
      %v800 = vshll.u32 %v782, 16
      %v802 = vrot.slane %v800, 1
      %v803 = vor.u32 %v798, %v802
      %v805 = vshll.u32 %v783, 16
      %v807 = vrot.slane %v805, 1
      %v808 = vsel %vm796, %v803, %v807
      %v809 = vshrl.u32 %v783, 16
      %v811 = vor.u32 %v809, %v807
      %v813 = vshll.u32 %v784, 16
      %v815 = vrot.slane %v813, 1
      %v816 = vsel %vm796, %v811, %v815
      %v817 = vshrl.u32 %v784, 16
      %v819 = vor.u32 %v817, %v815
      %v821 = vshll.u32 %v785, 16
      %v823 = vrot.slane %v821, 1
      %v824 = vsel %vm796, %v819, %v823
      %v825 = vshrl.u32 %v785, 16
      %v827 = vor.u32 %v825, %v823
      %v829 = vshll.u32 %v786, 16
      %v831 = vrot.slane %v829, 1
      %v832 = vsel %vm796, %v827, %v831
      %v833 = vshrl.u32 %v786, 16
      %v835 = vor.u32 %v833, %v831
      %v837 = vshll.u32 %v787, 16
      %v839 = vrot.slane %v837, 1
      %v840 = vsel %vm796, %v835, %v839
      %v841 = vshrl.u32 %v787, 16
      %v843 = vor.u32 %v841, %v839
      %v845 = vshll.u32 %v788, 16
      %v847 = vrot.slane %v845, 1
      %v848 = vsel %vm796, %v843, %v847
      %v849 = vshrl.u32 %v788, 16
      %v851 = vor.u32 %v849, %v847
      %v853 = vshll.u32 %v789, 16
      %v855 = vrot.slane %v853, 1
      %v856 = vsel %vm796, %v851, %v855
      %v857 = vshrl.u32 %v789, 16
      %v859 = vor.u32 %v857, %v855
      %v861 = vshll.u32 %v790, 16
      %v863 = vrot.slane %v861, 1
      %v864 = vsel %vm796, %v859, %v863
      %v867 = vunpack.c.l.b16 %v794
      %v868 = vunpack.c.l.b16 %v795
      %v869 = vpack.c.b16 %v868, %v867
      %v872 = vsel %vm363, %v808, 0
      %v875 = vsel %vm363, %v816, 0
      %v878 = vsel %vm363, %v824, 0
      %v881 = vsel %vm363, %v832, 0
      %v884 = vsel %vm363, %v840, 0
      %v887 = vsel %vm363, %v848, 0
      %v890 = vsel %vm363, %v856, 0
      %v893 = vsel %vm363, %v864, 0
      %895 = vmatprep.subr.bf16.mxu0 0
      %896 = vmatpush1.bf16.msra.mxu0 %v869
      %897 = vmatprep.subr.bf16.mxu0 0
      %898 = vmatpush1.bf16.msra.mxu0 0
      %899 = vmatprep.subr.bf16.mxu0 0
      %900 = vmatpush1.bf16.msra.mxu0 0
      %901 = vmatprep.subr.bf16.mxu0 0
      %902 = vmatpush1.bf16.msra.mxu0 0
      %903 = vmatprep.subr.bf16.mxu0 0
      %904 = vmatpush1.bf16.msra.mxu0 0
      %905 = vmatprep.subr.bf16.mxu0 0
      %906 = vmatpush1.bf16.msra.mxu0 0
      %907 = vmatprep.subr.bf16.mxu0 0
      %908 = vmatpush1.bf16.msra.mxu0 0
      %909 = vmatprep.subr.bf16.mxu0 0
      %910 = vmatpush1.bf16.msra.mxu0 0
      %911 = vmatprep.subr.bf16.mxu0 0
      %912 = vmatpush1.bf16.msra.mxu0 0
      %913 = vmatprep.subr.bf16.mxu0 0
      %914 = vmatpush1.bf16.msra.mxu0 0
      %915 = vmatprep.subr.bf16.mxu0 0
      %916 = vmatpush1.bf16.msra.mxu0 0
      %917 = vmatprep.subr.bf16.mxu0 0
      %918 = vmatpush1.bf16.msra.mxu0 0
      %919 = vmatprep.subr.bf16.mxu0 0
      %920 = vmatpush1.bf16.msra.mxu0 0
      %921 = vmatprep.subr.bf16.mxu0 0
      %922 = vmatpush1.bf16.msra.mxu0 0
      %923 = vmatprep.subr.bf16.mxu0 0
      %924 = vmatpush1.bf16.msra.mxu0 0
      %925 = vmatprep.subr.bf16.mxu0 0
      %926 = vmatpush1.bf16.msra.mxu0 0
      %927 = vmatprep.mubr.bf16.mxu0 0
      %928 = vmatmul.mubr.bf16.gmra.mrb[0].mxu0 %v872
      %v929 = vpop.f32.mrb[0].mxu0
      %v930 = vadd.f32 0.0, %v929
      %v931 = vpop.f32.mrb[0].mxu0
      %v932 = vpop.f32.mrb[0].mxu0
      %v933 = vadd.f32 0.0, %v932
      %v934 = vpop.f32.mrb[0].mxu0
      %935 = vmatprep.mubr.bf16.mxu0 0
      %936 = vmatmul.mubr.bf16.gmra.mrb[0].mxu0 %v875
      %v937 = vpop.f32.mrb[0].mxu0
      %v938 = vadd.f32 0.0, %v937
      %v939 = vpop.f32.mrb[0].mxu0
      %v940 = vpop.f32.mrb[0].mxu0
      %v941 = vadd.f32 0.0, %v940
      %v942 = vpop.f32.mrb[0].mxu0
      %943 = vmatprep.mubr.bf16.mxu0 0
      %944 = vmatmul.mubr.bf16.gmra.mrb[0].mxu0 %v878
      %v945 = vpop.f32.mrb[0].mxu0
      %v946 = vadd.f32 0.0, %v945
      %v947 = vpop.f32.mrb[0].mxu0
      %v948 = vpop.f32.mrb[0].mxu0
      %v949 = vadd.f32 0.0, %v948
      %v950 = vpop.f32.mrb[0].mxu0
      %951 = vmatprep.mubr.bf16.mxu0 0
      %952 = vmatmul.mubr.bf16.gmra.mrb[0].mxu0 %v881
      %v953 = vpop.f32.mrb[0].mxu0
      %v954 = vadd.f32 0.0, %v953
      %v955 = vpop.f32.mrb[0].mxu0
      %v956 = vpop.f32.mrb[0].mxu0
      %v957 = vadd.f32 0.0, %v956
      %v958 = vpop.f32.mrb[0].mxu0
      %959 = vmatprep.mubr.bf16.mxu0 0
      %960 = vmatmul.mubr.bf16.gmra.mrb[0].mxu0 %v884
      %v961 = vpop.f32.mrb[0].mxu0
      %v962 = vadd.f32 0.0, %v961
      %v963 = vpop.f32.mrb[0].mxu0
      %v964 = vpop.f32.mrb[0].mxu0
      %v965 = vadd.f32 0.0, %v964
      %v966 = vpop.f32.mrb[0].mxu0
      %967 = vmatprep.mubr.bf16.mxu0 0
      %968 = vmatmul.mubr.bf16.gmra.mrb[0].mxu0 %v887
      %v969 = vpop.f32.mrb[0].mxu0
      %v970 = vadd.f32 0.0, %v969
      %v971 = vpop.f32.mrb[0].mxu0
      %v972 = vpop.f32.mrb[0].mxu0
      %v973 = vadd.f32 0.0, %v972
      %v974 = vpop.f32.mrb[0].mxu0
      %975 = vmatprep.mubr.bf16.mxu0 0
      %976 = vmatmul.mubr.bf16.gmra.mrb[0].mxu0 %v890
      %v977 = vpop.f32.mrb[0].mxu0
      %v978 = vadd.f32 0.0, %v977
      %v979 = vpop.f32.mrb[0].mxu0
      %v980 = vpop.f32.mrb[0].mxu0
      %v981 = vadd.f32 0.0, %v980
      %v982 = vpop.f32.mrb[0].mxu0
      %983 = vmatprep.mubr.bf16.mxu0 0
      %984 = vmatmul.mubr.bf16.gmra.mrb[0].mxu0 %v893
      %v985 = vpop.f32.mrb[0].mxu0
      %v986 = vadd.f32 0.0, %v985
      %v987 = vpop.f32.mrb[0].mxu0
      %v988 = vpop.f32.mrb[0].mxu0
      %v989 = vadd.f32 0.0, %v988
      %v990 = vpop.f32.mrb[0].mxu0
      %991 = vdwg.mxu0
      %v992 = vadd.f32 %v745, %v930
      %v993 = vadd.f32 %v746, %v933
      %v994 = vadd.f32 %v747, %v938
      %v995 = vadd.f32 %v748, %v941
      %v996 = vadd.f32 %v749, %v946
      %v997 = vadd.f32 %v750, %v949
      %v998 = vadd.f32 %v751, %v954
      %v999 = vadd.f32 %v752, %v957
      %v1000 = vadd.f32 %v753, %v962
      %v1001 = vadd.f32 %v754, %v965
      %v1002 = vadd.f32 %v755, %v970
      %v1003 = vadd.f32 %v756, %v973
      %v1004 = vadd.f32 %v757, %v978
      %v1005 = vadd.f32 %v758, %v981
      %v1006 = vadd.f32 %v759, %v986
      %v1007 = vadd.f32 %v760, %v989
      %s1008 = scalar_lea.vmem %s243, 32
      %v1009 = vld [vmem:[%s1008] sm:$0xf]
      %v1010 = vld [vmem:[%s1008 + $0x4] sm:$0xf]
      %v1011 = vshrl.u32 %v790, 16
      %v1013 = vor.u32 %v1011, %v863
      %v1015 = vshll.u32 %v791, 16
      %v1017 = vrot.slane %v1015, 1
      %v1018 = vsel %vm796, %v1013, %v1017
      %v1021 = vunpack.c.l.b16 %v1009
      %v1022 = vunpack.c.l.b16 %v1010
      %v1023 = vpack.c.b16 %v1022, %v1021
      %v1026 = vsel %vm363, %v1018, 0
      %1028 = vmatprep.subr.bf16.mxu0 0
      %1029 = vmatpush1.bf16.msra.mxu0 %v1023
      %1030 = vmatprep.subr.bf16.mxu0 0
      %1031 = vmatpush1.bf16.msra.mxu0 0
      %1032 = vmatprep.subr.bf16.mxu0 0
      %1033 = vmatpush1.bf16.msra.mxu0 0
      %1034 = vmatprep.subr.bf16.mxu0 0
      %1035 = vmatpush1.bf16.msra.mxu0 0
      %1036 = vmatprep.subr.bf16.mxu0 0
      %1037 = vmatpush1.bf16.msra.mxu0 0
      %1038 = vmatprep.subr.bf16.mxu0 0
      %1039 = vmatpush1.bf16.msra.mxu0 0
      %1040 = vmatprep.subr.bf16.mxu0 0
      %1041 = vmatpush1.bf16.msra.mxu0 0
      %1042 = vmatprep.subr.bf16.mxu0 0
      %1043 = vmatpush1.bf16.msra.mxu0 0
      %1044 = vmatprep.subr.bf16.mxu0 0
      %1045 = vmatpush1.bf16.msra.mxu0 0
      %1046 = vmatprep.subr.bf16.mxu0 0
      %1047 = vmatpush1.bf16.msra.mxu0 0
      %1048 = vmatprep.subr.bf16.mxu0 0
      %1049 = vmatpush1.bf16.msra.mxu0 0
      %1050 = vmatprep.subr.bf16.mxu0 0
      %1051 = vmatpush1.bf16.msra.mxu0 0
      %1052 = vmatprep.subr.bf16.mxu0 0
      %1053 = vmatpush1.bf16.msra.mxu0 0
      %1054 = vmatprep.subr.bf16.mxu0 0
      %1055 = vmatpush1.bf16.msra.mxu0 0
      %1056 = vmatprep.subr.bf16.mxu0 0
      %1057 = vmatpush1.bf16.msra.mxu0 0
      %1058 = vmatprep.subr.bf16.mxu0 0
      %1059 = vmatpush1.bf16.msra.mxu0 0
      %1060 = vmatprep.mubr.bf16.mxu0 0
      %1061 = vmatmul.mubr.bf16.gmra.mrb[0].mxu0 %v875
      %v1062 = vpop.f32.mrb[0].mxu0
      %v1063 = vadd.f32 0.0, %v1062
      %v1064 = vpop.f32.mrb[0].mxu0
      %v1065 = vpop.f32.mrb[0].mxu0
      %v1066 = vadd.f32 0.0, %v1065
      %v1067 = vpop.f32.mrb[0].mxu0
      %1068 = vmatprep.mubr.bf16.mxu0 0
      %1069 = vmatmul.mubr.bf16.gmra.mrb[0].mxu0 %v878
      %v1070 = vpop.f32.mrb[0].mxu0
      %v1071 = vadd.f32 0.0, %v1070
      %v1072 = vpop.f32.mrb[0].mxu0
      %v1073 = vpop.f32.mrb[0].mxu0
      %v1074 = vadd.f32 0.0, %v1073
      %v1075 = vpop.f32.mrb[0].mxu0
      %1076 = vmatprep.mubr.bf16.mxu0 0
      %1077 = vmatmul.mubr.bf16.gmra.mrb[0].mxu0 %v881
      %v1078 = vpop.f32.mrb[0].mxu0
      %v1079 = vadd.f32 0.0, %v1078
      %v1080 = vpop.f32.mrb[0].mxu0
      %v1081 = vpop.f32.mrb[0].mxu0
      %v1082 = vadd.f32 0.0, %v1081
      %v1083 = vpop.f32.mrb[0].mxu0
      %1084 = vmatprep.mubr.bf16.mxu0 0
      %1085 = vmatmul.mubr.bf16.gmra.mrb[0].mxu0 %v884
      %v1086 = vpop.f32.mrb[0].mxu0
      %v1087 = vadd.f32 0.0, %v1086
      %v1088 = vpop.f32.mrb[0].mxu0
      %v1089 = vpop.f32.mrb[0].mxu0
      %v1090 = vadd.f32 0.0, %v1089
      %v1091 = vpop.f32.mrb[0].mxu0
      %1092 = vmatprep.mubr.bf16.mxu0 0
      %1093 = vmatmul.mubr.bf16.gmra.mrb[0].mxu0 %v887
      %v1094 = vpop.f32.mrb[0].mxu0
      %v1095 = vadd.f32 0.0, %v1094
      %v1096 = vpop.f32.mrb[0].mxu0
      %v1097 = vpop.f32.mrb[0].mxu0
      %v1098 = vadd.f32 0.0, %v1097
      %v1099 = vpop.f32.mrb[0].mxu0
      %1100 = vmatprep.mubr.bf16.mxu0 0
      %1101 = vmatmul.mubr.bf16.gmra.mrb[0].mxu0 %v890
      %v1102 = vpop.f32.mrb[0].mxu0
      %v1103 = vadd.f32 0.0, %v1102
      %v1104 = vpop.f32.mrb[0].mxu0
      %v1105 = vpop.f32.mrb[0].mxu0
      %v1106 = vadd.f32 0.0, %v1105
      %v1107 = vpop.f32.mrb[0].mxu0
      %1108 = vmatprep.mubr.bf16.mxu0 0
      %1109 = vmatmul.mubr.bf16.gmra.mrb[0].mxu0 %v893
      %v1110 = vpop.f32.mrb[0].mxu0
      %v1111 = vadd.f32 0.0, %v1110
      %v1112 = vpop.f32.mrb[0].mxu0
      %v1113 = vpop.f32.mrb[0].mxu0
      %v1114 = vadd.f32 0.0, %v1113
      %v1115 = vpop.f32.mrb[0].mxu0
      %1116 = vmatprep.mubr.bf16.mxu0 0
      %1117 = vmatmul.mubr.bf16.gmra.mrb[0].mxu0 %v1026
      %v1118 = vpop.f32.mrb[0].mxu0
      %v1119 = vadd.f32 0.0, %v1118
      %v1120 = vpop.f32.mrb[0].mxu0
      %v1121 = vpop.f32.mrb[0].mxu0
      %v1122 = vadd.f32 0.0, %v1121
      %v1123 = vpop.f32.mrb[0].mxu0
      %1124 = vdwg.mxu0
      %v1125 = vadd.f32 %v992, %v1063
      %v1126 = vadd.f32 %v993, %v1066
      %v1127 = vadd.f32 %v994, %v1071
      %v1128 = vadd.f32 %v995, %v1074
      %v1129 = vadd.f32 %v996, %v1079
      %v1130 = vadd.f32 %v997, %v1082
      %v1131 = vadd.f32 %v998, %v1087
      %v1132 = vadd.f32 %v999, %v1090
      %v1133 = vadd.f32 %v1000, %v1095
      %v1134 = vadd.f32 %v1001, %v1098
      %v1135 = vadd.f32 %v1002, %v1103
      %v1136 = vadd.f32 %v1003, %v1106
      %v1137 = vadd.f32 %v1004, %v1111
      %v1138 = vadd.f32 %v1005, %v1114
      %v1139 = vadd.f32 %v1006, %v1119
      %v1140 = vadd.f32 %v1007, %v1122
      %s1141 = scalar_lea.vmem %s243, 56
      %v1142 = vld [vmem:[%s1141] sm:$0xf]
      %v1143 = vld [vmem:[%s1141 + $0x4] sm:$0xf]
      %v1144 = vshrl.u32 %v791, 16
      %v1146 = vor.u32 %v1144, %v1017
      %v1148 = vshll.u32 %v792, 16
      %v1150 = vrot.slane %v1148, 1
      %v1151 = vsel %vm796, %v1146, %v1150
      %v1154 = vunpack.c.l.b16 %v1142
      %v1155 = vunpack.c.l.b16 %v1143
      %v1156 = vpack.c.b16 %v1155, %v1154
      %v1159 = vsel %vm363, %v1151, 0
      %1161 = vmatprep.subr.bf16.mxu0 0
      %1162 = vmatpush1.bf16.msra.mxu0 %v1156
      %1163 = vmatprep.subr.bf16.mxu0 0
      %1164 = vmatpush1.bf16.msra.mxu0 0
      %1165 = vmatprep.subr.bf16.mxu0 0
      %1166 = vmatpush1.bf16.msra.mxu0 0
      %1167 = vmatprep.subr.bf16.mxu0 0
      %1168 = vmatpush1.bf16.msra.mxu0 0
      %1169 = vmatprep.subr.bf16.mxu0 0
      %1170 = vmatpush1.bf16.msra.mxu0 0
      %1171 = vmatprep.subr.bf16.mxu0 0
      %1172 = vmatpush1.bf16.msra.mxu0 0
      %1173 = vmatprep.subr.bf16.mxu0 0
      %1174 = vmatpush1.bf16.msra.mxu0 0
      %1175 = vmatprep.subr.bf16.mxu0 0
      %1176 = vmatpush1.bf16.msra.mxu0 0
      %1177 = vmatprep.subr.bf16.mxu0 0
      %1178 = vmatpush1.bf16.msra.mxu0 0
      %1179 = vmatprep.subr.bf16.mxu0 0
      %1180 = vmatpush1.bf16.msra.mxu0 0
      %1181 = vmatprep.subr.bf16.mxu0 0
      %1182 = vmatpush1.bf16.msra.mxu0 0
      %1183 = vmatprep.subr.bf16.mxu0 0
      %1184 = vmatpush1.bf16.msra.mxu0 0
      %1185 = vmatprep.subr.bf16.mxu0 0
      %1186 = vmatpush1.bf16.msra.mxu0 0
      %1187 = vmatprep.subr.bf16.mxu0 0
      %1188 = vmatpush1.bf16.msra.mxu0 0
      %1189 = vmatprep.subr.bf16.mxu0 0
      %1190 = vmatpush1.bf16.msra.mxu0 0
      %1191 = vmatprep.subr.bf16.mxu0 0
      %1192 = vmatpush1.bf16.msra.mxu0 0
      %1193 = vmatprep.mubr.bf16.mxu0 0
      %1194 = vmatmul.mubr.bf16.gmra.mrb[0].mxu0 %v878
      %v1195 = vpop.f32.mrb[0].mxu0
      %v1196 = vadd.f32 0.0, %v1195
      %v1197 = vpop.f32.mrb[0].mxu0
      %v1198 = vpop.f32.mrb[0].mxu0
      %v1199 = vadd.f32 0.0, %v1198
      %v1200 = vpop.f32.mrb[0].mxu0
      %1201 = vmatprep.mubr.bf16.mxu0 0
      %1202 = vmatmul.mubr.bf16.gmra.mrb[0].mxu0 %v881
      %v1203 = vpop.f32.mrb[0].mxu0
      %v1204 = vadd.f32 0.0, %v1203
      %v1205 = vpop.f32.mrb[0].mxu0
      %v1206 = vpop.f32.mrb[0].mxu0
      %v1207 = vadd.f32 0.0, %v1206
      %v1208 = vpop.f32.mrb[0].mxu0
      %1209 = vmatprep.mubr.bf16.mxu0 0
      %1210 = vmatmul.mubr.bf16.gmra.mrb[0].mxu0 %v884
      %v1211 = vpop.f32.mrb[0].mxu0
      %v1212 = vadd.f32 0.0, %v1211
      %v1213 = vpop.f32.mrb[0].mxu0
      %v1214 = vpop.f32.mrb[0].mxu0
      %v1215 = vadd.f32 0.0, %v1214
      %v1216 = vpop.f32.mrb[0].mxu0
      %1217 = vmatprep.mubr.bf16.mxu0 0
      %1218 = vmatmul.mubr.bf16.gmra.mrb[0].mxu0 %v887
      %v1219 = vpop.f32.mrb[0].mxu0
      %v1220 = vadd.f32 0.0, %v1219
      %v1221 = vpop.f32.mrb[0].mxu0
      %v1222 = vpop.f32.mrb[0].mxu0
      %v1223 = vadd.f32 0.0, %v1222
      %v1224 = vpop.f32.mrb[0].mxu0
      %1225 = vmatprep.mubr.bf16.mxu0 0
      %1226 = vmatmul.mubr.bf16.gmra.mrb[0].mxu0 %v890
      %v1227 = vpop.f32.mrb[0].mxu0
      %v1228 = vadd.f32 0.0, %v1227
      %v1229 = vpop.f32.mrb[0].mxu0
      %v1230 = vpop.f32.mrb[0].mxu0
      %v1231 = vadd.f32 0.0, %v1230
      %v1232 = vpop.f32.mrb[0].mxu0
      %1233 = vmatprep.mubr.bf16.mxu0 0
      %1234 = vmatmul.mubr.bf16.gmra.mrb[0].mxu0 %v893
      %v1235 = vpop.f32.mrb[0].mxu0
      %v1236 = vadd.f32 0.0, %v1235
      %v1237 = vpop.f32.mrb[0].mxu0
      %v1238 = vpop.f32.mrb[0].mxu0
      %v1239 = vadd.f32 0.0, %v1238
      %v1240 = vpop.f32.mrb[0].mxu0
      %1241 = vmatprep.mubr.bf16.mxu0 0
      %1242 = vmatmul.mubr.bf16.gmra.mrb[0].mxu0 %v1026
      %v1243 = vpop.f32.mrb[0].mxu0
      %v1244 = vadd.f32 0.0, %v1243
      %v1245 = vpop.f32.mrb[0].mxu0
      %v1246 = vpop.f32.mrb[0].mxu0
      %v1247 = vadd.f32 0.0, %v1246
      %v1248 = vpop.f32.mrb[0].mxu0
      %1249 = vmatprep.mubr.bf16.mxu0 0
      %1250 = vmatmul.mubr.bf16.gmra.mrb[0].mxu0 %v1159
      %v1251 = vpop.f32.mrb[0].mxu0
      %v1252 = vadd.f32 0.0, %v1251
      %v1253 = vpop.f32.mrb[0].mxu0
      %v1254 = vpop.f32.mrb[0].mxu0
      %v1255 = vadd.f32 0.0, %v1254
      %v1256 = vpop.f32.mrb[0].mxu0
      %1257 = vdwg.mxu0
      %v1258 = vadd.f32 %v1125, %v1196
      %v1259 = vadd.f32 %v1126, %v1199
      %v1260 = vadd.f32 %v1127, %v1204
      %v1261 = vadd.f32 %v1128, %v1207
      %v1262 = vadd.f32 %v1129, %v1212
      %v1263 = vadd.f32 %v1130, %v1215
      %v1264 = vadd.f32 %v1131, %v1220
      %v1265 = vadd.f32 %v1132, %v1223
      %v1266 = vadd.f32 %v1133, %v1228
      %v1267 = vadd.f32 %v1134, %v1231
      %v1268 = vadd.f32 %v1135, %v1236
      %v1269 = vadd.f32 %v1136, %v1239
      %v1270 = vadd.f32 %v1137, %v1244
      %v1271 = vadd.f32 %v1138, %v1247
      %v1272 = vadd.f32 %v1139, %v1252
      %v1273 = vadd.f32 %v1140, %v1255
      %s1274 = scalar_lea.vmem %s243, 16
      %v1275 = vld [vmem:[%s1274] sm:$0xf]
      %v1276 = vld [vmem:[%s1274 + $0x4] sm:$0xf]
      %vm1286 = vcmask 1046528
      %v1287 = vrot.slane %v782, 1
      %v1288 = vrot.slane %v783, 1
      %v1289 = vsel %vm1286, %v1287, %v1288
      %v1290 = vrot.slane %v784, 1
      %v1291 = vsel %vm1286, %v1288, %v1290
      %v1292 = vrot.slane %v785, 1
      %v1293 = vsel %vm1286, %v1290, %v1292
      %v1294 = vrot.slane %v786, 1
      %v1295 = vsel %vm1286, %v1292, %v1294
      %v1296 = vrot.slane %v787, 1
      %v1297 = vsel %vm1286, %v1294, %v1296
      %v1298 = vrot.slane %v788, 1
      %v1299 = vsel %vm1286, %v1296, %v1298
      %v1300 = vrot.slane %v789, 1
      %v1301 = vsel %vm1286, %v1298, %v1300
      %v1302 = vrot.slane %v790, 1
      %v1303 = vsel %vm1286, %v1300, %v1302
      %v1306 = vunpack.c.l.b16 %v1275
      %v1307 = vunpack.c.l.b16 %v1276
      %v1308 = vpack.c.b16 %v1307, %v1306
      %v1311 = vsel %vm363, %v1289, 0
      %v1314 = vsel %vm363, %v1291, 0
      %v1317 = vsel %vm363, %v1293, 0
      %v1320 = vsel %vm363, %v1295, 0
      %v1323 = vsel %vm363, %v1297, 0
      %v1326 = vsel %vm363, %v1299, 0
      %v1329 = vsel %vm363, %v1301, 0
      %v1332 = vsel %vm363, %v1303, 0
      %1334 = vmatprep.subr.bf16.mxu0 0
      %1335 = vmatpush1.bf16.msra.mxu0 %v1308
      %1336 = vmatprep.subr.bf16.mxu0 0
      %1337 = vmatpush1.bf16.msra.mxu0 0
      %1338 = vmatprep.subr.bf16.mxu0 0
      %1339 = vmatpush1.bf16.msra.mxu0 0
      %1340 = vmatprep.subr.bf16.mxu0 0
      %1341 = vmatpush1.bf16.msra.mxu0 0
      %1342 = vmatprep.subr.bf16.mxu0 0
      %1343 = vmatpush1.bf16.msra.mxu0 0
      %1344 = vmatprep.subr.bf16.mxu0 0
      %1345 = vmatpush1.bf16.msra.mxu0 0
      %1346 = vmatprep.subr.bf16.mxu0 0
      %1347 = vmatpush1.bf16.msra.mxu0 0
      %1348 = vmatprep.subr.bf16.mxu0 0
      %1349 = vmatpush1.bf16.msra.mxu0 0
      %1350 = vmatprep.subr.bf16.mxu0 0
      %1351 = vmatpush1.bf16.msra.mxu0 0
      %1352 = vmatprep.subr.bf16.mxu0 0
      %1353 = vmatpush1.bf16.msra.mxu0 0
      %1354 = vmatprep.subr.bf16.mxu0 0
      %1355 = vmatpush1.bf16.msra.mxu0 0
      %1356 = vmatprep.subr.bf16.mxu0 0
      %1357 = vmatpush1.bf16.msra.mxu0 0
      %1358 = vmatprep.subr.bf16.mxu0 0
      %1359 = vmatpush1.bf16.msra.mxu0 0
      %1360 = vmatprep.subr.bf16.mxu0 0
      %1361 = vmatpush1.bf16.msra.mxu0 0
      %1362 = vmatprep.subr.bf16.mxu0 0
      %1363 = vmatpush1.bf16.msra.mxu0 0
      %1364 = vmatprep.subr.bf16.mxu0 0
      %1365 = vmatpush1.bf16.msra.mxu0 0
      %1366 = vmatprep.mubr.bf16.mxu0 0
      %1367 = vmatmul.mubr.bf16.gmra.mrb[0].mxu0 %v1311
      %v1368 = vpop.f32.mrb[0].mxu0
      %v1369 = vadd.f32 0.0, %v1368
      %v1370 = vpop.f32.mrb[0].mxu0
      %v1371 = vpop.f32.mrb[0].mxu0
      %v1372 = vadd.f32 0.0, %v1371
      %v1373 = vpop.f32.mrb[0].mxu0
      %1374 = vmatprep.mubr.bf16.mxu0 0
      %1375 = vmatmul.mubr.bf16.gmra.mrb[0].mxu0 %v1314
      %v1376 = vpop.f32.mrb[0].mxu0
      %v1377 = vadd.f32 0.0, %v1376
      %v1378 = vpop.f32.mrb[0].mxu0
      %v1379 = vpop.f32.mrb[0].mxu0
      %v1380 = vadd.f32 0.0, %v1379
      %v1381 = vpop.f32.mrb[0].mxu0
      %1382 = vmatprep.mubr.bf16.mxu0 0
      %1383 = vmatmul.mubr.bf16.gmra.mrb[0].mxu0 %v1317
      %v1384 = vpop.f32.mrb[0].mxu0
      %v1385 = vadd.f32 0.0, %v1384
      %v1386 = vpop.f32.mrb[0].mxu0
      %v1387 = vpop.f32.mrb[0].mxu0
      %v1388 = vadd.f32 0.0, %v1387
      %v1389 = vpop.f32.mrb[0].mxu0
      %1390 = vmatprep.mubr.bf16.mxu0 0
      %1391 = vmatmul.mubr.bf16.gmra.mrb[0].mxu0 %v1320
      %v1392 = vpop.f32.mrb[0].mxu0
      %v1393 = vadd.f32 0.0, %v1392
      %v1394 = vpop.f32.mrb[0].mxu0
      %v1395 = vpop.f32.mrb[0].mxu0
      %v1396 = vadd.f32 0.0, %v1395
      %v1397 = vpop.f32.mrb[0].mxu0
      %1398 = vmatprep.mubr.bf16.mxu0 0
      %1399 = vmatmul.mubr.bf16.gmra.mrb[0].mxu0 %v1323
      %v1400 = vpop.f32.mrb[0].mxu0
      %v1401 = vadd.f32 0.0, %v1400
      %v1402 = vpop.f32.mrb[0].mxu0
      %v1403 = vpop.f32.mrb[0].mxu0
      %v1404 = vadd.f32 0.0, %v1403
      %v1405 = vpop.f32.mrb[0].mxu0
      %1406 = vmatprep.mubr.bf16.mxu0 0
      %1407 = vmatmul.mubr.bf16.gmra.mrb[0].mxu0 %v1326
      %v1408 = vpop.f32.mrb[0].mxu0
      %v1409 = vadd.f32 0.0, %v1408
      %v1410 = vpop.f32.mrb[0].mxu0
      %v1411 = vpop.f32.mrb[0].mxu0
      %v1412 = vadd.f32 0.0, %v1411
      %v1413 = vpop.f32.mrb[0].mxu0
      %1414 = vmatprep.mubr.bf16.mxu0 0
      %1415 = vmatmul.mubr.bf16.gmra.mrb[0].mxu0 %v1329
      %v1416 = vpop.f32.mrb[0].mxu0
      %v1417 = vadd.f32 0.0, %v1416
      %v1418 = vpop.f32.mrb[0].mxu0
      %v1419 = vpop.f32.mrb[0].mxu0
      %v1420 = vadd.f32 0.0, %v1419
      %v1421 = vpop.f32.mrb[0].mxu0
      %1422 = vmatprep.mubr.bf16.mxu0 0
      %1423 = vmatmul.mubr.bf16.gmra.mrb[0].mxu0 %v1332
      %v1424 = vpop.f32.mrb[0].mxu0
      %v1425 = vadd.f32 0.0, %v1424
      %v1426 = vpop.f32.mrb[0].mxu0
      %v1427 = vpop.f32.mrb[0].mxu0
      %v1428 = vadd.f32 0.0, %v1427
      %v1429 = vpop.f32.mrb[0].mxu0
      %1430 = vdwg.mxu0
      %v1431 = vadd.f32 %v1258, %v1369
      %v1432 = vadd.f32 %v1259, %v1372
      %v1433 = vadd.f32 %v1260, %v1377
      %v1434 = vadd.f32 %v1261, %v1380
      %v1435 = vadd.f32 %v1262, %v1385
      %v1436 = vadd.f32 %v1263, %v1388
      %v1437 = vadd.f32 %v1264, %v1393
      %v1438 = vadd.f32 %v1265, %v1396
      %v1439 = vadd.f32 %v1266, %v1401
      %v1440 = vadd.f32 %v1267, %v1404
      %v1441 = vadd.f32 %v1268, %v1409
      %v1442 = vadd.f32 %v1269, %v1412
      %v1443 = vadd.f32 %v1270, %v1417
      %v1444 = vadd.f32 %v1271, %v1420
      %v1445 = vadd.f32 %v1272, %v1425
      %v1446 = vadd.f32 %v1273, %v1428
      %s1447 = scalar_lea.vmem %s243, 40
      %v1448 = vld [vmem:[%s1447] sm:$0xf]
      %v1449 = vld [vmem:[%s1447 + $0x4] sm:$0xf]
      %v1451 = vrot.slane %v791, 1
      %v1452 = vsel %vm1286, %v1302, %v1451
      %v1455 = vunpack.c.l.b16 %v1448
      %v1456 = vunpack.c.l.b16 %v1449
      %v1457 = vpack.c.b16 %v1456, %v1455
      %v1460 = vsel %vm363, %v1452, 0
      %1462 = vmatprep.subr.bf16.mxu0 0
      %1463 = vmatpush1.bf16.msra.mxu0 %v1457
      %1464 = vmatprep.subr.bf16.mxu0 0
      %1465 = vmatpush1.bf16.msra.mxu0 0
      %1466 = vmatprep.subr.bf16.mxu0 0
      %1467 = vmatpush1.bf16.msra.mxu0 0
      %1468 = vmatprep.subr.bf16.mxu0 0
      %1469 = vmatpush1.bf16.msra.mxu0 0
      %1470 = vmatprep.subr.bf16.mxu0 0
      %1471 = vmatpush1.bf16.msra.mxu0 0
      %1472 = vmatprep.subr.bf16.mxu0 0
      %1473 = vmatpush1.bf16.msra.mxu0 0
      %1474 = vmatprep.subr.bf16.mxu0 0
      %1475 = vmatpush1.bf16.msra.mxu0 0
      %1476 = vmatprep.subr.bf16.mxu0 0
      %1477 = vmatpush1.bf16.msra.mxu0 0
      %1478 = vmatprep.subr.bf16.mxu0 0
      %1479 = vmatpush1.bf16.msra.mxu0 0
      %1480 = vmatprep.subr.bf16.mxu0 0
      %1481 = vmatpush1.bf16.msra.mxu0 0
      %1482 = vmatprep.subr.bf16.mxu0 0
      %1483 = vmatpush1.bf16.msra.mxu0 0
      %1484 = vmatprep.subr.bf16.mxu0 0
      %1485 = vmatpush1.bf16.msra.mxu0 0
      %1486 = vmatprep.subr.bf16.mxu0 0
      %1487 = vmatpush1.bf16.msra.mxu0 0
      %1488 = vmatprep.subr.bf16.mxu0 0
      %1489 = vmatpush1.bf16.msra.mxu0 0
      %1490 = vmatprep.subr.bf16.mxu0 0
      %1491 = vmatpush1.bf16.msra.mxu0 0
      %1492 = vmatprep.subr.bf16.mxu0 0
      %1493 = vmatpush1.bf16.msra.mxu0 0
      %1494 = vmatprep.mubr.bf16.mxu0 0
      %1495 = vmatmul.mubr.bf16.gmra.mrb[0].mxu0 %v1314
      %v1496 = vpop.f32.mrb[0].mxu0
      %v1497 = vadd.f32 0.0, %v1496
      %v1498 = vpop.f32.mrb[0].mxu0
      %v1499 = vpop.f32.mrb[0].mxu0
      %v1500 = vadd.f32 0.0, %v1499
      %v1501 = vpop.f32.mrb[0].mxu0
      %1502 = vmatprep.mubr.bf16.mxu0 0
      %1503 = vmatmul.mubr.bf16.gmra.mrb[0].mxu0 %v1317
      %v1504 = vpop.f32.mrb[0].mxu0
      %v1505 = vadd.f32 0.0, %v1504
      %v1506 = vpop.f32.mrb[0].mxu0
      %v1507 = vpop.f32.mrb[0].mxu0
      %v1508 = vadd.f32 0.0, %v1507
      %v1509 = vpop.f32.mrb[0].mxu0
      %1510 = vmatprep.mubr.bf16.mxu0 0
      %1511 = vmatmul.mubr.bf16.gmra.mrb[0].mxu0 %v1320
      %v1512 = vpop.f32.mrb[0].mxu0
      %v1513 = vadd.f32 0.0, %v1512
      %v1514 = vpop.f32.mrb[0].mxu0
      %v1515 = vpop.f32.mrb[0].mxu0
      %v1516 = vadd.f32 0.0, %v1515
      %v1517 = vpop.f32.mrb[0].mxu0
      %1518 = vmatprep.mubr.bf16.mxu0 0
      %1519 = vmatmul.mubr.bf16.gmra.mrb[0].mxu0 %v1323
      %v1520 = vpop.f32.mrb[0].mxu0
      %v1521 = vadd.f32 0.0, %v1520
      %v1522 = vpop.f32.mrb[0].mxu0
      %v1523 = vpop.f32.mrb[0].mxu0
      %v1524 = vadd.f32 0.0, %v1523
      %v1525 = vpop.f32.mrb[0].mxu0
      %1526 = vmatprep.mubr.bf16.mxu0 0
      %1527 = vmatmul.mubr.bf16.gmra.mrb[0].mxu0 %v1326
      %v1528 = vpop.f32.mrb[0].mxu0
      %v1529 = vadd.f32 0.0, %v1528
      %v1530 = vpop.f32.mrb[0].mxu0
      %v1531 = vpop.f32.mrb[0].mxu0
      %v1532 = vadd.f32 0.0, %v1531
      %v1533 = vpop.f32.mrb[0].mxu0
      %1534 = vmatprep.mubr.bf16.mxu0 0
      %1535 = vmatmul.mubr.bf16.gmra.mrb[0].mxu0 %v1329
      %v1536 = vpop.f32.mrb[0].mxu0
      %v1537 = vadd.f32 0.0, %v1536
      %v1538 = vpop.f32.mrb[0].mxu0
      %v1539 = vpop.f32.mrb[0].mxu0
      %v1540 = vadd.f32 0.0, %v1539
      %v1541 = vpop.f32.mrb[0].mxu0
      %1542 = vmatprep.mubr.bf16.mxu0 0
      %1543 = vmatmul.mubr.bf16.gmra.mrb[0].mxu0 %v1332
      %v1544 = vpop.f32.mrb[0].mxu0
      %v1545 = vadd.f32 0.0, %v1544
      %v1546 = vpop.f32.mrb[0].mxu0
      %v1547 = vpop.f32.mrb[0].mxu0
      %v1548 = vadd.f32 0.0, %v1547
      %v1549 = vpop.f32.mrb[0].mxu0
      %1550 = vmatprep.mubr.bf16.mxu0 0
      %1551 = vmatmul.mubr.bf16.gmra.mrb[0].mxu0 %v1460
      %v1552 = vpop.f32.mrb[0].mxu0
      %v1553 = vadd.f32 0.0, %v1552
      %v1554 = vpop.f32.mrb[0].mxu0
      %v1555 = vpop.f32.mrb[0].mxu0
      %v1556 = vadd.f32 0.0, %v1555
      %v1557 = vpop.f32.mrb[0].mxu0
      %1558 = vdwg.mxu0
      %v1559 = vadd.f32 %v1431, %v1497
      %v1560 = vadd.f32 %v1432, %v1500
      %v1561 = vadd.f32 %v1433, %v1505
      %v1562 = vadd.f32 %v1434, %v1508
      %v1563 = vadd.f32 %v1435, %v1513
      %v1564 = vadd.f32 %v1436, %v1516
      %v1565 = vadd.f32 %v1437, %v1521
      %v1566 = vadd.f32 %v1438, %v1524
      %v1567 = vadd.f32 %v1439, %v1529
      %v1568 = vadd.f32 %v1440, %v1532
      %v1569 = vadd.f32 %v1441, %v1537
      %v1570 = vadd.f32 %v1442, %v1540
      %v1571 = vadd.f32 %v1443, %v1545
      %v1572 = vadd.f32 %v1444, %v1548
      %v1573 = vadd.f32 %v1445, %v1553
      %v1574 = vadd.f32 %v1446, %v1556
      %s1575 = scalar_lea.vmem %s243, 64
      %v1576 = vld [vmem:[%s1575] sm:$0xf]
      %v1577 = vld [vmem:[%s1575 + $0x4] sm:$0xf]
      %v1579 = vrot.slane %v792, 1
      %v1580 = vsel %vm1286, %v1451, %v1579
      %v1583 = vunpack.c.l.b16 %v1576
      %v1584 = vunpack.c.l.b16 %v1577
      %v1585 = vpack.c.b16 %v1584, %v1583
      %v1588 = vsel %vm363, %v1580, 0
      %1590 = vmatprep.subr.bf16.mxu0 0
      %1591 = vmatpush1.bf16.msra.mxu0 %v1585
      %1592 = vmatprep.subr.bf16.mxu0 0
      %1593 = vmatpush1.bf16.msra.mxu0 0
      %1594 = vmatprep.subr.bf16.mxu0 0
      %1595 = vmatpush1.bf16.msra.mxu0 0
      %1596 = vmatprep.subr.bf16.mxu0 0
      %1597 = vmatpush1.bf16.msra.mxu0 0
      %1598 = vmatprep.subr.bf16.mxu0 0
      %1599 = vmatpush1.bf16.msra.mxu0 0
      %1600 = vmatprep.subr.bf16.mxu0 0
      %1601 = vmatpush1.bf16.msra.mxu0 0
      %1602 = vmatprep.subr.bf16.mxu0 0
      %1603 = vmatpush1.bf16.msra.mxu0 0
      %1604 = vmatprep.subr.bf16.mxu0 0
      %1605 = vmatpush1.bf16.msra.mxu0 0
      %1606 = vmatprep.subr.bf16.mxu0 0
      %1607 = vmatpush1.bf16.msra.mxu0 0
      %1608 = vmatprep.subr.bf16.mxu0 0
      %1609 = vmatpush1.bf16.msra.mxu0 0
      %1610 = vmatprep.subr.bf16.mxu0 0
      %1611 = vmatpush1.bf16.msra.mxu0 0
      %1612 = vmatprep.subr.bf16.mxu0 0
      %1613 = vmatpush1.bf16.msra.mxu0 0
      %1614 = vmatprep.subr.bf16.mxu0 0
      %1615 = vmatpush1.bf16.msra.mxu0 0
      %1616 = vmatprep.subr.bf16.mxu0 0
      %1617 = vmatpush1.bf16.msra.mxu0 0
      %1618 = vmatprep.subr.bf16.mxu0 0
      %1619 = vmatpush1.bf16.msra.mxu0 0
      %1620 = vmatprep.subr.bf16.mxu0 0
      %1621 = vmatpush1.bf16.msra.mxu0 0
      %1622 = vmatprep.mubr.bf16.mxu0 0
      %1623 = vmatmul.mubr.bf16.gmra.mrb[0].mxu0 %v1317
      %v1624 = vpop.f32.mrb[0].mxu0
      %v1625 = vadd.f32 0.0, %v1624
      %v1626 = vpop.f32.mrb[0].mxu0
      %v1627 = vpop.f32.mrb[0].mxu0
      %v1628 = vadd.f32 0.0, %v1627
      %v1629 = vpop.f32.mrb[0].mxu0
      %1630 = vmatprep.mubr.bf16.mxu0 0
      %1631 = vmatmul.mubr.bf16.gmra.mrb[0].mxu0 %v1320
      %v1632 = vpop.f32.mrb[0].mxu0
      %v1633 = vadd.f32 0.0, %v1632
      %v1634 = vpop.f32.mrb[0].mxu0
      %v1635 = vpop.f32.mrb[0].mxu0
      %v1636 = vadd.f32 0.0, %v1635
      %v1637 = vpop.f32.mrb[0].mxu0
      %1638 = vmatprep.mubr.bf16.mxu0 0
      %1639 = vmatmul.mubr.bf16.gmra.mrb[0].mxu0 %v1323
      %v1640 = vpop.f32.mrb[0].mxu0
      %v1641 = vadd.f32 0.0, %v1640
      %v1642 = vpop.f32.mrb[0].mxu0
      %v1643 = vpop.f32.mrb[0].mxu0
      %v1644 = vadd.f32 0.0, %v1643
      %v1645 = vpop.f32.mrb[0].mxu0
      %1646 = vmatprep.mubr.bf16.mxu0 0
      %1647 = vmatmul.mubr.bf16.gmra.mrb[0].mxu0 %v1326
      %v1648 = vpop.f32.mrb[0].mxu0
      %v1649 = vadd.f32 0.0, %v1648
      %v1650 = vpop.f32.mrb[0].mxu0
      %v1651 = vpop.f32.mrb[0].mxu0
      %v1652 = vadd.f32 0.0, %v1651
      %v1653 = vpop.f32.mrb[0].mxu0
      %1654 = vmatprep.mubr.bf16.mxu0 0
      %1655 = vmatmul.mubr.bf16.gmra.mrb[0].mxu0 %v1329
      %v1656 = vpop.f32.mrb[0].mxu0
      %v1657 = vadd.f32 0.0, %v1656
      %v1658 = vpop.f32.mrb[0].mxu0
      %v1659 = vpop.f32.mrb[0].mxu0
      %v1660 = vadd.f32 0.0, %v1659
      %v1661 = vpop.f32.mrb[0].mxu0
      %1662 = vmatprep.mubr.bf16.mxu0 0
      %1663 = vmatmul.mubr.bf16.gmra.mrb[0].mxu0 %v1332
      %v1664 = vpop.f32.mrb[0].mxu0
      %v1665 = vadd.f32 0.0, %v1664
      %v1666 = vpop.f32.mrb[0].mxu0
      %v1667 = vpop.f32.mrb[0].mxu0
      %v1668 = vadd.f32 0.0, %v1667
      %v1669 = vpop.f32.mrb[0].mxu0
      %1670 = vmatprep.mubr.bf16.mxu0 0
      %1671 = vmatmul.mubr.bf16.gmra.mrb[0].mxu0 %v1460
      %v1672 = vpop.f32.mrb[0].mxu0
      %v1673 = vadd.f32 0.0, %v1672
      %v1674 = vpop.f32.mrb[0].mxu0
      %v1675 = vpop.f32.mrb[0].mxu0
      %v1676 = vadd.f32 0.0, %v1675
      %v1677 = vpop.f32.mrb[0].mxu0
      %1678 = vmatprep.mubr.bf16.mxu0 0
      %1679 = vmatmul.mubr.bf16.gmra.mrb[0].mxu0 %v1588
      %v1680 = vpop.f32.mrb[0].mxu0
      %v1681 = vadd.f32 0.0, %v1680
      %v1682 = vpop.f32.mrb[0].mxu0
      %v1683 = vpop.f32.mrb[0].mxu0
      %v1684 = vadd.f32 0.0, %v1683
      %v1685 = vpop.f32.mrb[0].mxu0
      %1686 = vdwg.mxu0
      %v1687 = vadd.f32 %v1559, %v1625
      %v1688 = vadd.f32 %v1560, %v1628
      %v1689 = vadd.f32 %v1561, %v1633
      %v1690 = vadd.f32 %v1562, %v1636
      %v1691 = vadd.f32 %v1563, %v1641
      %v1692 = vadd.f32 %v1564, %v1644
      %v1693 = vadd.f32 %v1565, %v1649
      %v1694 = vadd.f32 %v1566, %v1652
      %v1695 = vadd.f32 %v1567, %v1657
      %v1696 = vadd.f32 %v1568, %v1660
      %v1697 = vadd.f32 %v1569, %v1665
      %v1698 = vadd.f32 %v1570, %v1668
      %v1699 = vadd.f32 %v1571, %v1673
      %v1700 = vadd.f32 %v1572, %v1676
      %v1701 = vadd.f32 %v1573, %v1681
      %v1702 = vadd.f32 %v1574, %v1684
      %1703 = vst.msk [vmem:[#allocation2] sm:$0xff] %vm363, %v1687
      %1704 = vst.msk [vmem:[#allocation2 + $0x8] sm:$0xff] %vm363, %v1688
      %1705 = vst.msk [vmem:[#allocation2 + $0x10] sm:$0xff] %vm363, %v1689
      %1706 = vst.msk [vmem:[#allocation2 + $0x18] sm:$0xff] %vm363, %v1690
      %1707 = vst.msk [vmem:[#allocation2 + $0x20] sm:$0xff] %vm363, %v1691
      %1708 = vst.msk [vmem:[#allocation2 + $0x28] sm:$0xff] %vm363, %v1692
      %1709 = vst.msk [vmem:[#allocation2 + $0x30] sm:$0xff] %vm363, %v1693
      %1710 = vst.msk [vmem:[#allocation2 + $0x38] sm:$0xff] %vm363, %v1694
      %1711 = vst.msk [vmem:[#allocation2 + $0x40] sm:$0xff] %vm363, %v1695
      %1712 = vst.msk [vmem:[#allocation2 + $0x48] sm:$0xff] %vm363, %v1696
      %1713 = vst.msk [vmem:[#allocation2 + $0x50] sm:$0xff] %vm363, %v1697
      %1714 = vst.msk [vmem:[#allocation2 + $0x58] sm:$0xff] %vm363, %v1698
      %1715 = vst.msk [vmem:[#allocation2 + $0x60] sm:$0xff] %vm363, %v1699
      %1716 = vst.msk [vmem:[#allocation2 + $0x68] sm:$0xff] %vm363, %v1700
      %1717 = vst.msk [vmem:[#allocation2 + $0x70] sm:$0xff] %vm363, %v1701
      %1718 = vst.msk [vmem:[#allocation2 + $0x78] sm:$0xff] %vm363, %v1702
      // Predicated region
      $region37: #{ema_head_forward.11} parent=31 // pred_check
        %p1719 = pneg %p257
      $region38: #{ema_head_forward.11} parent=31 // pred_check_branch
        %1721 = sbr.rel (%p1719) target = $region40
      $region39: #{ema_head_forward.11} parent=31 // pred_region
        %v1722 = vld [vmem:[#allocation2] sm:$0xff]
        %v1723 = vld [vmem:[#allocation2 + $0x8] sm:$0xff]
        %v1724 = vld [vmem:[#allocation2 + $0x10] sm:$0xff]
        %v1725 = vld [vmem:[#allocation2 + $0x18] sm:$0xff]
        %v1726 = vld [vmem:[#allocation2 + $0x20] sm:$0xff]
        %v1727 = vld [vmem:[#allocation2 + $0x28] sm:$0xff]
        %v1728 = vld [vmem:[#allocation2 + $0x30] sm:$0xff]
        %v1729 = vld [vmem:[#allocation2 + $0x38] sm:$0xff]
        %v1730 = vld [vmem:[#allocation2 + $0x40] sm:$0xff]
        %v1731 = vld [vmem:[#allocation2 + $0x48] sm:$0xff]
        %v1732 = vld [vmem:[#allocation2 + $0x50] sm:$0xff]
        %v1733 = vld [vmem:[#allocation2 + $0x58] sm:$0xff]
        %v1734 = vld [vmem:[#allocation2 + $0x60] sm:$0xff]
        %v1735 = vld [vmem:[#allocation2 + $0x68] sm:$0xff]
        %v1736 = vld [vmem:[#allocation2 + $0x70] sm:$0xff]
        %v1737 = vld [vmem:[#allocation2 + $0x78] sm:$0xff]
        %v1738 = vld [vmem:[%s247] sm:$0x1]
        %v1740 = vlaneseq
        %v1741 = vshrl.u32 %v1740, 7
        %v1742 = vsub.s32 0, %v1741
        %v1743 = vrot.slane %v1738, %v1742
        %v1745 = vadd.f32 %v1722, %v1743
        %v1746 = vadd.f32 %v1723, %v1743
        %v1747 = vadd.f32 %v1724, %v1743
        %v1748 = vadd.f32 %v1725, %v1743
        %v1749 = vadd.f32 %v1726, %v1743
        %v1750 = vadd.f32 %v1727, %v1743
        %v1751 = vadd.f32 %v1728, %v1743
        %v1752 = vadd.f32 %v1729, %v1743
        %v1753 = vadd.f32 %v1730, %v1743
        %v1754 = vadd.f32 %v1731, %v1743
        %v1755 = vadd.f32 %v1732, %v1743
        %v1756 = vadd.f32 %v1733, %v1743
        %v1757 = vadd.f32 %v1734, %v1743
        %v1758 = vadd.f32 %v1735, %v1743
        %v1759 = vadd.f32 %v1736, %v1743
        %v1760 = vadd.f32 %v1737, %v1743
        %v1761 = vmax.f32 %v1745, 0.0
        %v1762 = vmax.f32 %v1746, 0.0
        %v1763 = vmax.f32 %v1747, 0.0
        %v1764 = vmax.f32 %v1748, 0.0
        %v1765 = vmax.f32 %v1749, 0.0
        %v1766 = vmax.f32 %v1750, 0.0
        %v1767 = vmax.f32 %v1751, 0.0
        %v1768 = vmax.f32 %v1752, 0.0
        %v1769 = vmax.f32 %v1753, 0.0
        %v1770 = vmax.f32 %v1754, 0.0
        %v1771 = vmax.f32 %v1755, 0.0
        %v1772 = vmax.f32 %v1756, 0.0
        %v1773 = vmax.f32 %v1757, 0.0
        %v1774 = vmax.f32 %v1758, 0.0
        %v1775 = vmax.f32 %v1759, 0.0
        %v1776 = vmax.f32 %v1760, 0.0
        %v1777 = vpack.c.bf16 %v1762, %v1761
        %v1778 = vpack.c.bf16 %v1764, %v1763
        %v1779 = vpack.c.bf16 %v1766, %v1765
        %v1780 = vpack.c.bf16 %v1768, %v1767
        %v1781 = vpack.c.bf16 %v1770, %v1769
        %v1782 = vpack.c.bf16 %v1772, %v1771
        %v1783 = vpack.c.bf16 %v1774, %v1773
        %v1784 = vpack.c.bf16 %v1776, %v1775
        %v1793 = vunpack.c.l.b16 %v1777
        %v1794 = vunpack.c.h.b16 %v1777
        %v1795 = vunpack.c.l.b16 %v1778
        %v1796 = vunpack.c.h.b16 %v1778
        %v1797 = vunpack.c.l.b16 %v1779
        %v1798 = vunpack.c.h.b16 %v1779
        %v1799 = vunpack.c.l.b16 %v1780
        %v1800 = vunpack.c.h.b16 %v1780
        %v1801 = vunpack.c.l.b16 %v1781
        %v1802 = vunpack.c.h.b16 %v1781
        %v1803 = vunpack.c.l.b16 %v1782
        %v1804 = vunpack.c.h.b16 %v1782
        %v1805 = vunpack.c.l.b16 %v1783
        %v1806 = vunpack.c.h.b16 %v1783
        %v1807 = vunpack.c.l.b16 %v1784
        %v1808 = vunpack.c.h.b16 %v1784
        %v1809 = vpack.c.b16 %v1793, %v1793
        %v1810 = vpack.c.b16 %v1794, %v1794
        %v1811 = vpack.c.b16 %v1795, %v1795
        %v1812 = vpack.c.b16 %v1796, %v1796
        %v1813 = vpack.c.b16 %v1797, %v1797
        %v1814 = vpack.c.b16 %v1798, %v1798
        %v1815 = vpack.c.b16 %v1799, %v1799
        %v1816 = vpack.c.b16 %v1800, %v1800
        %v1817 = vpack.c.b16 %v1801, %v1801
        %v1818 = vpack.c.b16 %v1802, %v1802
        %v1819 = vpack.c.b16 %v1803, %v1803
        %v1820 = vpack.c.b16 %v1804, %v1804
        %v1821 = vpack.c.b16 %v1805, %v1805
        %v1822 = vpack.c.b16 %v1806, %v1806
        %v1823 = vpack.c.b16 %v1807, %v1807
        %v1824 = vpack.c.b16 %v1808, %v1808
        %vm1841 = vcmask 125952
        %1842 = vst.msk [vmem:[%s255] sm:$0xf] %vm1841, %v1809
        %1843 = vst.msk [vmem:[%s255 + $0x4] sm:$0xf] %vm1841, %v1810
        %1844 = vst.msk [vmem:[%s255 + $0x8] sm:$0xf] %vm1841, %v1811
        %1845 = vst.msk [vmem:[%s255 + $0xc] sm:$0xf] %vm1841, %v1812
        %1846 = vst.msk [vmem:[%s255 + $0x10] sm:$0xf] %vm1841, %v1813
        %1847 = vst.msk [vmem:[%s255 + $0x14] sm:$0xf] %vm1841, %v1814
        %1848 = vst.msk [vmem:[%s255 + $0x18] sm:$0xf] %vm1841, %v1815
        %1849 = vst.msk [vmem:[%s255 + $0x1c] sm:$0xf] %vm1841, %v1816
        %1850 = vst.msk [vmem:[%s255 + $0x20] sm:$0xf] %vm1841, %v1817
        %1851 = vst.msk [vmem:[%s255 + $0x24] sm:$0xf] %vm1841, %v1818
        %1852 = vst.msk [vmem:[%s255 + $0x28] sm:$0xf] %vm1841, %v1819
        %1853 = vst.msk [vmem:[%s255 + $0x2c] sm:$0xf] %vm1841, %v1820
        %1854 = vst.msk [vmem:[%s255 + $0x30] sm:$0xf] %vm1841, %v1821
        %1855 = vst.msk [vmem:[%s255 + $0x34] sm:$0xf] %vm1841, %v1822
        %1856 = vst.msk [vmem:[%s255 + $0x38] sm:$0xf] %vm1841, %v1823
        %1857 = vst.msk [vmem:[%s255 + $0x3c] sm:$0xf] %vm1841, %v1824
      $region40: #{ema_head_forward.11} parent=31 // pred_fallthru
        _
      %p1858 = scmp.lt.s32.totalorder %s19, 1
      %s1859 = scalar_select %p1858, %s19, 1
      %p1860 = scmp.lt.s32.totalorder %s20, 0
      %s1861 = scalar_select %p1860, %s20, 0
      %s1862 = smul.addr %s1859, 16
      %s1863 = sadd.s32 %s1861, %s1862
      %s1864 = smul.addr %s1863, 4
      %s1865 = scalar_lea.vmem %s3, %s1864
      // Predicated region
      $region41: #{ema_head_forward.11} parent=31 // pred_check
        %p1866 = pneg %p135
      $region42: #{ema_head_forward.11} parent=31 // pred_check_branch
        %1868 = sbr.rel (%p1866) target = $region44
      $region43: #{ema_head_forward.11} parent=31 // pred_region
        _
      $region44: #{ema_head_forward.11} parent=31 // pred_fallthru
        _
    $region32: #{ema_head_forward.11} parent=5 // pred_fallthru
      _
    %p1869 = scmp.le.s32.totalorder 2, %s9
    // Predicated region
    $region45: #{ema_head_forward.11} parent=5 // pred_check
      %p1870 = pneg %p1869
    $region46: #{ema_head_forward.11} parent=5 // pred_check_branch
      %1872 = sbr.rel (%p1870) target = $region48
    $region47: #{ema_head_forward.11} parent=5 // pred_region
      %s1873 = ssub.s32 %s9, 2
      // Predicated region
      $region49: #{ema_head_forward.11} parent=47 // pred_check
        %p1874 = pneg %p141
      $region50: #{ema_head_forward.11} parent=47 // pred_check_branch
        %1876 = sbr.rel (%p1874) target = $region52
      $region51: #{ema_head_forward.11} parent=47 // pred_region
        %p1877 = scmp.lt.s32.totalorder %s22, 1
        %s1878 = scalar_select %p1877, %s22, 1
        %p1879 = scmp.lt.s32.totalorder %s23, 0
        %s1880 = scalar_select %p1879, %s23, 0
        %s1881 = smul.addr %s1878, 16
        %s1882 = sadd.s32 %s1880, %s1881
        %s1883 = smul.addr %s1882, 4
        %s1884 = scalar_lea.vmem %s3, %s1883
      $region52: #{ema_head_forward.11} parent=47 // pred_fallthru
        _
    $region48: #{ema_head_forward.11} parent=5 // pred_fallthru
      _
  $region6: #{ema_head_forward.11} parent=0 // loop_footer
    %s13 = sadd.s32 1, %s9
  $region7: #{ema_head_forward.11} parent=0 // loop_footer_branch
    %8 = sbr.rel target = $region3
  $region8: #{ema_head_forward.11} parent=0 // loop_exit
    _

// kernel: ema_head_forward.13
$region0: #{ema_head_forward.13}
  #allocation0 [shape = 'u32[]', space=smem, size = 0x4, offset = 0x4, fixed_abs, tag = 'smem constant byte address 0x4 - core index']
  #allocation1 [shape = 'u32[144,128]{1,0:T(1,128)}', space=vmem, size = 0x12000, scoped, tag = 'internal scratch']
  %s0 = inlined_call_operand.vmem [shape: bf16[2,8,8,8], index: 0, kind: input, shape index: {}]
  %s1 = inlined_call_operand.vmem [shape: bf16[16,8], index: 1, kind: input, shape index: {}]
  %s2 = inlined_call_operand.vmem [shape: bf16[8,16], index: 2, kind: input, shape index: {}]
  %s3 = inlined_call_operand.hbm [shape: f32[2,8,16,16], index: 3, kind: output, shape index: {}]
  %s4 = sld [smem:[#allocation0]]
  $region45: #{ema_head_forward.13} parent=0
    _
  %s6 = ssub.s32 1, %s4
  %s7 = scalar_select 0, %s6, %s4
  $region1: #{ema_head_forward.13} parent=0
    #allocation2 [shape = 'u8[131072]{0}', space=vmem, size = 0x20000, scoped, tag = 'output window, operand 0']
    #allocation3 [shape = 's32[2]{0}', space=sflag, size = 0x8, scoped, tag = 'scoped memory for ema_head_forward.13']
    %8 = vsyncpa [#allocation3], 0
    %s9 = scalar_lea.sflag [#allocation3], 1
    %10 = vsyncpa %s9, 0
    loop: start=0, step=1, limit=4
    $region2: #{ema_head_forward.13} parent=1 // loop_pre_header
      _
    $region3: #{ema_head_forward.13} parent=1 // loop_header
      %s12 = sphi 0, %s16
      %p13 = scmp.ge.s32.totalorder %s12, 4
      %s19 = sphi 0, %s31
      %s20 = sphi 0, %s27
      %s21 = sphi 0, %s19
      %s22 = sphi 0, %s20
      %s23 = sphi 0, %s21
      %s24 = sphi 0, %s22
      %s34 = sphi 0, %s36
      %s37 = sphi 0, %s34
      %s38 = sphi 0, %s37
      %s54 = sphi 0, %s38
      %s60 = sphi 0, %s62
      %s63 = sphi 0, %s60
      %s64 = sphi 0, %s63
      %s80 = sphi 0, %s64
      %s84 = sphi 0, %s84
      %s86 = sphi 0, %s84
      %s87 = sphi 0, %s86
      %s101 = sphi 0, %s87
      %s109 = sphi 0, %s111
      %s112 = sphi 0, %s109
      %s113 = sphi 0, %s112
      %s129 = sphi 0, %s113
    $region4: #{ema_head_forward.13} parent=1 // loop_header_branch
      %15 = sbr.rel (%p13) target = $region8
    $region5: #{ema_head_forward.13} parent=1 // loop_body
      %s17 = ssub.s32 %s12, 1
      %s18 = ssub.s32 %s12, 2
      %s25 = sadd.s32 1, %s20
      %p26 = scmp.ge.s32.totalorder %s25, 1
      %s27 = scalar_select %p26, 0, %s25
      %s28 = sadd.s32 1, %s19
      %s29 = scalar_select %p26, %s28, %s19
      %p30 = scmp.ge.s32.totalorder %s29, 2
      %s31 = scalar_select %p30, 0, %s29
      %s32 = ssub.s32 %s19, %s31
      %p33 = scmp.eq.s32.totalorder %s32, 0
      %s35 = sadd.s32 %s34, 1
      %s36 = scalar_select %p33, %s34, %s35
      %p39 = pneg %p33
      %p40 = scmp.eq.s32.totalorder %s12, 1
      %p41 = por %p39, %p40
      %p42 = scmp.ne.s32.totalorder %s34, %s37
      %p43 = scmp.eq.s32.totalorder %s12, 0
      %p44 = por %p42, %p43
      %p45 = scmp.ne.s32.totalorder %s34, %s37
      %p46 = scmp.eq.s32.totalorder %s17, 1
      %p47 = por %p45, %p46
      %p48 = scmp.ne.s32.totalorder %s37, %s38
      %p49 = scmp.eq.s32.totalorder %s17, 0
      %p50 = por %p48, %p49
      %p51 = scmp.ne.s32.totalorder %s37, %s38
      %p52 = scmp.eq.s32.totalorder %s18, 1
      %p53 = por %p51, %p52
      %p55 = scmp.ne.s32.totalorder %s38, %s54
      %p56 = scmp.eq.s32.totalorder %s18, 0
      %p57 = por %p55, %p56
      %s58 = ssub.s32 %s20, %s27
      %p59 = scmp.eq.s32.totalorder %s58, 0
      %s61 = sadd.s32 %s60, 1
      %s62 = scalar_select %p59, %s60, %s61
      %p65 = pneg %p59
      %p66 = scmp.eq.s32.totalorder %s12, 1
      %p67 = por %p65, %p66
      %p68 = scmp.ne.s32.totalorder %s60, %s63
      %p69 = scmp.eq.s32.totalorder %s12, 0
      %p70 = por %p68, %p69
      %p71 = scmp.ne.s32.totalorder %s60, %s63
      %p72 = scmp.eq.s32.totalorder %s17, 1
      %p73 = por %p71, %p72
      %p74 = scmp.ne.s32.totalorder %s63, %s64
      %p75 = scmp.eq.s32.totalorder %s17, 0
      %p76 = por %p74, %p75
      %p77 = scmp.ne.s32.totalorder %s63, %s64
      %p78 = scmp.eq.s32.totalorder %s18, 1
      %p79 = por %p77, %p78
      %p81 = scmp.ne.s32.totalorder %s64, %s80
      %p82 = scmp.eq.s32.totalorder %s18, 0
      %p83 = por %p81, %p82
      %s85 = sadd.s32 %s84, 1
      %p88 = scmp.eq.s32.totalorder %s12, 1
      %p89 = scmp.ne.s32.totalorder %s84, %s86
      %p90 = scmp.eq.s32.totalorder %s12, 0
      %p91 = por %p89, %p90
      %p92 = scmp.ne.s32.totalorder %s84, %s86
      %p93 = scmp.eq.s32.totalorder %s17, 1
      %p94 = por %p92, %p93
      %p95 = scmp.ne.s32.totalorder %s86, %s87
      %p96 = scmp.eq.s32.totalorder %s17, 0
      %p97 = por %p95, %p96
      %p98 = scmp.ne.s32.totalorder %s86, %s87
      %p99 = scmp.eq.s32.totalorder %s18, 1
      %p100 = por %p98, %p99
      %p102 = scmp.ne.s32.totalorder %s87, %s101
      %p103 = scmp.eq.s32.totalorder %s18, 0
      %p104 = por %p102, %p103
      %s105 = ssub.s32 %s19, %s31
      %s106 = ssub.s32 %s20, %s27
      %s107 = sor.u32 %s105, %s106
      %p108 = scmp.eq.s32.totalorder %s107, 0
      %s110 = sadd.s32 %s109, 1
      %s111 = scalar_select %p108, %s109, %s110
      %p114 = pneg %p108
      %p115 = scmp.eq.s32.totalorder %s12, 1
      %p116 = por %p114, %p115
      %p117 = scmp.ne.s32.totalorder %s109, %s112
      %p118 = scmp.eq.s32.totalorder %s12, 0
      %p119 = por %p117, %p118
      %p120 = scmp.ne.s32.totalorder %s109, %s112
      %p121 = scmp.eq.s32.totalorder %s17, 1
      %p122 = por %p120, %p121
      %p123 = scmp.ne.s32.totalorder %s112, %s113
      %p124 = scmp.eq.s32.totalorder %s17, 0
      %p125 = por %p123, %p124
      %p126 = scmp.ne.s32.totalorder %s112, %s113
      %p127 = scmp.eq.s32.totalorder %s18, 1
      %p128 = por %p126, %p127
      %p130 = scmp.ne.s32.totalorder %s113, %s129
      %p131 = scmp.eq.s32.totalorder %s18, 0
      %p132 = por %p130, %p131
      %p133 = scmp.le.s32.totalorder 1, %s12
      %p134 = scmp.lt.s32.totalorder %s12, 3
      %p135 = pnand %p133, %p134
      %p136 = pneg %p135
      // Predicated region
      $region9: #{ema_head_forward.13} parent=5 // pred_check
        _
      $region10: #{ema_head_forward.13} parent=5 // pred_check_branch
        %138 = sbr.rel (%p135) target = $region12
      $region11: #{ema_head_forward.13} parent=5 // pred_region
        %s139 = ssub.s32 %s12, 1
        // Predicated region
        $region13: #{ema_head_forward.13} parent=11 // pred_check
          %p140 = pneg %p76
        $region14: #{ema_head_forward.13} parent=11 // pred_check_branch
          %142 = sbr.rel (%p140) target = $region16
        $region15: #{ema_head_forward.13} parent=11 // pred_region
          %s143 = smul.u32 2, %s22
          %p144 = scmp.lt.s32.totalorder %s143, 1
          %s145 = scalar_select %p144, %s143, 1
          %s146 = smul.addr %s145, 4
          %s147 = scalar_lea.vmem %s1, %s146
          %s148 = smul.u32 2, %s22
        $region16: #{ema_head_forward.13} parent=11 // pred_fallthru
          _
        // Predicated region
        $region17: #{ema_head_forward.13} parent=11 // pred_check
          %p149 = pneg %p97
        $region18: #{ema_head_forward.13} parent=11 // pred_check_branch
          %151 = sbr.rel (%p149) target = $region20
        $region19: #{ema_head_forward.13} parent=11 // pred_region
          _
        $region20: #{ema_head_forward.13} parent=11 // pred_fallthru
          _
      $region12: #{ema_head_forward.13} parent=5 // pred_fallthru
        _
      %p152 = scmp.lt.s32.totalorder %s12, 2
      // Predicated region
      $region21: #{ema_head_forward.13} parent=5 // pred_check
        %p153 = pneg %p152
      $region22: #{ema_head_forward.13} parent=5 // pred_check_branch
        %155 = sbr.rel (%p153) target = $region24
      $region23: #{ema_head_forward.13} parent=5 // pred_region
        // Predicated region
        $region25: #{ema_head_forward.13} parent=23 // pred_check
          %p156 = pneg %p44
        $region26: #{ema_head_forward.13} parent=23 // pred_check_branch
          %158 = sbr.rel (%p156) target = $region28
        $region27: #{ema_head_forward.13} parent=23 // pred_region
          %p159 = scmp.lt.s32.totalorder %s19, 1
          %s160 = scalar_select %p159, %s19, 1
          %s161 = smul.addr %s160, 8
          %s162 = smul.addr %s161, 4
          %s163 = scalar_lea.vmem %s0, %s162
        $region28: #{ema_head_forward.13} parent=23 // pred_fallthru
          _
      $region24: #{ema_head_forward.13} parent=5 // pred_fallthru
        _
      %p164 = scmp.le.s32.totalorder 1, %s12
      %p165 = scmp.lt.s32.totalorder %s12, 3
      %p166 = pnand %p164, %p165
      %p167 = pneg %p166
      // Predicated region
      $region29: #{ema_head_forward.13} parent=5 // pred_check
        _
      $region30: #{ema_head_forward.13} parent=5 // pred_check_branch
        %169 = sbr.rel (%p166) target = $region32
      $region31: #{ema_head_forward.13} parent=5 // pred_region
        %s170 = ssub.s32 %s12, 1
        %p171 = scmp.lt.s32.totalorder %s21, 1
        %s172 = scalar_select %p171, %s21, 1
        %s173 = smul.addr %s172, 8
        %s174 = smul.addr %s173, 4
        %s175 = scalar_lea.vmem %s0, %s174
        %p176 = pneg %p50
        %p177 = pneg %p47
        %s178 = smul.u32 2, %s22
        %p179 = scmp.lt.s32.totalorder %s178, 1
        %s180 = scalar_select %p179, %s178, 1
        %s181 = smul.addr %s180, 4
        %s182 = scalar_lea.vmem %s1, %s181
        %p183 = pneg %p76
        %p184 = pneg %p73
        %p185 = pneg %p97
        %p186 = pneg %p94
        %p187 = pneg %p125
        %p188 = pneg %p122
        %s189 = sand.u32 %s112, 1
        %s190 = scalar_lea.sflag [#allocation3], %s189
        %s191 = sand.u32 %s112, 1
        %s192 = smul.addr %s191, 128
        %s193 = scalar_lea.vmem [#allocation2], %s192
        %p194 = scmp.lt.s32.totalorder %s21, 1
        %s195 = scalar_select %p194, %s21, 1
        %s196 = smul.addr %s195, 8
        %s197 = smul.addr %s196, 4
        %s198 = scalar_lea.vmem %s0, %s197
        %s199 = smul.u32 2, %s22
        %p200 = scmp.lt.s32.totalorder %s199, 1
        %s201 = scalar_select %p200, %s199, 1
        %s202 = smul.addr %s201, 4
        %s203 = scalar_lea.vmem %s1, %s202
        %s204 = smul.u32 2, %s22
        %s205 = smul.u32 2, %s22
        %v207 = vld [vmem:[%s198] sm:$0xf]
        %v208 = vld [vmem:[%s198 + $0x4] sm:$0xf]
        %v209 = vld [vmem:[%s198 + $0x8] sm:$0xf]
        %v210 = vld [vmem:[%s198 + $0xc] sm:$0xf]
        %v211 = vld [vmem:[%s198 + $0x10] sm:$0xf]
        %v212 = vld [vmem:[%s198 + $0x14] sm:$0xf]
        %v213 = vld [vmem:[%s198 + $0x18] sm:$0xf]
        %v214 = vld [vmem:[%s198 + $0x1c] sm:$0xf]
        %v215 = vld [vmem:[%s2] sm:$0xf]
        %v224 = vunpack.c.l.b16 %v207
        %v225 = vunpack.c.l.b16 %v208
        %v226 = vunpack.c.l.b16 %v209
        %v227 = vunpack.c.l.b16 %v210
        %v228 = vunpack.c.l.b16 %v211
        %v229 = vunpack.c.l.b16 %v212
        %v230 = vunpack.c.l.b16 %v213
        %v231 = vunpack.c.l.b16 %v214
        %v232 = vpack.c.b16 %v225, %v224
        %v233 = vpack.c.b16 %v227, %v226
        %v234 = vpack.c.b16 %v229, %v228
        %v235 = vpack.c.b16 %v231, %v230
        %vm236 = vcmask 64512
        %v238 = vsel %vm236, %v232, 0
        %v241 = vsel %vm236, %v233, 0
        %v244 = vsel %vm236, %v234, 0
        %v247 = vsel %vm236, %v235, 0
        %vm249 = vcmask 1043456
        %v251 = vsel %vm249, %v215, 0
        %253 = vmatprep.subr.bf16.mxu0 0
        %254 = vmatpush1.bf16.msra.mxu0 %v251
        %255 = vmatprep.subr.bf16.mxu0 0
        %256 = vmatpush1.bf16.msra.mxu0 0
        %257 = vmatprep.subr.bf16.mxu0 0
        %258 = vmatpush1.bf16.msra.mxu0 0
        %259 = vmatprep.subr.bf16.mxu0 0
        %260 = vmatpush1.bf16.msra.mxu0 0
        %261 = vmatprep.subr.bf16.mxu0 0
        %262 = vmatpush1.bf16.msra.mxu0 0
        %263 = vmatprep.subr.bf16.mxu0 0
        %264 = vmatpush1.bf16.msra.mxu0 0
        %265 = vmatprep.subr.bf16.mxu0 0
        %266 = vmatpush1.bf16.msra.mxu0 0
        %267 = vmatprep.subr.bf16.mxu0 0
        %268 = vmatpush1.bf16.msra.mxu0 0
        %269 = vmatprep.subr.bf16.mxu0 0
        %270 = vmatpush1.bf16.msra.mxu0 0
        %271 = vmatprep.subr.bf16.mxu0 0
        %272 = vmatpush1.bf16.msra.mxu0 0
        %273 = vmatprep.subr.bf16.mxu0 0
        %274 = vmatpush1.bf16.msra.mxu0 0
        %275 = vmatprep.subr.bf16.mxu0 0
        %276 = vmatpush1.bf16.msra.mxu0 0
        %277 = vmatprep.subr.bf16.mxu0 0
        %278 = vmatpush1.bf16.msra.mxu0 0
        %279 = vmatprep.subr.bf16.mxu0 0
        %280 = vmatpush1.bf16.msra.mxu0 0
        %281 = vmatprep.subr.bf16.mxu0 0
        %282 = vmatpush1.bf16.msra.mxu0 0
        %283 = vmatprep.subr.bf16.mxu0 0
        %284 = vmatpush1.bf16.msra.mxu0 0
        %285 = vmatprep.mubr.bf16.mxu0 0
        %286 = vmatmul.mubr.bf16.gmra.mrb[0].mxu0 %v238
        %v287 = vpop.f32.mrb[0].mxu0
        %v288 = vadd.f32 0.0, %v287
        %v289 = vpop.f32.mrb[0].mxu0
        %v290 = vpop.f32.mrb[0].mxu0
        %v291 = vadd.f32 0.0, %v290
        %v292 = vpop.f32.mrb[0].mxu0
        %293 = vmatprep.mubr.bf16.mxu0 0
        %294 = vmatmul.mubr.bf16.gmra.mrb[0].mxu0 %v241
        %v295 = vpop.f32.mrb[0].mxu0
        %v296 = vadd.f32 0.0, %v295
        %v297 = vpop.f32.mrb[0].mxu0
        %v298 = vpop.f32.mrb[0].mxu0
        %v299 = vadd.f32 0.0, %v298
        %v300 = vpop.f32.mrb[0].mxu0
        %301 = vmatprep.mubr.bf16.mxu0 0
        %302 = vmatmul.mubr.bf16.gmra.mrb[0].mxu0 %v244
        %v303 = vpop.f32.mrb[0].mxu0
        %v304 = vadd.f32 0.0, %v303
        %v305 = vpop.f32.mrb[0].mxu0
        %v306 = vpop.f32.mrb[0].mxu0
        %v307 = vadd.f32 0.0, %v306
        %v308 = vpop.f32.mrb[0].mxu0
        %309 = vmatprep.mubr.bf16.mxu0 0
        %310 = vmatmul.mubr.bf16.gmra.mrb[0].mxu0 %v247
        %v311 = vpop.f32.mrb[0].mxu0
        %v312 = vadd.f32 0.0, %v311
        %v313 = vpop.f32.mrb[0].mxu0
        %v314 = vpop.f32.mrb[0].mxu0
        %v315 = vadd.f32 0.0, %v314
        %v316 = vpop.f32.mrb[0].mxu0
        %317 = vdwg.mxu0
        %v318 = vpack.c.bf16 %v288, %v288
        %v319 = vpack.c.bf16 %v291, %v291
        %v320 = vpack.c.bf16 %v296, %v296
        %v321 = vpack.c.bf16 %v299, %v299
        %v322 = vpack.c.bf16 %v304, %v304
        %v323 = vpack.c.bf16 %v307, %v307
        %v324 = vpack.c.bf16 %v312, %v312
        %v325 = vpack.c.bf16 %v315, %v315
        %v326 = vld [vmem:[%s203] sm:$0xf]
        %v327 = vld [vmem:[%s203 + $0x4] sm:$0xf]
        %v330 = vunpack.c.l.b16 %v326
        %v331 = vunpack.c.l.b16 %v327
        %v332 = vpack.c.b16 %v331, %v330
        %v334 = vsel %vm236, %v332, 0
        %v337 = vsel %vm249, %v318, 0
        %339 = vmatprep.subr.bf16.mxu0 0
        %340 = vmatpush1.bf16.msra.mxu0 %v337
        %341 = vmatprep.subr.bf16.mxu0 0
        %342 = vmatpush1.bf16.msra.mxu0 0
        %343 = vmatprep.subr.bf16.mxu0 0
        %344 = vmatpush1.bf16.msra.mxu0 0
        %345 = vmatprep.subr.bf16.mxu0 0
        %346 = vmatpush1.bf16.msra.mxu0 0
        %347 = vmatprep.subr.bf16.mxu0 0
        %348 = vmatpush1.bf16.msra.mxu0 0
        %349 = vmatprep.subr.bf16.mxu0 0
        %350 = vmatpush1.bf16.msra.mxu0 0
        %351 = vmatprep.subr.bf16.mxu0 0
        %352 = vmatpush1.bf16.msra.mxu0 0
        %353 = vmatprep.subr.bf16.mxu0 0
        %354 = vmatpush1.bf16.msra.mxu0 0
        %355 = vmatprep.subr.bf16.mxu0 0
        %356 = vmatpush1.bf16.msra.mxu0 0
        %357 = vmatprep.subr.bf16.mxu0 0
        %358 = vmatpush1.bf16.msra.mxu0 0
        %359 = vmatprep.subr.bf16.mxu0 0
        %360 = vmatpush1.bf16.msra.mxu0 0
        %361 = vmatprep.subr.bf16.mxu0 0
        %362 = vmatpush1.bf16.msra.mxu0 0
        %363 = vmatprep.subr.bf16.mxu0 0
        %364 = vmatpush1.bf16.msra.mxu0 0
        %365 = vmatprep.subr.bf16.mxu0 0
        %366 = vmatpush1.bf16.msra.mxu0 0
        %367 = vmatprep.subr.bf16.mxu0 0
        %368 = vmatpush1.bf16.msra.mxu0 0
        %369 = vmatprep.subr.bf16.mxu0 0
        %370 = vmatpush1.bf16.msra.mxu0 0
        %371 = vmatprep.mubr.bf16.mxu0 0
        %372 = vmatmul.mubr.bf16.gmra.mrb[0].mxu0 %v334
        %v373 = vpop.f32.mrb[0].mxu0
        %v374 = vadd.f32 0.0, %v373
        %v375 = vpop.f32.mrb[0].mxu0
        %v376 = vpop.f32.mrb[0].mxu0
        %v377 = vadd.f32 0.0, %v376
        %v378 = vpop.f32.mrb[0].mxu0
        %379 = vdwg.mxu0
        %vm380 = vcmask 130048
        %381 = vst.msk [vmem:[%s193] sm:$0xff] %vm380, %v374
        %382 = vst.msk [vmem:[%s193 + $0x8] sm:$0xff] %vm380, %v377
        %v384 = vsel %vm249, %v319, 0
        %386 = vmatprep.subr.bf16.mxu0 0
        %387 = vmatpush1.bf16.msra.mxu0 %v384
        %388 = vmatprep.subr.bf16.mxu0 0
        %389 = vmatpush1.bf16.msra.mxu0 0
        %390 = vmatprep.subr.bf16.mxu0 0
        %391 = vmatpush1.bf16.msra.mxu0 0
        %392 = vmatprep.subr.bf16.mxu0 0
        %393 = vmatpush1.bf16.msra.mxu0 0
        %394 = vmatprep.subr.bf16.mxu0 0
        %395 = vmatpush1.bf16.msra.mxu0 0
        %396 = vmatprep.subr.bf16.mxu0 0
        %397 = vmatpush1.bf16.msra.mxu0 0
        %398 = vmatprep.subr.bf16.mxu0 0
        %399 = vmatpush1.bf16.msra.mxu0 0
        %400 = vmatprep.subr.bf16.mxu0 0
        %401 = vmatpush1.bf16.msra.mxu0 0
        %402 = vmatprep.subr.bf16.mxu0 0
        %403 = vmatpush1.bf16.msra.mxu0 0
        %404 = vmatprep.subr.bf16.mxu0 0
        %405 = vmatpush1.bf16.msra.mxu0 0
        %406 = vmatprep.subr.bf16.mxu0 0
        %407 = vmatpush1.bf16.msra.mxu0 0
        %408 = vmatprep.subr.bf16.mxu0 0
        %409 = vmatpush1.bf16.msra.mxu0 0
        %410 = vmatprep.subr.bf16.mxu0 0
        %411 = vmatpush1.bf16.msra.mxu0 0
        %412 = vmatprep.subr.bf16.mxu0 0
        %413 = vmatpush1.bf16.msra.mxu0 0
        %414 = vmatprep.subr.bf16.mxu0 0
        %415 = vmatpush1.bf16.msra.mxu0 0
        %416 = vmatprep.subr.bf16.mxu0 0
        %417 = vmatpush1.bf16.msra.mxu0 0
        %418 = vmatprep.mubr.bf16.mxu0 0
        %419 = vmatmul.mubr.bf16.gmra.mrb[0].mxu0 %v334
        %v420 = vpop.f32.mrb[0].mxu0
        %v421 = vadd.f32 0.0, %v420
        %v422 = vpop.f32.mrb[0].mxu0
        %v423 = vpop.f32.mrb[0].mxu0
        %v424 = vadd.f32 0.0, %v423
        %v425 = vpop.f32.mrb[0].mxu0
        %426 = vdwg.mxu0
        %s427 = scalar_lea.vmem %s193, 16 [#allocation2]
        %428 = vst.msk [vmem:[%s427] sm:$0xff] %vm380, %v421
        %429 = vst.msk [vmem:[%s427 + $0x8] sm:$0xff] %vm380, %v424
        %v431 = vsel %vm249, %v320, 0
        %433 = vmatprep.subr.bf16.mxu0 0
        %434 = vmatpush1.bf16.msra.mxu0 %v431
        %435 = vmatprep.subr.bf16.mxu0 0
        %436 = vmatpush1.bf16.msra.mxu0 0
        %437 = vmatprep.subr.bf16.mxu0 0
        %438 = vmatpush1.bf16.msra.mxu0 0
        %439 = vmatprep.subr.bf16.mxu0 0
        %440 = vmatpush1.bf16.msra.mxu0 0
        %441 = vmatprep.subr.bf16.mxu0 0
        %442 = vmatpush1.bf16.msra.mxu0 0
        %443 = vmatprep.subr.bf16.mxu0 0
        %444 = vmatpush1.bf16.msra.mxu0 0
        %445 = vmatprep.subr.bf16.mxu0 0
        %446 = vmatpush1.bf16.msra.mxu0 0
        %447 = vmatprep.subr.bf16.mxu0 0
        %448 = vmatpush1.bf16.msra.mxu0 0
        %449 = vmatprep.subr.bf16.mxu0 0
        %450 = vmatpush1.bf16.msra.mxu0 0
        %451 = vmatprep.subr.bf16.mxu0 0
        %452 = vmatpush1.bf16.msra.mxu0 0
        %453 = vmatprep.subr.bf16.mxu0 0
        %454 = vmatpush1.bf16.msra.mxu0 0
        %455 = vmatprep.subr.bf16.mxu0 0
        %456 = vmatpush1.bf16.msra.mxu0 0
        %457 = vmatprep.subr.bf16.mxu0 0
        %458 = vmatpush1.bf16.msra.mxu0 0
        %459 = vmatprep.subr.bf16.mxu0 0
        %460 = vmatpush1.bf16.msra.mxu0 0
        %461 = vmatprep.subr.bf16.mxu0 0
        %462 = vmatpush1.bf16.msra.mxu0 0
        %463 = vmatprep.subr.bf16.mxu0 0
        %464 = vmatpush1.bf16.msra.mxu0 0
        %465 = vmatprep.mubr.bf16.mxu0 0
        %466 = vmatmul.mubr.bf16.gmra.mrb[0].mxu0 %v334
        %v467 = vpop.f32.mrb[0].mxu0
        %v468 = vadd.f32 0.0, %v467
        %v469 = vpop.f32.mrb[0].mxu0
        %v470 = vpop.f32.mrb[0].mxu0
        %v471 = vadd.f32 0.0, %v470
        %v472 = vpop.f32.mrb[0].mxu0
        %473 = vdwg.mxu0
        %s474 = scalar_lea.vmem %s193, 32 [#allocation2]
        %475 = vst.msk [vmem:[%s474] sm:$0xff] %vm380, %v468
        %476 = vst.msk [vmem:[%s474 + $0x8] sm:$0xff] %vm380, %v471
        %v478 = vsel %vm249, %v321, 0
        %480 = vmatprep.subr.bf16.mxu0 0
        %481 = vmatpush1.bf16.msra.mxu0 %v478
        %482 = vmatprep.subr.bf16.mxu0 0
        %483 = vmatpush1.bf16.msra.mxu0 0
        %484 = vmatprep.subr.bf16.mxu0 0
        %485 = vmatpush1.bf16.msra.mxu0 0
        %486 = vmatprep.subr.bf16.mxu0 0
        %487 = vmatpush1.bf16.msra.mxu0 0
        %488 = vmatprep.subr.bf16.mxu0 0
        %489 = vmatpush1.bf16.msra.mxu0 0
        %490 = vmatprep.subr.bf16.mxu0 0
        %491 = vmatpush1.bf16.msra.mxu0 0
        %492 = vmatprep.subr.bf16.mxu0 0
        %493 = vmatpush1.bf16.msra.mxu0 0
        %494 = vmatprep.subr.bf16.mxu0 0
        %495 = vmatpush1.bf16.msra.mxu0 0
        %496 = vmatprep.subr.bf16.mxu0 0
        %497 = vmatpush1.bf16.msra.mxu0 0
        %498 = vmatprep.subr.bf16.mxu0 0
        %499 = vmatpush1.bf16.msra.mxu0 0
        %500 = vmatprep.subr.bf16.mxu0 0
        %501 = vmatpush1.bf16.msra.mxu0 0
        %502 = vmatprep.subr.bf16.mxu0 0
        %503 = vmatpush1.bf16.msra.mxu0 0
        %504 = vmatprep.subr.bf16.mxu0 0
        %505 = vmatpush1.bf16.msra.mxu0 0
        %506 = vmatprep.subr.bf16.mxu0 0
        %507 = vmatpush1.bf16.msra.mxu0 0
        %508 = vmatprep.subr.bf16.mxu0 0
        %509 = vmatpush1.bf16.msra.mxu0 0
        %510 = vmatprep.subr.bf16.mxu0 0
        %511 = vmatpush1.bf16.msra.mxu0 0
        %512 = vmatprep.mubr.bf16.mxu0 0
        %513 = vmatmul.mubr.bf16.gmra.mrb[0].mxu0 %v334
        %v514 = vpop.f32.mrb[0].mxu0
        %v515 = vadd.f32 0.0, %v514
        %v516 = vpop.f32.mrb[0].mxu0
        %v517 = vpop.f32.mrb[0].mxu0
        %v518 = vadd.f32 0.0, %v517
        %v519 = vpop.f32.mrb[0].mxu0
        %520 = vdwg.mxu0
        %s521 = scalar_lea.vmem %s193, 48 [#allocation2]
        %522 = vst.msk [vmem:[%s521] sm:$0xff] %vm380, %v515
        %523 = vst.msk [vmem:[%s521 + $0x8] sm:$0xff] %vm380, %v518
        %v525 = vsel %vm249, %v322, 0
        %527 = vmatprep.subr.bf16.mxu0 0
        %528 = vmatpush1.bf16.msra.mxu0 %v525
        %529 = vmatprep.subr.bf16.mxu0 0
        %530 = vmatpush1.bf16.msra.mxu0 0
        %531 = vmatprep.subr.bf16.mxu0 0
        %532 = vmatpush1.bf16.msra.mxu0 0
        %533 = vmatprep.subr.bf16.mxu0 0
        %534 = vmatpush1.bf16.msra.mxu0 0
        %535 = vmatprep.subr.bf16.mxu0 0
        %536 = vmatpush1.bf16.msra.mxu0 0
        %537 = vmatprep.subr.bf16.mxu0 0
        %538 = vmatpush1.bf16.msra.mxu0 0
        %539 = vmatprep.subr.bf16.mxu0 0
        %540 = vmatpush1.bf16.msra.mxu0 0
        %541 = vmatprep.subr.bf16.mxu0 0
        %542 = vmatpush1.bf16.msra.mxu0 0
        %543 = vmatprep.subr.bf16.mxu0 0
        %544 = vmatpush1.bf16.msra.mxu0 0
        %545 = vmatprep.subr.bf16.mxu0 0
        %546 = vmatpush1.bf16.msra.mxu0 0
        %547 = vmatprep.subr.bf16.mxu0 0
        %548 = vmatpush1.bf16.msra.mxu0 0
        %549 = vmatprep.subr.bf16.mxu0 0
        %550 = vmatpush1.bf16.msra.mxu0 0
        %551 = vmatprep.subr.bf16.mxu0 0
        %552 = vmatpush1.bf16.msra.mxu0 0
        %553 = vmatprep.subr.bf16.mxu0 0
        %554 = vmatpush1.bf16.msra.mxu0 0
        %555 = vmatprep.subr.bf16.mxu0 0
        %556 = vmatpush1.bf16.msra.mxu0 0
        %557 = vmatprep.subr.bf16.mxu0 0
        %558 = vmatpush1.bf16.msra.mxu0 0
        %559 = vmatprep.mubr.bf16.mxu0 0
        %560 = vmatmul.mubr.bf16.gmra.mrb[0].mxu0 %v334
        %v561 = vpop.f32.mrb[0].mxu0
        %v562 = vadd.f32 0.0, %v561
        %v563 = vpop.f32.mrb[0].mxu0
        %v564 = vpop.f32.mrb[0].mxu0
        %v565 = vadd.f32 0.0, %v564
        %v566 = vpop.f32.mrb[0].mxu0
        %567 = vdwg.mxu0
        %s568 = scalar_lea.vmem %s193, 64 [#allocation2]
        %569 = vst.msk [vmem:[%s568] sm:$0xff] %vm380, %v562
        %570 = vst.msk [vmem:[%s568 + $0x8] sm:$0xff] %vm380, %v565
        %v572 = vsel %vm249, %v323, 0
        %574 = vmatprep.subr.bf16.mxu0 0
        %575 = vmatpush1.bf16.msra.mxu0 %v572
        %576 = vmatprep.subr.bf16.mxu0 0
        %577 = vmatpush1.bf16.msra.mxu0 0
        %578 = vmatprep.subr.bf16.mxu0 0
        %579 = vmatpush1.bf16.msra.mxu0 0
        %580 = vmatprep.subr.bf16.mxu0 0
        %581 = vmatpush1.bf16.msra.mxu0 0
        %582 = vmatprep.subr.bf16.mxu0 0
        %583 = vmatpush1.bf16.msra.mxu0 0
        %584 = vmatprep.subr.bf16.mxu0 0
        %585 = vmatpush1.bf16.msra.mxu0 0
        %586 = vmatprep.subr.bf16.mxu0 0
        %587 = vmatpush1.bf16.msra.mxu0 0
        %588 = vmatprep.subr.bf16.mxu0 0
        %589 = vmatpush1.bf16.msra.mxu0 0
        %590 = vmatprep.subr.bf16.mxu0 0
        %591 = vmatpush1.bf16.msra.mxu0 0
        %592 = vmatprep.subr.bf16.mxu0 0
        %593 = vmatpush1.bf16.msra.mxu0 0
        %594 = vmatprep.subr.bf16.mxu0 0
        %595 = vmatpush1.bf16.msra.mxu0 0
        %596 = vmatprep.subr.bf16.mxu0 0
        %597 = vmatpush1.bf16.msra.mxu0 0
        %598 = vmatprep.subr.bf16.mxu0 0
        %599 = vmatpush1.bf16.msra.mxu0 0
        %600 = vmatprep.subr.bf16.mxu0 0
        %601 = vmatpush1.bf16.msra.mxu0 0
        %602 = vmatprep.subr.bf16.mxu0 0
        %603 = vmatpush1.bf16.msra.mxu0 0
        %604 = vmatprep.subr.bf16.mxu0 0
        %605 = vmatpush1.bf16.msra.mxu0 0
        %606 = vmatprep.mubr.bf16.mxu0 0
        %607 = vmatmul.mubr.bf16.gmra.mrb[0].mxu0 %v334
        %v608 = vpop.f32.mrb[0].mxu0
        %v609 = vadd.f32 0.0, %v608
        %v610 = vpop.f32.mrb[0].mxu0
        %v611 = vpop.f32.mrb[0].mxu0
        %v612 = vadd.f32 0.0, %v611
        %v613 = vpop.f32.mrb[0].mxu0
        %614 = vdwg.mxu0
        %s615 = scalar_lea.vmem %s193, 80 [#allocation2]
        %616 = vst.msk [vmem:[%s615] sm:$0xff] %vm380, %v609
        %617 = vst.msk [vmem:[%s615 + $0x8] sm:$0xff] %vm380, %v612
        %v619 = vsel %vm249, %v324, 0
        %621 = vmatprep.subr.bf16.mxu0 0
        %622 = vmatpush1.bf16.msra.mxu0 %v619
        %623 = vmatprep.subr.bf16.mxu0 0
        %624 = vmatpush1.bf16.msra.mxu0 0
        %625 = vmatprep.subr.bf16.mxu0 0
        %626 = vmatpush1.bf16.msra.mxu0 0
        %627 = vmatprep.subr.bf16.mxu0 0
        %628 = vmatpush1.bf16.msra.mxu0 0
        %629 = vmatprep.subr.bf16.mxu0 0
        %630 = vmatpush1.bf16.msra.mxu0 0
        %631 = vmatprep.subr.bf16.mxu0 0
        %632 = vmatpush1.bf16.msra.mxu0 0
        %633 = vmatprep.subr.bf16.mxu0 0
        %634 = vmatpush1.bf16.msra.mxu0 0
        %635 = vmatprep.subr.bf16.mxu0 0
        %636 = vmatpush1.bf16.msra.mxu0 0
        %637 = vmatprep.subr.bf16.mxu0 0
        %638 = vmatpush1.bf16.msra.mxu0 0
        %639 = vmatprep.subr.bf16.mxu0 0
        %640 = vmatpush1.bf16.msra.mxu0 0
        %641 = vmatprep.subr.bf16.mxu0 0
        %642 = vmatpush1.bf16.msra.mxu0 0
        %643 = vmatprep.subr.bf16.mxu0 0
        %644 = vmatpush1.bf16.msra.mxu0 0
        %645 = vmatprep.subr.bf16.mxu0 0
        %646 = vmatpush1.bf16.msra.mxu0 0
        %647 = vmatprep.subr.bf16.mxu0 0
        %648 = vmatpush1.bf16.msra.mxu0 0
        %649 = vmatprep.subr.bf16.mxu0 0
        %650 = vmatpush1.bf16.msra.mxu0 0
        %651 = vmatprep.subr.bf16.mxu0 0
        %652 = vmatpush1.bf16.msra.mxu0 0
        %653 = vmatprep.mubr.bf16.mxu0 0
        %654 = vmatmul.mubr.bf16.gmra.mrb[0].mxu0 %v334
        %v655 = vpop.f32.mrb[0].mxu0
        %v656 = vadd.f32 0.0, %v655
        %v657 = vpop.f32.mrb[0].mxu0
        %v658 = vpop.f32.mrb[0].mxu0
        %v659 = vadd.f32 0.0, %v658
        %v660 = vpop.f32.mrb[0].mxu0
        %661 = vdwg.mxu0
        %s662 = scalar_lea.vmem %s193, 96 [#allocation2]
        %663 = vst.msk [vmem:[%s662] sm:$0xff] %vm380, %v656
        %664 = vst.msk [vmem:[%s662 + $0x8] sm:$0xff] %vm380, %v659
        %v666 = vsel %vm249, %v325, 0
        %668 = vmatprep.subr.bf16.mxu0 0
        %669 = vmatpush1.bf16.msra.mxu0 %v666
        %670 = vmatprep.subr.bf16.mxu0 0
        %671 = vmatpush1.bf16.msra.mxu0 0
        %672 = vmatprep.subr.bf16.mxu0 0
        %673 = vmatpush1.bf16.msra.mxu0 0
        %674 = vmatprep.subr.bf16.mxu0 0
        %675 = vmatpush1.bf16.msra.mxu0 0
        %676 = vmatprep.subr.bf16.mxu0 0
        %677 = vmatpush1.bf16.msra.mxu0 0
        %678 = vmatprep.subr.bf16.mxu0 0
        %679 = vmatpush1.bf16.msra.mxu0 0
        %680 = vmatprep.subr.bf16.mxu0 0
        %681 = vmatpush1.bf16.msra.mxu0 0
        %682 = vmatprep.subr.bf16.mxu0 0
        %683 = vmatpush1.bf16.msra.mxu0 0
        %684 = vmatprep.subr.bf16.mxu0 0
        %685 = vmatpush1.bf16.msra.mxu0 0
        %686 = vmatprep.subr.bf16.mxu0 0
        %687 = vmatpush1.bf16.msra.mxu0 0
        %688 = vmatprep.subr.bf16.mxu0 0
        %689 = vmatpush1.bf16.msra.mxu0 0
        %690 = vmatprep.subr.bf16.mxu0 0
        %691 = vmatpush1.bf16.msra.mxu0 0
        %692 = vmatprep.subr.bf16.mxu0 0
        %693 = vmatpush1.bf16.msra.mxu0 0
        %694 = vmatprep.subr.bf16.mxu0 0
        %695 = vmatpush1.bf16.msra.mxu0 0
        %696 = vmatprep.subr.bf16.mxu0 0
        %697 = vmatpush1.bf16.msra.mxu0 0
        %698 = vmatprep.subr.bf16.mxu0 0
        %699 = vmatpush1.bf16.msra.mxu0 0
        %700 = vmatprep.mubr.bf16.mxu0 0
        %701 = vmatmul.mubr.bf16.gmra.mrb[0].mxu0 %v334
        %v702 = vpop.f32.mrb[0].mxu0
        %v703 = vadd.f32 0.0, %v702
        %v704 = vpop.f32.mrb[0].mxu0
        %v705 = vpop.f32.mrb[0].mxu0
        %v706 = vadd.f32 0.0, %v705
        %v707 = vpop.f32.mrb[0].mxu0
        %708 = vdwg.mxu0
        %s709 = scalar_lea.vmem %s193, 112 [#allocation2]
        %710 = vst.msk [vmem:[%s709] sm:$0xff] %vm380, %v703
        %711 = vst.msk [vmem:[%s709 + $0x8] sm:$0xff] %vm380, %v706
        %s712 = sand.u32 %s112, 1
        %s713 = scalar_lea.sflag [#allocation3], %s712
        %s714 = sand.u32 %s112, 1
        %s715 = smul.addr %s714, 128
        %s716 = scalar_lea.vmem [#allocation2], %s715
        // Predicated region
        $region33: #{ema_head_forward.13} parent=31 // pred_check
          %p717 = pneg %p122
        $region34: #{ema_head_forward.13} parent=31 // pred_check_branch
          %719 = sbr.rel (%p717) target = $region36
        $region35: #{ema_head_forward.13} parent=31 // pred_region
          %s720 = smul.u32 2, %s22
          %s722 = ssub.s32 2048, 2048
          %723 = vsyncadd %s713, %s722
          %s724 = smul.addr %s21, 16
          %s725 = sadd.s32 %s720, %s724
          %s726 = smul.addr %s725, 128
          %s727 = scalar_lea.hbm %s3, %s726
          %s728 = sshll.u32 %s716, 4
          %s729 = int_to_ptr.vmem [resolvable:$true] %s728
          %734 = dma.vmem_to_hbm [thread:$0]  %s729, 2048, %s727, %s713, 128, 128, 8
        $region36: #{ema_head_forward.13} parent=31 // pred_fallthru
          _
      $region32: #{ema_head_forward.13} parent=5 // pred_fallthru
        _
      %p735 = scmp.le.s32.totalorder 2, %s12
      // Predicated region
      $region37: #{ema_head_forward.13} parent=5 // pred_check
        %p736 = pneg %p735
      $region38: #{ema_head_forward.13} parent=5 // pred_check_branch
        %738 = sbr.rel (%p736) target = $region40
      $region39: #{ema_head_forward.13} parent=5 // pred_region
        %s739 = ssub.s32 %s12, 2
        // Predicated region
        $region41: #{ema_head_forward.13} parent=39 // pred_check
          %p740 = pneg %p128
        $region42: #{ema_head_forward.13} parent=39 // pred_check_branch
          %742 = sbr.rel (%p740) target = $region44
        $region43: #{ema_head_forward.13} parent=39 // pred_region
          %s743 = sand.u32 %s113, 1
          %s744 = scalar_lea.sflag [#allocation3], %s743
          %s745 = sand.u32 %s113, 1
          %s746 = smul.addr %s745, 128
          %s747 = scalar_lea.vmem [#allocation2], %s746
          %748 = dma.done %s744, 2048
        $region44: #{ema_head_forward.13} parent=39 // pred_fallthru
          _
      $region40: #{ema_head_forward.13} parent=5 // pred_fallthru
        _
    $region6: #{ema_head_forward.13} parent=1 // loop_footer
      %s16 = sadd.s32 1, %s12
    $region7: #{ema_head_forward.13} parent=1 // loop_footer_branch
      %11 = sbr.rel target = $region3
    $region8: #{ema_head_forward.13} parent=1 // loop_exit
      _
    %749 = vsyncpa [#allocation3], 1
    %s750 = scalar_lea.sflag [#allocation3], 1
    %751 = vsyncpa %s750, 1

</llo_original>
